<compile_context>
chip_gen: v6e
topology: v6e:2x2x1
jax: 0.10.0
libtpu: 0.0.40
codegen_flags: <defaults>
</compile_context>

<pallas_src>
import jax
import jax.numpy as jnp
import numpy as np
from jax import lax
from jax.experimental import pallas as pl
from jax.experimental.pallas import tpu as pltpu

PARAM_NAMES = (
    "kmax", "kmin", "b", "d", "kabs", "f", "BW",
    "kp1", "kp2", "kp3", "Fsnc",
    "ke1", "ke2", "k1", "k2",
    "Vm0", "Vmx", "Km0",
    "m1", "m2", "m30", "m4",
    "ka1", "ka2", "kd",
    "Vi", "p2u", "Ib", "ki", "ksc",
)

_SUBLANES = 8
_LANES = 128
_SUB_BATCH = _SUBLANES * _LANES          # patients per grid block (one vreg / state row)
_N_STATES = 13


def _fold_params(params):
    """Fold the per-patient model parameters into compile-time constants."""
    p = {k: float(params[k]) for k in PARAM_NAMES}
    p["khalf"] = (p["kmax"] - p["kmin"]) / 2.0
    p["aa_c"] = 2.5 / (1.0 - p["b"])          # aa = aa_c / Dbar
    p["cc_c"] = 2.5 / p["d"]                  # cc = cc_c / Dbar
    p["ins_scale"] = 6000.0 / p["BW"]         # insulin = u * ins_scale
    p["ra_c"] = p["f"] * p["kabs"] / p["BW"]  # Rat = ra_c * x2
    p["m2m4"] = p["m2"] + p["m4"]
    p["m1m30"] = p["m1"] + p["m30"]
    p["ka1kd"] = p["ka1"] + p["kd"]
    p["inv_Vi"] = 1.0 / p["Vi"]
    return p


def _make_kernel(c, n_steps, dt):
    """Build the Euler-stepping kernel with all parameters as constants."""
    kmax, kmin, kabs = c["kmax"], c["kmin"], c["kabs"]
    b_p, d_p = c["b"], c["d"]
    kp1, kp2, kp3, Fsnc = c["kp1"], c["kp2"], c["kp3"], c["Fsnc"]
    ke1, ke2, k1, k2 = c["ke1"], c["ke2"], c["k1"], c["k2"]
    Vm0, Vmx, Km0 = c["Vm0"], c["Vmx"], c["Km0"]
    m1, m2 = c["m1"], c["m2"]
    ka1, ka2, kd = c["ka1"], c["ka2"], c["kd"]
    p2u, Ib, ki, ksc = c["p2u"], c["Ib"], c["ki"], c["ksc"]
    khalf, aa_c, cc_c = c["khalf"], c["aa_c"], c["cc_c"]
    ins_scale, ra_c = c["ins_scale"], c["ra_c"]
    m2m4, m1m30, ka1kd, inv_Vi = c["m2m4"], c["m1m30"], c["ka1kd"], c["inv_Vi"]
    dt = float(dt)

    def kernel(x_ref, drive_ref, xout_ref, dxdt_ref):
        # drive rows: 0 = CHO [g/min], 1 = insulin [U/min], 2 = last_Qsto, 3 = last_foodtaken
        cho = drive_ref[0]
        ins_u = drive_ref[1]
        dbar = drive_ref[2] + drive_ref[3]
        zero = jnp.zeros_like(dbar)

        # loop-invariant drive quantities (computed once per block)
        d_meal = cho * 1000.0
        insulin = ins_u * ins_scale
        dbar_pos = dbar > 0.0
        inv_dbar = 1.0 / jnp.where(dbar_pos, dbar, 1.0)   # safe: no inf*0 NaN
        aa = aa_c * inv_dbar
        cc = cc_c * inv_dbar
        b_dbar = b_p * dbar
        d_dbar = d_p * dbar

        def rhs(xs):
            x0, x1, x2, x3, x4, x5, x6, x7, x8, x9, x10, x11, x12 = xs
            qsto = x0 + x1
            kgut_fed = kmin + khalf * (
                jnp.tanh(aa * (qsto - b_dbar))
                - jnp.tanh(cc * (qsto - d_dbar)) + 2.0)
            kgut = jnp.where(dbar_pos, kgut_fed, kmax)

            dx0 = -kmax * x0 + d_meal
            dx1 = kmax * x0 - x1 * kgut
            dx2 = kgut * x1 - kabs * x2

            Rat = ra_c * x2
            EGPt = kp1 - kp2 * x3 - kp3 * x8
            Et = jnp.where(x3 > ke2, ke1 * (x3 - ke2), zero)
            dx3 = jnp.maximum(EGPt, zero) + Rat - Fsnc - Et - k1 * x3 + k2 * x4
            dx3 = jnp.where(x3 >= 0.0, dx3, zero)

            Vmt = Vm0 + Vmx * x6
            Uidt = Vmt * x4 / (Km0 + x4)
            dx4 = -Uidt + k1 * x3 - k2 * x4
            dx4 = jnp.where(x4 >= 0.0, dx4, zero)

            dx5 = -m2m4 * x5 + m1 * x9 + ka1 * x10 + ka2 * x11
            It = x5 * inv_Vi
            dx5 = jnp.where(x5 >= 0.0, dx5, zero)

            dx6 = -p2u * x6 + p2u * (It - Ib)
            dx7 = -ki * (x7 - It)
            dx8 = -ki * (x8 - x7)

            dx9 = -m1m30 * x9 + m2 * x5
            dx9 = jnp.where(x9 >= 0.0, dx9, zero)

            dx10 = insulin - ka1kd * x10
            dx10 = jnp.where(x10 >= 0.0, dx10, zero)

            dx11 = kd * x10 - ka2 * x11
            dx11 = jnp.where(x11 >= 0.0, dx11, zero)

            dx12 = -ksc * x12 + ksc * x3
            dx12 = jnp.where(x12 >= 0.0, dx12, zero)

            return (dx0, dx1, dx2, dx3, dx4, dx5, dx6,
                    dx7, dx8, dx9, dx10, dx11, dx12)

        # initial state: 13 full (8,128) tiles
        xs0 = tuple(x_ref[i] for i in range(_N_STATES))

        # forward() output: dxdt at the INPUT state (direct per-row stores)
        dx0 = rhs(xs0)
        for i in range(_N_STATES):
            dxdt_ref[i] = dx0[i]

        # in-kernel fixed-step Euler integration
        def body(_, xs):
            dxs = rhs(xs)
            return tuple(xi + dt * dxi for xi, dxi in zip(xs, dxs))

        xs_final = lax.fori_loop(0, n_steps, body, xs0,
                                 unroll=True if n_steps <= 32 else 8)
        for i in range(_N_STATES):
            xout_ref[i] = xs_final[i]

    return kernel


def t1d_step_batch(x, cho, insulin, last_qsto, last_foodtaken, params,
                   *, n_steps=16, dt=1.0 / 16.0):
    """Batched T1D patient kernel.

    x: (13, B) states, cho/insulin/last_qsto/last_foodtaken: (B,).
    Returns (x_final, dxdt0), both (13, B):
      dxdt0  = forward(t, x)      (exact PyTorch-forward semantics)
      x_final= x after n_steps explicit-Euler steps of size dt.
    """
    x = jnp.asarray(x, jnp.float32)
    B = x.shape[1]
    n_blocks = -(-B // _SUB_BATCH)
    Bp = n_blocks * _SUB_BATCH
    pad = Bp - B

    def pad_b(a):
        a = jnp.asarray(a, jnp.float32)
        if pad:
            widths = [(0, 0)] * (a.ndim - 1) + [(0, pad)]
            a = jnp.pad(a, widths)
        return a

    xp = pad_b(x)                                                    # (13, Bp)
    drive = jnp.stack([pad_b(cho), pad_b(insulin),
                       pad_b(last_qsto), pad_b(last_foodtaken)], 0)  # (4, Bp)

    x3 = xp.reshape(_N_STATES, n_blocks * _SUBLANES, _LANES)
    d3 = drive.reshape(4, n_blocks * _SUBLANES, _LANES)

    kernel = _make_kernel(_fold_params(params), int(n_steps), float(dt))

    out_shape = (
        jax.ShapeDtypeStruct((_N_STATES, n_blocks * _SUBLANES, _LANES), jnp.float32),
        jax.ShapeDtypeStruct((_N_STATES, n_blocks * _SUBLANES, _LANES), jnp.float32),
    )
    x_final, dxdt0 = pl.pallas_call(
        kernel,
        out_shape=out_shape,
        grid=(n_blocks,),
        in_specs=[
            pl.BlockSpec((_N_STATES, _SUBLANES, _LANES), lambda blk: (0, blk, 0)),
            pl.BlockSpec((4, _SUBLANES, _LANES), lambda blk: (0, blk, 0)),
        ],
        out_specs=(
            pl.BlockSpec((_N_STATES, _SUBLANES, _LANES), lambda blk: (0, blk, 0)),
            pl.BlockSpec((_N_STATES, _SUBLANES, _LANES), lambda blk: (0, blk, 0)),
        ),
        compiler_params=pltpu.CompilerParams(dimension_semantics=("parallel",)),
    )(x3, d3)

    x_final = x_final.reshape(_N_STATES, Bp)[:, :B]
    dxdt0 = dxdt0.reshape(_N_STATES, Bp)[:, :B]
    return x_final, dxdt0


# ----------------------------- pure-JAX reference -----------------------------

def _t1d_rhs_ref(xs, cho, ins_u, dbar, params):
    """Batched reference mirroring the PyTorch forward formulas (xs: (13,B))."""
    p = {k: float(params[k]) for k in PARAM_NAMES}
    x = [xs[i] for i in range(_N_STATES)]
    zero = jnp.zeros_like(x[0])

    d_meal = cho * 1000.0
    insulin = ins_u * 6000.0 / p["BW"]
    qsto = x[0] + x[1]
    dbar_safe = jnp.where(dbar > 0, dbar, 1.0)

    aa = 5.0 / 2.0 / (1.0 - p["b"]) / dbar_safe
    cc = 5.0 / 2.0 / p["d"] / dbar_safe
    kgut_fed = p["kmin"] + (p["kmax"] - p["kmin"]) / 2.0 * (
        jnp.tanh(aa * (qsto - p["b"] * dbar))
        - jnp.tanh(cc * (qsto - p["d"] * dbar)) + 2.0)
    kgut = jnp.where(dbar > 0, kgut_fed, p["kmax"])

    dx0 = -p["kmax"] * x[0] + d_meal
    dx1 = p["kmax"] * x[0] - x[1] * kgut
    dx2 = kgut * x[1] - p["kabs"] * x[2]

    Rat = p["f"] * p["kabs"] * x[2] / p["BW"]
    EGPt = p["kp1"] - p["kp2"] * x[3] - p["kp3"] * x[8]
    Et = jnp.where(x[3] > p["ke2"], p["ke1"] * (x[3] - p["ke2"]), zero)
    dx3 = jnp.maximum(EGPt, zero) + Rat - p["Fsnc"] - Et - p["k1"] * x[3] + p["k2"] * x[4]
    dx3 = jnp.where(x[3] >= 0, dx3, zero)

    Vmt = p["Vm0"] + p["Vmx"] * x[6]
    Uidt = Vmt * x[4] / (p["Km0"] + x[4])
    dx4 = -Uidt + p["k1"] * x[3] - p["k2"] * x[4]
    dx4 = jnp.where(x[4] >= 0, dx4, zero)

    dx5 = -(p["m2"] + p["m4"]) * x[5] + p["m1"] * x[9] + p["ka1"] * x[10] + p["ka2"] * x[11]
    It = x[5] / p["Vi"]
    dx5 = jnp.where(x[5] >= 0, dx5, zero)

    dx6 = -p["p2u"] * x[6] + p["p2u"] * (It - p["Ib"])
    dx7 = -p["ki"] * (x[7] - It)
    dx8 = -p["ki"] * (x[8] - x[7])

    dx9 = -(p["m1"] + p["m30"]) * x[9] + p["m2"] * x[5]
    dx9 = jnp.where(x[9] >= 0, dx9, zero)

    dx10 = insulin - (p["ka1"] + p["kd"]) * x[10]
    dx10 = jnp.where(x[10] >= 0, dx10, zero)

    dx11 = p["kd"] * x[10] - p["ka2"] * x[11]
    dx11 = jnp.where(x[11] >= 0, dx11, zero)

    dx12 = -p["ksc"] * x[12] + p["ksc"] * x[3]
    dx12 = jnp.where(x[12] >= 0, dx12, zero)

    return jnp.stack([dx0, dx1, dx2, dx3, dx4, dx5, dx6,
                      dx7, dx8, dx9, dx10, dx11, dx12], axis=0)


def t1d_step_ref(x, cho, ins_u, last_qsto, last_foodtaken, params, *, n_steps, dt):
    x = jnp.asarray(x, jnp.float32)
    dbar = jnp.asarray(last_qsto, jnp.float32) + jnp.asarray(last_foodtaken, jnp.float32)
    cho = jnp.asarray(cho, jnp.float32)
    ins_u = jnp.asarray(ins_u, jnp.float32)

    dxdt0 = _t1d_rhs_ref(x, cho, ins_u, dbar, params)

    def body(_, xs):
        return xs + dt * _t1d_rhs_ref(xs, cho, ins_u, dbar, params)

    x_final = lax.fori_loop(0, n_steps, body, x)
    return x_final, dxdt0


# ----------------------------------- demo -----------------------------------

if __name__ == "__main__":
    # deterministic synthetic UVA/Padova-style patient parameters
    params = {
        "kmax": 0.0458, "kmin": 0.0078, "b": 0.83, "d": 0.33,
        "kabs": 0.0568, "f": 0.9, "BW": 68.7,
        "kp1": 4.73, "kp2": 0.00649, "kp3": 0.00951, "Fsnc": 1.0,
        "ke1": 0.0005, "ke2": 339.0, "k1": 0.0656, "k2": 0.0718,
        "Vm0": 3.25, "Vmx": 0.0737, "Km0": 260.89,
        "m1": 0.145, "m2": 0.393, "m30": 0.22, "m4": 0.157,
        "ka1": 0.0018, "ka2": 0.0182, "kd": 0.0164,
        "Vi": 0.0488, "p2u": 0.0275, "Ib": 100.25, "ki": 0.0076, "ksc": 0.0569,
    }

    key = jax.random.PRNGKey(0)
    kx, kc, kf = jax.random.split(key, 3)

    B = 2 * _SUB_BATCH          # 2048 patients -> two grid blocks ("parallel" axis)
    n_steps, dt = 16, 1.0 / 16.0  # SAMPLE_TIME = 1 min of Euler steps per call

    # deterministic positive 13-state ensemble (glucose/insulin compartments)
    x = jnp.abs(jax.random.normal(kx, (13, B), dtype=jnp.float32)) * 100.0 + 1.0

    # per-patient meal / insulin drive; some patients have Dbar == 0 (fasting branch)
    eating = jax.random.uniform(kc, (B,)) > 0.5
    feeding_hist = jax.random.uniform(kf, (B,)) > 0.25
    cho = jnp.where(eating, 5.0, 0.0).astype(jnp.float32)          # g/min
    insulin = jnp.full((B,), 0.02, jnp.float32)                    # U/min
    last_qsto = jnp.where(feeding_hist, x[0] + x[1], 0.0).astype(jnp.float32)
    last_food = jnp.where(feeding_hist, 45.0, 0.0).astype(jnp.float32)

    x_final, dxdt0 = t1d_step_batch(x, cho, insulin, last_qsto, last_food, params,
                                    n_steps=n_steps, dt=dt)
    x_final = jax.block_until_ready(x_final)
    dxdt0 = jax.block_until_ready(dxdt0)

    x_final_ref, dxdt0_ref = t1d_step_ref(x, cho, insulin, last_qsto, last_food,
                                          params, n_steps=n_steps, dt=dt)
    x_final_ref = jax.block_until_ready(x_final_ref)
    dxdt0_ref = jax.block_until_ready(dxdt0_ref)

    # forward() semantics: dxdt at the input state
    np.testing.assert_allclose(np.asarray(dxdt0), np.asarray(dxdt0_ref),
                               rtol=2e-3, atol=1e-3)
    # in-kernel Euler stepping
    np.testing.assert_allclose(np.asarray(x_final), np.asarray(x_final_ref),
                               rtol=2e-3, atol=1e-3)
    print("KERNEL_OK")
</pallas_src>

<mosaic_0001>
module attributes {stable_mosaic.version = 11 : i64} {
  func.func @kernel(%arg0: i32, %arg1: memref<13x8x128xf32, #tpu.memory_space<vmem>>, %arg2: memref<4x8x128xf32, #tpu.memory_space<vmem>>, %arg3: memref<13x8x128xf32, #tpu.memory_space<vmem>>, %arg4: memref<13x8x128xf32, #tpu.memory_space<vmem>>) attributes {dimension_semantics = [#tpu.dimension_semantics<parallel>], iteration_bounds = array<i64: 2>, scalar_prefetch = 0 : i64, scratch_operands = 0 : i64, tpu.core_type = #tpu.core_type<tc>, window_params = [{transform_indices = @transform_0, window_bounds = array<i64: 13, 8, 128>}, {transform_indices = @transform_1, window_bounds = array<i64: 4, 8, 128>}, {transform_indices = @transform_2, window_bounds = array<i64: 13, 8, 128>}, {transform_indices = @transform_3, window_bounds = array<i64: 13, 8, 128>}]} {
    %c0 = arith.constant 0 : index
    %c0_0 = arith.constant 0 : index
    %c0_1 = arith.constant 0 : index
    %0 = vector.load %arg2[%c0, %c0_0, %c0_1] : memref<4x8x128xf32, #tpu.memory_space<vmem>>, vector<1x8x128xf32>
    %1 = vector.shape_cast %0 : vector<1x8x128xf32> to vector<8x128xf32>
    %c1 = arith.constant 1 : index
    %c0_2 = arith.constant 0 : index
    %c0_3 = arith.constant 0 : index
    %2 = vector.load %arg2[%c1, %c0_2, %c0_3] : memref<4x8x128xf32, #tpu.memory_space<vmem>>, vector<1x8x128xf32>
    %3 = vector.shape_cast %2 : vector<1x8x128xf32> to vector<8x128xf32>
    %c2 = arith.constant 2 : index
    %c0_4 = arith.constant 0 : index
    %c0_5 = arith.constant 0 : index
    %4 = vector.load %arg2[%c2, %c0_4, %c0_5] : memref<4x8x128xf32, #tpu.memory_space<vmem>>, vector<1x8x128xf32>
    %5 = vector.shape_cast %4 : vector<1x8x128xf32> to vector<8x128xf32>
    %c3 = arith.constant 3 : index
    %c0_6 = arith.constant 0 : index
    %c0_7 = arith.constant 0 : index
    %6 = vector.load %arg2[%c3, %c0_6, %c0_7] : memref<4x8x128xf32, #tpu.memory_space<vmem>>, vector<1x8x128xf32>
    %7 = vector.shape_cast %6 : vector<1x8x128xf32> to vector<8x128xf32>
    %8 = arith.addf %5, %7 : vector<8x128xf32>
    %cst = arith.constant 0.000000e+00 : f32
    %9 = vector.broadcast %cst : f32 to vector<8x128xf32>
    %cst_8 = arith.constant 1.000000e+03 : f32
    %10 = vector.broadcast %cst_8 : f32 to vector<8x128xf32>
    %11 = arith.mulf %1, %10 : vector<8x128xf32>
    %cst_9 = arith.constant 87.3362427 : f32
    %12 = vector.broadcast %cst_9 : f32 to vector<8x128xf32>
    %13 = arith.mulf %3, %12 : vector<8x128xf32>
    %cst_10 = arith.constant 0.000000e+00 : f32
    %14 = vector.broadcast %cst_10 : f32 to vector<8x128xf32>
    %15 = arith.cmpf ogt, %8, %14 : vector<8x128xf32>
    %cst_11 = arith.constant 1.000000e+00 : f32
    %16 = vector.broadcast %cst_11 : f32 to vector<8x128xf32>
    %17 = arith.select %15, %8, %16 : vector<8x128xi1>, vector<8x128xf32>
    %cst_12 = arith.constant 1.000000e+00 : f32
    %18 = vector.broadcast %cst_12 : f32 to vector<8x128xf32>
    %19 = arith.divf %18, %17 : vector<8x128xf32>
    %cst_13 = arith.constant 14.7058821 : f32
    %20 = vector.broadcast %cst_13 : f32 to vector<8x128xf32>
    %21 = arith.mulf %20, %19 : vector<8x128xf32>
    %cst_14 = arith.constant 7.5757575 : f32
    %22 = vector.broadcast %cst_14 : f32 to vector<8x128xf32>
    %23 = arith.mulf %22, %19 : vector<8x128xf32>
    %cst_15 = arith.constant 0.829999983 : f32
    %24 = vector.broadcast %cst_15 : f32 to vector<8x128xf32>
    %25 = arith.mulf %24, %8 : vector<8x128xf32>
    %cst_16 = arith.constant 3.300000e-01 : f32
    %26 = vector.broadcast %cst_16 : f32 to vector<8x128xf32>
    %27 = arith.mulf %26, %8 : vector<8x128xf32>
    %c0_17 = arith.constant 0 : index
    %c0_18 = arith.constant 0 : index
    %c0_19 = arith.constant 0 : index
    %28 = vector.load %arg1[%c0_17, %c0_18, %c0_19] : memref<13x8x128xf32, #tpu.memory_space<vmem>>, vector<1x8x128xf32>
    %29 = vector.shape_cast %28 : vector<1x8x128xf32> to vector<8x128xf32>
    %c1_20 = arith.constant 1 : index
    %c0_21 = arith.constant 0 : index
    %c0_22 = arith.constant 0 : index
    %30 = vector.load %arg1[%c1_20, %c0_21, %c0_22] : memref<13x8x128xf32, #tpu.memory_space<vmem>>, vector<1x8x128xf32>
    %31 = vector.shape_cast %30 : vector<1x8x128xf32> to vector<8x128xf32>
    %c2_23 = arith.constant 2 : index
    %c0_24 = arith.constant 0 : index
    %c0_25 = arith.constant 0 : index
    %32 = vector.load %arg1[%c2_23, %c0_24, %c0_25] : memref<13x8x128xf32, #tpu.memory_space<vmem>>, vector<1x8x128xf32>
    %33 = vector.shape_cast %32 : vector<1x8x128xf32> to vector<8x128xf32>
    %c3_26 = arith.constant 3 : index
    %c0_27 = arith.constant 0 : index
    %c0_28 = arith.constant 0 : index
    %34 = vector.load %arg1[%c3_26, %c0_27, %c0_28] : memref<13x8x128xf32, #tpu.memory_space<vmem>>, vector<1x8x128xf32>
    %35 = vector.shape_cast %34 : vector<1x8x128xf32> to vector<8x128xf32>
    %c4 = arith.constant 4 : index
    %c0_29 = arith.constant 0 : index
    %c0_30 = arith.constant 0 : index
    %36 = vector.load %arg1[%c4, %c0_29, %c0_30] : memref<13x8x128xf32, #tpu.memory_space<vmem>>, vector<1x8x128xf32>
    %37 = vector.shape_cast %36 : vector<1x8x128xf32> to vector<8x128xf32>
    %c5 = arith.constant 5 : index
    %c0_31 = arith.constant 0 : index
    %c0_32 = arith.constant 0 : index
    %38 = vector.load %arg1[%c5, %c0_31, %c0_32] : memref<13x8x128xf32, #tpu.memory_space<vmem>>, vector<1x8x128xf32>
    %39 = vector.shape_cast %38 : vector<1x8x128xf32> to vector<8x128xf32>
    %c6 = arith.constant 6 : index
    %c0_33 = arith.constant 0 : index
    %c0_34 = arith.constant 0 : index
    %40 = vector.load %arg1[%c6, %c0_33, %c0_34] : memref<13x8x128xf32, #tpu.memory_space<vmem>>, vector<1x8x128xf32>
    %41 = vector.shape_cast %40 : vector<1x8x128xf32> to vector<8x128xf32>
    %c7 = arith.constant 7 : index
    %c0_35 = arith.constant 0 : index
    %c0_36 = arith.constant 0 : index
    %42 = vector.load %arg1[%c7, %c0_35, %c0_36] : memref<13x8x128xf32, #tpu.memory_space<vmem>>, vector<1x8x128xf32>
    %43 = vector.shape_cast %42 : vector<1x8x128xf32> to vector<8x128xf32>
    %c8 = arith.constant 8 : index
    %c0_37 = arith.constant 0 : index
    %c0_38 = arith.constant 0 : index
    %44 = vector.load %arg1[%c8, %c0_37, %c0_38] : memref<13x8x128xf32, #tpu.memory_space<vmem>>, vector<1x8x128xf32>
    %45 = vector.shape_cast %44 : vector<1x8x128xf32> to vector<8x128xf32>
    %c9 = arith.constant 9 : index
    %c0_39 = arith.constant 0 : index
    %c0_40 = arith.constant 0 : index
    %46 = vector.load %arg1[%c9, %c0_39, %c0_40] : memref<13x8x128xf32, #tpu.memory_space<vmem>>, vector<1x8x128xf32>
    %47 = vector.shape_cast %46 : vector<1x8x128xf32> to vector<8x128xf32>
    %c10 = arith.constant 10 : index
    %c0_41 = arith.constant 0 : index
    %c0_42 = arith.constant 0 : index
    %48 = vector.load %arg1[%c10, %c0_41, %c0_42] : memref<13x8x128xf32, #tpu.memory_space<vmem>>, vector<1x8x128xf32>
    %49 = vector.shape_cast %48 : vector<1x8x128xf32> to vector<8x128xf32>
    %c11 = arith.constant 11 : index
    %c0_43 = arith.constant 0 : index
    %c0_44 = arith.constant 0 : index
    %50 = vector.load %arg1[%c11, %c0_43, %c0_44] : memref<13x8x128xf32, #tpu.memory_space<vmem>>, vector<1x8x128xf32>
    %51 = vector.shape_cast %50 : vector<1x8x128xf32> to vector<8x128xf32>
    %c12 = arith.constant 12 : index
    %c0_45 = arith.constant 0 : index
    %c0_46 = arith.constant 0 : index
    %52 = vector.load %arg1[%c12, %c0_45, %c0_46] : memref<13x8x128xf32, #tpu.memory_space<vmem>>, vector<1x8x128xf32>
    %53 = vector.shape_cast %52 : vector<1x8x128xf32> to vector<8x128xf32>
    %54 = arith.addf %29, %31 : vector<8x128xf32>
    %55 = arith.subf %54, %25 : vector<8x128xf32>
    %56 = arith.mulf %21, %55 : vector<8x128xf32>
    %57 = math.tanh %56 : vector<8x128xf32>
    %58 = arith.subf %54, %27 : vector<8x128xf32>
    %59 = arith.mulf %23, %58 : vector<8x128xf32>
    %60 = math.tanh %59 : vector<8x128xf32>
    %61 = arith.subf %57, %60 : vector<8x128xf32>
    %cst_47 = arith.constant 2.000000e+00 : f32
    %62 = vector.broadcast %cst_47 : f32 to vector<8x128xf32>
    %63 = arith.addf %61, %62 : vector<8x128xf32>
    %cst_48 = arith.constant 1.900000e-02 : f32
    %64 = vector.broadcast %cst_48 : f32 to vector<8x128xf32>
    %65 = arith.mulf %64, %63 : vector<8x128xf32>
    %cst_49 = arith.constant 0.00779999978 : f32
    %66 = vector.broadcast %cst_49 : f32 to vector<8x128xf32>
    %67 = arith.addf %66, %65 : vector<8x128xf32>
    %cst_50 = arith.constant 4.580000e-02 : f32
    %68 = vector.broadcast %cst_50 : f32 to vector<8x128xf32>
    %69 = arith.select %15, %67, %68 : vector<8x128xi1>, vector<8x128xf32>
    %cst_51 = arith.constant -4.580000e-02 : f32
    %70 = vector.broadcast %cst_51 : f32 to vector<8x128xf32>
    %71 = arith.mulf %70, %29 : vector<8x128xf32>
    %72 = arith.addf %71, %11 : vector<8x128xf32>
    %cst_52 = arith.constant 4.580000e-02 : f32
    %73 = vector.broadcast %cst_52 : f32 to vector<8x128xf32>
    %74 = arith.mulf %73, %29 : vector<8x128xf32>
    %75 = arith.mulf %31, %69 : vector<8x128xf32>
    %76 = arith.subf %74, %75 : vector<8x128xf32>
    %77 = arith.mulf %69, %31 : vector<8x128xf32>
    %cst_53 = arith.constant 5.680000e-02 : f32
    %78 = vector.broadcast %cst_53 : f32 to vector<8x128xf32>
    %79 = arith.mulf %78, %33 : vector<8x128xf32>
    %80 = arith.subf %77, %79 : vector<8x128xf32>
    %cst_54 = arith.constant 7.44104793E-4 : f32
    %81 = vector.broadcast %cst_54 : f32 to vector<8x128xf32>
    %82 = arith.mulf %81, %33 : vector<8x128xf32>
    %cst_55 = arith.constant 6.490000e-03 : f32
    %83 = vector.broadcast %cst_55 : f32 to vector<8x128xf32>
    %84 = arith.mulf %83, %35 : vector<8x128xf32>
    %cst_56 = arith.constant 4.730000e+00 : f32
    %85 = vector.broadcast %cst_56 : f32 to vector<8x128xf32>
    %86 = arith.subf %85, %84 : vector<8x128xf32>
    %cst_57 = arith.constant 9.510000e-03 : f32
    %87 = vector.broadcast %cst_57 : f32 to vector<8x128xf32>
    %88 = arith.mulf %87, %45 : vector<8x128xf32>
    %89 = arith.subf %86, %88 : vector<8x128xf32>
    %cst_58 = arith.constant 3.390000e+02 : f32
    %90 = vector.broadcast %cst_58 : f32 to vector<8x128xf32>
    %91 = arith.cmpf ogt, %35, %90 : vector<8x128xf32>
    %cst_59 = arith.constant 3.390000e+02 : f32
    %92 = vector.broadcast %cst_59 : f32 to vector<8x128xf32>
    %93 = arith.subf %35, %92 : vector<8x128xf32>
    %cst_60 = arith.constant 5.000000e-04 : f32
    %94 = vector.broadcast %cst_60 : f32 to vector<8x128xf32>
    %95 = arith.mulf %94, %93 : vector<8x128xf32>
    %96 = arith.select %91, %95, %9 : vector<8x128xi1>, vector<8x128xf32>
    %97 = arith.maximumf %89, %9 : vector<8x128xf32>
    %98 = arith.addf %97, %82 : vector<8x128xf32>
    %cst_61 = arith.constant 1.000000e+00 : f32
    %99 = vector.broadcast %cst_61 : f32 to vector<8x128xf32>
    %100 = arith.subf %98, %99 : vector<8x128xf32>
    %101 = arith.subf %100, %96 : vector<8x128xf32>
    %cst_62 = arith.constant 6.560000e-02 : f32
    %102 = vector.broadcast %cst_62 : f32 to vector<8x128xf32>
    %103 = arith.mulf %102, %35 : vector<8x128xf32>
    %104 = arith.subf %101, %103 : vector<8x128xf32>
    %cst_63 = arith.constant 7.180000e-02 : f32
    %105 = vector.broadcast %cst_63 : f32 to vector<8x128xf32>
    %106 = arith.mulf %105, %37 : vector<8x128xf32>
    %107 = arith.addf %104, %106 : vector<8x128xf32>
    %cst_64 = arith.constant 0.000000e+00 : f32
    %108 = vector.broadcast %cst_64 : f32 to vector<8x128xf32>
    %109 = arith.cmpf oge, %35, %108 : vector<8x128xf32>
    %110 = arith.select %109, %107, %9 : vector<8x128xi1>, vector<8x128xf32>
    %cst_65 = arith.constant 7.370000e-02 : f32
    %111 = vector.broadcast %cst_65 : f32 to vector<8x128xf32>
    %112 = arith.mulf %111, %41 : vector<8x128xf32>
    %cst_66 = arith.constant 3.250000e+00 : f32
    %113 = vector.broadcast %cst_66 : f32 to vector<8x128xf32>
    %114 = arith.addf %113, %112 : vector<8x128xf32>
    %115 = arith.mulf %114, %37 : vector<8x128xf32>
    %cst_67 = arith.constant 2.608900e+02 : f32
    %116 = vector.broadcast %cst_67 : f32 to vector<8x128xf32>
    %117 = arith.addf %116, %37 : vector<8x128xf32>
    %118 = arith.divf %115, %117 : vector<8x128xf32>
    %cst_68 = arith.constant 0.000000e+00 : f32
    %119 = vector.broadcast %cst_68 : f32 to vector<8x128xf32>
    %120 = arith.subf %119, %118 : vector<8x128xf32>
    %cst_69 = arith.constant 6.560000e-02 : f32
    %121 = vector.broadcast %cst_69 : f32 to vector<8x128xf32>
    %122 = arith.mulf %121, %35 : vector<8x128xf32>
    %123 = arith.addf %120, %122 : vector<8x128xf32>
    %cst_70 = arith.constant 7.180000e-02 : f32
    %124 = vector.broadcast %cst_70 : f32 to vector<8x128xf32>
    %125 = arith.mulf %124, %37 : vector<8x128xf32>
    %126 = arith.subf %123, %125 : vector<8x128xf32>
    %cst_71 = arith.constant 0.000000e+00 : f32
    %127 = vector.broadcast %cst_71 : f32 to vector<8x128xf32>
    %128 = arith.cmpf oge, %37, %127 : vector<8x128xf32>
    %129 = arith.select %128, %126, %9 : vector<8x128xi1>, vector<8x128xf32>
    %cst_72 = arith.constant -5.500000e-01 : f32
    %130 = vector.broadcast %cst_72 : f32 to vector<8x128xf32>
    %131 = arith.mulf %130, %39 : vector<8x128xf32>
    %cst_73 = arith.constant 1.450000e-01 : f32
    %132 = vector.broadcast %cst_73 : f32 to vector<8x128xf32>
    %133 = arith.mulf %132, %47 : vector<8x128xf32>
    %134 = arith.addf %131, %133 : vector<8x128xf32>
    %cst_74 = arith.constant 1.800000e-03 : f32
    %135 = vector.broadcast %cst_74 : f32 to vector<8x128xf32>
    %136 = arith.mulf %135, %49 : vector<8x128xf32>
    %137 = arith.addf %134, %136 : vector<8x128xf32>
    %cst_75 = arith.constant 1.820000e-02 : f32
    %138 = vector.broadcast %cst_75 : f32 to vector<8x128xf32>
    %139 = arith.mulf %138, %51 : vector<8x128xf32>
    %140 = arith.addf %137, %139 : vector<8x128xf32>
    %cst_76 = arith.constant 20.4918041 : f32
    %141 = vector.broadcast %cst_76 : f32 to vector<8x128xf32>
    %142 = arith.mulf %39, %141 : vector<8x128xf32>
    %cst_77 = arith.constant 0.000000e+00 : f32
    %143 = vector.broadcast %cst_77 : f32 to vector<8x128xf32>
    %144 = arith.cmpf oge, %39, %143 : vector<8x128xf32>
    %145 = arith.select %144, %140, %9 : vector<8x128xi1>, vector<8x128xf32>
    %cst_78 = arith.constant -2.750000e-02 : f32
    %146 = vector.broadcast %cst_78 : f32 to vector<8x128xf32>
    %147 = arith.mulf %146, %41 : vector<8x128xf32>
    %cst_79 = arith.constant 1.002500e+02 : f32
    %148 = vector.broadcast %cst_79 : f32 to vector<8x128xf32>
    %149 = arith.subf %142, %148 : vector<8x128xf32>
    %cst_80 = arith.constant 2.750000e-02 : f32
    %150 = vector.broadcast %cst_80 : f32 to vector<8x128xf32>
    %151 = arith.mulf %150, %149 : vector<8x128xf32>
    %152 = arith.addf %147, %151 : vector<8x128xf32>
    %153 = arith.subf %43, %142 : vector<8x128xf32>
    %cst_81 = arith.constant -7.600000e-03 : f32
    %154 = vector.broadcast %cst_81 : f32 to vector<8x128xf32>
    %155 = arith.mulf %154, %153 : vector<8x128xf32>
    %156 = arith.subf %45, %43 : vector<8x128xf32>
    %cst_82 = arith.constant -7.600000e-03 : f32
    %157 = vector.broadcast %cst_82 : f32 to vector<8x128xf32>
    %158 = arith.mulf %157, %156 : vector<8x128xf32>
    %cst_83 = arith.constant -3.650000e-01 : f32
    %159 = vector.broadcast %cst_83 : f32 to vector<8x128xf32>
    %160 = arith.mulf %159, %47 : vector<8x128xf32>
    %cst_84 = arith.constant 3.930000e-01 : f32
    %161 = vector.broadcast %cst_84 : f32 to vector<8x128xf32>
    %162 = arith.mulf %161, %39 : vector<8x128xf32>
    %163 = arith.addf %160, %162 : vector<8x128xf32>
    %cst_85 = arith.constant 0.000000e+00 : f32
    %164 = vector.broadcast %cst_85 : f32 to vector<8x128xf32>
    %165 = arith.cmpf oge, %47, %164 : vector<8x128xf32>
    %166 = arith.select %165, %163, %9 : vector<8x128xi1>, vector<8x128xf32>
    %cst_86 = arith.constant 1.820000e-02 : f32
    %167 = vector.broadcast %cst_86 : f32 to vector<8x128xf32>
    %168 = arith.mulf %167, %49 : vector<8x128xf32>
    %169 = arith.subf %13, %168 : vector<8x128xf32>
    %cst_87 = arith.constant 0.000000e+00 : f32
    %170 = vector.broadcast %cst_87 : f32 to vector<8x128xf32>
    %171 = arith.cmpf oge, %49, %170 : vector<8x128xf32>
    %172 = arith.select %171, %169, %9 : vector<8x128xi1>, vector<8x128xf32>
    %cst_88 = arith.constant 1.640000e-02 : f32
    %173 = vector.broadcast %cst_88 : f32 to vector<8x128xf32>
    %174 = arith.mulf %173, %49 : vector<8x128xf32>
    %cst_89 = arith.constant 1.820000e-02 : f32
    %175 = vector.broadcast %cst_89 : f32 to vector<8x128xf32>
    %176 = arith.mulf %175, %51 : vector<8x128xf32>
    %177 = arith.subf %174, %176 : vector<8x128xf32>
    %cst_90 = arith.constant 0.000000e+00 : f32
    %178 = vector.broadcast %cst_90 : f32 to vector<8x128xf32>
    %179 = arith.cmpf oge, %51, %178 : vector<8x128xf32>
    %180 = arith.select %179, %177, %9 : vector<8x128xi1>, vector<8x128xf32>
    %cst_91 = arith.constant -5.690000e-02 : f32
    %181 = vector.broadcast %cst_91 : f32 to vector<8x128xf32>
    %182 = arith.mulf %181, %53 : vector<8x128xf32>
    %cst_92 = arith.constant 5.690000e-02 : f32
    %183 = vector.broadcast %cst_92 : f32 to vector<8x128xf32>
    %184 = arith.mulf %183, %35 : vector<8x128xf32>
    %185 = arith.addf %182, %184 : vector<8x128xf32>
    %cst_93 = arith.constant 0.000000e+00 : f32
    %186 = vector.broadcast %cst_93 : f32 to vector<8x128xf32>
    %187 = arith.cmpf oge, %53, %186 : vector<8x128xf32>
    %188 = arith.select %187, %185, %9 : vector<8x128xi1>, vector<8x128xf32>
    %c0_94 = arith.constant 0 : index
    %c0_95 = arith.constant 0 : index
    %c0_96 = arith.constant 0 : index
    %189 = vector.load %arg4[%c0_94, %c0_95, %c0_96] : memref<13x8x128xf32, #tpu.memory_space<vmem>>, vector<1x8x128xf32>
    %190 = vector.shape_cast %189 : vector<1x8x128xf32> to vector<8x128xf32>
    %191 = vector.shape_cast %72 : vector<8x128xf32> to vector<1x8x128xf32>
    tpu.vector_store %arg4[%c0_94, %c0_95, %c0_96], %191 {strides = array<i32>} : memref<13x8x128xf32, #tpu.memory_space<vmem>>, vector<1x8x128xf32>,
    %c1_97 = arith.constant 1 : index
    %c0_98 = arith.constant 0 : index
    %c0_99 = arith.constant 0 : index
    %192 = vector.load %arg4[%c1_97, %c0_98, %c0_99] : memref<13x8x128xf32, #tpu.memory_space<vmem>>, vector<1x8x128xf32>
    %193 = vector.shape_cast %192 : vector<1x8x128xf32> to vector<8x128xf32>
    %194 = vector.shape_cast %76 : vector<8x128xf32> to vector<1x8x128xf32>
    tpu.vector_store %arg4[%c1_97, %c0_98, %c0_99], %194 {strides = array<i32>} : memref<13x8x128xf32, #tpu.memory_space<vmem>>, vector<1x8x128xf32>,
    %c2_100 = arith.constant 2 : index
    %c0_101 = arith.constant 0 : index
    %c0_102 = arith.constant 0 : index
    %195 = vector.load %arg4[%c2_100, %c0_101, %c0_102] : memref<13x8x128xf32, #tpu.memory_space<vmem>>, vector<1x8x128xf32>
    %196 = vector.shape_cast %195 : vector<1x8x128xf32> to vector<8x128xf32>
    %197 = vector.shape_cast %80 : vector<8x128xf32> to vector<1x8x128xf32>
    tpu.vector_store %arg4[%c2_100, %c0_101, %c0_102], %197 {strides = array<i32>} : memref<13x8x128xf32, #tpu.memory_space<vmem>>, vector<1x8x128xf32>,
    %c3_103 = arith.constant 3 : index
    %c0_104 = arith.constant 0 : index
    %c0_105 = arith.constant 0 : index
    %198 = vector.load %arg4[%c3_103, %c0_104, %c0_105] : memref<13x8x128xf32, #tpu.memory_space<vmem>>, vector<1x8x128xf32>
    %199 = vector.shape_cast %198 : vector<1x8x128xf32> to vector<8x128xf32>
    %200 = vector.shape_cast %110 : vector<8x128xf32> to vector<1x8x128xf32>
    tpu.vector_store %arg4[%c3_103, %c0_104, %c0_105], %200 {strides = array<i32>} : memref<13x8x128xf32, #tpu.memory_space<vmem>>, vector<1x8x128xf32>,
    %c4_106 = arith.constant 4 : index
    %c0_107 = arith.constant 0 : index
    %c0_108 = arith.constant 0 : index
    %201 = vector.load %arg4[%c4_106, %c0_107, %c0_108] : memref<13x8x128xf32, #tpu.memory_space<vmem>>, vector<1x8x128xf32>
    %202 = vector.shape_cast %201 : vector<1x8x128xf32> to vector<8x128xf32>
    %203 = vector.shape_cast %129 : vector<8x128xf32> to vector<1x8x128xf32>
    tpu.vector_store %arg4[%c4_106, %c0_107, %c0_108], %203 {strides = array<i32>} : memref<13x8x128xf32, #tpu.memory_space<vmem>>, vector<1x8x128xf32>,
    %c5_109 = arith.constant 5 : index
    %c0_110 = arith.constant 0 : index
    %c0_111 = arith.constant 0 : index
    %204 = vector.load %arg4[%c5_109, %c0_110, %c0_111] : memref<13x8x128xf32, #tpu.memory_space<vmem>>, vector<1x8x128xf32>
    %205 = vector.shape_cast %204 : vector<1x8x128xf32> to vector<8x128xf32>
    %206 = vector.shape_cast %145 : vector<8x128xf32> to vector<1x8x128xf32>
    tpu.vector_store %arg4[%c5_109, %c0_110, %c0_111], %206 {strides = array<i32>} : memref<13x8x128xf32, #tpu.memory_space<vmem>>, vector<1x8x128xf32>,
    %c6_112 = arith.constant 6 : index
    %c0_113 = arith.constant 0 : index
    %c0_114 = arith.constant 0 : index
    %207 = vector.load %arg4[%c6_112, %c0_113, %c0_114] : memref<13x8x128xf32, #tpu.memory_space<vmem>>, vector<1x8x128xf32>
    %208 = vector.shape_cast %207 : vector<1x8x128xf32> to vector<8x128xf32>
    %209 = vector.shape_cast %152 : vector<8x128xf32> to vector<1x8x128xf32>
    tpu.vector_store %arg4[%c6_112, %c0_113, %c0_114], %209 {strides = array<i32>} : memref<13x8x128xf32, #tpu.memory_space<vmem>>, vector<1x8x128xf32>,
    %c7_115 = arith.constant 7 : index
    %c0_116 = arith.constant 0 : index
    %c0_117 = arith.constant 0 : index
    %210 = vector.load %arg4[%c7_115, %c0_116, %c0_117] : memref<13x8x128xf32, #tpu.memory_space<vmem>>, vector<1x8x128xf32>
    %211 = vector.shape_cast %210 : vector<1x8x128xf32> to vector<8x128xf32>
    %212 = vector.shape_cast %155 : vector<8x128xf32> to vector<1x8x128xf32>
    tpu.vector_store %arg4[%c7_115, %c0_116, %c0_117], %212 {strides = array<i32>} : memref<13x8x128xf32, #tpu.memory_space<vmem>>, vector<1x8x128xf32>,
    %c8_118 = arith.constant 8 : index
    %c0_119 = arith.constant 0 : index
    %c0_120 = arith.constant 0 : index
    %213 = vector.load %arg4[%c8_118, %c0_119, %c0_120] : memref<13x8x128xf32, #tpu.memory_space<vmem>>, vector<1x8x128xf32>
    %214 = vector.shape_cast %213 : vector<1x8x128xf32> to vector<8x128xf32>
    %215 = vector.shape_cast %158 : vector<8x128xf32> to vector<1x8x128xf32>
    tpu.vector_store %arg4[%c8_118, %c0_119, %c0_120], %215 {strides = array<i32>} : memref<13x8x128xf32, #tpu.memory_space<vmem>>, vector<1x8x128xf32>,
    %c9_121 = arith.constant 9 : index
    %c0_122 = arith.constant 0 : index
    %c0_123 = arith.constant 0 : index
    %216 = vector.load %arg4[%c9_121, %c0_122, %c0_123] : memref<13x8x128xf32, #tpu.memory_space<vmem>>, vector<1x8x128xf32>
    %217 = vector.shape_cast %216 : vector<1x8x128xf32> to vector<8x128xf32>
    %218 = vector.shape_cast %166 : vector<8x128xf32> to vector<1x8x128xf32>
    tpu.vector_store %arg4[%c9_121, %c0_122, %c0_123], %218 {strides = array<i32>} : memref<13x8x128xf32, #tpu.memory_space<vmem>>, vector<1x8x128xf32>,
    %c10_124 = arith.constant 10 : index
    %c0_125 = arith.constant 0 : index
    %c0_126 = arith.constant 0 : index
    %219 = vector.load %arg4[%c10_124, %c0_125, %c0_126] : memref<13x8x128xf32, #tpu.memory_space<vmem>>, vector<1x8x128xf32>
    %220 = vector.shape_cast %219 : vector<1x8x128xf32> to vector<8x128xf32>
    %221 = vector.shape_cast %172 : vector<8x128xf32> to vector<1x8x128xf32>
    tpu.vector_store %arg4[%c10_124, %c0_125, %c0_126], %221 {strides = array<i32>} : memref<13x8x128xf32, #tpu.memory_space<vmem>>, vector<1x8x128xf32>,
    %c11_127 = arith.constant 11 : index
    %c0_128 = arith.constant 0 : index
    %c0_129 = arith.constant 0 : index
    %222 = vector.load %arg4[%c11_127, %c0_128, %c0_129] : memref<13x8x128xf32, #tpu.memory_space<vmem>>, vector<1x8x128xf32>
    %223 = vector.shape_cast %222 : vector<1x8x128xf32> to vector<8x128xf32>
    %224 = vector.shape_cast %180 : vector<8x128xf32> to vector<1x8x128xf32>
    tpu.vector_store %arg4[%c11_127, %c0_128, %c0_129], %224 {strides = array<i32>} : memref<13x8x128xf32, #tpu.memory_space<vmem>>, vector<1x8x128xf32>,
    %c12_130 = arith.constant 12 : index
    %c0_131 = arith.constant 0 : index
    %c0_132 = arith.constant 0 : index
    %225 = vector.load %arg4[%c12_130, %c0_131, %c0_132] : memref<13x8x128xf32, #tpu.memory_space<vmem>>, vector<1x8x128xf32>
    %226 = vector.shape_cast %225 : vector<1x8x128xf32> to vector<8x128xf32>
    %227 = vector.shape_cast %188 : vector<8x128xf32> to vector<1x8x128xf32>
    tpu.vector_store %arg4[%c12_130, %c0_131, %c0_132], %227 {strides = array<i32>} : memref<13x8x128xf32, #tpu.memory_space<vmem>>, vector<1x8x128xf32>,
    %c0_i32 = arith.constant 0 : i32
    %228 = arith.addf %29, %31 : vector<8x128xf32>
    %229 = arith.subf %228, %25 : vector<8x128xf32>
    %230 = arith.mulf %21, %229 : vector<8x128xf32>
    %231 = math.tanh %230 : vector<8x128xf32>
    %232 = arith.subf %228, %27 : vector<8x128xf32>
    %233 = arith.mulf %23, %232 : vector<8x128xf32>
    %234 = math.tanh %233 : vector<8x128xf32>
    %235 = arith.subf %231, %234 : vector<8x128xf32>
    %cst_133 = arith.constant 2.000000e+00 : f32
    %236 = vector.broadcast %cst_133 : f32 to vector<8x128xf32>
    %237 = arith.addf %235, %236 : vector<8x128xf32>
    %cst_134 = arith.constant 1.900000e-02 : f32
    %238 = vector.broadcast %cst_134 : f32 to vector<8x128xf32>
    %239 = arith.mulf %238, %237 : vector<8x128xf32>
    %cst_135 = arith.constant 0.00779999978 : f32
    %240 = vector.broadcast %cst_135 : f32 to vector<8x128xf32>
    %241 = arith.addf %240, %239 : vector<8x128xf32>
    %cst_136 = arith.constant 4.580000e-02 : f32
    %242 = vector.broadcast %cst_136 : f32 to vector<8x128xf32>
    %243 = arith.select %15, %241, %242 : vector<8x128xi1>, vector<8x128xf32>
    %cst_137 = arith.constant -4.580000e-02 : f32
    %244 = vector.broadcast %cst_137 : f32 to vector<8x128xf32>
    %245 = arith.mulf %244, %29 : vector<8x128xf32>
    %246 = arith.addf %245, %11 : vector<8x128xf32>
    %cst_138 = arith.constant 4.580000e-02 : f32
    %247 = vector.broadcast %cst_138 : f32 to vector<8x128xf32>
    %248 = arith.mulf %247, %29 : vector<8x128xf32>
    %249 = arith.mulf %31, %243 : vector<8x128xf32>
    %250 = arith.subf %248, %249 : vector<8x128xf32>
    %251 = arith.mulf %243, %31 : vector<8x128xf32>
    %cst_139 = arith.constant 5.680000e-02 : f32
    %252 = vector.broadcast %cst_139 : f32 to vector<8x128xf32>
    %253 = arith.mulf %252, %33 : vector<8x128xf32>
    %254 = arith.subf %251, %253 : vector<8x128xf32>
    %cst_140 = arith.constant 7.44104793E-4 : f32
    %255 = vector.broadcast %cst_140 : f32 to vector<8x128xf32>
    %256 = arith.mulf %255, %33 : vector<8x128xf32>
    %cst_141 = arith.constant 6.490000e-03 : f32
    %257 = vector.broadcast %cst_141 : f32 to vector<8x128xf32>
    %258 = arith.mulf %257, %35 : vector<8x128xf32>
    %cst_142 = arith.constant 4.730000e+00 : f32
    %259 = vector.broadcast %cst_142 : f32 to vector<8x128xf32>
    %260 = arith.subf %259, %258 : vector<8x128xf32>
    %cst_143 = arith.constant 9.510000e-03 : f32
    %261 = vector.broadcast %cst_143 : f32 to vector<8x128xf32>
    %262 = arith.mulf %261, %45 : vector<8x128xf32>
    %263 = arith.subf %260, %262 : vector<8x128xf32>
    %cst_144 = arith.constant 3.390000e+02 : f32
    %264 = vector.broadcast %cst_144 : f32 to vector<8x128xf32>
    %265 = arith.cmpf ogt, %35, %264 : vector<8x128xf32>
    %cst_145 = arith.constant 3.390000e+02 : f32
    %266 = vector.broadcast %cst_145 : f32 to vector<8x128xf32>
    %267 = arith.subf %35, %266 : vector<8x128xf32>
    %cst_146 = arith.constant 5.000000e-04 : f32
    %268 = vector.broadcast %cst_146 : f32 to vector<8x128xf32>
    %269 = arith.mulf %268, %267 : vector<8x128xf32>
    %270 = arith.select %265, %269, %9 : vector<8x128xi1>, vector<8x128xf32>
    %271 = arith.maximumf %263, %9 : vector<8x128xf32>
    %272 = arith.addf %271, %256 : vector<8x128xf32>
    %cst_147 = arith.constant 1.000000e+00 : f32
    %273 = vector.broadcast %cst_147 : f32 to vector<8x128xf32>
    %274 = arith.subf %272, %273 : vector<8x128xf32>
    %275 = arith.subf %274, %270 : vector<8x128xf32>
    %cst_148 = arith.constant 6.560000e-02 : f32
    %276 = vector.broadcast %cst_148 : f32 to vector<8x128xf32>
    %277 = arith.mulf %276, %35 : vector<8x128xf32>
    %278 = arith.subf %275, %277 : vector<8x128xf32>
    %cst_149 = arith.constant 7.180000e-02 : f32
    %279 = vector.broadcast %cst_149 : f32 to vector<8x128xf32>
    %280 = arith.mulf %279, %37 : vector<8x128xf32>
    %281 = arith.addf %278, %280 : vector<8x128xf32>
    %cst_150 = arith.constant 0.000000e+00 : f32
    %282 = vector.broadcast %cst_150 : f32 to vector<8x128xf32>
    %283 = arith.cmpf oge, %35, %282 : vector<8x128xf32>
    %284 = arith.select %283, %281, %9 : vector<8x128xi1>, vector<8x128xf32>
    %cst_151 = arith.constant 7.370000e-02 : f32
    %285 = vector.broadcast %cst_151 : f32 to vector<8x128xf32>
    %286 = arith.mulf %285, %41 : vector<8x128xf32>
    %cst_152 = arith.constant 3.250000e+00 : f32
    %287 = vector.broadcast %cst_152 : f32 to vector<8x128xf32>
    %288 = arith.addf %287, %286 : vector<8x128xf32>
    %289 = arith.mulf %288, %37 : vector<8x128xf32>
    %cst_153 = arith.constant 2.608900e+02 : f32
    %290 = vector.broadcast %cst_153 : f32 to vector<8x128xf32>
    %291 = arith.addf %290, %37 : vector<8x128xf32>
    %292 = arith.divf %289, %291 : vector<8x128xf32>
    %cst_154 = arith.constant 0.000000e+00 : f32
    %293 = vector.broadcast %cst_154 : f32 to vector<8x128xf32>
    %294 = arith.subf %293, %292 : vector<8x128xf32>
    %cst_155 = arith.constant 6.560000e-02 : f32
    %295 = vector.broadcast %cst_155 : f32 to vector<8x128xf32>
    %296 = arith.mulf %295, %35 : vector<8x128xf32>
    %297 = arith.addf %294, %296 : vector<8x128xf32>
    %cst_156 = arith.constant 7.180000e-02 : f32
    %298 = vector.broadcast %cst_156 : f32 to vector<8x128xf32>
    %299 = arith.mulf %298, %37 : vector<8x128xf32>
    %300 = arith.subf %297, %299 : vector<8x128xf32>
    %cst_157 = arith.constant 0.000000e+00 : f32
    %301 = vector.broadcast %cst_157 : f32 to vector<8x128xf32>
    %302 = arith.cmpf oge, %37, %301 : vector<8x128xf32>
    %303 = arith.select %302, %300, %9 : vector<8x128xi1>, vector<8x128xf32>
    %cst_158 = arith.constant -5.500000e-01 : f32
    %304 = vector.broadcast %cst_158 : f32 to vector<8x128xf32>
    %305 = arith.mulf %304, %39 : vector<8x128xf32>
    %cst_159 = arith.constant 1.450000e-01 : f32
    %306 = vector.broadcast %cst_159 : f32 to vector<8x128xf32>
    %307 = arith.mulf %306, %47 : vector<8x128xf32>
    %308 = arith.addf %305, %307 : vector<8x128xf32>
    %cst_160 = arith.constant 1.800000e-03 : f32
    %309 = vector.broadcast %cst_160 : f32 to vector<8x128xf32>
    %310 = arith.mulf %309, %49 : vector<8x128xf32>
    %311 = arith.addf %308, %310 : vector<8x128xf32>
    %cst_161 = arith.constant 1.820000e-02 : f32
    %312 = vector.broadcast %cst_161 : f32 to vector<8x128xf32>
    %313 = arith.mulf %312, %51 : vector<8x128xf32>
    %314 = arith.addf %311, %313 : vector<8x128xf32>
    %cst_162 = arith.constant 20.4918041 : f32
    %315 = vector.broadcast %cst_162 : f32 to vector<8x128xf32>
    %316 = arith.mulf %39, %315 : vector<8x128xf32>
    %cst_163 = arith.constant 0.000000e+00 : f32
    %317 = vector.broadcast %cst_163 : f32 to vector<8x128xf32>
    %318 = arith.cmpf oge, %39, %317 : vector<8x128xf32>
    %319 = arith.select %318, %314, %9 : vector<8x128xi1>, vector<8x128xf32>
    %cst_164 = arith.constant -2.750000e-02 : f32
    %320 = vector.broadcast %cst_164 : f32 to vector<8x128xf32>
    %321 = arith.mulf %320, %41 : vector<8x128xf32>
    %cst_165 = arith.constant 1.002500e+02 : f32
    %322 = vector.broadcast %cst_165 : f32 to vector<8x128xf32>
    %323 = arith.subf %316, %322 : vector<8x128xf32>
    %cst_166 = arith.constant 2.750000e-02 : f32
    %324 = vector.broadcast %cst_166 : f32 to vector<8x128xf32>
    %325 = arith.mulf %324, %323 : vector<8x128xf32>
    %326 = arith.addf %321, %325 : vector<8x128xf32>
    %327 = arith.subf %43, %316 : vector<8x128xf32>
    %cst_167 = arith.constant -7.600000e-03 : f32
    %328 = vector.broadcast %cst_167 : f32 to vector<8x128xf32>
    %329 = arith.mulf %328, %327 : vector<8x128xf32>
    %330 = arith.subf %45, %43 : vector<8x128xf32>
    %cst_168 = arith.constant -7.600000e-03 : f32
    %331 = vector.broadcast %cst_168 : f32 to vector<8x128xf32>
    %332 = arith.mulf %331, %330 : vector<8x128xf32>
    %cst_169 = arith.constant -3.650000e-01 : f32
    %333 = vector.broadcast %cst_169 : f32 to vector<8x128xf32>
    %334 = arith.mulf %333, %47 : vector<8x128xf32>
    %cst_170 = arith.constant 3.930000e-01 : f32
    %335 = vector.broadcast %cst_170 : f32 to vector<8x128xf32>
    %336 = arith.mulf %335, %39 : vector<8x128xf32>
    %337 = arith.addf %334, %336 : vector<8x128xf32>
    %cst_171 = arith.constant 0.000000e+00 : f32
    %338 = vector.broadcast %cst_171 : f32 to vector<8x128xf32>
    %339 = arith.cmpf oge, %47, %338 : vector<8x128xf32>
    %340 = arith.select %339, %337, %9 : vector<8x128xi1>, vector<8x128xf32>
    %cst_172 = arith.constant 1.820000e-02 : f32
    %341 = vector.broadcast %cst_172 : f32 to vector<8x128xf32>
    %342 = arith.mulf %341, %49 : vector<8x128xf32>
    %343 = arith.subf %13, %342 : vector<8x128xf32>
    %cst_173 = arith.constant 0.000000e+00 : f32
    %344 = vector.broadcast %cst_173 : f32 to vector<8x128xf32>
    %345 = arith.cmpf oge, %49, %344 : vector<8x128xf32>
    %346 = arith.select %345, %343, %9 : vector<8x128xi1>, vector<8x128xf32>
    %cst_174 = arith.constant 1.640000e-02 : f32
    %347 = vector.broadcast %cst_174 : f32 to vector<8x128xf32>
    %348 = arith.mulf %347, %49 : vector<8x128xf32>
    %cst_175 = arith.constant 1.820000e-02 : f32
    %349 = vector.broadcast %cst_175 : f32 to vector<8x128xf32>
    %350 = arith.mulf %349, %51 : vector<8x128xf32>
    %351 = arith.subf %348, %350 : vector<8x128xf32>
    %cst_176 = arith.constant 0.000000e+00 : f32
    %352 = vector.broadcast %cst_176 : f32 to vector<8x128xf32>
    %353 = arith.cmpf oge, %51, %352 : vector<8x128xf32>
    %354 = arith.select %353, %351, %9 : vector<8x128xi1>, vector<8x128xf32>
    %cst_177 = arith.constant -5.690000e-02 : f32
    %355 = vector.broadcast %cst_177 : f32 to vector<8x128xf32>
    %356 = arith.mulf %355, %53 : vector<8x128xf32>
    %cst_178 = arith.constant 5.690000e-02 : f32
    %357 = vector.broadcast %cst_178 : f32 to vector<8x128xf32>
    %358 = arith.mulf %357, %35 : vector<8x128xf32>
    %359 = arith.addf %356, %358 : vector<8x128xf32>
    %cst_179 = arith.constant 0.000000e+00 : f32
    %360 = vector.broadcast %cst_179 : f32 to vector<8x128xf32>
    %361 = arith.cmpf oge, %53, %360 : vector<8x128xf32>
    %362 = arith.select %361, %359, %9 : vector<8x128xi1>, vector<8x128xf32>
    %cst_180 = arith.constant 6.250000e-02 : f32
    %363 = vector.broadcast %cst_180 : f32 to vector<8x128xf32>
    %364 = arith.mulf %363, %246 : vector<8x128xf32>
    %365 = arith.addf %29, %364 : vector<8x128xf32>
    %cst_181 = arith.constant 6.250000e-02 : f32
    %366 = vector.broadcast %cst_181 : f32 to vector<8x128xf32>
    %367 = arith.mulf %366, %250 : vector<8x128xf32>
    %368 = arith.addf %31, %367 : vector<8x128xf32>
    %cst_182 = arith.constant 6.250000e-02 : f32
    %369 = vector.broadcast %cst_182 : f32 to vector<8x128xf32>
    %370 = arith.mulf %369, %254 : vector<8x128xf32>
    %371 = arith.addf %33, %370 : vector<8x128xf32>
    %cst_183 = arith.constant 6.250000e-02 : f32
    %372 = vector.broadcast %cst_183 : f32 to vector<8x128xf32>
    %373 = arith.mulf %372, %284 : vector<8x128xf32>
    %374 = arith.addf %35, %373 : vector<8x128xf32>
    %cst_184 = arith.constant 6.250000e-02 : f32
    %375 = vector.broadcast %cst_184 : f32 to vector<8x128xf32>
    %376 = arith.mulf %375, %303 : vector<8x128xf32>
    %377 = arith.addf %37, %376 : vector<8x128xf32>
    %cst_185 = arith.constant 6.250000e-02 : f32
    %378 = vector.broadcast %cst_185 : f32 to vector<8x128xf32>
    %379 = arith.mulf %378, %319 : vector<8x128xf32>
    %380 = arith.addf %39, %379 : vector<8x128xf32>
    %cst_186 = arith.constant 6.250000e-02 : f32
    %381 = vector.broadcast %cst_186 : f32 to vector<8x128xf32>
    %382 = arith.mulf %381, %326 : vector<8x128xf32>
    %383 = arith.addf %41, %382 : vector<8x128xf32>
    %cst_187 = arith.constant 6.250000e-02 : f32
    %384 = vector.broadcast %cst_187 : f32 to vector<8x128xf32>
    %385 = arith.mulf %384, %329 : vector<8x128xf32>
    %386 = arith.addf %43, %385 : vector<8x128xf32>
    %cst_188 = arith.constant 6.250000e-02 : f32
    %387 = vector.broadcast %cst_188 : f32 to vector<8x128xf32>
    %388 = arith.mulf %387, %332 : vector<8x128xf32>
    %389 = arith.addf %45, %388 : vector<8x128xf32>
    %cst_189 = arith.constant 6.250000e-02 : f32
    %390 = vector.broadcast %cst_189 : f32 to vector<8x128xf32>
    %391 = arith.mulf %390, %340 : vector<8x128xf32>
    %392 = arith.addf %47, %391 : vector<8x128xf32>
    %cst_190 = arith.constant 6.250000e-02 : f32
    %393 = vector.broadcast %cst_190 : f32 to vector<8x128xf32>
    %394 = arith.mulf %393, %346 : vector<8x128xf32>
    %395 = arith.addf %49, %394 : vector<8x128xf32>
    %cst_191 = arith.constant 6.250000e-02 : f32
    %396 = vector.broadcast %cst_191 : f32 to vector<8x128xf32>
    %397 = arith.mulf %396, %354 : vector<8x128xf32>
    %398 = arith.addf %51, %397 : vector<8x128xf32>
    %cst_192 = arith.constant 6.250000e-02 : f32
    %399 = vector.broadcast %cst_192 : f32 to vector<8x128xf32>
    %400 = arith.mulf %399, %362 : vector<8x128xf32>
    %401 = arith.addf %53, %400 : vector<8x128xf32>
    %c1_i32 = arith.constant 1 : i32
    %402 = arith.addf %365, %368 : vector<8x128xf32>
    %403 = arith.subf %402, %25 : vector<8x128xf32>
    %404 = arith.mulf %21, %403 : vector<8x128xf32>
    %405 = math.tanh %404 : vector<8x128xf32>
    %406 = arith.subf %402, %27 : vector<8x128xf32>
    %407 = arith.mulf %23, %406 : vector<8x128xf32>
    %408 = math.tanh %407 : vector<8x128xf32>
    %409 = arith.subf %405, %408 : vector<8x128xf32>
    %cst_193 = arith.constant 2.000000e+00 : f32
    %410 = vector.broadcast %cst_193 : f32 to vector<8x128xf32>
    %411 = arith.addf %409, %410 : vector<8x128xf32>
    %cst_194 = arith.constant 1.900000e-02 : f32
    %412 = vector.broadcast %cst_194 : f32 to vector<8x128xf32>
    %413 = arith.mulf %412, %411 : vector<8x128xf32>
    %cst_195 = arith.constant 0.00779999978 : f32
    %414 = vector.broadcast %cst_195 : f32 to vector<8x128xf32>
    %415 = arith.addf %414, %413 : vector<8x128xf32>
    %cst_196 = arith.constant 4.580000e-02 : f32
    %416 = vector.broadcast %cst_196 : f32 to vector<8x128xf32>
    %417 = arith.select %15, %415, %416 : vector<8x128xi1>, vector<8x128xf32>
    %cst_197 = arith.constant -4.580000e-02 : f32
    %418 = vector.broadcast %cst_197 : f32 to vector<8x128xf32>
    %419 = arith.mulf %418, %365 : vector<8x128xf32>
    %420 = arith.addf %419, %11 : vector<8x128xf32>
    %cst_198 = arith.constant 4.580000e-02 : f32
    %421 = vector.broadcast %cst_198 : f32 to vector<8x128xf32>
    %422 = arith.mulf %421, %365 : vector<8x128xf32>
    %423 = arith.mulf %368, %417 : vector<8x128xf32>
    %424 = arith.subf %422, %423 : vector<8x128xf32>
    %425 = arith.mulf %417, %368 : vector<8x128xf32>
    %cst_199 = arith.constant 5.680000e-02 : f32
    %426 = vector.broadcast %cst_199 : f32 to vector<8x128xf32>
    %427 = arith.mulf %426, %371 : vector<8x128xf32>
    %428 = arith.subf %425, %427 : vector<8x128xf32>
    %cst_200 = arith.constant 7.44104793E-4 : f32
    %429 = vector.broadcast %cst_200 : f32 to vector<8x128xf32>
    %430 = arith.mulf %429, %371 : vector<8x128xf32>
    %cst_201 = arith.constant 6.490000e-03 : f32
    %431 = vector.broadcast %cst_201 : f32 to vector<8x128xf32>
    %432 = arith.mulf %431, %374 : vector<8x128xf32>
    %cst_202 = arith.constant 4.730000e+00 : f32
    %433 = vector.broadcast %cst_202 : f32 to vector<8x128xf32>
    %434 = arith.subf %433, %432 : vector<8x128xf32>
    %cst_203 = arith.constant 9.510000e-03 : f32
    %435 = vector.broadcast %cst_203 : f32 to vector<8x128xf32>
    %436 = arith.mulf %435, %389 : vector<8x128xf32>
    %437 = arith.subf %434, %436 : vector<8x128xf32>
    %cst_204 = arith.constant 3.390000e+02 : f32
    %438 = vector.broadcast %cst_204 : f32 to vector<8x128xf32>
    %439 = arith.cmpf ogt, %374, %438 : vector<8x128xf32>
    %cst_205 = arith.constant 3.390000e+02 : f32
    %440 = vector.broadcast %cst_205 : f32 to vector<8x128xf32>
    %441 = arith.subf %374, %440 : vector<8x128xf32>
    %cst_206 = arith.constant 5.000000e-04 : f32
    %442 = vector.broadcast %cst_206 : f32 to vector<8x128xf32>
    %443 = arith.mulf %442, %441 : vector<8x128xf32>
    %444 = arith.select %439, %443, %9 : vector<8x128xi1>, vector<8x128xf32>
    %445 = arith.maximumf %437, %9 : vector<8x128xf32>
    %446 = arith.addf %445, %430 : vector<8x128xf32>
    %cst_207 = arith.constant 1.000000e+00 : f32
    %447 = vector.broadcast %cst_207 : f32 to vector<8x128xf32>
    %448 = arith.subf %446, %447 : vector<8x128xf32>
    %449 = arith.subf %448, %444 : vector<8x128xf32>
    %cst_208 = arith.constant 6.560000e-02 : f32
    %450 = vector.broadcast %cst_208 : f32 to vector<8x128xf32>
    %451 = arith.mulf %450, %374 : vector<8x128xf32>
    %452 = arith.subf %449, %451 : vector<8x128xf32>
    %cst_209 = arith.constant 7.180000e-02 : f32
    %453 = vector.broadcast %cst_209 : f32 to vector<8x128xf32>
    %454 = arith.mulf %453, %377 : vector<8x128xf32>
    %455 = arith.addf %452, %454 : vector<8x128xf32>
    %cst_210 = arith.constant 0.000000e+00 : f32
    %456 = vector.broadcast %cst_210 : f32 to vector<8x128xf32>
    %457 = arith.cmpf oge, %374, %456 : vector<8x128xf32>
    %458 = arith.select %457, %455, %9 : vector<8x128xi1>, vector<8x128xf32>
    %cst_211 = arith.constant 7.370000e-02 : f32
    %459 = vector.broadcast %cst_211 : f32 to vector<8x128xf32>
    %460 = arith.mulf %459, %383 : vector<8x128xf32>
    %cst_212 = arith.constant 3.250000e+00 : f32
    %461 = vector.broadcast %cst_212 : f32 to vector<8x128xf32>
    %462 = arith.addf %461, %460 : vector<8x128xf32>
    %463 = arith.mulf %462, %377 : vector<8x128xf32>
    %cst_213 = arith.constant 2.608900e+02 : f32
    %464 = vector.broadcast %cst_213 : f32 to vector<8x128xf32>
    %465 = arith.addf %464, %377 : vector<8x128xf32>
    %466 = arith.divf %463, %465 : vector<8x128xf32>
    %cst_214 = arith.constant 0.000000e+00 : f32
    %467 = vector.broadcast %cst_214 : f32 to vector<8x128xf32>
    %468 = arith.subf %467, %466 : vector<8x128xf32>
    %cst_215 = arith.constant 6.560000e-02 : f32
    %469 = vector.broadcast %cst_215 : f32 to vector<8x128xf32>
    %470 = arith.mulf %469, %374 : vector<8x128xf32>
    %471 = arith.addf %468, %470 : vector<8x128xf32>
    %cst_216 = arith.constant 7.180000e-02 : f32
    %472 = vector.broadcast %cst_216 : f32 to vector<8x128xf32>
    %473 = arith.mulf %472, %377 : vector<8x128xf32>
    %474 = arith.subf %471, %473 : vector<8x128xf32>
    %cst_217 = arith.constant 0.000000e+00 : f32
    %475 = vector.broadcast %cst_217 : f32 to vector<8x128xf32>
    %476 = arith.cmpf oge, %377, %475 : vector<8x128xf32>
    %477 = arith.select %476, %474, %9 : vector<8x128xi1>, vector<8x128xf32>
    %cst_218 = arith.constant -5.500000e-01 : f32
    %478 = vector.broadcast %cst_218 : f32 to vector<8x128xf32>
    %479 = arith.mulf %478, %380 : vector<8x128xf32>
    %cst_219 = arith.constant 1.450000e-01 : f32
    %480 = vector.broadcast %cst_219 : f32 to vector<8x128xf32>
    %481 = arith.mulf %480, %392 : vector<8x128xf32>
    %482 = arith.addf %479, %481 : vector<8x128xf32>
    %cst_220 = arith.constant 1.800000e-03 : f32
    %483 = vector.broadcast %cst_220 : f32 to vector<8x128xf32>
    %484 = arith.mulf %483, %395 : vector<8x128xf32>
    %485 = arith.addf %482, %484 : vector<8x128xf32>
    %cst_221 = arith.constant 1.820000e-02 : f32
    %486 = vector.broadcast %cst_221 : f32 to vector<8x128xf32>
    %487 = arith.mulf %486, %398 : vector<8x128xf32>
    %488 = arith.addf %485, %487 : vector<8x128xf32>
    %cst_222 = arith.constant 20.4918041 : f32
    %489 = vector.broadcast %cst_222 : f32 to vector<8x128xf32>
    %490 = arith.mulf %380, %489 : vector<8x128xf32>
    %cst_223 = arith.constant 0.000000e+00 : f32
    %491 = vector.broadcast %cst_223 : f32 to vector<8x128xf32>
    %492 = arith.cmpf oge, %380, %491 : vector<8x128xf32>
    %493 = arith.select %492, %488, %9 : vector<8x128xi1>, vector<8x128xf32>
    %cst_224 = arith.constant -2.750000e-02 : f32
    %494 = vector.broadcast %cst_224 : f32 to vector<8x128xf32>
    %495 = arith.mulf %494, %383 : vector<8x128xf32>
    %cst_225 = arith.constant 1.002500e+02 : f32
    %496 = vector.broadcast %cst_225 : f32 to vector<8x128xf32>
    %497 = arith.subf %490, %496 : vector<8x128xf32>
    %cst_226 = arith.constant 2.750000e-02 : f32
    %498 = vector.broadcast %cst_226 : f32 to vector<8x128xf32>
    %499 = arith.mulf %498, %497 : vector<8x128xf32>
    %500 = arith.addf %495, %499 : vector<8x128xf32>
    %501 = arith.subf %386, %490 : vector<8x128xf32>
    %cst_227 = arith.constant -7.600000e-03 : f32
    %502 = vector.broadcast %cst_227 : f32 to vector<8x128xf32>
    %503 = arith.mulf %502, %501 : vector<8x128xf32>
    %504 = arith.subf %389, %386 : vector<8x128xf32>
    %cst_228 = arith.constant -7.600000e-03 : f32
    %505 = vector.broadcast %cst_228 : f32 to vector<8x128xf32>
    %506 = arith.mulf %505, %504 : vector<8x128xf32>
    %cst_229 = arith.constant -3.650000e-01 : f32
    %507 = vector.broadcast %cst_229 : f32 to vector<8x128xf32>
    %508 = arith.mulf %507, %392 : vector<8x128xf32>
    %cst_230 = arith.constant 3.930000e-01 : f32
    %509 = vector.broadcast %cst_230 : f32 to vector<8x128xf32>
    %510 = arith.mulf %509, %380 : vector<8x128xf32>
    %511 = arith.addf %508, %510 : vector<8x128xf32>
    %cst_231 = arith.constant 0.000000e+00 : f32
    %512 = vector.broadcast %cst_231 : f32 to vector<8x128xf32>
    %513 = arith.cmpf oge, %392, %512 : vector<8x128xf32>
    %514 = arith.select %513, %511, %9 : vector<8x128xi1>, vector<8x128xf32>
    %cst_232 = arith.constant 1.820000e-02 : f32
    %515 = vector.broadcast %cst_232 : f32 to vector<8x128xf32>
    %516 = arith.mulf %515, %395 : vector<8x128xf32>
    %517 = arith.subf %13, %516 : vector<8x128xf32>
    %cst_233 = arith.constant 0.000000e+00 : f32
    %518 = vector.broadcast %cst_233 : f32 to vector<8x128xf32>
    %519 = arith.cmpf oge, %395, %518 : vector<8x128xf32>
    %520 = arith.select %519, %517, %9 : vector<8x128xi1>, vector<8x128xf32>
    %cst_234 = arith.constant 1.640000e-02 : f32
    %521 = vector.broadcast %cst_234 : f32 to vector<8x128xf32>
    %522 = arith.mulf %521, %395 : vector<8x128xf32>
    %cst_235 = arith.constant 1.820000e-02 : f32
    %523 = vector.broadcast %cst_235 : f32 to vector<8x128xf32>
    %524 = arith.mulf %523, %398 : vector<8x128xf32>
    %525 = arith.subf %522, %524 : vector<8x128xf32>
    %cst_236 = arith.constant 0.000000e+00 : f32
    %526 = vector.broadcast %cst_236 : f32 to vector<8x128xf32>
    %527 = arith.cmpf oge, %398, %526 : vector<8x128xf32>
    %528 = arith.select %527, %525, %9 : vector<8x128xi1>, vector<8x128xf32>
    %cst_237 = arith.constant -5.690000e-02 : f32
    %529 = vector.broadcast %cst_237 : f32 to vector<8x128xf32>
    %530 = arith.mulf %529, %401 : vector<8x128xf32>
    %cst_238 = arith.constant 5.690000e-02 : f32
    %531 = vector.broadcast %cst_238 : f32 to vector<8x128xf32>
    %532 = arith.mulf %531, %374 : vector<8x128xf32>
    %533 = arith.addf %530, %532 : vector<8x128xf32>
    %cst_239 = arith.constant 0.000000e+00 : f32
    %534 = vector.broadcast %cst_239 : f32 to vector<8x128xf32>
    %535 = arith.cmpf oge, %401, %534 : vector<8x128xf32>
    %536 = arith.select %535, %533, %9 : vector<8x128xi1>, vector<8x128xf32>
    %cst_240 = arith.constant 6.250000e-02 : f32
    %537 = vector.broadcast %cst_240 : f32 to vector<8x128xf32>
    %538 = arith.mulf %537, %420 : vector<8x128xf32>
    %539 = arith.addf %365, %538 : vector<8x128xf32>
    %cst_241 = arith.constant 6.250000e-02 : f32
    %540 = vector.broadcast %cst_241 : f32 to vector<8x128xf32>
    %541 = arith.mulf %540, %424 : vector<8x128xf32>
    %542 = arith.addf %368, %541 : vector<8x128xf32>
    %cst_242 = arith.constant 6.250000e-02 : f32
    %543 = vector.broadcast %cst_242 : f32 to vector<8x128xf32>
    %544 = arith.mulf %543, %428 : vector<8x128xf32>
    %545 = arith.addf %371, %544 : vector<8x128xf32>
    %cst_243 = arith.constant 6.250000e-02 : f32
    %546 = vector.broadcast %cst_243 : f32 to vector<8x128xf32>
    %547 = arith.mulf %546, %458 : vector<8x128xf32>
    %548 = arith.addf %374, %547 : vector<8x128xf32>
    %cst_244 = arith.constant 6.250000e-02 : f32
    %549 = vector.broadcast %cst_244 : f32 to vector<8x128xf32>
    %550 = arith.mulf %549, %477 : vector<8x128xf32>
    %551 = arith.addf %377, %550 : vector<8x128xf32>
    %cst_245 = arith.constant 6.250000e-02 : f32
    %552 = vector.broadcast %cst_245 : f32 to vector<8x128xf32>
    %553 = arith.mulf %552, %493 : vector<8x128xf32>
    %554 = arith.addf %380, %553 : vector<8x128xf32>
    %cst_246 = arith.constant 6.250000e-02 : f32
    %555 = vector.broadcast %cst_246 : f32 to vector<8x128xf32>
    %556 = arith.mulf %555, %500 : vector<8x128xf32>
    %557 = arith.addf %383, %556 : vector<8x128xf32>
    %cst_247 = arith.constant 6.250000e-02 : f32
    %558 = vector.broadcast %cst_247 : f32 to vector<8x128xf32>
    %559 = arith.mulf %558, %503 : vector<8x128xf32>
    %560 = arith.addf %386, %559 : vector<8x128xf32>
    %cst_248 = arith.constant 6.250000e-02 : f32
    %561 = vector.broadcast %cst_248 : f32 to vector<8x128xf32>
    %562 = arith.mulf %561, %506 : vector<8x128xf32>
    %563 = arith.addf %389, %562 : vector<8x128xf32>
    %cst_249 = arith.constant 6.250000e-02 : f32
    %564 = vector.broadcast %cst_249 : f32 to vector<8x128xf32>
    %565 = arith.mulf %564, %514 : vector<8x128xf32>
    %566 = arith.addf %392, %565 : vector<8x128xf32>
    %cst_250 = arith.constant 6.250000e-02 : f32
    %567 = vector.broadcast %cst_250 : f32 to vector<8x128xf32>
    %568 = arith.mulf %567, %520 : vector<8x128xf32>
    %569 = arith.addf %395, %568 : vector<8x128xf32>
    %cst_251 = arith.constant 6.250000e-02 : f32
    %570 = vector.broadcast %cst_251 : f32 to vector<8x128xf32>
    %571 = arith.mulf %570, %528 : vector<8x128xf32>
    %572 = arith.addf %398, %571 : vector<8x128xf32>
    %cst_252 = arith.constant 6.250000e-02 : f32
    %573 = vector.broadcast %cst_252 : f32 to vector<8x128xf32>
    %574 = arith.mulf %573, %536 : vector<8x128xf32>
    %575 = arith.addf %401, %574 : vector<8x128xf32>
    %c2_i32 = arith.constant 2 : i32
    %576 = arith.addf %539, %542 : vector<8x128xf32>
    %577 = arith.subf %576, %25 : vector<8x128xf32>
    %578 = arith.mulf %21, %577 : vector<8x128xf32>
    %579 = math.tanh %578 : vector<8x128xf32>
    %580 = arith.subf %576, %27 : vector<8x128xf32>
    %581 = arith.mulf %23, %580 : vector<8x128xf32>
    %582 = math.tanh %581 : vector<8x128xf32>
    %583 = arith.subf %579, %582 : vector<8x128xf32>
    %cst_253 = arith.constant 2.000000e+00 : f32
    %584 = vector.broadcast %cst_253 : f32 to vector<8x128xf32>
    %585 = arith.addf %583, %584 : vector<8x128xf32>
    %cst_254 = arith.constant 1.900000e-02 : f32
    %586 = vector.broadcast %cst_254 : f32 to vector<8x128xf32>
    %587 = arith.mulf %586, %585 : vector<8x128xf32>
    %cst_255 = arith.constant 0.00779999978 : f32
    %588 = vector.broadcast %cst_255 : f32 to vector<8x128xf32>
    %589 = arith.addf %588, %587 : vector<8x128xf32>
    %cst_256 = arith.constant 4.580000e-02 : f32
    %590 = vector.broadcast %cst_256 : f32 to vector<8x128xf32>
    %591 = arith.select %15, %589, %590 : vector<8x128xi1>, vector<8x128xf32>
    %cst_257 = arith.constant -4.580000e-02 : f32
    %592 = vector.broadcast %cst_257 : f32 to vector<8x128xf32>
    %593 = arith.mulf %592, %539 : vector<8x128xf32>
    %594 = arith.addf %593, %11 : vector<8x128xf32>
    %cst_258 = arith.constant 4.580000e-02 : f32
    %595 = vector.broadcast %cst_258 : f32 to vector<8x128xf32>
    %596 = arith.mulf %595, %539 : vector<8x128xf32>
    %597 = arith.mulf %542, %591 : vector<8x128xf32>
    %598 = arith.subf %596, %597 : vector<8x128xf32>
    %599 = arith.mulf %591, %542 : vector<8x128xf32>
    %cst_259 = arith.constant 5.680000e-02 : f32
    %600 = vector.broadcast %cst_259 : f32 to vector<8x128xf32>
    %601 = arith.mulf %600, %545 : vector<8x128xf32>
    %602 = arith.subf %599, %601 : vector<8x128xf32>
    %cst_260 = arith.constant 7.44104793E-4 : f32
    %603 = vector.broadcast %cst_260 : f32 to vector<8x128xf32>
    %604 = arith.mulf %603, %545 : vector<8x128xf32>
    %cst_261 = arith.constant 6.490000e-03 : f32
    %605 = vector.broadcast %cst_261 : f32 to vector<8x128xf32>
    %606 = arith.mulf %605, %548 : vector<8x128xf32>
    %cst_262 = arith.constant 4.730000e+00 : f32
    %607 = vector.broadcast %cst_262 : f32 to vector<8x128xf32>
    %608 = arith.subf %607, %606 : vector<8x128xf32>
    %cst_263 = arith.constant 9.510000e-03 : f32
    %609 = vector.broadcast %cst_263 : f32 to vector<8x128xf32>
    %610 = arith.mulf %609, %563 : vector<8x128xf32>
    %611 = arith.subf %608, %610 : vector<8x128xf32>
    %cst_264 = arith.constant 3.390000e+02 : f32
    %612 = vector.broadcast %cst_264 : f32 to vector<8x128xf32>
    %613 = arith.cmpf ogt, %548, %612 : vector<8x128xf32>
    %cst_265 = arith.constant 3.390000e+02 : f32
    %614 = vector.broadcast %cst_265 : f32 to vector<8x128xf32>
    %615 = arith.subf %548, %614 : vector<8x128xf32>
    %cst_266 = arith.constant 5.000000e-04 : f32
    %616 = vector.broadcast %cst_266 : f32 to vector<8x128xf32>
    %617 = arith.mulf %616, %615 : vector<8x128xf32>
    %618 = arith.select %613, %617, %9 : vector<8x128xi1>, vector<8x128xf32>
    %619 = arith.maximumf %611, %9 : vector<8x128xf32>
    %620 = arith.addf %619, %604 : vector<8x128xf32>
    %cst_267 = arith.constant 1.000000e+00 : f32
    %621 = vector.broadcast %cst_267 : f32 to vector<8x128xf32>
    %622 = arith.subf %620, %621 : vector<8x128xf32>
    %623 = arith.subf %622, %618 : vector<8x128xf32>
    %cst_268 = arith.constant 6.560000e-02 : f32
    %624 = vector.broadcast %cst_268 : f32 to vector<8x128xf32>
    %625 = arith.mulf %624, %548 : vector<8x128xf32>
    %626 = arith.subf %623, %625 : vector<8x128xf32>
    %cst_269 = arith.constant 7.180000e-02 : f32
    %627 = vector.broadcast %cst_269 : f32 to vector<8x128xf32>
    %628 = arith.mulf %627, %551 : vector<8x128xf32>
    %629 = arith.addf %626, %628 : vector<8x128xf32>
    %cst_270 = arith.constant 0.000000e+00 : f32
    %630 = vector.broadcast %cst_270 : f32 to vector<8x128xf32>
    %631 = arith.cmpf oge, %548, %630 : vector<8x128xf32>
    %632 = arith.select %631, %629, %9 : vector<8x128xi1>, vector<8x128xf32>
    %cst_271 = arith.constant 7.370000e-02 : f32
    %633 = vector.broadcast %cst_271 : f32 to vector<8x128xf32>
    %634 = arith.mulf %633, %557 : vector<8x128xf32>
    %cst_272 = arith.constant 3.250000e+00 : f32
    %635 = vector.broadcast %cst_272 : f32 to vector<8x128xf32>
    %636 = arith.addf %635, %634 : vector<8x128xf32>
    %637 = arith.mulf %636, %551 : vector<8x128xf32>
    %cst_273 = arith.constant 2.608900e+02 : f32
    %638 = vector.broadcast %cst_273 : f32 to vector<8x128xf32>
    %639 = arith.addf %638, %551 : vector<8x128xf32>
    %640 = arith.divf %637, %639 : vector<8x128xf32>
    %cst_274 = arith.constant 0.000000e+00 : f32
    %641 = vector.broadcast %cst_274 : f32 to vector<8x128xf32>
    %642 = arith.subf %641, %640 : vector<8x128xf32>
    %cst_275 = arith.constant 6.560000e-02 : f32
    %643 = vector.broadcast %cst_275 : f32 to vector<8x128xf32>
    %644 = arith.mulf %643, %548 : vector<8x128xf32>
    %645 = arith.addf %642, %644 : vector<8x128xf32>
    %cst_276 = arith.constant 7.180000e-02 : f32
    %646 = vector.broadcast %cst_276 : f32 to vector<8x128xf32>
    %647 = arith.mulf %646, %551 : vector<8x128xf32>
    %648 = arith.subf %645, %647 : vector<8x128xf32>
    %cst_277 = arith.constant 0.000000e+00 : f32
    %649 = vector.broadcast %cst_277 : f32 to vector<8x128xf32>
    %650 = arith.cmpf oge, %551, %649 : vector<8x128xf32>
    %651 = arith.select %650, %648, %9 : vector<8x128xi1>, vector<8x128xf32>
    %cst_278 = arith.constant -5.500000e-01 : f32
    %652 = vector.broadcast %cst_278 : f32 to vector<8x128xf32>
    %653 = arith.mulf %652, %554 : vector<8x128xf32>
    %cst_279 = arith.constant 1.450000e-01 : f32
    %654 = vector.broadcast %cst_279 : f32 to vector<8x128xf32>
    %655 = arith.mulf %654, %566 : vector<8x128xf32>
    %656 = arith.addf %653, %655 : vector<8x128xf32>
    %cst_280 = arith.constant 1.800000e-03 : f32
    %657 = vector.broadcast %cst_280 : f32 to vector<8x128xf32>
    %658 = arith.mulf %657, %569 : vector<8x128xf32>
    %659 = arith.addf %656, %658 : vector<8x128xf32>
    %cst_281 = arith.constant 1.820000e-02 : f32
    %660 = vector.broadcast %cst_281 : f32 to vector<8x128xf32>
    %661 = arith.mulf %660, %572 : vector<8x128xf32>
    %662 = arith.addf %659, %661 : vector<8x128xf32>
    %cst_282 = arith.constant 20.4918041 : f32
    %663 = vector.broadcast %cst_282 : f32 to vector<8x128xf32>
    %664 = arith.mulf %554, %663 : vector<8x128xf32>
    %cst_283 = arith.constant 0.000000e+00 : f32
    %665 = vector.broadcast %cst_283 : f32 to vector<8x128xf32>
    %666 = arith.cmpf oge, %554, %665 : vector<8x128xf32>
    %667 = arith.select %666, %662, %9 : vector<8x128xi1>, vector<8x128xf32>
    %cst_284 = arith.constant -2.750000e-02 : f32
    %668 = vector.broadcast %cst_284 : f32 to vector<8x128xf32>
    %669 = arith.mulf %668, %557 : vector<8x128xf32>
    %cst_285 = arith.constant 1.002500e+02 : f32
    %670 = vector.broadcast %cst_285 : f32 to vector<8x128xf32>
    %671 = arith.subf %664, %670 : vector<8x128xf32>
    %cst_286 = arith.constant 2.750000e-02 : f32
    %672 = vector.broadcast %cst_286 : f32 to vector<8x128xf32>
    %673 = arith.mulf %672, %671 : vector<8x128xf32>
    %674 = arith.addf %669, %673 : vector<8x128xf32>
    %675 = arith.subf %560, %664 : vector<8x128xf32>
    %cst_287 = arith.constant -7.600000e-03 : f32
    %676 = vector.broadcast %cst_287 : f32 to vector<8x128xf32>
    %677 = arith.mulf %676, %675 : vector<8x128xf32>
    %678 = arith.subf %563, %560 : vector<8x128xf32>
    %cst_288 = arith.constant -7.600000e-03 : f32
    %679 = vector.broadcast %cst_288 : f32 to vector<8x128xf32>
    %680 = arith.mulf %679, %678 : vector<8x128xf32>
    %cst_289 = arith.constant -3.650000e-01 : f32
    %681 = vector.broadcast %cst_289 : f32 to vector<8x128xf32>
    %682 = arith.mulf %681, %566 : vector<8x128xf32>
    %cst_290 = arith.constant 3.930000e-01 : f32
    %683 = vector.broadcast %cst_290 : f32 to vector<8x128xf32>
    %684 = arith.mulf %683, %554 : vector<8x128xf32>
    %685 = arith.addf %682, %684 : vector<8x128xf32>
    %cst_291 = arith.constant 0.000000e+00 : f32
    %686 = vector.broadcast %cst_291 : f32 to vector<8x128xf32>
    %687 = arith.cmpf oge, %566, %686 : vector<8x128xf32>
    %688 = arith.select %687, %685, %9 : vector<8x128xi1>, vector<8x128xf32>
    %cst_292 = arith.constant 1.820000e-02 : f32
    %689 = vector.broadcast %cst_292 : f32 to vector<8x128xf32>
    %690 = arith.mulf %689, %569 : vector<8x128xf32>
    %691 = arith.subf %13, %690 : vector<8x128xf32>
    %cst_293 = arith.constant 0.000000e+00 : f32
    %692 = vector.broadcast %cst_293 : f32 to vector<8x128xf32>
    %693 = arith.cmpf oge, %569, %692 : vector<8x128xf32>
    %694 = arith.select %693, %691, %9 : vector<8x128xi1>, vector<8x128xf32>
    %cst_294 = arith.constant 1.640000e-02 : f32
    %695 = vector.broadcast %cst_294 : f32 to vector<8x128xf32>
    %696 = arith.mulf %695, %569 : vector<8x128xf32>
    %cst_295 = arith.constant 1.820000e-02 : f32
    %697 = vector.broadcast %cst_295 : f32 to vector<8x128xf32>
    %698 = arith.mulf %697, %572 : vector<8x128xf32>
    %699 = arith.subf %696, %698 : vector<8x128xf32>
    %cst_296 = arith.constant 0.000000e+00 : f32
    %700 = vector.broadcast %cst_296 : f32 to vector<8x128xf32>
    %701 = arith.cmpf oge, %572, %700 : vector<8x128xf32>
    %702 = arith.select %701, %699, %9 : vector<8x128xi1>, vector<8x128xf32>
    %cst_297 = arith.constant -5.690000e-02 : f32
    %703 = vector.broadcast %cst_297 : f32 to vector<8x128xf32>
    %704 = arith.mulf %703, %575 : vector<8x128xf32>
    %cst_298 = arith.constant 5.690000e-02 : f32
    %705 = vector.broadcast %cst_298 : f32 to vector<8x128xf32>
    %706 = arith.mulf %705, %548 : vector<8x128xf32>
    %707 = arith.addf %704, %706 : vector<8x128xf32>
    %cst_299 = arith.constant 0.000000e+00 : f32
    %708 = vector.broadcast %cst_299 : f32 to vector<8x128xf32>
    %709 = arith.cmpf oge, %575, %708 : vector<8x128xf32>
    %710 = arith.select %709, %707, %9 : vector<8x128xi1>, vector<8x128xf32>
    %cst_300 = arith.constant 6.250000e-02 : f32
    %711 = vector.broadcast %cst_300 : f32 to vector<8x128xf32>
    %712 = arith.mulf %711, %594 : vector<8x128xf32>
    %713 = arith.addf %539, %712 : vector<8x128xf32>
    %cst_301 = arith.constant 6.250000e-02 : f32
    %714 = vector.broadcast %cst_301 : f32 to vector<8x128xf32>
    %715 = arith.mulf %714, %598 : vector<8x128xf32>
    %716 = arith.addf %542, %715 : vector<8x128xf32>
    %cst_302 = arith.constant 6.250000e-02 : f32
    %717 = vector.broadcast %cst_302 : f32 to vector<8x128xf32>
    %718 = arith.mulf %717, %602 : vector<8x128xf32>
    %719 = arith.addf %545, %718 : vector<8x128xf32>
    %cst_303 = arith.constant 6.250000e-02 : f32
    %720 = vector.broadcast %cst_303 : f32 to vector<8x128xf32>
    %721 = arith.mulf %720, %632 : vector<8x128xf32>
    %722 = arith.addf %548, %721 : vector<8x128xf32>
    %cst_304 = arith.constant 6.250000e-02 : f32
    %723 = vector.broadcast %cst_304 : f32 to vector<8x128xf32>
    %724 = arith.mulf %723, %651 : vector<8x128xf32>
    %725 = arith.addf %551, %724 : vector<8x128xf32>
    %cst_305 = arith.constant 6.250000e-02 : f32
    %726 = vector.broadcast %cst_305 : f32 to vector<8x128xf32>
    %727 = arith.mulf %726, %667 : vector<8x128xf32>
    %728 = arith.addf %554, %727 : vector<8x128xf32>
    %cst_306 = arith.constant 6.250000e-02 : f32
    %729 = vector.broadcast %cst_306 : f32 to vector<8x128xf32>
    %730 = arith.mulf %729, %674 : vector<8x128xf32>
    %731 = arith.addf %557, %730 : vector<8x128xf32>
    %cst_307 = arith.constant 6.250000e-02 : f32
    %732 = vector.broadcast %cst_307 : f32 to vector<8x128xf32>
    %733 = arith.mulf %732, %677 : vector<8x128xf32>
    %734 = arith.addf %560, %733 : vector<8x128xf32>
    %cst_308 = arith.constant 6.250000e-02 : f32
    %735 = vector.broadcast %cst_308 : f32 to vector<8x128xf32>
    %736 = arith.mulf %735, %680 : vector<8x128xf32>
    %737 = arith.addf %563, %736 : vector<8x128xf32>
    %cst_309 = arith.constant 6.250000e-02 : f32
    %738 = vector.broadcast %cst_309 : f32 to vector<8x128xf32>
    %739 = arith.mulf %738, %688 : vector<8x128xf32>
    %740 = arith.addf %566, %739 : vector<8x128xf32>
    %cst_310 = arith.constant 6.250000e-02 : f32
    %741 = vector.broadcast %cst_310 : f32 to vector<8x128xf32>
    %742 = arith.mulf %741, %694 : vector<8x128xf32>
    %743 = arith.addf %569, %742 : vector<8x128xf32>
    %cst_311 = arith.constant 6.250000e-02 : f32
    %744 = vector.broadcast %cst_311 : f32 to vector<8x128xf32>
    %745 = arith.mulf %744, %702 : vector<8x128xf32>
    %746 = arith.addf %572, %745 : vector<8x128xf32>
    %cst_312 = arith.constant 6.250000e-02 : f32
    %747 = vector.broadcast %cst_312 : f32 to vector<8x128xf32>
    %748 = arith.mulf %747, %710 : vector<8x128xf32>
    %749 = arith.addf %575, %748 : vector<8x128xf32>
    %c3_i32 = arith.constant 3 : i32
    %750 = arith.addf %713, %716 : vector<8x128xf32>
    %751 = arith.subf %750, %25 : vector<8x128xf32>
    %752 = arith.mulf %21, %751 : vector<8x128xf32>
    %753 = math.tanh %752 : vector<8x128xf32>
    %754 = arith.subf %750, %27 : vector<8x128xf32>
    %755 = arith.mulf %23, %754 : vector<8x128xf32>
    %756 = math.tanh %755 : vector<8x128xf32>
    %757 = arith.subf %753, %756 : vector<8x128xf32>
    %cst_313 = arith.constant 2.000000e+00 : f32
    %758 = vector.broadcast %cst_313 : f32 to vector<8x128xf32>
    %759 = arith.addf %757, %758 : vector<8x128xf32>
    %cst_314 = arith.constant 1.900000e-02 : f32
    %760 = vector.broadcast %cst_314 : f32 to vector<8x128xf32>
    %761 = arith.mulf %760, %759 : vector<8x128xf32>
    %cst_315 = arith.constant 0.00779999978 : f32
    %762 = vector.broadcast %cst_315 : f32 to vector<8x128xf32>
    %763 = arith.addf %762, %761 : vector<8x128xf32>
    %cst_316 = arith.constant 4.580000e-02 : f32
    %764 = vector.broadcast %cst_316 : f32 to vector<8x128xf32>
    %765 = arith.select %15, %763, %764 : vector<8x128xi1>, vector<8x128xf32>
    %cst_317 = arith.constant -4.580000e-02 : f32
    %766 = vector.broadcast %cst_317 : f32 to vector<8x128xf32>
    %767 = arith.mulf %766, %713 : vector<8x128xf32>
    %768 = arith.addf %767, %11 : vector<8x128xf32>
    %cst_318 = arith.constant 4.580000e-02 : f32
    %769 = vector.broadcast %cst_318 : f32 to vector<8x128xf32>
    %770 = arith.mulf %769, %713 : vector<8x128xf32>
    %771 = arith.mulf %716, %765 : vector<8x128xf32>
    %772 = arith.subf %770, %771 : vector<8x128xf32>
    %773 = arith.mulf %765, %716 : vector<8x128xf32>
    %cst_319 = arith.constant 5.680000e-02 : f32
    %774 = vector.broadcast %cst_319 : f32 to vector<8x128xf32>
    %775 = arith.mulf %774, %719 : vector<8x128xf32>
    %776 = arith.subf %773, %775 : vector<8x128xf32>
    %cst_320 = arith.constant 7.44104793E-4 : f32
    %777 = vector.broadcast %cst_320 : f32 to vector<8x128xf32>
    %778 = arith.mulf %777, %719 : vector<8x128xf32>
    %cst_321 = arith.constant 6.490000e-03 : f32
    %779 = vector.broadcast %cst_321 : f32 to vector<8x128xf32>
    %780 = arith.mulf %779, %722 : vector<8x128xf32>
    %cst_322 = arith.constant 4.730000e+00 : f32
    %781 = vector.broadcast %cst_322 : f32 to vector<8x128xf32>
    %782 = arith.subf %781, %780 : vector<8x128xf32>
    %cst_323 = arith.constant 9.510000e-03 : f32
    %783 = vector.broadcast %cst_323 : f32 to vector<8x128xf32>
    %784 = arith.mulf %783, %737 : vector<8x128xf32>
    %785 = arith.subf %782, %784 : vector<8x128xf32>
    %cst_324 = arith.constant 3.390000e+02 : f32
    %786 = vector.broadcast %cst_324 : f32 to vector<8x128xf32>
    %787 = arith.cmpf ogt, %722, %786 : vector<8x128xf32>
    %cst_325 = arith.constant 3.390000e+02 : f32
    %788 = vector.broadcast %cst_325 : f32 to vector<8x128xf32>
    %789 = arith.subf %722, %788 : vector<8x128xf32>
    %cst_326 = arith.constant 5.000000e-04 : f32
    %790 = vector.broadcast %cst_326 : f32 to vector<8x128xf32>
    %791 = arith.mulf %790, %789 : vector<8x128xf32>
    %792 = arith.select %787, %791, %9 : vector<8x128xi1>, vector<8x128xf32>
    %793 = arith.maximumf %785, %9 : vector<8x128xf32>
    %794 = arith.addf %793, %778 : vector<8x128xf32>
    %cst_327 = arith.constant 1.000000e+00 : f32
    %795 = vector.broadcast %cst_327 : f32 to vector<8x128xf32>
    %796 = arith.subf %794, %795 : vector<8x128xf32>
    %797 = arith.subf %796, %792 : vector<8x128xf32>
    %cst_328 = arith.constant 6.560000e-02 : f32
    %798 = vector.broadcast %cst_328 : f32 to vector<8x128xf32>
    %799 = arith.mulf %798, %722 : vector<8x128xf32>
    %800 = arith.subf %797, %799 : vector<8x128xf32>
    %cst_329 = arith.constant 7.180000e-02 : f32
    %801 = vector.broadcast %cst_329 : f32 to vector<8x128xf32>
    %802 = arith.mulf %801, %725 : vector<8x128xf32>
    %803 = arith.addf %800, %802 : vector<8x128xf32>
    %cst_330 = arith.constant 0.000000e+00 : f32
    %804 = vector.broadcast %cst_330 : f32 to vector<8x128xf32>
    %805 = arith.cmpf oge, %722, %804 : vector<8x128xf32>
    %806 = arith.select %805, %803, %9 : vector<8x128xi1>, vector<8x128xf32>
    %cst_331 = arith.constant 7.370000e-02 : f32
    %807 = vector.broadcast %cst_331 : f32 to vector<8x128xf32>
    %808 = arith.mulf %807, %731 : vector<8x128xf32>
    %cst_332 = arith.constant 3.250000e+00 : f32
    %809 = vector.broadcast %cst_332 : f32 to vector<8x128xf32>
    %810 = arith.addf %809, %808 : vector<8x128xf32>
    %811 = arith.mulf %810, %725 : vector<8x128xf32>
    %cst_333 = arith.constant 2.608900e+02 : f32
    %812 = vector.broadcast %cst_333 : f32 to vector<8x128xf32>
    %813 = arith.addf %812, %725 : vector<8x128xf32>
    %814 = arith.divf %811, %813 : vector<8x128xf32>
    %cst_334 = arith.constant 0.000000e+00 : f32
    %815 = vector.broadcast %cst_334 : f32 to vector<8x128xf32>
    %816 = arith.subf %815, %814 : vector<8x128xf32>
    %cst_335 = arith.constant 6.560000e-02 : f32
    %817 = vector.broadcast %cst_335 : f32 to vector<8x128xf32>
    %818 = arith.mulf %817, %722 : vector<8x128xf32>
    %819 = arith.addf %816, %818 : vector<8x128xf32>
    %cst_336 = arith.constant 7.180000e-02 : f32
    %820 = vector.broadcast %cst_336 : f32 to vector<8x128xf32>
    %821 = arith.mulf %820, %725 : vector<8x128xf32>
    %822 = arith.subf %819, %821 : vector<8x128xf32>
    %cst_337 = arith.constant 0.000000e+00 : f32
    %823 = vector.broadcast %cst_337 : f32 to vector<8x128xf32>
    %824 = arith.cmpf oge, %725, %823 : vector<8x128xf32>
    %825 = arith.select %824, %822, %9 : vector<8x128xi1>, vector<8x128xf32>
    %cst_338 = arith.constant -5.500000e-01 : f32
    %826 = vector.broadcast %cst_338 : f32 to vector<8x128xf32>
    %827 = arith.mulf %826, %728 : vector<8x128xf32>
    %cst_339 = arith.constant 1.450000e-01 : f32
    %828 = vector.broadcast %cst_339 : f32 to vector<8x128xf32>
    %829 = arith.mulf %828, %740 : vector<8x128xf32>
    %830 = arith.addf %827, %829 : vector<8x128xf32>
    %cst_340 = arith.constant 1.800000e-03 : f32
    %831 = vector.broadcast %cst_340 : f32 to vector<8x128xf32>
    %832 = arith.mulf %831, %743 : vector<8x128xf32>
    %833 = arith.addf %830, %832 : vector<8x128xf32>
    %cst_341 = arith.constant 1.820000e-02 : f32
    %834 = vector.broadcast %cst_341 : f32 to vector<8x128xf32>
    %835 = arith.mulf %834, %746 : vector<8x128xf32>
    %836 = arith.addf %833, %835 : vector<8x128xf32>
    %cst_342 = arith.constant 20.4918041 : f32
    %837 = vector.broadcast %cst_342 : f32 to vector<8x128xf32>
    %838 = arith.mulf %728, %837 : vector<8x128xf32>
    %cst_343 = arith.constant 0.000000e+00 : f32
    %839 = vector.broadcast %cst_343 : f32 to vector<8x128xf32>
    %840 = arith.cmpf oge, %728, %839 : vector<8x128xf32>
    %841 = arith.select %840, %836, %9 : vector<8x128xi1>, vector<8x128xf32>
    %cst_344 = arith.constant -2.750000e-02 : f32
    %842 = vector.broadcast %cst_344 : f32 to vector<8x128xf32>
    %843 = arith.mulf %842, %731 : vector<8x128xf32>
    %cst_345 = arith.constant 1.002500e+02 : f32
    %844 = vector.broadcast %cst_345 : f32 to vector<8x128xf32>
    %845 = arith.subf %838, %844 : vector<8x128xf32>
    %cst_346 = arith.constant 2.750000e-02 : f32
    %846 = vector.broadcast %cst_346 : f32 to vector<8x128xf32>
    %847 = arith.mulf %846, %845 : vector<8x128xf32>
    %848 = arith.addf %843, %847 : vector<8x128xf32>
    %849 = arith.subf %734, %838 : vector<8x128xf32>
    %cst_347 = arith.constant -7.600000e-03 : f32
    %850 = vector.broadcast %cst_347 : f32 to vector<8x128xf32>
    %851 = arith.mulf %850, %849 : vector<8x128xf32>
    %852 = arith.subf %737, %734 : vector<8x128xf32>
    %cst_348 = arith.constant -7.600000e-03 : f32
    %853 = vector.broadcast %cst_348 : f32 to vector<8x128xf32>
    %854 = arith.mulf %853, %852 : vector<8x128xf32>
    %cst_349 = arith.constant -3.650000e-01 : f32
    %855 = vector.broadcast %cst_349 : f32 to vector<8x128xf32>
    %856 = arith.mulf %855, %740 : vector<8x128xf32>
    %cst_350 = arith.constant 3.930000e-01 : f32
    %857 = vector.broadcast %cst_350 : f32 to vector<8x128xf32>
    %858 = arith.mulf %857, %728 : vector<8x128xf32>
    %859 = arith.addf %856, %858 : vector<8x128xf32>
    %cst_351 = arith.constant 0.000000e+00 : f32
    %860 = vector.broadcast %cst_351 : f32 to vector<8x128xf32>
    %861 = arith.cmpf oge, %740, %860 : vector<8x128xf32>
    %862 = arith.select %861, %859, %9 : vector<8x128xi1>, vector<8x128xf32>
    %cst_352 = arith.constant 1.820000e-02 : f32
    %863 = vector.broadcast %cst_352 : f32 to vector<8x128xf32>
    %864 = arith.mulf %863, %743 : vector<8x128xf32>
    %865 = arith.subf %13, %864 : vector<8x128xf32>
    %cst_353 = arith.constant 0.000000e+00 : f32
    %866 = vector.broadcast %cst_353 : f32 to vector<8x128xf32>
    %867 = arith.cmpf oge, %743, %866 : vector<8x128xf32>
    %868 = arith.select %867, %865, %9 : vector<8x128xi1>, vector<8x128xf32>
    %cst_354 = arith.constant 1.640000e-02 : f32
    %869 = vector.broadcast %cst_354 : f32 to vector<8x128xf32>
    %870 = arith.mulf %869, %743 : vector<8x128xf32>
    %cst_355 = arith.constant 1.820000e-02 : f32
    %871 = vector.broadcast %cst_355 : f32 to vector<8x128xf32>
    %872 = arith.mulf %871, %746 : vector<8x128xf32>
    %873 = arith.subf %870, %872 : vector<8x128xf32>
    %cst_356 = arith.constant 0.000000e+00 : f32
    %874 = vector.broadcast %cst_356 : f32 to vector<8x128xf32>
    %875 = arith.cmpf oge, %746, %874 : vector<8x128xf32>
    %876 = arith.select %875, %873, %9 : vector<8x128xi1>, vector<8x128xf32>
    %cst_357 = arith.constant -5.690000e-02 : f32
    %877 = vector.broadcast %cst_357 : f32 to vector<8x128xf32>
    %878 = arith.mulf %877, %749 : vector<8x128xf32>
    %cst_358 = arith.constant 5.690000e-02 : f32
    %879 = vector.broadcast %cst_358 : f32 to vector<8x128xf32>
    %880 = arith.mulf %879, %722 : vector<8x128xf32>
    %881 = arith.addf %878, %880 : vector<8x128xf32>
    %cst_359 = arith.constant 0.000000e+00 : f32
    %882 = vector.broadcast %cst_359 : f32 to vector<8x128xf32>
    %883 = arith.cmpf oge, %749, %882 : vector<8x128xf32>
    %884 = arith.select %883, %881, %9 : vector<8x128xi1>, vector<8x128xf32>
    %cst_360 = arith.constant 6.250000e-02 : f32
    %885 = vector.broadcast %cst_360 : f32 to vector<8x128xf32>
    %886 = arith.mulf %885, %768 : vector<8x128xf32>
    %887 = arith.addf %713, %886 : vector<8x128xf32>
    %cst_361 = arith.constant 6.250000e-02 : f32
    %888 = vector.broadcast %cst_361 : f32 to vector<8x128xf32>
    %889 = arith.mulf %888, %772 : vector<8x128xf32>
    %890 = arith.addf %716, %889 : vector<8x128xf32>
    %cst_362 = arith.constant 6.250000e-02 : f32
    %891 = vector.broadcast %cst_362 : f32 to vector<8x128xf32>
    %892 = arith.mulf %891, %776 : vector<8x128xf32>
    %893 = arith.addf %719, %892 : vector<8x128xf32>
    %cst_363 = arith.constant 6.250000e-02 : f32
    %894 = vector.broadcast %cst_363 : f32 to vector<8x128xf32>
    %895 = arith.mulf %894, %806 : vector<8x128xf32>
    %896 = arith.addf %722, %895 : vector<8x128xf32>
    %cst_364 = arith.constant 6.250000e-02 : f32
    %897 = vector.broadcast %cst_364 : f32 to vector<8x128xf32>
    %898 = arith.mulf %897, %825 : vector<8x128xf32>
    %899 = arith.addf %725, %898 : vector<8x128xf32>
    %cst_365 = arith.constant 6.250000e-02 : f32
    %900 = vector.broadcast %cst_365 : f32 to vector<8x128xf32>
    %901 = arith.mulf %900, %841 : vector<8x128xf32>
    %902 = arith.addf %728, %901 : vector<8x128xf32>
    %cst_366 = arith.constant 6.250000e-02 : f32
    %903 = vector.broadcast %cst_366 : f32 to vector<8x128xf32>
    %904 = arith.mulf %903, %848 : vector<8x128xf32>
    %905 = arith.addf %731, %904 : vector<8x128xf32>
    %cst_367 = arith.constant 6.250000e-02 : f32
    %906 = vector.broadcast %cst_367 : f32 to vector<8x128xf32>
    %907 = arith.mulf %906, %851 : vector<8x128xf32>
    %908 = arith.addf %734, %907 : vector<8x128xf32>
    %cst_368 = arith.constant 6.250000e-02 : f32
    %909 = vector.broadcast %cst_368 : f32 to vector<8x128xf32>
    %910 = arith.mulf %909, %854 : vector<8x128xf32>
    %911 = arith.addf %737, %910 : vector<8x128xf32>
    %cst_369 = arith.constant 6.250000e-02 : f32
    %912 = vector.broadcast %cst_369 : f32 to vector<8x128xf32>
    %913 = arith.mulf %912, %862 : vector<8x128xf32>
    %914 = arith.addf %740, %913 : vector<8x128xf32>
    %cst_370 = arith.constant 6.250000e-02 : f32
    %915 = vector.broadcast %cst_370 : f32 to vector<8x128xf32>
    %916 = arith.mulf %915, %868 : vector<8x128xf32>
    %917 = arith.addf %743, %916 : vector<8x128xf32>
    %cst_371 = arith.constant 6.250000e-02 : f32
    %918 = vector.broadcast %cst_371 : f32 to vector<8x128xf32>
    %919 = arith.mulf %918, %876 : vector<8x128xf32>
    %920 = arith.addf %746, %919 : vector<8x128xf32>
    %cst_372 = arith.constant 6.250000e-02 : f32
    %921 = vector.broadcast %cst_372 : f32 to vector<8x128xf32>
    %922 = arith.mulf %921, %884 : vector<8x128xf32>
    %923 = arith.addf %749, %922 : vector<8x128xf32>
    %c4_i32 = arith.constant 4 : i32
    %924 = arith.addf %887, %890 : vector<8x128xf32>
    %925 = arith.subf %924, %25 : vector<8x128xf32>
    %926 = arith.mulf %21, %925 : vector<8x128xf32>
    %927 = math.tanh %926 : vector<8x128xf32>
    %928 = arith.subf %924, %27 : vector<8x128xf32>
    %929 = arith.mulf %23, %928 : vector<8x128xf32>
    %930 = math.tanh %929 : vector<8x128xf32>
    %931 = arith.subf %927, %930 : vector<8x128xf32>
    %cst_373 = arith.constant 2.000000e+00 : f32
    %932 = vector.broadcast %cst_373 : f32 to vector<8x128xf32>
    %933 = arith.addf %931, %932 : vector<8x128xf32>
    %cst_374 = arith.constant 1.900000e-02 : f32
    %934 = vector.broadcast %cst_374 : f32 to vector<8x128xf32>
    %935 = arith.mulf %934, %933 : vector<8x128xf32>
    %cst_375 = arith.constant 0.00779999978 : f32
    %936 = vector.broadcast %cst_375 : f32 to vector<8x128xf32>
    %937 = arith.addf %936, %935 : vector<8x128xf32>
    %cst_376 = arith.constant 4.580000e-02 : f32
    %938 = vector.broadcast %cst_376 : f32 to vector<8x128xf32>
    %939 = arith.select %15, %937, %938 : vector<8x128xi1>, vector<8x128xf32>
    %cst_377 = arith.constant -4.580000e-02 : f32
    %940 = vector.broadcast %cst_377 : f32 to vector<8x128xf32>
    %941 = arith.mulf %940, %887 : vector<8x128xf32>
    %942 = arith.addf %941, %11 : vector<8x128xf32>
    %cst_378 = arith.constant 4.580000e-02 : f32
    %943 = vector.broadcast %cst_378 : f32 to vector<8x128xf32>
    %944 = arith.mulf %943, %887 : vector<8x128xf32>
    %945 = arith.mulf %890, %939 : vector<8x128xf32>
    %946 = arith.subf %944, %945 : vector<8x128xf32>
    %947 = arith.mulf %939, %890 : vector<8x128xf32>
    %cst_379 = arith.constant 5.680000e-02 : f32
    %948 = vector.broadcast %cst_379 : f32 to vector<8x128xf32>
    %949 = arith.mulf %948, %893 : vector<8x128xf32>
    %950 = arith.subf %947, %949 : vector<8x128xf32>
    %cst_380 = arith.constant 7.44104793E-4 : f32
    %951 = vector.broadcast %cst_380 : f32 to vector<8x128xf32>
    %952 = arith.mulf %951, %893 : vector<8x128xf32>
    %cst_381 = arith.constant 6.490000e-03 : f32
    %953 = vector.broadcast %cst_381 : f32 to vector<8x128xf32>
    %954 = arith.mulf %953, %896 : vector<8x128xf32>
    %cst_382 = arith.constant 4.730000e+00 : f32
    %955 = vector.broadcast %cst_382 : f32 to vector<8x128xf32>
    %956 = arith.subf %955, %954 : vector<8x128xf32>
    %cst_383 = arith.constant 9.510000e-03 : f32
    %957 = vector.broadcast %cst_383 : f32 to vector<8x128xf32>
    %958 = arith.mulf %957, %911 : vector<8x128xf32>
    %959 = arith.subf %956, %958 : vector<8x128xf32>
    %cst_384 = arith.constant 3.390000e+02 : f32
    %960 = vector.broadcast %cst_384 : f32 to vector<8x128xf32>
    %961 = arith.cmpf ogt, %896, %960 : vector<8x128xf32>
    %cst_385 = arith.constant 3.390000e+02 : f32
    %962 = vector.broadcast %cst_385 : f32 to vector<8x128xf32>
    %963 = arith.subf %896, %962 : vector<8x128xf32>
    %cst_386 = arith.constant 5.000000e-04 : f32
    %964 = vector.broadcast %cst_386 : f32 to vector<8x128xf32>
    %965 = arith.mulf %964, %963 : vector<8x128xf32>
    %966 = arith.select %961, %965, %9 : vector<8x128xi1>, vector<8x128xf32>
    %967 = arith.maximumf %959, %9 : vector<8x128xf32>
    %968 = arith.addf %967, %952 : vector<8x128xf32>
    %cst_387 = arith.constant 1.000000e+00 : f32
    %969 = vector.broadcast %cst_387 : f32 to vector<8x128xf32>
    %970 = arith.subf %968, %969 : vector<8x128xf32>
    %971 = arith.subf %970, %966 : vector<8x128xf32>
    %cst_388 = arith.constant 6.560000e-02 : f32
    %972 = vector.broadcast %cst_388 : f32 to vector<8x128xf32>
    %973 = arith.mulf %972, %896 : vector<8x128xf32>
    %974 = arith.subf %971, %973 : vector<8x128xf32>
    %cst_389 = arith.constant 7.180000e-02 : f32
    %975 = vector.broadcast %cst_389 : f32 to vector<8x128xf32>
    %976 = arith.mulf %975, %899 : vector<8x128xf32>
    %977 = arith.addf %974, %976 : vector<8x128xf32>
    %cst_390 = arith.constant 0.000000e+00 : f32
    %978 = vector.broadcast %cst_390 : f32 to vector<8x128xf32>
    %979 = arith.cmpf oge, %896, %978 : vector<8x128xf32>
    %980 = arith.select %979, %977, %9 : vector<8x128xi1>, vector<8x128xf32>
    %cst_391 = arith.constant 7.370000e-02 : f32
    %981 = vector.broadcast %cst_391 : f32 to vector<8x128xf32>
    %982 = arith.mulf %981, %905 : vector<8x128xf32>
    %cst_392 = arith.constant 3.250000e+00 : f32
    %983 = vector.broadcast %cst_392 : f32 to vector<8x128xf32>
    %984 = arith.addf %983, %982 : vector<8x128xf32>
    %985 = arith.mulf %984, %899 : vector<8x128xf32>
    %cst_393 = arith.constant 2.608900e+02 : f32
    %986 = vector.broadcast %cst_393 : f32 to vector<8x128xf32>
    %987 = arith.addf %986, %899 : vector<8x128xf32>
    %988 = arith.divf %985, %987 : vector<8x128xf32>
    %cst_394 = arith.constant 0.000000e+00 : f32
    %989 = vector.broadcast %cst_394 : f32 to vector<8x128xf32>
    %990 = arith.subf %989, %988 : vector<8x128xf32>
    %cst_395 = arith.constant 6.560000e-02 : f32
    %991 = vector.broadcast %cst_395 : f32 to vector<8x128xf32>
    %992 = arith.mulf %991, %896 : vector<8x128xf32>
    %993 = arith.addf %990, %992 : vector<8x128xf32>
    %cst_396 = arith.constant 7.180000e-02 : f32
    %994 = vector.broadcast %cst_396 : f32 to vector<8x128xf32>
    %995 = arith.mulf %994, %899 : vector<8x128xf32>
    %996 = arith.subf %993, %995 : vector<8x128xf32>
    %cst_397 = arith.constant 0.000000e+00 : f32
    %997 = vector.broadcast %cst_397 : f32 to vector<8x128xf32>
    %998 = arith.cmpf oge, %899, %997 : vector<8x128xf32>
    %999 = arith.select %998, %996, %9 : vector<8x128xi1>, vector<8x128xf32>
    %cst_398 = arith.constant -5.500000e-01 : f32
    %1000 = vector.broadcast %cst_398 : f32 to vector<8x128xf32>
    %1001 = arith.mulf %1000, %902 : vector<8x128xf32>
    %cst_399 = arith.constant 1.450000e-01 : f32
    %1002 = vector.broadcast %cst_399 : f32 to vector<8x128xf32>
    %1003 = arith.mulf %1002, %914 : vector<8x128xf32>
    %1004 = arith.addf %1001, %1003 : vector<8x128xf32>
    %cst_400 = arith.constant 1.800000e-03 : f32
    %1005 = vector.broadcast %cst_400 : f32 to vector<8x128xf32>
    %1006 = arith.mulf %1005, %917 : vector<8x128xf32>
    %1007 = arith.addf %1004, %1006 : vector<8x128xf32>
    %cst_401 = arith.constant 1.820000e-02 : f32
    %1008 = vector.broadcast %cst_401 : f32 to vector<8x128xf32>
    %1009 = arith.mulf %1008, %920 : vector<8x128xf32>
    %1010 = arith.addf %1007, %1009 : vector<8x128xf32>
    %cst_402 = arith.constant 20.4918041 : f32
    %1011 = vector.broadcast %cst_402 : f32 to vector<8x128xf32>
    %1012 = arith.mulf %902, %1011 : vector<8x128xf32>
    %cst_403 = arith.constant 0.000000e+00 : f32
    %1013 = vector.broadcast %cst_403 : f32 to vector<8x128xf32>
    %1014 = arith.cmpf oge, %902, %1013 : vector<8x128xf32>
    %1015 = arith.select %1014, %1010, %9 : vector<8x128xi1>, vector<8x128xf32>
    %cst_404 = arith.constant -2.750000e-02 : f32
    %1016 = vector.broadcast %cst_404 : f32 to vector<8x128xf32>
    %1017 = arith.mulf %1016, %905 : vector<8x128xf32>
    %cst_405 = arith.constant 1.002500e+02 : f32
    %1018 = vector.broadcast %cst_405 : f32 to vector<8x128xf32>
    %1019 = arith.subf %1012, %1018 : vector<8x128xf32>
    %cst_406 = arith.constant 2.750000e-02 : f32
    %1020 = vector.broadcast %cst_406 : f32 to vector<8x128xf32>
    %1021 = arith.mulf %1020, %1019 : vector<8x128xf32>
    %1022 = arith.addf %1017, %1021 : vector<8x128xf32>
    %1023 = arith.subf %908, %1012 : vector<8x128xf32>
    %cst_407 = arith.constant -7.600000e-03 : f32
    %1024 = vector.broadcast %cst_407 : f32 to vector<8x128xf32>
    %1025 = arith.mulf %1024, %1023 : vector<8x128xf32>
    %1026 = arith.subf %911, %908 : vector<8x128xf32>
    %cst_408 = arith.constant -7.600000e-03 : f32
    %1027 = vector.broadcast %cst_408 : f32 to vector<8x128xf32>
    %1028 = arith.mulf %1027, %1026 : vector<8x128xf32>
    %cst_409 = arith.constant -3.650000e-01 : f32
    %1029 = vector.broadcast %cst_409 : f32 to vector<8x128xf32>
    %1030 = arith.mulf %1029, %914 : vector<8x128xf32>
    %cst_410 = arith.constant 3.930000e-01 : f32
    %1031 = vector.broadcast %cst_410 : f32 to vector<8x128xf32>
    %1032 = arith.mulf %1031, %902 : vector<8x128xf32>
    %1033 = arith.addf %1030, %1032 : vector<8x128xf32>
    %cst_411 = arith.constant 0.000000e+00 : f32
    %1034 = vector.broadcast %cst_411 : f32 to vector<8x128xf32>
    %1035 = arith.cmpf oge, %914, %1034 : vector<8x128xf32>
    %1036 = arith.select %1035, %1033, %9 : vector<8x128xi1>, vector<8x128xf32>
    %cst_412 = arith.constant 1.820000e-02 : f32
    %1037 = vector.broadcast %cst_412 : f32 to vector<8x128xf32>
    %1038 = arith.mulf %1037, %917 : vector<8x128xf32>
    %1039 = arith.subf %13, %1038 : vector<8x128xf32>
    %cst_413 = arith.constant 0.000000e+00 : f32
    %1040 = vector.broadcast %cst_413 : f32 to vector<8x128xf32>
    %1041 = arith.cmpf oge, %917, %1040 : vector<8x128xf32>
    %1042 = arith.select %1041, %1039, %9 : vector<8x128xi1>, vector<8x128xf32>
    %cst_414 = arith.constant 1.640000e-02 : f32
    %1043 = vector.broadcast %cst_414 : f32 to vector<8x128xf32>
    %1044 = arith.mulf %1043, %917 : vector<8x128xf32>
    %cst_415 = arith.constant 1.820000e-02 : f32
    %1045 = vector.broadcast %cst_415 : f32 to vector<8x128xf32>
    %1046 = arith.mulf %1045, %920 : vector<8x128xf32>
    %1047 = arith.subf %1044, %1046 : vector<8x128xf32>
    %cst_416 = arith.constant 0.000000e+00 : f32
    %1048 = vector.broadcast %cst_416 : f32 to vector<8x128xf32>
    %1049 = arith.cmpf oge, %920, %1048 : vector<8x128xf32>
    %1050 = arith.select %1049, %1047, %9 : vector<8x128xi1>, vector<8x128xf32>
    %cst_417 = arith.constant -5.690000e-02 : f32
    %1051 = vector.broadcast %cst_417 : f32 to vector<8x128xf32>
    %1052 = arith.mulf %1051, %923 : vector<8x128xf32>
    %cst_418 = arith.constant 5.690000e-02 : f32
    %1053 = vector.broadcast %cst_418 : f32 to vector<8x128xf32>
    %1054 = arith.mulf %1053, %896 : vector<8x128xf32>
    %1055 = arith.addf %1052, %1054 : vector<8x128xf32>
    %cst_419 = arith.constant 0.000000e+00 : f32
    %1056 = vector.broadcast %cst_419 : f32 to vector<8x128xf32>
    %1057 = arith.cmpf oge, %923, %1056 : vector<8x128xf32>
    %1058 = arith.select %1057, %1055, %9 : vector<8x128xi1>, vector<8x128xf32>
    %cst_420 = arith.constant 6.250000e-02 : f32
    %1059 = vector.broadcast %cst_420 : f32 to vector<8x128xf32>
    %1060 = arith.mulf %1059, %942 : vector<8x128xf32>
    %1061 = arith.addf %887, %1060 : vector<8x128xf32>
    %cst_421 = arith.constant 6.250000e-02 : f32
    %1062 = vector.broadcast %cst_421 : f32 to vector<8x128xf32>
    %1063 = arith.mulf %1062, %946 : vector<8x128xf32>
    %1064 = arith.addf %890, %1063 : vector<8x128xf32>
    %cst_422 = arith.constant 6.250000e-02 : f32
    %1065 = vector.broadcast %cst_422 : f32 to vector<8x128xf32>
    %1066 = arith.mulf %1065, %950 : vector<8x128xf32>
    %1067 = arith.addf %893, %1066 : vector<8x128xf32>
    %cst_423 = arith.constant 6.250000e-02 : f32
    %1068 = vector.broadcast %cst_423 : f32 to vector<8x128xf32>
    %1069 = arith.mulf %1068, %980 : vector<8x128xf32>
    %1070 = arith.addf %896, %1069 : vector<8x128xf32>
    %cst_424 = arith.constant 6.250000e-02 : f32
    %1071 = vector.broadcast %cst_424 : f32 to vector<8x128xf32>
    %1072 = arith.mulf %1071, %999 : vector<8x128xf32>
    %1073 = arith.addf %899, %1072 : vector<8x128xf32>
    %cst_425 = arith.constant 6.250000e-02 : f32
    %1074 = vector.broadcast %cst_425 : f32 to vector<8x128xf32>
    %1075 = arith.mulf %1074, %1015 : vector<8x128xf32>
    %1076 = arith.addf %902, %1075 : vector<8x128xf32>
    %cst_426 = arith.constant 6.250000e-02 : f32
    %1077 = vector.broadcast %cst_426 : f32 to vector<8x128xf32>
    %1078 = arith.mulf %1077, %1022 : vector<8x128xf32>
    %1079 = arith.addf %905, %1078 : vector<8x128xf32>
    %cst_427 = arith.constant 6.250000e-02 : f32
    %1080 = vector.broadcast %cst_427 : f32 to vector<8x128xf32>
    %1081 = arith.mulf %1080, %1025 : vector<8x128xf32>
    %1082 = arith.addf %908, %1081 : vector<8x128xf32>
    %cst_428 = arith.constant 6.250000e-02 : f32
    %1083 = vector.broadcast %cst_428 : f32 to vector<8x128xf32>
    %1084 = arith.mulf %1083, %1028 : vector<8x128xf32>
    %1085 = arith.addf %911, %1084 : vector<8x128xf32>
    %cst_429 = arith.constant 6.250000e-02 : f32
    %1086 = vector.broadcast %cst_429 : f32 to vector<8x128xf32>
    %1087 = arith.mulf %1086, %1036 : vector<8x128xf32>
    %1088 = arith.addf %914, %1087 : vector<8x128xf32>
    %cst_430 = arith.constant 6.250000e-02 : f32
    %1089 = vector.broadcast %cst_430 : f32 to vector<8x128xf32>
    %1090 = arith.mulf %1089, %1042 : vector<8x128xf32>
    %1091 = arith.addf %917, %1090 : vector<8x128xf32>
    %cst_431 = arith.constant 6.250000e-02 : f32
    %1092 = vector.broadcast %cst_431 : f32 to vector<8x128xf32>
    %1093 = arith.mulf %1092, %1050 : vector<8x128xf32>
    %1094 = arith.addf %920, %1093 : vector<8x128xf32>
    %cst_432 = arith.constant 6.250000e-02 : f32
    %1095 = vector.broadcast %cst_432 : f32 to vector<8x128xf32>
    %1096 = arith.mulf %1095, %1058 : vector<8x128xf32>
    %1097 = arith.addf %923, %1096 : vector<8x128xf32>
    %c5_i32 = arith.constant 5 : i32
    %1098 = arith.addf %1061, %1064 : vector<8x128xf32>
    %1099 = arith.subf %1098, %25 : vector<8x128xf32>
    %1100 = arith.mulf %21, %1099 : vector<8x128xf32>
    %1101 = math.tanh %1100 : vector<8x128xf32>
    %1102 = arith.subf %1098, %27 : vector<8x128xf32>
    %1103 = arith.mulf %23, %1102 : vector<8x128xf32>
    %1104 = math.tanh %1103 : vector<8x128xf32>
    %1105 = arith.subf %1101, %1104 : vector<8x128xf32>
    %cst_433 = arith.constant 2.000000e+00 : f32
    %1106 = vector.broadcast %cst_433 : f32 to vector<8x128xf32>
    %1107 = arith.addf %1105, %1106 : vector<8x128xf32>
    %cst_434 = arith.constant 1.900000e-02 : f32
    %1108 = vector.broadcast %cst_434 : f32 to vector<8x128xf32>
    %1109 = arith.mulf %1108, %1107 : vector<8x128xf32>
    %cst_435 = arith.constant 0.00779999978 : f32
    %1110 = vector.broadcast %cst_435 : f32 to vector<8x128xf32>
    %1111 = arith.addf %1110, %1109 : vector<8x128xf32>
    %cst_436 = arith.constant 4.580000e-02 : f32
    %1112 = vector.broadcast %cst_436 : f32 to vector<8x128xf32>
    %1113 = arith.select %15, %1111, %1112 : vector<8x128xi1>, vector<8x128xf32>
    %cst_437 = arith.constant -4.580000e-02 : f32
    %1114 = vector.broadcast %cst_437 : f32 to vector<8x128xf32>
    %1115 = arith.mulf %1114, %1061 : vector<8x128xf32>
    %1116 = arith.addf %1115, %11 : vector<8x128xf32>
    %cst_438 = arith.constant 4.580000e-02 : f32
    %1117 = vector.broadcast %cst_438 : f32 to vector<8x128xf32>
    %1118 = arith.mulf %1117, %1061 : vector<8x128xf32>
    %1119 = arith.mulf %1064, %1113 : vector<8x128xf32>
    %1120 = arith.subf %1118, %1119 : vector<8x128xf32>
    %1121 = arith.mulf %1113, %1064 : vector<8x128xf32>
    %cst_439 = arith.constant 5.680000e-02 : f32
    %1122 = vector.broadcast %cst_439 : f32 to vector<8x128xf32>
    %1123 = arith.mulf %1122, %1067 : vector<8x128xf32>
    %1124 = arith.subf %1121, %1123 : vector<8x128xf32>
    %cst_440 = arith.constant 7.44104793E-4 : f32
    %1125 = vector.broadcast %cst_440 : f32 to vector<8x128xf32>
    %1126 = arith.mulf %1125, %1067 : vector<8x128xf32>
    %cst_441 = arith.constant 6.490000e-03 : f32
    %1127 = vector.broadcast %cst_441 : f32 to vector<8x128xf32>
    %1128 = arith.mulf %1127, %1070 : vector<8x128xf32>
    %cst_442 = arith.constant 4.730000e+00 : f32
    %1129 = vector.broadcast %cst_442 : f32 to vector<8x128xf32>
    %1130 = arith.subf %1129, %1128 : vector<8x128xf32>
    %cst_443 = arith.constant 9.510000e-03 : f32
    %1131 = vector.broadcast %cst_443 : f32 to vector<8x128xf32>
    %1132 = arith.mulf %1131, %1085 : vector<8x128xf32>
    %1133 = arith.subf %1130, %1132 : vector<8x128xf32>
    %cst_444 = arith.constant 3.390000e+02 : f32
    %1134 = vector.broadcast %cst_444 : f32 to vector<8x128xf32>
    %1135 = arith.cmpf ogt, %1070, %1134 : vector<8x128xf32>
    %cst_445 = arith.constant 3.390000e+02 : f32
    %1136 = vector.broadcast %cst_445 : f32 to vector<8x128xf32>
    %1137 = arith.subf %1070, %1136 : vector<8x128xf32>
    %cst_446 = arith.constant 5.000000e-04 : f32
    %1138 = vector.broadcast %cst_446 : f32 to vector<8x128xf32>
    %1139 = arith.mulf %1138, %1137 : vector<8x128xf32>
    %1140 = arith.select %1135, %1139, %9 : vector<8x128xi1>, vector<8x128xf32>
    %1141 = arith.maximumf %1133, %9 : vector<8x128xf32>
    %1142 = arith.addf %1141, %1126 : vector<8x128xf32>
    %cst_447 = arith.constant 1.000000e+00 : f32
    %1143 = vector.broadcast %cst_447 : f32 to vector<8x128xf32>
    %1144 = arith.subf %1142, %1143 : vector<8x128xf32>
    %1145 = arith.subf %1144, %1140 : vector<8x128xf32>
    %cst_448 = arith.constant 6.560000e-02 : f32
    %1146 = vector.broadcast %cst_448 : f32 to vector<8x128xf32>
    %1147 = arith.mulf %1146, %1070 : vector<8x128xf32>
    %1148 = arith.subf %1145, %1147 : vector<8x128xf32>
    %cst_449 = arith.constant 7.180000e-02 : f32
    %1149 = vector.broadcast %cst_449 : f32 to vector<8x128xf32>
    %1150 = arith.mulf %1149, %1073 : vector<8x128xf32>
    %1151 = arith.addf %1148, %1150 : vector<8x128xf32>
    %cst_450 = arith.constant 0.000000e+00 : f32
    %1152 = vector.broadcast %cst_450 : f32 to vector<8x128xf32>
    %1153 = arith.cmpf oge, %1070, %1152 : vector<8x128xf32>
    %1154 = arith.select %1153, %1151, %9 : vector<8x128xi1>, vector<8x128xf32>
    %cst_451 = arith.constant 7.370000e-02 : f32
    %1155 = vector.broadcast %cst_451 : f32 to vector<8x128xf32>
    %1156 = arith.mulf %1155, %1079 : vector<8x128xf32>
    %cst_452 = arith.constant 3.250000e+00 : f32
    %1157 = vector.broadcast %cst_452 : f32 to vector<8x128xf32>
    %1158 = arith.addf %1157, %1156 : vector<8x128xf32>
    %1159 = arith.mulf %1158, %1073 : vector<8x128xf32>
    %cst_453 = arith.constant 2.608900e+02 : f32
    %1160 = vector.broadcast %cst_453 : f32 to vector<8x128xf32>
    %1161 = arith.addf %1160, %1073 : vector<8x128xf32>
    %1162 = arith.divf %1159, %1161 : vector<8x128xf32>
    %cst_454 = arith.constant 0.000000e+00 : f32
    %1163 = vector.broadcast %cst_454 : f32 to vector<8x128xf32>
    %1164 = arith.subf %1163, %1162 : vector<8x128xf32>
    %cst_455 = arith.constant 6.560000e-02 : f32
    %1165 = vector.broadcast %cst_455 : f32 to vector<8x128xf32>
    %1166 = arith.mulf %1165, %1070 : vector<8x128xf32>
    %1167 = arith.addf %1164, %1166 : vector<8x128xf32>
    %cst_456 = arith.constant 7.180000e-02 : f32
    %1168 = vector.broadcast %cst_456 : f32 to vector<8x128xf32>
    %1169 = arith.mulf %1168, %1073 : vector<8x128xf32>
    %1170 = arith.subf %1167, %1169 : vector<8x128xf32>
    %cst_457 = arith.constant 0.000000e+00 : f32
    %1171 = vector.broadcast %cst_457 : f32 to vector<8x128xf32>
    %1172 = arith.cmpf oge, %1073, %1171 : vector<8x128xf32>
    %1173 = arith.select %1172, %1170, %9 : vector<8x128xi1>, vector<8x128xf32>
    %cst_458 = arith.constant -5.500000e-01 : f32
    %1174 = vector.broadcast %cst_458 : f32 to vector<8x128xf32>
    %1175 = arith.mulf %1174, %1076 : vector<8x128xf32>
    %cst_459 = arith.constant 1.450000e-01 : f32
    %1176 = vector.broadcast %cst_459 : f32 to vector<8x128xf32>
    %1177 = arith.mulf %1176, %1088 : vector<8x128xf32>
    %1178 = arith.addf %1175, %1177 : vector<8x128xf32>
    %cst_460 = arith.constant 1.800000e-03 : f32
    %1179 = vector.broadcast %cst_460 : f32 to vector<8x128xf32>
    %1180 = arith.mulf %1179, %1091 : vector<8x128xf32>
    %1181 = arith.addf %1178, %1180 : vector<8x128xf32>
    %cst_461 = arith.constant 1.820000e-02 : f32
    %1182 = vector.broadcast %cst_461 : f32 to vector<8x128xf32>
    %1183 = arith.mulf %1182, %1094 : vector<8x128xf32>
    %1184 = arith.addf %1181, %1183 : vector<8x128xf32>
    %cst_462 = arith.constant 20.4918041 : f32
    %1185 = vector.broadcast %cst_462 : f32 to vector<8x128xf32>
    %1186 = arith.mulf %1076, %1185 : vector<8x128xf32>
    %cst_463 = arith.constant 0.000000e+00 : f32
    %1187 = vector.broadcast %cst_463 : f32 to vector<8x128xf32>
    %1188 = arith.cmpf oge, %1076, %1187 : vector<8x128xf32>
    %1189 = arith.select %1188, %1184, %9 : vector<8x128xi1>, vector<8x128xf32>
    %cst_464 = arith.constant -2.750000e-02 : f32
    %1190 = vector.broadcast %cst_464 : f32 to vector<8x128xf32>
    %1191 = arith.mulf %1190, %1079 : vector<8x128xf32>
    %cst_465 = arith.constant 1.002500e+02 : f32
    %1192 = vector.broadcast %cst_465 : f32 to vector<8x128xf32>
    %1193 = arith.subf %1186, %1192 : vector<8x128xf32>
    %cst_466 = arith.constant 2.750000e-02 : f32
    %1194 = vector.broadcast %cst_466 : f32 to vector<8x128xf32>
    %1195 = arith.mulf %1194, %1193 : vector<8x128xf32>
    %1196 = arith.addf %1191, %1195 : vector<8x128xf32>
    %1197 = arith.subf %1082, %1186 : vector<8x128xf32>
    %cst_467 = arith.constant -7.600000e-03 : f32
    %1198 = vector.broadcast %cst_467 : f32 to vector<8x128xf32>
    %1199 = arith.mulf %1198, %1197 : vector<8x128xf32>
    %1200 = arith.subf %1085, %1082 : vector<8x128xf32>
    %cst_468 = arith.constant -7.600000e-03 : f32
    %1201 = vector.broadcast %cst_468 : f32 to vector<8x128xf32>
    %1202 = arith.mulf %1201, %1200 : vector<8x128xf32>
    %cst_469 = arith.constant -3.650000e-01 : f32
    %1203 = vector.broadcast %cst_469 : f32 to vector<8x128xf32>
    %1204 = arith.mulf %1203, %1088 : vector<8x128xf32>
    %cst_470 = arith.constant 3.930000e-01 : f32
    %1205 = vector.broadcast %cst_470 : f32 to vector<8x128xf32>
    %1206 = arith.mulf %1205, %1076 : vector<8x128xf32>
    %1207 = arith.addf %1204, %1206 : vector<8x128xf32>
    %cst_471 = arith.constant 0.000000e+00 : f32
    %1208 = vector.broadcast %cst_471 : f32 to vector<8x128xf32>
    %1209 = arith.cmpf oge, %1088, %1208 : vector<8x128xf32>
    %1210 = arith.select %1209, %1207, %9 : vector<8x128xi1>, vector<8x128xf32>
    %cst_472 = arith.constant 1.820000e-02 : f32
    %1211 = vector.broadcast %cst_472 : f32 to vector<8x128xf32>
    %1212 = arith.mulf %1211, %1091 : vector<8x128xf32>
    %1213 = arith.subf %13, %1212 : vector<8x128xf32>
    %cst_473 = arith.constant 0.000000e+00 : f32
    %1214 = vector.broadcast %cst_473 : f32 to vector<8x128xf32>
    %1215 = arith.cmpf oge, %1091, %1214 : vector<8x128xf32>
    %1216 = arith.select %1215, %1213, %9 : vector<8x128xi1>, vector<8x128xf32>
    %cst_474 = arith.constant 1.640000e-02 : f32
    %1217 = vector.broadcast %cst_474 : f32 to vector<8x128xf32>
    %1218 = arith.mulf %1217, %1091 : vector<8x128xf32>
    %cst_475 = arith.constant 1.820000e-02 : f32
    %1219 = vector.broadcast %cst_475 : f32 to vector<8x128xf32>
    %1220 = arith.mulf %1219, %1094 : vector<8x128xf32>
    %1221 = arith.subf %1218, %1220 : vector<8x128xf32>
    %cst_476 = arith.constant 0.000000e+00 : f32
    %1222 = vector.broadcast %cst_476 : f32 to vector<8x128xf32>
    %1223 = arith.cmpf oge, %1094, %1222 : vector<8x128xf32>
    %1224 = arith.select %1223, %1221, %9 : vector<8x128xi1>, vector<8x128xf32>
    %cst_477 = arith.constant -5.690000e-02 : f32
    %1225 = vector.broadcast %cst_477 : f32 to vector<8x128xf32>
    %1226 = arith.mulf %1225, %1097 : vector<8x128xf32>
    %cst_478 = arith.constant 5.690000e-02 : f32
    %1227 = vector.broadcast %cst_478 : f32 to vector<8x128xf32>
    %1228 = arith.mulf %1227, %1070 : vector<8x128xf32>
    %1229 = arith.addf %1226, %1228 : vector<8x128xf32>
    %cst_479 = arith.constant 0.000000e+00 : f32
    %1230 = vector.broadcast %cst_479 : f32 to vector<8x128xf32>
    %1231 = arith.cmpf oge, %1097, %1230 : vector<8x128xf32>
    %1232 = arith.select %1231, %1229, %9 : vector<8x128xi1>, vector<8x128xf32>
    %cst_480 = arith.constant 6.250000e-02 : f32
    %1233 = vector.broadcast %cst_480 : f32 to vector<8x128xf32>
    %1234 = arith.mulf %1233, %1116 : vector<8x128xf32>
    %1235 = arith.addf %1061, %1234 : vector<8x128xf32>
    %cst_481 = arith.constant 6.250000e-02 : f32
    %1236 = vector.broadcast %cst_481 : f32 to vector<8x128xf32>
    %1237 = arith.mulf %1236, %1120 : vector<8x128xf32>
    %1238 = arith.addf %1064, %1237 : vector<8x128xf32>
    %cst_482 = arith.constant 6.250000e-02 : f32
    %1239 = vector.broadcast %cst_482 : f32 to vector<8x128xf32>
    %1240 = arith.mulf %1239, %1124 : vector<8x128xf32>
    %1241 = arith.addf %1067, %1240 : vector<8x128xf32>
    %cst_483 = arith.constant 6.250000e-02 : f32
    %1242 = vector.broadcast %cst_483 : f32 to vector<8x128xf32>
    %1243 = arith.mulf %1242, %1154 : vector<8x128xf32>
    %1244 = arith.addf %1070, %1243 : vector<8x128xf32>
    %cst_484 = arith.constant 6.250000e-02 : f32
    %1245 = vector.broadcast %cst_484 : f32 to vector<8x128xf32>
    %1246 = arith.mulf %1245, %1173 : vector<8x128xf32>
    %1247 = arith.addf %1073, %1246 : vector<8x128xf32>
    %cst_485 = arith.constant 6.250000e-02 : f32
    %1248 = vector.broadcast %cst_485 : f32 to vector<8x128xf32>
    %1249 = arith.mulf %1248, %1189 : vector<8x128xf32>
    %1250 = arith.addf %1076, %1249 : vector<8x128xf32>
    %cst_486 = arith.constant 6.250000e-02 : f32
    %1251 = vector.broadcast %cst_486 : f32 to vector<8x128xf32>
    %1252 = arith.mulf %1251, %1196 : vector<8x128xf32>
    %1253 = arith.addf %1079, %1252 : vector<8x128xf32>
    %cst_487 = arith.constant 6.250000e-02 : f32
    %1254 = vector.broadcast %cst_487 : f32 to vector<8x128xf32>
    %1255 = arith.mulf %1254, %1199 : vector<8x128xf32>
    %1256 = arith.addf %1082, %1255 : vector<8x128xf32>
    %cst_488 = arith.constant 6.250000e-02 : f32
    %1257 = vector.broadcast %cst_488 : f32 to vector<8x128xf32>
    %1258 = arith.mulf %1257, %1202 : vector<8x128xf32>
    %1259 = arith.addf %1085, %1258 : vector<8x128xf32>
    %cst_489 = arith.constant 6.250000e-02 : f32
    %1260 = vector.broadcast %cst_489 : f32 to vector<8x128xf32>
    %1261 = arith.mulf %1260, %1210 : vector<8x128xf32>
    %1262 = arith.addf %1088, %1261 : vector<8x128xf32>
    %cst_490 = arith.constant 6.250000e-02 : f32
    %1263 = vector.broadcast %cst_490 : f32 to vector<8x128xf32>
    %1264 = arith.mulf %1263, %1216 : vector<8x128xf32>
    %1265 = arith.addf %1091, %1264 : vector<8x128xf32>
    %cst_491 = arith.constant 6.250000e-02 : f32
    %1266 = vector.broadcast %cst_491 : f32 to vector<8x128xf32>
    %1267 = arith.mulf %1266, %1224 : vector<8x128xf32>
    %1268 = arith.addf %1094, %1267 : vector<8x128xf32>
    %cst_492 = arith.constant 6.250000e-02 : f32
    %1269 = vector.broadcast %cst_492 : f32 to vector<8x128xf32>
    %1270 = arith.mulf %1269, %1232 : vector<8x128xf32>
    %1271 = arith.addf %1097, %1270 : vector<8x128xf32>
    %c6_i32 = arith.constant 6 : i32
    %1272 = arith.addf %1235, %1238 : vector<8x128xf32>
    %1273 = arith.subf %1272, %25 : vector<8x128xf32>
    %1274 = arith.mulf %21, %1273 : vector<8x128xf32>
    %1275 = math.tanh %1274 : vector<8x128xf32>
    %1276 = arith.subf %1272, %27 : vector<8x128xf32>
    %1277 = arith.mulf %23, %1276 : vector<8x128xf32>
    %1278 = math.tanh %1277 : vector<8x128xf32>
    %1279 = arith.subf %1275, %1278 : vector<8x128xf32>
    %cst_493 = arith.constant 2.000000e+00 : f32
    %1280 = vector.broadcast %cst_493 : f32 to vector<8x128xf32>
    %1281 = arith.addf %1279, %1280 : vector<8x128xf32>
    %cst_494 = arith.constant 1.900000e-02 : f32
    %1282 = vector.broadcast %cst_494 : f32 to vector<8x128xf32>
    %1283 = arith.mulf %1282, %1281 : vector<8x128xf32>
    %cst_495 = arith.constant 0.00779999978 : f32
    %1284 = vector.broadcast %cst_495 : f32 to vector<8x128xf32>
    %1285 = arith.addf %1284, %1283 : vector<8x128xf32>
    %cst_496 = arith.constant 4.580000e-02 : f32
    %1286 = vector.broadcast %cst_496 : f32 to vector<8x128xf32>
    %1287 = arith.select %15, %1285, %1286 : vector<8x128xi1>, vector<8x128xf32>
    %cst_497 = arith.constant -4.580000e-02 : f32
    %1288 = vector.broadcast %cst_497 : f32 to vector<8x128xf32>
    %1289 = arith.mulf %1288, %1235 : vector<8x128xf32>
    %1290 = arith.addf %1289, %11 : vector<8x128xf32>
    %cst_498 = arith.constant 4.580000e-02 : f32
    %1291 = vector.broadcast %cst_498 : f32 to vector<8x128xf32>
    %1292 = arith.mulf %1291, %1235 : vector<8x128xf32>
    %1293 = arith.mulf %1238, %1287 : vector<8x128xf32>
    %1294 = arith.subf %1292, %1293 : vector<8x128xf32>
    %1295 = arith.mulf %1287, %1238 : vector<8x128xf32>
    %cst_499 = arith.constant 5.680000e-02 : f32
    %1296 = vector.broadcast %cst_499 : f32 to vector<8x128xf32>
    %1297 = arith.mulf %1296, %1241 : vector<8x128xf32>
    %1298 = arith.subf %1295, %1297 : vector<8x128xf32>
    %cst_500 = arith.constant 7.44104793E-4 : f32
    %1299 = vector.broadcast %cst_500 : f32 to vector<8x128xf32>
    %1300 = arith.mulf %1299, %1241 : vector<8x128xf32>
    %cst_501 = arith.constant 6.490000e-03 : f32
    %1301 = vector.broadcast %cst_501 : f32 to vector<8x128xf32>
    %1302 = arith.mulf %1301, %1244 : vector<8x128xf32>
    %cst_502 = arith.constant 4.730000e+00 : f32
    %1303 = vector.broadcast %cst_502 : f32 to vector<8x128xf32>
    %1304 = arith.subf %1303, %1302 : vector<8x128xf32>
    %cst_503 = arith.constant 9.510000e-03 : f32
    %1305 = vector.broadcast %cst_503 : f32 to vector<8x128xf32>
    %1306 = arith.mulf %1305, %1259 : vector<8x128xf32>
    %1307 = arith.subf %1304, %1306 : vector<8x128xf32>
    %cst_504 = arith.constant 3.390000e+02 : f32
    %1308 = vector.broadcast %cst_504 : f32 to vector<8x128xf32>
    %1309 = arith.cmpf ogt, %1244, %1308 : vector<8x128xf32>
    %cst_505 = arith.constant 3.390000e+02 : f32
    %1310 = vector.broadcast %cst_505 : f32 to vector<8x128xf32>
    %1311 = arith.subf %1244, %1310 : vector<8x128xf32>
    %cst_506 = arith.constant 5.000000e-04 : f32
    %1312 = vector.broadcast %cst_506 : f32 to vector<8x128xf32>
    %1313 = arith.mulf %1312, %1311 : vector<8x128xf32>
    %1314 = arith.select %1309, %1313, %9 : vector<8x128xi1>, vector<8x128xf32>
    %1315 = arith.maximumf %1307, %9 : vector<8x128xf32>
    %1316 = arith.addf %1315, %1300 : vector<8x128xf32>
    %cst_507 = arith.constant 1.000000e+00 : f32
    %1317 = vector.broadcast %cst_507 : f32 to vector<8x128xf32>
    %1318 = arith.subf %1316, %1317 : vector<8x128xf32>
    %1319 = arith.subf %1318, %1314 : vector<8x128xf32>
    %cst_508 = arith.constant 6.560000e-02 : f32
    %1320 = vector.broadcast %cst_508 : f32 to vector<8x128xf32>
    %1321 = arith.mulf %1320, %1244 : vector<8x128xf32>
    %1322 = arith.subf %1319, %1321 : vector<8x128xf32>
    %cst_509 = arith.constant 7.180000e-02 : f32
    %1323 = vector.broadcast %cst_509 : f32 to vector<8x128xf32>
    %1324 = arith.mulf %1323, %1247 : vector<8x128xf32>
    %1325 = arith.addf %1322, %1324 : vector<8x128xf32>
    %cst_510 = arith.constant 0.000000e+00 : f32
    %1326 = vector.broadcast %cst_510 : f32 to vector<8x128xf32>
    %1327 = arith.cmpf oge, %1244, %1326 : vector<8x128xf32>
    %1328 = arith.select %1327, %1325, %9 : vector<8x128xi1>, vector<8x128xf32>
    %cst_511 = arith.constant 7.370000e-02 : f32
    %1329 = vector.broadcast %cst_511 : f32 to vector<8x128xf32>
    %1330 = arith.mulf %1329, %1253 : vector<8x128xf32>
    %cst_512 = arith.constant 3.250000e+00 : f32
    %1331 = vector.broadcast %cst_512 : f32 to vector<8x128xf32>
    %1332 = arith.addf %1331, %1330 : vector<8x128xf32>
    %1333 = arith.mulf %1332, %1247 : vector<8x128xf32>
    %cst_513 = arith.constant 2.608900e+02 : f32
    %1334 = vector.broadcast %cst_513 : f32 to vector<8x128xf32>
    %1335 = arith.addf %1334, %1247 : vector<8x128xf32>
    %1336 = arith.divf %1333, %1335 : vector<8x128xf32>
    %cst_514 = arith.constant 0.000000e+00 : f32
    %1337 = vector.broadcast %cst_514 : f32 to vector<8x128xf32>
    %1338 = arith.subf %1337, %1336 : vector<8x128xf32>
    %cst_515 = arith.constant 6.560000e-02 : f32
    %1339 = vector.broadcast %cst_515 : f32 to vector<8x128xf32>
    %1340 = arith.mulf %1339, %1244 : vector<8x128xf32>
    %1341 = arith.addf %1338, %1340 : vector<8x128xf32>
    %cst_516 = arith.constant 7.180000e-02 : f32
    %1342 = vector.broadcast %cst_516 : f32 to vector<8x128xf32>
    %1343 = arith.mulf %1342, %1247 : vector<8x128xf32>
    %1344 = arith.subf %1341, %1343 : vector<8x128xf32>
    %cst_517 = arith.constant 0.000000e+00 : f32
    %1345 = vector.broadcast %cst_517 : f32 to vector<8x128xf32>
    %1346 = arith.cmpf oge, %1247, %1345 : vector<8x128xf32>
    %1347 = arith.select %1346, %1344, %9 : vector<8x128xi1>, vector<8x128xf32>
    %cst_518 = arith.constant -5.500000e-01 : f32
    %1348 = vector.broadcast %cst_518 : f32 to vector<8x128xf32>
    %1349 = arith.mulf %1348, %1250 : vector<8x128xf32>
    %cst_519 = arith.constant 1.450000e-01 : f32
    %1350 = vector.broadcast %cst_519 : f32 to vector<8x128xf32>
    %1351 = arith.mulf %1350, %1262 : vector<8x128xf32>
    %1352 = arith.addf %1349, %1351 : vector<8x128xf32>
    %cst_520 = arith.constant 1.800000e-03 : f32
    %1353 = vector.broadcast %cst_520 : f32 to vector<8x128xf32>
    %1354 = arith.mulf %1353, %1265 : vector<8x128xf32>
    %1355 = arith.addf %1352, %1354 : vector<8x128xf32>
    %cst_521 = arith.constant 1.820000e-02 : f32
    %1356 = vector.broadcast %cst_521 : f32 to vector<8x128xf32>
    %1357 = arith.mulf %1356, %1268 : vector<8x128xf32>
    %1358 = arith.addf %1355, %1357 : vector<8x128xf32>
    %cst_522 = arith.constant 20.4918041 : f32
    %1359 = vector.broadcast %cst_522 : f32 to vector<8x128xf32>
    %1360 = arith.mulf %1250, %1359 : vector<8x128xf32>
    %cst_523 = arith.constant 0.000000e+00 : f32
    %1361 = vector.broadcast %cst_523 : f32 to vector<8x128xf32>
    %1362 = arith.cmpf oge, %1250, %1361 : vector<8x128xf32>
    %1363 = arith.select %1362, %1358, %9 : vector<8x128xi1>, vector<8x128xf32>
    %cst_524 = arith.constant -2.750000e-02 : f32
    %1364 = vector.broadcast %cst_524 : f32 to vector<8x128xf32>
    %1365 = arith.mulf %1364, %1253 : vector<8x128xf32>
    %cst_525 = arith.constant 1.002500e+02 : f32
    %1366 = vector.broadcast %cst_525 : f32 to vector<8x128xf32>
    %1367 = arith.subf %1360, %1366 : vector<8x128xf32>
    %cst_526 = arith.constant 2.750000e-02 : f32
    %1368 = vector.broadcast %cst_526 : f32 to vector<8x128xf32>
    %1369 = arith.mulf %1368, %1367 : vector<8x128xf32>
    %1370 = arith.addf %1365, %1369 : vector<8x128xf32>
    %1371 = arith.subf %1256, %1360 : vector<8x128xf32>
    %cst_527 = arith.constant -7.600000e-03 : f32
    %1372 = vector.broadcast %cst_527 : f32 to vector<8x128xf32>
    %1373 = arith.mulf %1372, %1371 : vector<8x128xf32>
    %1374 = arith.subf %1259, %1256 : vector<8x128xf32>
    %cst_528 = arith.constant -7.600000e-03 : f32
    %1375 = vector.broadcast %cst_528 : f32 to vector<8x128xf32>
    %1376 = arith.mulf %1375, %1374 : vector<8x128xf32>
    %cst_529 = arith.constant -3.650000e-01 : f32
    %1377 = vector.broadcast %cst_529 : f32 to vector<8x128xf32>
    %1378 = arith.mulf %1377, %1262 : vector<8x128xf32>
    %cst_530 = arith.constant 3.930000e-01 : f32
    %1379 = vector.broadcast %cst_530 : f32 to vector<8x128xf32>
    %1380 = arith.mulf %1379, %1250 : vector<8x128xf32>
    %1381 = arith.addf %1378, %1380 : vector<8x128xf32>
    %cst_531 = arith.constant 0.000000e+00 : f32
    %1382 = vector.broadcast %cst_531 : f32 to vector<8x128xf32>
    %1383 = arith.cmpf oge, %1262, %1382 : vector<8x128xf32>
    %1384 = arith.select %1383, %1381, %9 : vector<8x128xi1>, vector<8x128xf32>
    %cst_532 = arith.constant 1.820000e-02 : f32
    %1385 = vector.broadcast %cst_532 : f32 to vector<8x128xf32>
    %1386 = arith.mulf %1385, %1265 : vector<8x128xf32>
    %1387 = arith.subf %13, %1386 : vector<8x128xf32>
    %cst_533 = arith.constant 0.000000e+00 : f32
    %1388 = vector.broadcast %cst_533 : f32 to vector<8x128xf32>
    %1389 = arith.cmpf oge, %1265, %1388 : vector<8x128xf32>
    %1390 = arith.select %1389, %1387, %9 : vector<8x128xi1>, vector<8x128xf32>
    %cst_534 = arith.constant 1.640000e-02 : f32
    %1391 = vector.broadcast %cst_534 : f32 to vector<8x128xf32>
    %1392 = arith.mulf %1391, %1265 : vector<8x128xf32>
    %cst_535 = arith.constant 1.820000e-02 : f32
    %1393 = vector.broadcast %cst_535 : f32 to vector<8x128xf32>
    %1394 = arith.mulf %1393, %1268 : vector<8x128xf32>
    %1395 = arith.subf %1392, %1394 : vector<8x128xf32>
    %cst_536 = arith.constant 0.000000e+00 : f32
    %1396 = vector.broadcast %cst_536 : f32 to vector<8x128xf32>
    %1397 = arith.cmpf oge, %1268, %1396 : vector<8x128xf32>
    %1398 = arith.select %1397, %1395, %9 : vector<8x128xi1>, vector<8x128xf32>
    %cst_537 = arith.constant -5.690000e-02 : f32
    %1399 = vector.broadcast %cst_537 : f32 to vector<8x128xf32>
    %1400 = arith.mulf %1399, %1271 : vector<8x128xf32>
    %cst_538 = arith.constant 5.690000e-02 : f32
    %1401 = vector.broadcast %cst_538 : f32 to vector<8x128xf32>
    %1402 = arith.mulf %1401, %1244 : vector<8x128xf32>
    %1403 = arith.addf %1400, %1402 : vector<8x128xf32>
    %cst_539 = arith.constant 0.000000e+00 : f32
    %1404 = vector.broadcast %cst_539 : f32 to vector<8x128xf32>
    %1405 = arith.cmpf oge, %1271, %1404 : vector<8x128xf32>
    %1406 = arith.select %1405, %1403, %9 : vector<8x128xi1>, vector<8x128xf32>
    %cst_540 = arith.constant 6.250000e-02 : f32
    %1407 = vector.broadcast %cst_540 : f32 to vector<8x128xf32>
    %1408 = arith.mulf %1407, %1290 : vector<8x128xf32>
    %1409 = arith.addf %1235, %1408 : vector<8x128xf32>
    %cst_541 = arith.constant 6.250000e-02 : f32
    %1410 = vector.broadcast %cst_541 : f32 to vector<8x128xf32>
    %1411 = arith.mulf %1410, %1294 : vector<8x128xf32>
    %1412 = arith.addf %1238, %1411 : vector<8x128xf32>
    %cst_542 = arith.constant 6.250000e-02 : f32
    %1413 = vector.broadcast %cst_542 : f32 to vector<8x128xf32>
    %1414 = arith.mulf %1413, %1298 : vector<8x128xf32>
    %1415 = arith.addf %1241, %1414 : vector<8x128xf32>
    %cst_543 = arith.constant 6.250000e-02 : f32
    %1416 = vector.broadcast %cst_543 : f32 to vector<8x128xf32>
    %1417 = arith.mulf %1416, %1328 : vector<8x128xf32>
    %1418 = arith.addf %1244, %1417 : vector<8x128xf32>
    %cst_544 = arith.constant 6.250000e-02 : f32
    %1419 = vector.broadcast %cst_544 : f32 to vector<8x128xf32>
    %1420 = arith.mulf %1419, %1347 : vector<8x128xf32>
    %1421 = arith.addf %1247, %1420 : vector<8x128xf32>
    %cst_545 = arith.constant 6.250000e-02 : f32
    %1422 = vector.broadcast %cst_545 : f32 to vector<8x128xf32>
    %1423 = arith.mulf %1422, %1363 : vector<8x128xf32>
    %1424 = arith.addf %1250, %1423 : vector<8x128xf32>
    %cst_546 = arith.constant 6.250000e-02 : f32
    %1425 = vector.broadcast %cst_546 : f32 to vector<8x128xf32>
    %1426 = arith.mulf %1425, %1370 : vector<8x128xf32>
    %1427 = arith.addf %1253, %1426 : vector<8x128xf32>
    %cst_547 = arith.constant 6.250000e-02 : f32
    %1428 = vector.broadcast %cst_547 : f32 to vector<8x128xf32>
    %1429 = arith.mulf %1428, %1373 : vector<8x128xf32>
    %1430 = arith.addf %1256, %1429 : vector<8x128xf32>
    %cst_548 = arith.constant 6.250000e-02 : f32
    %1431 = vector.broadcast %cst_548 : f32 to vector<8x128xf32>
    %1432 = arith.mulf %1431, %1376 : vector<8x128xf32>
    %1433 = arith.addf %1259, %1432 : vector<8x128xf32>
    %cst_549 = arith.constant 6.250000e-02 : f32
    %1434 = vector.broadcast %cst_549 : f32 to vector<8x128xf32>
    %1435 = arith.mulf %1434, %1384 : vector<8x128xf32>
    %1436 = arith.addf %1262, %1435 : vector<8x128xf32>
    %cst_550 = arith.constant 6.250000e-02 : f32
    %1437 = vector.broadcast %cst_550 : f32 to vector<8x128xf32>
    %1438 = arith.mulf %1437, %1390 : vector<8x128xf32>
    %1439 = arith.addf %1265, %1438 : vector<8x128xf32>
    %cst_551 = arith.constant 6.250000e-02 : f32
    %1440 = vector.broadcast %cst_551 : f32 to vector<8x128xf32>
    %1441 = arith.mulf %1440, %1398 : vector<8x128xf32>
    %1442 = arith.addf %1268, %1441 : vector<8x128xf32>
    %cst_552 = arith.constant 6.250000e-02 : f32
    %1443 = vector.broadcast %cst_552 : f32 to vector<8x128xf32>
    %1444 = arith.mulf %1443, %1406 : vector<8x128xf32>
    %1445 = arith.addf %1271, %1444 : vector<8x128xf32>
    %c7_i32 = arith.constant 7 : i32
    %1446 = arith.addf %1409, %1412 : vector<8x128xf32>
    %1447 = arith.subf %1446, %25 : vector<8x128xf32>
    %1448 = arith.mulf %21, %1447 : vector<8x128xf32>
    %1449 = math.tanh %1448 : vector<8x128xf32>
    %1450 = arith.subf %1446, %27 : vector<8x128xf32>
    %1451 = arith.mulf %23, %1450 : vector<8x128xf32>
    %1452 = math.tanh %1451 : vector<8x128xf32>
    %1453 = arith.subf %1449, %1452 : vector<8x128xf32>
    %cst_553 = arith.constant 2.000000e+00 : f32
    %1454 = vector.broadcast %cst_553 : f32 to vector<8x128xf32>
    %1455 = arith.addf %1453, %1454 : vector<8x128xf32>
    %cst_554 = arith.constant 1.900000e-02 : f32
    %1456 = vector.broadcast %cst_554 : f32 to vector<8x128xf32>
    %1457 = arith.mulf %1456, %1455 : vector<8x128xf32>
    %cst_555 = arith.constant 0.00779999978 : f32
    %1458 = vector.broadcast %cst_555 : f32 to vector<8x128xf32>
    %1459 = arith.addf %1458, %1457 : vector<8x128xf32>
    %cst_556 = arith.constant 4.580000e-02 : f32
    %1460 = vector.broadcast %cst_556 : f32 to vector<8x128xf32>
    %1461 = arith.select %15, %1459, %1460 : vector<8x128xi1>, vector<8x128xf32>
    %cst_557 = arith.constant -4.580000e-02 : f32
    %1462 = vector.broadcast %cst_557 : f32 to vector<8x128xf32>
    %1463 = arith.mulf %1462, %1409 : vector<8x128xf32>
    %1464 = arith.addf %1463, %11 : vector<8x128xf32>
    %cst_558 = arith.constant 4.580000e-02 : f32
    %1465 = vector.broadcast %cst_558 : f32 to vector<8x128xf32>
    %1466 = arith.mulf %1465, %1409 : vector<8x128xf32>
    %1467 = arith.mulf %1412, %1461 : vector<8x128xf32>
    %1468 = arith.subf %1466, %1467 : vector<8x128xf32>
    %1469 = arith.mulf %1461, %1412 : vector<8x128xf32>
    %cst_559 = arith.constant 5.680000e-02 : f32
    %1470 = vector.broadcast %cst_559 : f32 to vector<8x128xf32>
    %1471 = arith.mulf %1470, %1415 : vector<8x128xf32>
    %1472 = arith.subf %1469, %1471 : vector<8x128xf32>
    %cst_560 = arith.constant 7.44104793E-4 : f32
    %1473 = vector.broadcast %cst_560 : f32 to vector<8x128xf32>
    %1474 = arith.mulf %1473, %1415 : vector<8x128xf32>
    %cst_561 = arith.constant 6.490000e-03 : f32
    %1475 = vector.broadcast %cst_561 : f32 to vector<8x128xf32>
    %1476 = arith.mulf %1475, %1418 : vector<8x128xf32>
    %cst_562 = arith.constant 4.730000e+00 : f32
    %1477 = vector.broadcast %cst_562 : f32 to vector<8x128xf32>
    %1478 = arith.subf %1477, %1476 : vector<8x128xf32>
    %cst_563 = arith.constant 9.510000e-03 : f32
    %1479 = vector.broadcast %cst_563 : f32 to vector<8x128xf32>
    %1480 = arith.mulf %1479, %1433 : vector<8x128xf32>
    %1481 = arith.subf %1478, %1480 : vector<8x128xf32>
    %cst_564 = arith.constant 3.390000e+02 : f32
    %1482 = vector.broadcast %cst_564 : f32 to vector<8x128xf32>
    %1483 = arith.cmpf ogt, %1418, %1482 : vector<8x128xf32>
    %cst_565 = arith.constant 3.390000e+02 : f32
    %1484 = vector.broadcast %cst_565 : f32 to vector<8x128xf32>
    %1485 = arith.subf %1418, %1484 : vector<8x128xf32>
    %cst_566 = arith.constant 5.000000e-04 : f32
    %1486 = vector.broadcast %cst_566 : f32 to vector<8x128xf32>
    %1487 = arith.mulf %1486, %1485 : vector<8x128xf32>
    %1488 = arith.select %1483, %1487, %9 : vector<8x128xi1>, vector<8x128xf32>
    %1489 = arith.maximumf %1481, %9 : vector<8x128xf32>
    %1490 = arith.addf %1489, %1474 : vector<8x128xf32>
    %cst_567 = arith.constant 1.000000e+00 : f32
    %1491 = vector.broadcast %cst_567 : f32 to vector<8x128xf32>
    %1492 = arith.subf %1490, %1491 : vector<8x128xf32>
    %1493 = arith.subf %1492, %1488 : vector<8x128xf32>
    %cst_568 = arith.constant 6.560000e-02 : f32
    %1494 = vector.broadcast %cst_568 : f32 to vector<8x128xf32>
    %1495 = arith.mulf %1494, %1418 : vector<8x128xf32>
    %1496 = arith.subf %1493, %1495 : vector<8x128xf32>
    %cst_569 = arith.constant 7.180000e-02 : f32
    %1497 = vector.broadcast %cst_569 : f32 to vector<8x128xf32>
    %1498 = arith.mulf %1497, %1421 : vector<8x128xf32>
    %1499 = arith.addf %1496, %1498 : vector<8x128xf32>
    %cst_570 = arith.constant 0.000000e+00 : f32
    %1500 = vector.broadcast %cst_570 : f32 to vector<8x128xf32>
    %1501 = arith.cmpf oge, %1418, %1500 : vector<8x128xf32>
    %1502 = arith.select %1501, %1499, %9 : vector<8x128xi1>, vector<8x128xf32>
    %cst_571 = arith.constant 7.370000e-02 : f32
    %1503 = vector.broadcast %cst_571 : f32 to vector<8x128xf32>
    %1504 = arith.mulf %1503, %1427 : vector<8x128xf32>
    %cst_572 = arith.constant 3.250000e+00 : f32
    %1505 = vector.broadcast %cst_572 : f32 to vector<8x128xf32>
    %1506 = arith.addf %1505, %1504 : vector<8x128xf32>
    %1507 = arith.mulf %1506, %1421 : vector<8x128xf32>
    %cst_573 = arith.constant 2.608900e+02 : f32
    %1508 = vector.broadcast %cst_573 : f32 to vector<8x128xf32>
    %1509 = arith.addf %1508, %1421 : vector<8x128xf32>
    %1510 = arith.divf %1507, %1509 : vector<8x128xf32>
    %cst_574 = arith.constant 0.000000e+00 : f32
    %1511 = vector.broadcast %cst_574 : f32 to vector<8x128xf32>
    %1512 = arith.subf %1511, %1510 : vector<8x128xf32>
    %cst_575 = arith.constant 6.560000e-02 : f32
    %1513 = vector.broadcast %cst_575 : f32 to vector<8x128xf32>
    %1514 = arith.mulf %1513, %1418 : vector<8x128xf32>
    %1515 = arith.addf %1512, %1514 : vector<8x128xf32>
    %cst_576 = arith.constant 7.180000e-02 : f32
    %1516 = vector.broadcast %cst_576 : f32 to vector<8x128xf32>
    %1517 = arith.mulf %1516, %1421 : vector<8x128xf32>
    %1518 = arith.subf %1515, %1517 : vector<8x128xf32>
    %cst_577 = arith.constant 0.000000e+00 : f32
    %1519 = vector.broadcast %cst_577 : f32 to vector<8x128xf32>
    %1520 = arith.cmpf oge, %1421, %1519 : vector<8x128xf32>
    %1521 = arith.select %1520, %1518, %9 : vector<8x128xi1>, vector<8x128xf32>
    %cst_578 = arith.constant -5.500000e-01 : f32
    %1522 = vector.broadcast %cst_578 : f32 to vector<8x128xf32>
    %1523 = arith.mulf %1522, %1424 : vector<8x128xf32>
    %cst_579 = arith.constant 1.450000e-01 : f32
    %1524 = vector.broadcast %cst_579 : f32 to vector<8x128xf32>
    %1525 = arith.mulf %1524, %1436 : vector<8x128xf32>
    %1526 = arith.addf %1523, %1525 : vector<8x128xf32>
    %cst_580 = arith.constant 1.800000e-03 : f32
    %1527 = vector.broadcast %cst_580 : f32 to vector<8x128xf32>
    %1528 = arith.mulf %1527, %1439 : vector<8x128xf32>
    %1529 = arith.addf %1526, %1528 : vector<8x128xf32>
    %cst_581 = arith.constant 1.820000e-02 : f32
    %1530 = vector.broadcast %cst_581 : f32 to vector<8x128xf32>
    %1531 = arith.mulf %1530, %1442 : vector<8x128xf32>
    %1532 = arith.addf %1529, %1531 : vector<8x128xf32>
    %cst_582 = arith.constant 20.4918041 : f32
    %1533 = vector.broadcast %cst_582 : f32 to vector<8x128xf32>
    %1534 = arith.mulf %1424, %1533 : vector<8x128xf32>
    %cst_583 = arith.constant 0.000000e+00 : f32
    %1535 = vector.broadcast %cst_583 : f32 to vector<8x128xf32>
    %1536 = arith.cmpf oge, %1424, %1535 : vector<8x128xf32>
    %1537 = arith.select %1536, %1532, %9 : vector<8x128xi1>, vector<8x128xf32>
    %cst_584 = arith.constant -2.750000e-02 : f32
    %1538 = vector.broadcast %cst_584 : f32 to vector<8x128xf32>
    %1539 = arith.mulf %1538, %1427 : vector<8x128xf32>
    %cst_585 = arith.constant 1.002500e+02 : f32
    %1540 = vector.broadcast %cst_585 : f32 to vector<8x128xf32>
    %1541 = arith.subf %1534, %1540 : vector<8x128xf32>
    %cst_586 = arith.constant 2.750000e-02 : f32
    %1542 = vector.broadcast %cst_586 : f32 to vector<8x128xf32>
    %1543 = arith.mulf %1542, %1541 : vector<8x128xf32>
    %1544 = arith.addf %1539, %1543 : vector<8x128xf32>
    %1545 = arith.subf %1430, %1534 : vector<8x128xf32>
    %cst_587 = arith.constant -7.600000e-03 : f32
    %1546 = vector.broadcast %cst_587 : f32 to vector<8x128xf32>
    %1547 = arith.mulf %1546, %1545 : vector<8x128xf32>
    %1548 = arith.subf %1433, %1430 : vector<8x128xf32>
    %cst_588 = arith.constant -7.600000e-03 : f32
    %1549 = vector.broadcast %cst_588 : f32 to vector<8x128xf32>
    %1550 = arith.mulf %1549, %1548 : vector<8x128xf32>
    %cst_589 = arith.constant -3.650000e-01 : f32
    %1551 = vector.broadcast %cst_589 : f32 to vector<8x128xf32>
    %1552 = arith.mulf %1551, %1436 : vector<8x128xf32>
    %cst_590 = arith.constant 3.930000e-01 : f32
    %1553 = vector.broadcast %cst_590 : f32 to vector<8x128xf32>
    %1554 = arith.mulf %1553, %1424 : vector<8x128xf32>
    %1555 = arith.addf %1552, %1554 : vector<8x128xf32>
    %cst_591 = arith.constant 0.000000e+00 : f32
    %1556 = vector.broadcast %cst_591 : f32 to vector<8x128xf32>
    %1557 = arith.cmpf oge, %1436, %1556 : vector<8x128xf32>
    %1558 = arith.select %1557, %1555, %9 : vector<8x128xi1>, vector<8x128xf32>
    %cst_592 = arith.constant 1.820000e-02 : f32
    %1559 = vector.broadcast %cst_592 : f32 to vector<8x128xf32>
    %1560 = arith.mulf %1559, %1439 : vector<8x128xf32>
    %1561 = arith.subf %13, %1560 : vector<8x128xf32>
    %cst_593 = arith.constant 0.000000e+00 : f32
    %1562 = vector.broadcast %cst_593 : f32 to vector<8x128xf32>
    %1563 = arith.cmpf oge, %1439, %1562 : vector<8x128xf32>
    %1564 = arith.select %1563, %1561, %9 : vector<8x128xi1>, vector<8x128xf32>
    %cst_594 = arith.constant 1.640000e-02 : f32
    %1565 = vector.broadcast %cst_594 : f32 to vector<8x128xf32>
    %1566 = arith.mulf %1565, %1439 : vector<8x128xf32>
    %cst_595 = arith.constant 1.820000e-02 : f32
    %1567 = vector.broadcast %cst_595 : f32 to vector<8x128xf32>
    %1568 = arith.mulf %1567, %1442 : vector<8x128xf32>
    %1569 = arith.subf %1566, %1568 : vector<8x128xf32>
    %cst_596 = arith.constant 0.000000e+00 : f32
    %1570 = vector.broadcast %cst_596 : f32 to vector<8x128xf32>
    %1571 = arith.cmpf oge, %1442, %1570 : vector<8x128xf32>
    %1572 = arith.select %1571, %1569, %9 : vector<8x128xi1>, vector<8x128xf32>
    %cst_597 = arith.constant -5.690000e-02 : f32
    %1573 = vector.broadcast %cst_597 : f32 to vector<8x128xf32>
    %1574 = arith.mulf %1573, %1445 : vector<8x128xf32>
    %cst_598 = arith.constant 5.690000e-02 : f32
    %1575 = vector.broadcast %cst_598 : f32 to vector<8x128xf32>
    %1576 = arith.mulf %1575, %1418 : vector<8x128xf32>
    %1577 = arith.addf %1574, %1576 : vector<8x128xf32>
    %cst_599 = arith.constant 0.000000e+00 : f32
    %1578 = vector.broadcast %cst_599 : f32 to vector<8x128xf32>
    %1579 = arith.cmpf oge, %1445, %1578 : vector<8x128xf32>
    %1580 = arith.select %1579, %1577, %9 : vector<8x128xi1>, vector<8x128xf32>
    %cst_600 = arith.constant 6.250000e-02 : f32
    %1581 = vector.broadcast %cst_600 : f32 to vector<8x128xf32>
    %1582 = arith.mulf %1581, %1464 : vector<8x128xf32>
    %1583 = arith.addf %1409, %1582 : vector<8x128xf32>
    %cst_601 = arith.constant 6.250000e-02 : f32
    %1584 = vector.broadcast %cst_601 : f32 to vector<8x128xf32>
    %1585 = arith.mulf %1584, %1468 : vector<8x128xf32>
    %1586 = arith.addf %1412, %1585 : vector<8x128xf32>
    %cst_602 = arith.constant 6.250000e-02 : f32
    %1587 = vector.broadcast %cst_602 : f32 to vector<8x128xf32>
    %1588 = arith.mulf %1587, %1472 : vector<8x128xf32>
    %1589 = arith.addf %1415, %1588 : vector<8x128xf32>
    %cst_603 = arith.constant 6.250000e-02 : f32
    %1590 = vector.broadcast %cst_603 : f32 to vector<8x128xf32>
    %1591 = arith.mulf %1590, %1502 : vector<8x128xf32>
    %1592 = arith.addf %1418, %1591 : vector<8x128xf32>
    %cst_604 = arith.constant 6.250000e-02 : f32
    %1593 = vector.broadcast %cst_604 : f32 to vector<8x128xf32>
    %1594 = arith.mulf %1593, %1521 : vector<8x128xf32>
    %1595 = arith.addf %1421, %1594 : vector<8x128xf32>
    %cst_605 = arith.constant 6.250000e-02 : f32
    %1596 = vector.broadcast %cst_605 : f32 to vector<8x128xf32>
    %1597 = arith.mulf %1596, %1537 : vector<8x128xf32>
    %1598 = arith.addf %1424, %1597 : vector<8x128xf32>
    %cst_606 = arith.constant 6.250000e-02 : f32
    %1599 = vector.broadcast %cst_606 : f32 to vector<8x128xf32>
    %1600 = arith.mulf %1599, %1544 : vector<8x128xf32>
    %1601 = arith.addf %1427, %1600 : vector<8x128xf32>
    %cst_607 = arith.constant 6.250000e-02 : f32
    %1602 = vector.broadcast %cst_607 : f32 to vector<8x128xf32>
    %1603 = arith.mulf %1602, %1547 : vector<8x128xf32>
    %1604 = arith.addf %1430, %1603 : vector<8x128xf32>
    %cst_608 = arith.constant 6.250000e-02 : f32
    %1605 = vector.broadcast %cst_608 : f32 to vector<8x128xf32>
    %1606 = arith.mulf %1605, %1550 : vector<8x128xf32>
    %1607 = arith.addf %1433, %1606 : vector<8x128xf32>
    %cst_609 = arith.constant 6.250000e-02 : f32
    %1608 = vector.broadcast %cst_609 : f32 to vector<8x128xf32>
    %1609 = arith.mulf %1608, %1558 : vector<8x128xf32>
    %1610 = arith.addf %1436, %1609 : vector<8x128xf32>
    %cst_610 = arith.constant 6.250000e-02 : f32
    %1611 = vector.broadcast %cst_610 : f32 to vector<8x128xf32>
    %1612 = arith.mulf %1611, %1564 : vector<8x128xf32>
    %1613 = arith.addf %1439, %1612 : vector<8x128xf32>
    %cst_611 = arith.constant 6.250000e-02 : f32
    %1614 = vector.broadcast %cst_611 : f32 to vector<8x128xf32>
    %1615 = arith.mulf %1614, %1572 : vector<8x128xf32>
    %1616 = arith.addf %1442, %1615 : vector<8x128xf32>
    %cst_612 = arith.constant 6.250000e-02 : f32
    %1617 = vector.broadcast %cst_612 : f32 to vector<8x128xf32>
    %1618 = arith.mulf %1617, %1580 : vector<8x128xf32>
    %1619 = arith.addf %1445, %1618 : vector<8x128xf32>
    %c8_i32 = arith.constant 8 : i32
    %1620 = arith.addf %1583, %1586 : vector<8x128xf32>
    %1621 = arith.subf %1620, %25 : vector<8x128xf32>
    %1622 = arith.mulf %21, %1621 : vector<8x128xf32>
    %1623 = math.tanh %1622 : vector<8x128xf32>
    %1624 = arith.subf %1620, %27 : vector<8x128xf32>
    %1625 = arith.mulf %23, %1624 : vector<8x128xf32>
    %1626 = math.tanh %1625 : vector<8x128xf32>
    %1627 = arith.subf %1623, %1626 : vector<8x128xf32>
    %cst_613 = arith.constant 2.000000e+00 : f32
    %1628 = vector.broadcast %cst_613 : f32 to vector<8x128xf32>
    %1629 = arith.addf %1627, %1628 : vector<8x128xf32>
    %cst_614 = arith.constant 1.900000e-02 : f32
    %1630 = vector.broadcast %cst_614 : f32 to vector<8x128xf32>
    %1631 = arith.mulf %1630, %1629 : vector<8x128xf32>
    %cst_615 = arith.constant 0.00779999978 : f32
    %1632 = vector.broadcast %cst_615 : f32 to vector<8x128xf32>
    %1633 = arith.addf %1632, %1631 : vector<8x128xf32>
    %cst_616 = arith.constant 4.580000e-02 : f32
    %1634 = vector.broadcast %cst_616 : f32 to vector<8x128xf32>
    %1635 = arith.select %15, %1633, %1634 : vector<8x128xi1>, vector<8x128xf32>
    %cst_617 = arith.constant -4.580000e-02 : f32
    %1636 = vector.broadcast %cst_617 : f32 to vector<8x128xf32>
    %1637 = arith.mulf %1636, %1583 : vector<8x128xf32>
    %1638 = arith.addf %1637, %11 : vector<8x128xf32>
    %cst_618 = arith.constant 4.580000e-02 : f32
    %1639 = vector.broadcast %cst_618 : f32 to vector<8x128xf32>
    %1640 = arith.mulf %1639, %1583 : vector<8x128xf32>
    %1641 = arith.mulf %1586, %1635 : vector<8x128xf32>
    %1642 = arith.subf %1640, %1641 : vector<8x128xf32>
    %1643 = arith.mulf %1635, %1586 : vector<8x128xf32>
    %cst_619 = arith.constant 5.680000e-02 : f32
    %1644 = vector.broadcast %cst_619 : f32 to vector<8x128xf32>
    %1645 = arith.mulf %1644, %1589 : vector<8x128xf32>
    %1646 = arith.subf %1643, %1645 : vector<8x128xf32>
    %cst_620 = arith.constant 7.44104793E-4 : f32
    %1647 = vector.broadcast %cst_620 : f32 to vector<8x128xf32>
    %1648 = arith.mulf %1647, %1589 : vector<8x128xf32>
    %cst_621 = arith.constant 6.490000e-03 : f32
    %1649 = vector.broadcast %cst_621 : f32 to vector<8x128xf32>
    %1650 = arith.mulf %1649, %1592 : vector<8x128xf32>
    %cst_622 = arith.constant 4.730000e+00 : f32
    %1651 = vector.broadcast %cst_622 : f32 to vector<8x128xf32>
    %1652 = arith.subf %1651, %1650 : vector<8x128xf32>
    %cst_623 = arith.constant 9.510000e-03 : f32
    %1653 = vector.broadcast %cst_623 : f32 to vector<8x128xf32>
    %1654 = arith.mulf %1653, %1607 : vector<8x128xf32>
    %1655 = arith.subf %1652, %1654 : vector<8x128xf32>
    %cst_624 = arith.constant 3.390000e+02 : f32
    %1656 = vector.broadcast %cst_624 : f32 to vector<8x128xf32>
    %1657 = arith.cmpf ogt, %1592, %1656 : vector<8x128xf32>
    %cst_625 = arith.constant 3.390000e+02 : f32
    %1658 = vector.broadcast %cst_625 : f32 to vector<8x128xf32>
    %1659 = arith.subf %1592, %1658 : vector<8x128xf32>
    %cst_626 = arith.constant 5.000000e-04 : f32
    %1660 = vector.broadcast %cst_626 : f32 to vector<8x128xf32>
    %1661 = arith.mulf %1660, %1659 : vector<8x128xf32>
    %1662 = arith.select %1657, %1661, %9 : vector<8x128xi1>, vector<8x128xf32>
    %1663 = arith.maximumf %1655, %9 : vector<8x128xf32>
    %1664 = arith.addf %1663, %1648 : vector<8x128xf32>
    %cst_627 = arith.constant 1.000000e+00 : f32
    %1665 = vector.broadcast %cst_627 : f32 to vector<8x128xf32>
    %1666 = arith.subf %1664, %1665 : vector<8x128xf32>
    %1667 = arith.subf %1666, %1662 : vector<8x128xf32>
    %cst_628 = arith.constant 6.560000e-02 : f32
    %1668 = vector.broadcast %cst_628 : f32 to vector<8x128xf32>
    %1669 = arith.mulf %1668, %1592 : vector<8x128xf32>
    %1670 = arith.subf %1667, %1669 : vector<8x128xf32>
    %cst_629 = arith.constant 7.180000e-02 : f32
    %1671 = vector.broadcast %cst_629 : f32 to vector<8x128xf32>
    %1672 = arith.mulf %1671, %1595 : vector<8x128xf32>
    %1673 = arith.addf %1670, %1672 : vector<8x128xf32>
    %cst_630 = arith.constant 0.000000e+00 : f32
    %1674 = vector.broadcast %cst_630 : f32 to vector<8x128xf32>
    %1675 = arith.cmpf oge, %1592, %1674 : vector<8x128xf32>
    %1676 = arith.select %1675, %1673, %9 : vector<8x128xi1>, vector<8x128xf32>
    %cst_631 = arith.constant 7.370000e-02 : f32
    %1677 = vector.broadcast %cst_631 : f32 to vector<8x128xf32>
    %1678 = arith.mulf %1677, %1601 : vector<8x128xf32>
    %cst_632 = arith.constant 3.250000e+00 : f32
    %1679 = vector.broadcast %cst_632 : f32 to vector<8x128xf32>
    %1680 = arith.addf %1679, %1678 : vector<8x128xf32>
    %1681 = arith.mulf %1680, %1595 : vector<8x128xf32>
    %cst_633 = arith.constant 2.608900e+02 : f32
    %1682 = vector.broadcast %cst_633 : f32 to vector<8x128xf32>
    %1683 = arith.addf %1682, %1595 : vector<8x128xf32>
    %1684 = arith.divf %1681, %1683 : vector<8x128xf32>
    %cst_634 = arith.constant 0.000000e+00 : f32
    %1685 = vector.broadcast %cst_634 : f32 to vector<8x128xf32>
    %1686 = arith.subf %1685, %1684 : vector<8x128xf32>
    %cst_635 = arith.constant 6.560000e-02 : f32
    %1687 = vector.broadcast %cst_635 : f32 to vector<8x128xf32>
    %1688 = arith.mulf %1687, %1592 : vector<8x128xf32>
    %1689 = arith.addf %1686, %1688 : vector<8x128xf32>
    %cst_636 = arith.constant 7.180000e-02 : f32
    %1690 = vector.broadcast %cst_636 : f32 to vector<8x128xf32>
    %1691 = arith.mulf %1690, %1595 : vector<8x128xf32>
    %1692 = arith.subf %1689, %1691 : vector<8x128xf32>
    %cst_637 = arith.constant 0.000000e+00 : f32
    %1693 = vector.broadcast %cst_637 : f32 to vector<8x128xf32>
    %1694 = arith.cmpf oge, %1595, %1693 : vector<8x128xf32>
    %1695 = arith.select %1694, %1692, %9 : vector<8x128xi1>, vector<8x128xf32>
    %cst_638 = arith.constant -5.500000e-01 : f32
    %1696 = vector.broadcast %cst_638 : f32 to vector<8x128xf32>
    %1697 = arith.mulf %1696, %1598 : vector<8x128xf32>
    %cst_639 = arith.constant 1.450000e-01 : f32
    %1698 = vector.broadcast %cst_639 : f32 to vector<8x128xf32>
    %1699 = arith.mulf %1698, %1610 : vector<8x128xf32>
    %1700 = arith.addf %1697, %1699 : vector<8x128xf32>
    %cst_640 = arith.constant 1.800000e-03 : f32
    %1701 = vector.broadcast %cst_640 : f32 to vector<8x128xf32>
    %1702 = arith.mulf %1701, %1613 : vector<8x128xf32>
    %1703 = arith.addf %1700, %1702 : vector<8x128xf32>
    %cst_641 = arith.constant 1.820000e-02 : f32
    %1704 = vector.broadcast %cst_641 : f32 to vector<8x128xf32>
    %1705 = arith.mulf %1704, %1616 : vector<8x128xf32>
    %1706 = arith.addf %1703, %1705 : vector<8x128xf32>
    %cst_642 = arith.constant 20.4918041 : f32
    %1707 = vector.broadcast %cst_642 : f32 to vector<8x128xf32>
    %1708 = arith.mulf %1598, %1707 : vector<8x128xf32>
    %cst_643 = arith.constant 0.000000e+00 : f32
    %1709 = vector.broadcast %cst_643 : f32 to vector<8x128xf32>
    %1710 = arith.cmpf oge, %1598, %1709 : vector<8x128xf32>
    %1711 = arith.select %1710, %1706, %9 : vector<8x128xi1>, vector<8x128xf32>
    %cst_644 = arith.constant -2.750000e-02 : f32
    %1712 = vector.broadcast %cst_644 : f32 to vector<8x128xf32>
    %1713 = arith.mulf %1712, %1601 : vector<8x128xf32>
    %cst_645 = arith.constant 1.002500e+02 : f32
    %1714 = vector.broadcast %cst_645 : f32 to vector<8x128xf32>
    %1715 = arith.subf %1708, %1714 : vector<8x128xf32>
    %cst_646 = arith.constant 2.750000e-02 : f32
    %1716 = vector.broadcast %cst_646 : f32 to vector<8x128xf32>
    %1717 = arith.mulf %1716, %1715 : vector<8x128xf32>
    %1718 = arith.addf %1713, %1717 : vector<8x128xf32>
    %1719 = arith.subf %1604, %1708 : vector<8x128xf32>
    %cst_647 = arith.constant -7.600000e-03 : f32
    %1720 = vector.broadcast %cst_647 : f32 to vector<8x128xf32>
    %1721 = arith.mulf %1720, %1719 : vector<8x128xf32>
    %1722 = arith.subf %1607, %1604 : vector<8x128xf32>
    %cst_648 = arith.constant -7.600000e-03 : f32
    %1723 = vector.broadcast %cst_648 : f32 to vector<8x128xf32>
    %1724 = arith.mulf %1723, %1722 : vector<8x128xf32>
    %cst_649 = arith.constant -3.650000e-01 : f32
    %1725 = vector.broadcast %cst_649 : f32 to vector<8x128xf32>
    %1726 = arith.mulf %1725, %1610 : vector<8x128xf32>
    %cst_650 = arith.constant 3.930000e-01 : f32
    %1727 = vector.broadcast %cst_650 : f32 to vector<8x128xf32>
    %1728 = arith.mulf %1727, %1598 : vector<8x128xf32>
    %1729 = arith.addf %1726, %1728 : vector<8x128xf32>
    %cst_651 = arith.constant 0.000000e+00 : f32
    %1730 = vector.broadcast %cst_651 : f32 to vector<8x128xf32>
    %1731 = arith.cmpf oge, %1610, %1730 : vector<8x128xf32>
    %1732 = arith.select %1731, %1729, %9 : vector<8x128xi1>, vector<8x128xf32>
    %cst_652 = arith.constant 1.820000e-02 : f32
    %1733 = vector.broadcast %cst_652 : f32 to vector<8x128xf32>
    %1734 = arith.mulf %1733, %1613 : vector<8x128xf32>
    %1735 = arith.subf %13, %1734 : vector<8x128xf32>
    %cst_653 = arith.constant 0.000000e+00 : f32
    %1736 = vector.broadcast %cst_653 : f32 to vector<8x128xf32>
    %1737 = arith.cmpf oge, %1613, %1736 : vector<8x128xf32>
    %1738 = arith.select %1737, %1735, %9 : vector<8x128xi1>, vector<8x128xf32>
    %cst_654 = arith.constant 1.640000e-02 : f32
    %1739 = vector.broadcast %cst_654 : f32 to vector<8x128xf32>
    %1740 = arith.mulf %1739, %1613 : vector<8x128xf32>
    %cst_655 = arith.constant 1.820000e-02 : f32
    %1741 = vector.broadcast %cst_655 : f32 to vector<8x128xf32>
    %1742 = arith.mulf %1741, %1616 : vector<8x128xf32>
    %1743 = arith.subf %1740, %1742 : vector<8x128xf32>
    %cst_656 = arith.constant 0.000000e+00 : f32
    %1744 = vector.broadcast %cst_656 : f32 to vector<8x128xf32>
    %1745 = arith.cmpf oge, %1616, %1744 : vector<8x128xf32>
    %1746 = arith.select %1745, %1743, %9 : vector<8x128xi1>, vector<8x128xf32>
    %cst_657 = arith.constant -5.690000e-02 : f32
    %1747 = vector.broadcast %cst_657 : f32 to vector<8x128xf32>
    %1748 = arith.mulf %1747, %1619 : vector<8x128xf32>
    %cst_658 = arith.constant 5.690000e-02 : f32
    %1749 = vector.broadcast %cst_658 : f32 to vector<8x128xf32>
    %1750 = arith.mulf %1749, %1592 : vector<8x128xf32>
    %1751 = arith.addf %1748, %1750 : vector<8x128xf32>
    %cst_659 = arith.constant 0.000000e+00 : f32
    %1752 = vector.broadcast %cst_659 : f32 to vector<8x128xf32>
    %1753 = arith.cmpf oge, %1619, %1752 : vector<8x128xf32>
    %1754 = arith.select %1753, %1751, %9 : vector<8x128xi1>, vector<8x128xf32>
    %cst_660 = arith.constant 6.250000e-02 : f32
    %1755 = vector.broadcast %cst_660 : f32 to vector<8x128xf32>
    %1756 = arith.mulf %1755, %1638 : vector<8x128xf32>
    %1757 = arith.addf %1583, %1756 : vector<8x128xf32>
    %cst_661 = arith.constant 6.250000e-02 : f32
    %1758 = vector.broadcast %cst_661 : f32 to vector<8x128xf32>
    %1759 = arith.mulf %1758, %1642 : vector<8x128xf32>
    %1760 = arith.addf %1586, %1759 : vector<8x128xf32>
    %cst_662 = arith.constant 6.250000e-02 : f32
    %1761 = vector.broadcast %cst_662 : f32 to vector<8x128xf32>
    %1762 = arith.mulf %1761, %1646 : vector<8x128xf32>
    %1763 = arith.addf %1589, %1762 : vector<8x128xf32>
    %cst_663 = arith.constant 6.250000e-02 : f32
    %1764 = vector.broadcast %cst_663 : f32 to vector<8x128xf32>
    %1765 = arith.mulf %1764, %1676 : vector<8x128xf32>
    %1766 = arith.addf %1592, %1765 : vector<8x128xf32>
    %cst_664 = arith.constant 6.250000e-02 : f32
    %1767 = vector.broadcast %cst_664 : f32 to vector<8x128xf32>
    %1768 = arith.mulf %1767, %1695 : vector<8x128xf32>
    %1769 = arith.addf %1595, %1768 : vector<8x128xf32>
    %cst_665 = arith.constant 6.250000e-02 : f32
    %1770 = vector.broadcast %cst_665 : f32 to vector<8x128xf32>
    %1771 = arith.mulf %1770, %1711 : vector<8x128xf32>
    %1772 = arith.addf %1598, %1771 : vector<8x128xf32>
    %cst_666 = arith.constant 6.250000e-02 : f32
    %1773 = vector.broadcast %cst_666 : f32 to vector<8x128xf32>
    %1774 = arith.mulf %1773, %1718 : vector<8x128xf32>
    %1775 = arith.addf %1601, %1774 : vector<8x128xf32>
    %cst_667 = arith.constant 6.250000e-02 : f32
    %1776 = vector.broadcast %cst_667 : f32 to vector<8x128xf32>
    %1777 = arith.mulf %1776, %1721 : vector<8x128xf32>
    %1778 = arith.addf %1604, %1777 : vector<8x128xf32>
    %cst_668 = arith.constant 6.250000e-02 : f32
    %1779 = vector.broadcast %cst_668 : f32 to vector<8x128xf32>
    %1780 = arith.mulf %1779, %1724 : vector<8x128xf32>
    %1781 = arith.addf %1607, %1780 : vector<8x128xf32>
    %cst_669 = arith.constant 6.250000e-02 : f32
    %1782 = vector.broadcast %cst_669 : f32 to vector<8x128xf32>
    %1783 = arith.mulf %1782, %1732 : vector<8x128xf32>
    %1784 = arith.addf %1610, %1783 : vector<8x128xf32>
    %cst_670 = arith.constant 6.250000e-02 : f32
    %1785 = vector.broadcast %cst_670 : f32 to vector<8x128xf32>
    %1786 = arith.mulf %1785, %1738 : vector<8x128xf32>
    %1787 = arith.addf %1613, %1786 : vector<8x128xf32>
    %cst_671 = arith.constant 6.250000e-02 : f32
    %1788 = vector.broadcast %cst_671 : f32 to vector<8x128xf32>
    %1789 = arith.mulf %1788, %1746 : vector<8x128xf32>
    %1790 = arith.addf %1616, %1789 : vector<8x128xf32>
    %cst_672 = arith.constant 6.250000e-02 : f32
    %1791 = vector.broadcast %cst_672 : f32 to vector<8x128xf32>
    %1792 = arith.mulf %1791, %1754 : vector<8x128xf32>
    %1793 = arith.addf %1619, %1792 : vector<8x128xf32>
    %c9_i32 = arith.constant 9 : i32
    %1794 = arith.addf %1757, %1760 : vector<8x128xf32>
    %1795 = arith.subf %1794, %25 : vector<8x128xf32>
    %1796 = arith.mulf %21, %1795 : vector<8x128xf32>
    %1797 = math.tanh %1796 : vector<8x128xf32>
    %1798 = arith.subf %1794, %27 : vector<8x128xf32>
    %1799 = arith.mulf %23, %1798 : vector<8x128xf32>
    %1800 = math.tanh %1799 : vector<8x128xf32>
    %1801 = arith.subf %1797, %1800 : vector<8x128xf32>
    %cst_673 = arith.constant 2.000000e+00 : f32
    %1802 = vector.broadcast %cst_673 : f32 to vector<8x128xf32>
    %1803 = arith.addf %1801, %1802 : vector<8x128xf32>
    %cst_674 = arith.constant 1.900000e-02 : f32
    %1804 = vector.broadcast %cst_674 : f32 to vector<8x128xf32>
    %1805 = arith.mulf %1804, %1803 : vector<8x128xf32>
    %cst_675 = arith.constant 0.00779999978 : f32
    %1806 = vector.broadcast %cst_675 : f32 to vector<8x128xf32>
    %1807 = arith.addf %1806, %1805 : vector<8x128xf32>
    %cst_676 = arith.constant 4.580000e-02 : f32
    %1808 = vector.broadcast %cst_676 : f32 to vector<8x128xf32>
    %1809 = arith.select %15, %1807, %1808 : vector<8x128xi1>, vector<8x128xf32>
    %cst_677 = arith.constant -4.580000e-02 : f32
    %1810 = vector.broadcast %cst_677 : f32 to vector<8x128xf32>
    %1811 = arith.mulf %1810, %1757 : vector<8x128xf32>
    %1812 = arith.addf %1811, %11 : vector<8x128xf32>
    %cst_678 = arith.constant 4.580000e-02 : f32
    %1813 = vector.broadcast %cst_678 : f32 to vector<8x128xf32>
    %1814 = arith.mulf %1813, %1757 : vector<8x128xf32>
    %1815 = arith.mulf %1760, %1809 : vector<8x128xf32>
    %1816 = arith.subf %1814, %1815 : vector<8x128xf32>
    %1817 = arith.mulf %1809, %1760 : vector<8x128xf32>
    %cst_679 = arith.constant 5.680000e-02 : f32
    %1818 = vector.broadcast %cst_679 : f32 to vector<8x128xf32>
    %1819 = arith.mulf %1818, %1763 : vector<8x128xf32>
    %1820 = arith.subf %1817, %1819 : vector<8x128xf32>
    %cst_680 = arith.constant 7.44104793E-4 : f32
    %1821 = vector.broadcast %cst_680 : f32 to vector<8x128xf32>
    %1822 = arith.mulf %1821, %1763 : vector<8x128xf32>
    %cst_681 = arith.constant 6.490000e-03 : f32
    %1823 = vector.broadcast %cst_681 : f32 to vector<8x128xf32>
    %1824 = arith.mulf %1823, %1766 : vector<8x128xf32>
    %cst_682 = arith.constant 4.730000e+00 : f32
    %1825 = vector.broadcast %cst_682 : f32 to vector<8x128xf32>
    %1826 = arith.subf %1825, %1824 : vector<8x128xf32>
    %cst_683 = arith.constant 9.510000e-03 : f32
    %1827 = vector.broadcast %cst_683 : f32 to vector<8x128xf32>
    %1828 = arith.mulf %1827, %1781 : vector<8x128xf32>
    %1829 = arith.subf %1826, %1828 : vector<8x128xf32>
    %cst_684 = arith.constant 3.390000e+02 : f32
    %1830 = vector.broadcast %cst_684 : f32 to vector<8x128xf32>
    %1831 = arith.cmpf ogt, %1766, %1830 : vector<8x128xf32>
    %cst_685 = arith.constant 3.390000e+02 : f32
    %1832 = vector.broadcast %cst_685 : f32 to vector<8x128xf32>
    %1833 = arith.subf %1766, %1832 : vector<8x128xf32>
    %cst_686 = arith.constant 5.000000e-04 : f32
    %1834 = vector.broadcast %cst_686 : f32 to vector<8x128xf32>
    %1835 = arith.mulf %1834, %1833 : vector<8x128xf32>
    %1836 = arith.select %1831, %1835, %9 : vector<8x128xi1>, vector<8x128xf32>
    %1837 = arith.maximumf %1829, %9 : vector<8x128xf32>
    %1838 = arith.addf %1837, %1822 : vector<8x128xf32>
    %cst_687 = arith.constant 1.000000e+00 : f32
    %1839 = vector.broadcast %cst_687 : f32 to vector<8x128xf32>
    %1840 = arith.subf %1838, %1839 : vector<8x128xf32>
    %1841 = arith.subf %1840, %1836 : vector<8x128xf32>
    %cst_688 = arith.constant 6.560000e-02 : f32
    %1842 = vector.broadcast %cst_688 : f32 to vector<8x128xf32>
    %1843 = arith.mulf %1842, %1766 : vector<8x128xf32>
    %1844 = arith.subf %1841, %1843 : vector<8x128xf32>
    %cst_689 = arith.constant 7.180000e-02 : f32
    %1845 = vector.broadcast %cst_689 : f32 to vector<8x128xf32>
    %1846 = arith.mulf %1845, %1769 : vector<8x128xf32>
    %1847 = arith.addf %1844, %1846 : vector<8x128xf32>
    %cst_690 = arith.constant 0.000000e+00 : f32
    %1848 = vector.broadcast %cst_690 : f32 to vector<8x128xf32>
    %1849 = arith.cmpf oge, %1766, %1848 : vector<8x128xf32>
    %1850 = arith.select %1849, %1847, %9 : vector<8x128xi1>, vector<8x128xf32>
    %cst_691 = arith.constant 7.370000e-02 : f32
    %1851 = vector.broadcast %cst_691 : f32 to vector<8x128xf32>
    %1852 = arith.mulf %1851, %1775 : vector<8x128xf32>
    %cst_692 = arith.constant 3.250000e+00 : f32
    %1853 = vector.broadcast %cst_692 : f32 to vector<8x128xf32>
    %1854 = arith.addf %1853, %1852 : vector<8x128xf32>
    %1855 = arith.mulf %1854, %1769 : vector<8x128xf32>
    %cst_693 = arith.constant 2.608900e+02 : f32
    %1856 = vector.broadcast %cst_693 : f32 to vector<8x128xf32>
    %1857 = arith.addf %1856, %1769 : vector<8x128xf32>
    %1858 = arith.divf %1855, %1857 : vector<8x128xf32>
    %cst_694 = arith.constant 0.000000e+00 : f32
    %1859 = vector.broadcast %cst_694 : f32 to vector<8x128xf32>
    %1860 = arith.subf %1859, %1858 : vector<8x128xf32>
    %cst_695 = arith.constant 6.560000e-02 : f32
    %1861 = vector.broadcast %cst_695 : f32 to vector<8x128xf32>
    %1862 = arith.mulf %1861, %1766 : vector<8x128xf32>
    %1863 = arith.addf %1860, %1862 : vector<8x128xf32>
    %cst_696 = arith.constant 7.180000e-02 : f32
    %1864 = vector.broadcast %cst_696 : f32 to vector<8x128xf32>
    %1865 = arith.mulf %1864, %1769 : vector<8x128xf32>
    %1866 = arith.subf %1863, %1865 : vector<8x128xf32>
    %cst_697 = arith.constant 0.000000e+00 : f32
    %1867 = vector.broadcast %cst_697 : f32 to vector<8x128xf32>
    %1868 = arith.cmpf oge, %1769, %1867 : vector<8x128xf32>
    %1869 = arith.select %1868, %1866, %9 : vector<8x128xi1>, vector<8x128xf32>
    %cst_698 = arith.constant -5.500000e-01 : f32
    %1870 = vector.broadcast %cst_698 : f32 to vector<8x128xf32>
    %1871 = arith.mulf %1870, %1772 : vector<8x128xf32>
    %cst_699 = arith.constant 1.450000e-01 : f32
    %1872 = vector.broadcast %cst_699 : f32 to vector<8x128xf32>
    %1873 = arith.mulf %1872, %1784 : vector<8x128xf32>
    %1874 = arith.addf %1871, %1873 : vector<8x128xf32>
    %cst_700 = arith.constant 1.800000e-03 : f32
    %1875 = vector.broadcast %cst_700 : f32 to vector<8x128xf32>
    %1876 = arith.mulf %1875, %1787 : vector<8x128xf32>
    %1877 = arith.addf %1874, %1876 : vector<8x128xf32>
    %cst_701 = arith.constant 1.820000e-02 : f32
    %1878 = vector.broadcast %cst_701 : f32 to vector<8x128xf32>
    %1879 = arith.mulf %1878, %1790 : vector<8x128xf32>
    %1880 = arith.addf %1877, %1879 : vector<8x128xf32>
    %cst_702 = arith.constant 20.4918041 : f32
    %1881 = vector.broadcast %cst_702 : f32 to vector<8x128xf32>
    %1882 = arith.mulf %1772, %1881 : vector<8x128xf32>
    %cst_703 = arith.constant 0.000000e+00 : f32
    %1883 = vector.broadcast %cst_703 : f32 to vector<8x128xf32>
    %1884 = arith.cmpf oge, %1772, %1883 : vector<8x128xf32>
    %1885 = arith.select %1884, %1880, %9 : vector<8x128xi1>, vector<8x128xf32>
    %cst_704 = arith.constant -2.750000e-02 : f32
    %1886 = vector.broadcast %cst_704 : f32 to vector<8x128xf32>
    %1887 = arith.mulf %1886, %1775 : vector<8x128xf32>
    %cst_705 = arith.constant 1.002500e+02 : f32
    %1888 = vector.broadcast %cst_705 : f32 to vector<8x128xf32>
    %1889 = arith.subf %1882, %1888 : vector<8x128xf32>
    %cst_706 = arith.constant 2.750000e-02 : f32
    %1890 = vector.broadcast %cst_706 : f32 to vector<8x128xf32>
    %1891 = arith.mulf %1890, %1889 : vector<8x128xf32>
    %1892 = arith.addf %1887, %1891 : vector<8x128xf32>
    %1893 = arith.subf %1778, %1882 : vector<8x128xf32>
    %cst_707 = arith.constant -7.600000e-03 : f32
    %1894 = vector.broadcast %cst_707 : f32 to vector<8x128xf32>
    %1895 = arith.mulf %1894, %1893 : vector<8x128xf32>
    %1896 = arith.subf %1781, %1778 : vector<8x128xf32>
    %cst_708 = arith.constant -7.600000e-03 : f32
    %1897 = vector.broadcast %cst_708 : f32 to vector<8x128xf32>
    %1898 = arith.mulf %1897, %1896 : vector<8x128xf32>
    %cst_709 = arith.constant -3.650000e-01 : f32
    %1899 = vector.broadcast %cst_709 : f32 to vector<8x128xf32>
    %1900 = arith.mulf %1899, %1784 : vector<8x128xf32>
    %cst_710 = arith.constant 3.930000e-01 : f32
    %1901 = vector.broadcast %cst_710 : f32 to vector<8x128xf32>
    %1902 = arith.mulf %1901, %1772 : vector<8x128xf32>
    %1903 = arith.addf %1900, %1902 : vector<8x128xf32>
    %cst_711 = arith.constant 0.000000e+00 : f32
    %1904 = vector.broadcast %cst_711 : f32 to vector<8x128xf32>
    %1905 = arith.cmpf oge, %1784, %1904 : vector<8x128xf32>
    %1906 = arith.select %1905, %1903, %9 : vector<8x128xi1>, vector<8x128xf32>
    %cst_712 = arith.constant 1.820000e-02 : f32
    %1907 = vector.broadcast %cst_712 : f32 to vector<8x128xf32>
    %1908 = arith.mulf %1907, %1787 : vector<8x128xf32>
    %1909 = arith.subf %13, %1908 : vector<8x128xf32>
    %cst_713 = arith.constant 0.000000e+00 : f32
    %1910 = vector.broadcast %cst_713 : f32 to vector<8x128xf32>
    %1911 = arith.cmpf oge, %1787, %1910 : vector<8x128xf32>
    %1912 = arith.select %1911, %1909, %9 : vector<8x128xi1>, vector<8x128xf32>
    %cst_714 = arith.constant 1.640000e-02 : f32
    %1913 = vector.broadcast %cst_714 : f32 to vector<8x128xf32>
    %1914 = arith.mulf %1913, %1787 : vector<8x128xf32>
    %cst_715 = arith.constant 1.820000e-02 : f32
    %1915 = vector.broadcast %cst_715 : f32 to vector<8x128xf32>
    %1916 = arith.mulf %1915, %1790 : vector<8x128xf32>
    %1917 = arith.subf %1914, %1916 : vector<8x128xf32>
    %cst_716 = arith.constant 0.000000e+00 : f32
    %1918 = vector.broadcast %cst_716 : f32 to vector<8x128xf32>
    %1919 = arith.cmpf oge, %1790, %1918 : vector<8x128xf32>
    %1920 = arith.select %1919, %1917, %9 : vector<8x128xi1>, vector<8x128xf32>
    %cst_717 = arith.constant -5.690000e-02 : f32
    %1921 = vector.broadcast %cst_717 : f32 to vector<8x128xf32>
    %1922 = arith.mulf %1921, %1793 : vector<8x128xf32>
    %cst_718 = arith.constant 5.690000e-02 : f32
    %1923 = vector.broadcast %cst_718 : f32 to vector<8x128xf32>
    %1924 = arith.mulf %1923, %1766 : vector<8x128xf32>
    %1925 = arith.addf %1922, %1924 : vector<8x128xf32>
    %cst_719 = arith.constant 0.000000e+00 : f32
    %1926 = vector.broadcast %cst_719 : f32 to vector<8x128xf32>
    %1927 = arith.cmpf oge, %1793, %1926 : vector<8x128xf32>
    %1928 = arith.select %1927, %1925, %9 : vector<8x128xi1>, vector<8x128xf32>
    %cst_720 = arith.constant 6.250000e-02 : f32
    %1929 = vector.broadcast %cst_720 : f32 to vector<8x128xf32>
    %1930 = arith.mulf %1929, %1812 : vector<8x128xf32>
    %1931 = arith.addf %1757, %1930 : vector<8x128xf32>
    %cst_721 = arith.constant 6.250000e-02 : f32
    %1932 = vector.broadcast %cst_721 : f32 to vector<8x128xf32>
    %1933 = arith.mulf %1932, %1816 : vector<8x128xf32>
    %1934 = arith.addf %1760, %1933 : vector<8x128xf32>
    %cst_722 = arith.constant 6.250000e-02 : f32
    %1935 = vector.broadcast %cst_722 : f32 to vector<8x128xf32>
    %1936 = arith.mulf %1935, %1820 : vector<8x128xf32>
    %1937 = arith.addf %1763, %1936 : vector<8x128xf32>
    %cst_723 = arith.constant 6.250000e-02 : f32
    %1938 = vector.broadcast %cst_723 : f32 to vector<8x128xf32>
    %1939 = arith.mulf %1938, %1850 : vector<8x128xf32>
    %1940 = arith.addf %1766, %1939 : vector<8x128xf32>
    %cst_724 = arith.constant 6.250000e-02 : f32
    %1941 = vector.broadcast %cst_724 : f32 to vector<8x128xf32>
    %1942 = arith.mulf %1941, %1869 : vector<8x128xf32>
    %1943 = arith.addf %1769, %1942 : vector<8x128xf32>
    %cst_725 = arith.constant 6.250000e-02 : f32
    %1944 = vector.broadcast %cst_725 : f32 to vector<8x128xf32>
    %1945 = arith.mulf %1944, %1885 : vector<8x128xf32>
    %1946 = arith.addf %1772, %1945 : vector<8x128xf32>
    %cst_726 = arith.constant 6.250000e-02 : f32
    %1947 = vector.broadcast %cst_726 : f32 to vector<8x128xf32>
    %1948 = arith.mulf %1947, %1892 : vector<8x128xf32>
    %1949 = arith.addf %1775, %1948 : vector<8x128xf32>
    %cst_727 = arith.constant 6.250000e-02 : f32
    %1950 = vector.broadcast %cst_727 : f32 to vector<8x128xf32>
    %1951 = arith.mulf %1950, %1895 : vector<8x128xf32>
    %1952 = arith.addf %1778, %1951 : vector<8x128xf32>
    %cst_728 = arith.constant 6.250000e-02 : f32
    %1953 = vector.broadcast %cst_728 : f32 to vector<8x128xf32>
    %1954 = arith.mulf %1953, %1898 : vector<8x128xf32>
    %1955 = arith.addf %1781, %1954 : vector<8x128xf32>
    %cst_729 = arith.constant 6.250000e-02 : f32
    %1956 = vector.broadcast %cst_729 : f32 to vector<8x128xf32>
    %1957 = arith.mulf %1956, %1906 : vector<8x128xf32>
    %1958 = arith.addf %1784, %1957 : vector<8x128xf32>
    %cst_730 = arith.constant 6.250000e-02 : f32
    %1959 = vector.broadcast %cst_730 : f32 to vector<8x128xf32>
    %1960 = arith.mulf %1959, %1912 : vector<8x128xf32>
    %1961 = arith.addf %1787, %1960 : vector<8x128xf32>
    %cst_731 = arith.constant 6.250000e-02 : f32
    %1962 = vector.broadcast %cst_731 : f32 to vector<8x128xf32>
    %1963 = arith.mulf %1962, %1920 : vector<8x128xf32>
    %1964 = arith.addf %1790, %1963 : vector<8x128xf32>
    %cst_732 = arith.constant 6.250000e-02 : f32
    %1965 = vector.broadcast %cst_732 : f32 to vector<8x128xf32>
    %1966 = arith.mulf %1965, %1928 : vector<8x128xf32>
    %1967 = arith.addf %1793, %1966 : vector<8x128xf32>
    %c10_i32 = arith.constant 10 : i32
    %1968 = arith.addf %1931, %1934 : vector<8x128xf32>
    %1969 = arith.subf %1968, %25 : vector<8x128xf32>
    %1970 = arith.mulf %21, %1969 : vector<8x128xf32>
    %1971 = math.tanh %1970 : vector<8x128xf32>
    %1972 = arith.subf %1968, %27 : vector<8x128xf32>
    %1973 = arith.mulf %23, %1972 : vector<8x128xf32>
    %1974 = math.tanh %1973 : vector<8x128xf32>
    %1975 = arith.subf %1971, %1974 : vector<8x128xf32>
    %cst_733 = arith.constant 2.000000e+00 : f32
    %1976 = vector.broadcast %cst_733 : f32 to vector<8x128xf32>
    %1977 = arith.addf %1975, %1976 : vector<8x128xf32>
    %cst_734 = arith.constant 1.900000e-02 : f32
    %1978 = vector.broadcast %cst_734 : f32 to vector<8x128xf32>
    %1979 = arith.mulf %1978, %1977 : vector<8x128xf32>
    %cst_735 = arith.constant 0.00779999978 : f32
    %1980 = vector.broadcast %cst_735 : f32 to vector<8x128xf32>
    %1981 = arith.addf %1980, %1979 : vector<8x128xf32>
    %cst_736 = arith.constant 4.580000e-02 : f32
    %1982 = vector.broadcast %cst_736 : f32 to vector<8x128xf32>
    %1983 = arith.select %15, %1981, %1982 : vector<8x128xi1>, vector<8x128xf32>
    %cst_737 = arith.constant -4.580000e-02 : f32
    %1984 = vector.broadcast %cst_737 : f32 to vector<8x128xf32>
    %1985 = arith.mulf %1984, %1931 : vector<8x128xf32>
    %1986 = arith.addf %1985, %11 : vector<8x128xf32>
    %cst_738 = arith.constant 4.580000e-02 : f32
    %1987 = vector.broadcast %cst_738 : f32 to vector<8x128xf32>
    %1988 = arith.mulf %1987, %1931 : vector<8x128xf32>
    %1989 = arith.mulf %1934, %1983 : vector<8x128xf32>
    %1990 = arith.subf %1988, %1989 : vector<8x128xf32>
    %1991 = arith.mulf %1983, %1934 : vector<8x128xf32>
    %cst_739 = arith.constant 5.680000e-02 : f32
    %1992 = vector.broadcast %cst_739 : f32 to vector<8x128xf32>
    %1993 = arith.mulf %1992, %1937 : vector<8x128xf32>
    %1994 = arith.subf %1991, %1993 : vector<8x128xf32>
    %cst_740 = arith.constant 7.44104793E-4 : f32
    %1995 = vector.broadcast %cst_740 : f32 to vector<8x128xf32>
    %1996 = arith.mulf %1995, %1937 : vector<8x128xf32>
    %cst_741 = arith.constant 6.490000e-03 : f32
    %1997 = vector.broadcast %cst_741 : f32 to vector<8x128xf32>
    %1998 = arith.mulf %1997, %1940 : vector<8x128xf32>
    %cst_742 = arith.constant 4.730000e+00 : f32
    %1999 = vector.broadcast %cst_742 : f32 to vector<8x128xf32>
    %2000 = arith.subf %1999, %1998 : vector<8x128xf32>
    %cst_743 = arith.constant 9.510000e-03 : f32
    %2001 = vector.broadcast %cst_743 : f32 to vector<8x128xf32>
    %2002 = arith.mulf %2001, %1955 : vector<8x128xf32>
    %2003 = arith.subf %2000, %2002 : vector<8x128xf32>
    %cst_744 = arith.constant 3.390000e+02 : f32
    %2004 = vector.broadcast %cst_744 : f32 to vector<8x128xf32>
    %2005 = arith.cmpf ogt, %1940, %2004 : vector<8x128xf32>
    %cst_745 = arith.constant 3.390000e+02 : f32
    %2006 = vector.broadcast %cst_745 : f32 to vector<8x128xf32>
    %2007 = arith.subf %1940, %2006 : vector<8x128xf32>
    %cst_746 = arith.constant 5.000000e-04 : f32
    %2008 = vector.broadcast %cst_746 : f32 to vector<8x128xf32>
    %2009 = arith.mulf %2008, %2007 : vector<8x128xf32>
    %2010 = arith.select %2005, %2009, %9 : vector<8x128xi1>, vector<8x128xf32>
    %2011 = arith.maximumf %2003, %9 : vector<8x128xf32>
    %2012 = arith.addf %2011, %1996 : vector<8x128xf32>
    %cst_747 = arith.constant 1.000000e+00 : f32
    %2013 = vector.broadcast %cst_747 : f32 to vector<8x128xf32>
    %2014 = arith.subf %2012, %2013 : vector<8x128xf32>
    %2015 = arith.subf %2014, %2010 : vector<8x128xf32>
    %cst_748 = arith.constant 6.560000e-02 : f32
    %2016 = vector.broadcast %cst_748 : f32 to vector<8x128xf32>
    %2017 = arith.mulf %2016, %1940 : vector<8x128xf32>
    %2018 = arith.subf %2015, %2017 : vector<8x128xf32>
    %cst_749 = arith.constant 7.180000e-02 : f32
    %2019 = vector.broadcast %cst_749 : f32 to vector<8x128xf32>
    %2020 = arith.mulf %2019, %1943 : vector<8x128xf32>
    %2021 = arith.addf %2018, %2020 : vector<8x128xf32>
    %cst_750 = arith.constant 0.000000e+00 : f32
    %2022 = vector.broadcast %cst_750 : f32 to vector<8x128xf32>
    %2023 = arith.cmpf oge, %1940, %2022 : vector<8x128xf32>
    %2024 = arith.select %2023, %2021, %9 : vector<8x128xi1>, vector<8x128xf32>
    %cst_751 = arith.constant 7.370000e-02 : f32
    %2025 = vector.broadcast %cst_751 : f32 to vector<8x128xf32>
    %2026 = arith.mulf %2025, %1949 : vector<8x128xf32>
    %cst_752 = arith.constant 3.250000e+00 : f32
    %2027 = vector.broadcast %cst_752 : f32 to vector<8x128xf32>
    %2028 = arith.addf %2027, %2026 : vector<8x128xf32>
    %2029 = arith.mulf %2028, %1943 : vector<8x128xf32>
    %cst_753 = arith.constant 2.608900e+02 : f32
    %2030 = vector.broadcast %cst_753 : f32 to vector<8x128xf32>
    %2031 = arith.addf %2030, %1943 : vector<8x128xf32>
    %2032 = arith.divf %2029, %2031 : vector<8x128xf32>
    %cst_754 = arith.constant 0.000000e+00 : f32
    %2033 = vector.broadcast %cst_754 : f32 to vector<8x128xf32>
    %2034 = arith.subf %2033, %2032 : vector<8x128xf32>
    %cst_755 = arith.constant 6.560000e-02 : f32
    %2035 = vector.broadcast %cst_755 : f32 to vector<8x128xf32>
    %2036 = arith.mulf %2035, %1940 : vector<8x128xf32>
    %2037 = arith.addf %2034, %2036 : vector<8x128xf32>
    %cst_756 = arith.constant 7.180000e-02 : f32
    %2038 = vector.broadcast %cst_756 : f32 to vector<8x128xf32>
    %2039 = arith.mulf %2038, %1943 : vector<8x128xf32>
    %2040 = arith.subf %2037, %2039 : vector<8x128xf32>
    %cst_757 = arith.constant 0.000000e+00 : f32
    %2041 = vector.broadcast %cst_757 : f32 to vector<8x128xf32>
    %2042 = arith.cmpf oge, %1943, %2041 : vector<8x128xf32>
    %2043 = arith.select %2042, %2040, %9 : vector<8x128xi1>, vector<8x128xf32>
    %cst_758 = arith.constant -5.500000e-01 : f32
    %2044 = vector.broadcast %cst_758 : f32 to vector<8x128xf32>
    %2045 = arith.mulf %2044, %1946 : vector<8x128xf32>
    %cst_759 = arith.constant 1.450000e-01 : f32
    %2046 = vector.broadcast %cst_759 : f32 to vector<8x128xf32>
    %2047 = arith.mulf %2046, %1958 : vector<8x128xf32>
    %2048 = arith.addf %2045, %2047 : vector<8x128xf32>
    %cst_760 = arith.constant 1.800000e-03 : f32
    %2049 = vector.broadcast %cst_760 : f32 to vector<8x128xf32>
    %2050 = arith.mulf %2049, %1961 : vector<8x128xf32>
    %2051 = arith.addf %2048, %2050 : vector<8x128xf32>
    %cst_761 = arith.constant 1.820000e-02 : f32
    %2052 = vector.broadcast %cst_761 : f32 to vector<8x128xf32>
    %2053 = arith.mulf %2052, %1964 : vector<8x128xf32>
    %2054 = arith.addf %2051, %2053 : vector<8x128xf32>
    %cst_762 = arith.constant 20.4918041 : f32
    %2055 = vector.broadcast %cst_762 : f32 to vector<8x128xf32>
    %2056 = arith.mulf %1946, %2055 : vector<8x128xf32>
    %cst_763 = arith.constant 0.000000e+00 : f32
    %2057 = vector.broadcast %cst_763 : f32 to vector<8x128xf32>
    %2058 = arith.cmpf oge, %1946, %2057 : vector<8x128xf32>
    %2059 = arith.select %2058, %2054, %9 : vector<8x128xi1>, vector<8x128xf32>
    %cst_764 = arith.constant -2.750000e-02 : f32
    %2060 = vector.broadcast %cst_764 : f32 to vector<8x128xf32>
    %2061 = arith.mulf %2060, %1949 : vector<8x128xf32>
    %cst_765 = arith.constant 1.002500e+02 : f32
    %2062 = vector.broadcast %cst_765 : f32 to vector<8x128xf32>
    %2063 = arith.subf %2056, %2062 : vector<8x128xf32>
    %cst_766 = arith.constant 2.750000e-02 : f32
    %2064 = vector.broadcast %cst_766 : f32 to vector<8x128xf32>
    %2065 = arith.mulf %2064, %2063 : vector<8x128xf32>
    %2066 = arith.addf %2061, %2065 : vector<8x128xf32>
    %2067 = arith.subf %1952, %2056 : vector<8x128xf32>
    %cst_767 = arith.constant -7.600000e-03 : f32
    %2068 = vector.broadcast %cst_767 : f32 to vector<8x128xf32>
    %2069 = arith.mulf %2068, %2067 : vector<8x128xf32>
    %2070 = arith.subf %1955, %1952 : vector<8x128xf32>
    %cst_768 = arith.constant -7.600000e-03 : f32
    %2071 = vector.broadcast %cst_768 : f32 to vector<8x128xf32>
    %2072 = arith.mulf %2071, %2070 : vector<8x128xf32>
    %cst_769 = arith.constant -3.650000e-01 : f32
    %2073 = vector.broadcast %cst_769 : f32 to vector<8x128xf32>
    %2074 = arith.mulf %2073, %1958 : vector<8x128xf32>
    %cst_770 = arith.constant 3.930000e-01 : f32
    %2075 = vector.broadcast %cst_770 : f32 to vector<8x128xf32>
    %2076 = arith.mulf %2075, %1946 : vector<8x128xf32>
    %2077 = arith.addf %2074, %2076 : vector<8x128xf32>
    %cst_771 = arith.constant 0.000000e+00 : f32
    %2078 = vector.broadcast %cst_771 : f32 to vector<8x128xf32>
    %2079 = arith.cmpf oge, %1958, %2078 : vector<8x128xf32>
    %2080 = arith.select %2079, %2077, %9 : vector<8x128xi1>, vector<8x128xf32>
    %cst_772 = arith.constant 1.820000e-02 : f32
    %2081 = vector.broadcast %cst_772 : f32 to vector<8x128xf32>
    %2082 = arith.mulf %2081, %1961 : vector<8x128xf32>
    %2083 = arith.subf %13, %2082 : vector<8x128xf32>
    %cst_773 = arith.constant 0.000000e+00 : f32
    %2084 = vector.broadcast %cst_773 : f32 to vector<8x128xf32>
    %2085 = arith.cmpf oge, %1961, %2084 : vector<8x128xf32>
    %2086 = arith.select %2085, %2083, %9 : vector<8x128xi1>, vector<8x128xf32>
    %cst_774 = arith.constant 1.640000e-02 : f32
    %2087 = vector.broadcast %cst_774 : f32 to vector<8x128xf32>
    %2088 = arith.mulf %2087, %1961 : vector<8x128xf32>
    %cst_775 = arith.constant 1.820000e-02 : f32
    %2089 = vector.broadcast %cst_775 : f32 to vector<8x128xf32>
    %2090 = arith.mulf %2089, %1964 : vector<8x128xf32>
    %2091 = arith.subf %2088, %2090 : vector<8x128xf32>
    %cst_776 = arith.constant 0.000000e+00 : f32
    %2092 = vector.broadcast %cst_776 : f32 to vector<8x128xf32>
    %2093 = arith.cmpf oge, %1964, %2092 : vector<8x128xf32>
    %2094 = arith.select %2093, %2091, %9 : vector<8x128xi1>, vector<8x128xf32>
    %cst_777 = arith.constant -5.690000e-02 : f32
    %2095 = vector.broadcast %cst_777 : f32 to vector<8x128xf32>
    %2096 = arith.mulf %2095, %1967 : vector<8x128xf32>
    %cst_778 = arith.constant 5.690000e-02 : f32
    %2097 = vector.broadcast %cst_778 : f32 to vector<8x128xf32>
    %2098 = arith.mulf %2097, %1940 : vector<8x128xf32>
    %2099 = arith.addf %2096, %2098 : vector<8x128xf32>
    %cst_779 = arith.constant 0.000000e+00 : f32
    %2100 = vector.broadcast %cst_779 : f32 to vector<8x128xf32>
    %2101 = arith.cmpf oge, %1967, %2100 : vector<8x128xf32>
    %2102 = arith.select %2101, %2099, %9 : vector<8x128xi1>, vector<8x128xf32>
    %cst_780 = arith.constant 6.250000e-02 : f32
    %2103 = vector.broadcast %cst_780 : f32 to vector<8x128xf32>
    %2104 = arith.mulf %2103, %1986 : vector<8x128xf32>
    %2105 = arith.addf %1931, %2104 : vector<8x128xf32>
    %cst_781 = arith.constant 6.250000e-02 : f32
    %2106 = vector.broadcast %cst_781 : f32 to vector<8x128xf32>
    %2107 = arith.mulf %2106, %1990 : vector<8x128xf32>
    %2108 = arith.addf %1934, %2107 : vector<8x128xf32>
    %cst_782 = arith.constant 6.250000e-02 : f32
    %2109 = vector.broadcast %cst_782 : f32 to vector<8x128xf32>
    %2110 = arith.mulf %2109, %1994 : vector<8x128xf32>
    %2111 = arith.addf %1937, %2110 : vector<8x128xf32>
    %cst_783 = arith.constant 6.250000e-02 : f32
    %2112 = vector.broadcast %cst_783 : f32 to vector<8x128xf32>
    %2113 = arith.mulf %2112, %2024 : vector<8x128xf32>
    %2114 = arith.addf %1940, %2113 : vector<8x128xf32>
    %cst_784 = arith.constant 6.250000e-02 : f32
    %2115 = vector.broadcast %cst_784 : f32 to vector<8x128xf32>
    %2116 = arith.mulf %2115, %2043 : vector<8x128xf32>
    %2117 = arith.addf %1943, %2116 : vector<8x128xf32>
    %cst_785 = arith.constant 6.250000e-02 : f32
    %2118 = vector.broadcast %cst_785 : f32 to vector<8x128xf32>
    %2119 = arith.mulf %2118, %2059 : vector<8x128xf32>
    %2120 = arith.addf %1946, %2119 : vector<8x128xf32>
    %cst_786 = arith.constant 6.250000e-02 : f32
    %2121 = vector.broadcast %cst_786 : f32 to vector<8x128xf32>
    %2122 = arith.mulf %2121, %2066 : vector<8x128xf32>
    %2123 = arith.addf %1949, %2122 : vector<8x128xf32>
    %cst_787 = arith.constant 6.250000e-02 : f32
    %2124 = vector.broadcast %cst_787 : f32 to vector<8x128xf32>
    %2125 = arith.mulf %2124, %2069 : vector<8x128xf32>
    %2126 = arith.addf %1952, %2125 : vector<8x128xf32>
    %cst_788 = arith.constant 6.250000e-02 : f32
    %2127 = vector.broadcast %cst_788 : f32 to vector<8x128xf32>
    %2128 = arith.mulf %2127, %2072 : vector<8x128xf32>
    %2129 = arith.addf %1955, %2128 : vector<8x128xf32>
    %cst_789 = arith.constant 6.250000e-02 : f32
    %2130 = vector.broadcast %cst_789 : f32 to vector<8x128xf32>
    %2131 = arith.mulf %2130, %2080 : vector<8x128xf32>
    %2132 = arith.addf %1958, %2131 : vector<8x128xf32>
    %cst_790 = arith.constant 6.250000e-02 : f32
    %2133 = vector.broadcast %cst_790 : f32 to vector<8x128xf32>
    %2134 = arith.mulf %2133, %2086 : vector<8x128xf32>
    %2135 = arith.addf %1961, %2134 : vector<8x128xf32>
    %cst_791 = arith.constant 6.250000e-02 : f32
    %2136 = vector.broadcast %cst_791 : f32 to vector<8x128xf32>
    %2137 = arith.mulf %2136, %2094 : vector<8x128xf32>
    %2138 = arith.addf %1964, %2137 : vector<8x128xf32>
    %cst_792 = arith.constant 6.250000e-02 : f32
    %2139 = vector.broadcast %cst_792 : f32 to vector<8x128xf32>
    %2140 = arith.mulf %2139, %2102 : vector<8x128xf32>
    %2141 = arith.addf %1967, %2140 : vector<8x128xf32>
    %c11_i32 = arith.constant 11 : i32
    %2142 = arith.addf %2105, %2108 : vector<8x128xf32>
    %2143 = arith.subf %2142, %25 : vector<8x128xf32>
    %2144 = arith.mulf %21, %2143 : vector<8x128xf32>
    %2145 = math.tanh %2144 : vector<8x128xf32>
    %2146 = arith.subf %2142, %27 : vector<8x128xf32>
    %2147 = arith.mulf %23, %2146 : vector<8x128xf32>
    %2148 = math.tanh %2147 : vector<8x128xf32>
    %2149 = arith.subf %2145, %2148 : vector<8x128xf32>
    %cst_793 = arith.constant 2.000000e+00 : f32
    %2150 = vector.broadcast %cst_793 : f32 to vector<8x128xf32>
    %2151 = arith.addf %2149, %2150 : vector<8x128xf32>
    %cst_794 = arith.constant 1.900000e-02 : f32
    %2152 = vector.broadcast %cst_794 : f32 to vector<8x128xf32>
    %2153 = arith.mulf %2152, %2151 : vector<8x128xf32>
    %cst_795 = arith.constant 0.00779999978 : f32
    %2154 = vector.broadcast %cst_795 : f32 to vector<8x128xf32>
    %2155 = arith.addf %2154, %2153 : vector<8x128xf32>
    %cst_796 = arith.constant 4.580000e-02 : f32
    %2156 = vector.broadcast %cst_796 : f32 to vector<8x128xf32>
    %2157 = arith.select %15, %2155, %2156 : vector<8x128xi1>, vector<8x128xf32>
    %cst_797 = arith.constant -4.580000e-02 : f32
    %2158 = vector.broadcast %cst_797 : f32 to vector<8x128xf32>
    %2159 = arith.mulf %2158, %2105 : vector<8x128xf32>
    %2160 = arith.addf %2159, %11 : vector<8x128xf32>
    %cst_798 = arith.constant 4.580000e-02 : f32
    %2161 = vector.broadcast %cst_798 : f32 to vector<8x128xf32>
    %2162 = arith.mulf %2161, %2105 : vector<8x128xf32>
    %2163 = arith.mulf %2108, %2157 : vector<8x128xf32>
    %2164 = arith.subf %2162, %2163 : vector<8x128xf32>
    %2165 = arith.mulf %2157, %2108 : vector<8x128xf32>
    %cst_799 = arith.constant 5.680000e-02 : f32
    %2166 = vector.broadcast %cst_799 : f32 to vector<8x128xf32>
    %2167 = arith.mulf %2166, %2111 : vector<8x128xf32>
    %2168 = arith.subf %2165, %2167 : vector<8x128xf32>
    %cst_800 = arith.constant 7.44104793E-4 : f32
    %2169 = vector.broadcast %cst_800 : f32 to vector<8x128xf32>
    %2170 = arith.mulf %2169, %2111 : vector<8x128xf32>
    %cst_801 = arith.constant 6.490000e-03 : f32
    %2171 = vector.broadcast %cst_801 : f32 to vector<8x128xf32>
    %2172 = arith.mulf %2171, %2114 : vector<8x128xf32>
    %cst_802 = arith.constant 4.730000e+00 : f32
    %2173 = vector.broadcast %cst_802 : f32 to vector<8x128xf32>
    %2174 = arith.subf %2173, %2172 : vector<8x128xf32>
    %cst_803 = arith.constant 9.510000e-03 : f32
    %2175 = vector.broadcast %cst_803 : f32 to vector<8x128xf32>
    %2176 = arith.mulf %2175, %2129 : vector<8x128xf32>
    %2177 = arith.subf %2174, %2176 : vector<8x128xf32>
    %cst_804 = arith.constant 3.390000e+02 : f32
    %2178 = vector.broadcast %cst_804 : f32 to vector<8x128xf32>
    %2179 = arith.cmpf ogt, %2114, %2178 : vector<8x128xf32>
    %cst_805 = arith.constant 3.390000e+02 : f32
    %2180 = vector.broadcast %cst_805 : f32 to vector<8x128xf32>
    %2181 = arith.subf %2114, %2180 : vector<8x128xf32>
    %cst_806 = arith.constant 5.000000e-04 : f32
    %2182 = vector.broadcast %cst_806 : f32 to vector<8x128xf32>
    %2183 = arith.mulf %2182, %2181 : vector<8x128xf32>
    %2184 = arith.select %2179, %2183, %9 : vector<8x128xi1>, vector<8x128xf32>
    %2185 = arith.maximumf %2177, %9 : vector<8x128xf32>
    %2186 = arith.addf %2185, %2170 : vector<8x128xf32>
    %cst_807 = arith.constant 1.000000e+00 : f32
    %2187 = vector.broadcast %cst_807 : f32 to vector<8x128xf32>
    %2188 = arith.subf %2186, %2187 : vector<8x128xf32>
    %2189 = arith.subf %2188, %2184 : vector<8x128xf32>
    %cst_808 = arith.constant 6.560000e-02 : f32
    %2190 = vector.broadcast %cst_808 : f32 to vector<8x128xf32>
    %2191 = arith.mulf %2190, %2114 : vector<8x128xf32>
    %2192 = arith.subf %2189, %2191 : vector<8x128xf32>
    %cst_809 = arith.constant 7.180000e-02 : f32
    %2193 = vector.broadcast %cst_809 : f32 to vector<8x128xf32>
    %2194 = arith.mulf %2193, %2117 : vector<8x128xf32>
    %2195 = arith.addf %2192, %2194 : vector<8x128xf32>
    %cst_810 = arith.constant 0.000000e+00 : f32
    %2196 = vector.broadcast %cst_810 : f32 to vector<8x128xf32>
    %2197 = arith.cmpf oge, %2114, %2196 : vector<8x128xf32>
    %2198 = arith.select %2197, %2195, %9 : vector<8x128xi1>, vector<8x128xf32>
    %cst_811 = arith.constant 7.370000e-02 : f32
    %2199 = vector.broadcast %cst_811 : f32 to vector<8x128xf32>
    %2200 = arith.mulf %2199, %2123 : vector<8x128xf32>
    %cst_812 = arith.constant 3.250000e+00 : f32
    %2201 = vector.broadcast %cst_812 : f32 to vector<8x128xf32>
    %2202 = arith.addf %2201, %2200 : vector<8x128xf32>
    %2203 = arith.mulf %2202, %2117 : vector<8x128xf32>
    %cst_813 = arith.constant 2.608900e+02 : f32
    %2204 = vector.broadcast %cst_813 : f32 to vector<8x128xf32>
    %2205 = arith.addf %2204, %2117 : vector<8x128xf32>
    %2206 = arith.divf %2203, %2205 : vector<8x128xf32>
    %cst_814 = arith.constant 0.000000e+00 : f32
    %2207 = vector.broadcast %cst_814 : f32 to vector<8x128xf32>
    %2208 = arith.subf %2207, %2206 : vector<8x128xf32>
    %cst_815 = arith.constant 6.560000e-02 : f32
    %2209 = vector.broadcast %cst_815 : f32 to vector<8x128xf32>
    %2210 = arith.mulf %2209, %2114 : vector<8x128xf32>
    %2211 = arith.addf %2208, %2210 : vector<8x128xf32>
    %cst_816 = arith.constant 7.180000e-02 : f32
    %2212 = vector.broadcast %cst_816 : f32 to vector<8x128xf32>
    %2213 = arith.mulf %2212, %2117 : vector<8x128xf32>
    %2214 = arith.subf %2211, %2213 : vector<8x128xf32>
    %cst_817 = arith.constant 0.000000e+00 : f32
    %2215 = vector.broadcast %cst_817 : f32 to vector<8x128xf32>
    %2216 = arith.cmpf oge, %2117, %2215 : vector<8x128xf32>
    %2217 = arith.select %2216, %2214, %9 : vector<8x128xi1>, vector<8x128xf32>
    %cst_818 = arith.constant -5.500000e-01 : f32
    %2218 = vector.broadcast %cst_818 : f32 to vector<8x128xf32>
    %2219 = arith.mulf %2218, %2120 : vector<8x128xf32>
    %cst_819 = arith.constant 1.450000e-01 : f32
    %2220 = vector.broadcast %cst_819 : f32 to vector<8x128xf32>
    %2221 = arith.mulf %2220, %2132 : vector<8x128xf32>
    %2222 = arith.addf %2219, %2221 : vector<8x128xf32>
    %cst_820 = arith.constant 1.800000e-03 : f32
    %2223 = vector.broadcast %cst_820 : f32 to vector<8x128xf32>
    %2224 = arith.mulf %2223, %2135 : vector<8x128xf32>
    %2225 = arith.addf %2222, %2224 : vector<8x128xf32>
    %cst_821 = arith.constant 1.820000e-02 : f32
    %2226 = vector.broadcast %cst_821 : f32 to vector<8x128xf32>
    %2227 = arith.mulf %2226, %2138 : vector<8x128xf32>
    %2228 = arith.addf %2225, %2227 : vector<8x128xf32>
    %cst_822 = arith.constant 20.4918041 : f32
    %2229 = vector.broadcast %cst_822 : f32 to vector<8x128xf32>
    %2230 = arith.mulf %2120, %2229 : vector<8x128xf32>
    %cst_823 = arith.constant 0.000000e+00 : f32
    %2231 = vector.broadcast %cst_823 : f32 to vector<8x128xf32>
    %2232 = arith.cmpf oge, %2120, %2231 : vector<8x128xf32>
    %2233 = arith.select %2232, %2228, %9 : vector<8x128xi1>, vector<8x128xf32>
    %cst_824 = arith.constant -2.750000e-02 : f32
    %2234 = vector.broadcast %cst_824 : f32 to vector<8x128xf32>
    %2235 = arith.mulf %2234, %2123 : vector<8x128xf32>
    %cst_825 = arith.constant 1.002500e+02 : f32
    %2236 = vector.broadcast %cst_825 : f32 to vector<8x128xf32>
    %2237 = arith.subf %2230, %2236 : vector<8x128xf32>
    %cst_826 = arith.constant 2.750000e-02 : f32
    %2238 = vector.broadcast %cst_826 : f32 to vector<8x128xf32>
    %2239 = arith.mulf %2238, %2237 : vector<8x128xf32>
    %2240 = arith.addf %2235, %2239 : vector<8x128xf32>
    %2241 = arith.subf %2126, %2230 : vector<8x128xf32>
    %cst_827 = arith.constant -7.600000e-03 : f32
    %2242 = vector.broadcast %cst_827 : f32 to vector<8x128xf32>
    %2243 = arith.mulf %2242, %2241 : vector<8x128xf32>
    %2244 = arith.subf %2129, %2126 : vector<8x128xf32>
    %cst_828 = arith.constant -7.600000e-03 : f32
    %2245 = vector.broadcast %cst_828 : f32 to vector<8x128xf32>
    %2246 = arith.mulf %2245, %2244 : vector<8x128xf32>
    %cst_829 = arith.constant -3.650000e-01 : f32
    %2247 = vector.broadcast %cst_829 : f32 to vector<8x128xf32>
    %2248 = arith.mulf %2247, %2132 : vector<8x128xf32>
    %cst_830 = arith.constant 3.930000e-01 : f32
    %2249 = vector.broadcast %cst_830 : f32 to vector<8x128xf32>
    %2250 = arith.mulf %2249, %2120 : vector<8x128xf32>
    %2251 = arith.addf %2248, %2250 : vector<8x128xf32>
    %cst_831 = arith.constant 0.000000e+00 : f32
    %2252 = vector.broadcast %cst_831 : f32 to vector<8x128xf32>
    %2253 = arith.cmpf oge, %2132, %2252 : vector<8x128xf32>
    %2254 = arith.select %2253, %2251, %9 : vector<8x128xi1>, vector<8x128xf32>
    %cst_832 = arith.constant 1.820000e-02 : f32
    %2255 = vector.broadcast %cst_832 : f32 to vector<8x128xf32>
    %2256 = arith.mulf %2255, %2135 : vector<8x128xf32>
    %2257 = arith.subf %13, %2256 : vector<8x128xf32>
    %cst_833 = arith.constant 0.000000e+00 : f32
    %2258 = vector.broadcast %cst_833 : f32 to vector<8x128xf32>
    %2259 = arith.cmpf oge, %2135, %2258 : vector<8x128xf32>
    %2260 = arith.select %2259, %2257, %9 : vector<8x128xi1>, vector<8x128xf32>
    %cst_834 = arith.constant 1.640000e-02 : f32
    %2261 = vector.broadcast %cst_834 : f32 to vector<8x128xf32>
    %2262 = arith.mulf %2261, %2135 : vector<8x128xf32>
    %cst_835 = arith.constant 1.820000e-02 : f32
    %2263 = vector.broadcast %cst_835 : f32 to vector<8x128xf32>
    %2264 = arith.mulf %2263, %2138 : vector<8x128xf32>
    %2265 = arith.subf %2262, %2264 : vector<8x128xf32>
    %cst_836 = arith.constant 0.000000e+00 : f32
    %2266 = vector.broadcast %cst_836 : f32 to vector<8x128xf32>
    %2267 = arith.cmpf oge, %2138, %2266 : vector<8x128xf32>
    %2268 = arith.select %2267, %2265, %9 : vector<8x128xi1>, vector<8x128xf32>
    %cst_837 = arith.constant -5.690000e-02 : f32
    %2269 = vector.broadcast %cst_837 : f32 to vector<8x128xf32>
    %2270 = arith.mulf %2269, %2141 : vector<8x128xf32>
    %cst_838 = arith.constant 5.690000e-02 : f32
    %2271 = vector.broadcast %cst_838 : f32 to vector<8x128xf32>
    %2272 = arith.mulf %2271, %2114 : vector<8x128xf32>
    %2273 = arith.addf %2270, %2272 : vector<8x128xf32>
    %cst_839 = arith.constant 0.000000e+00 : f32
    %2274 = vector.broadcast %cst_839 : f32 to vector<8x128xf32>
    %2275 = arith.cmpf oge, %2141, %2274 : vector<8x128xf32>
    %2276 = arith.select %2275, %2273, %9 : vector<8x128xi1>, vector<8x128xf32>
    %cst_840 = arith.constant 6.250000e-02 : f32
    %2277 = vector.broadcast %cst_840 : f32 to vector<8x128xf32>
    %2278 = arith.mulf %2277, %2160 : vector<8x128xf32>
    %2279 = arith.addf %2105, %2278 : vector<8x128xf32>
    %cst_841 = arith.constant 6.250000e-02 : f32
    %2280 = vector.broadcast %cst_841 : f32 to vector<8x128xf32>
    %2281 = arith.mulf %2280, %2164 : vector<8x128xf32>
    %2282 = arith.addf %2108, %2281 : vector<8x128xf32>
    %cst_842 = arith.constant 6.250000e-02 : f32
    %2283 = vector.broadcast %cst_842 : f32 to vector<8x128xf32>
    %2284 = arith.mulf %2283, %2168 : vector<8x128xf32>
    %2285 = arith.addf %2111, %2284 : vector<8x128xf32>
    %cst_843 = arith.constant 6.250000e-02 : f32
    %2286 = vector.broadcast %cst_843 : f32 to vector<8x128xf32>
    %2287 = arith.mulf %2286, %2198 : vector<8x128xf32>
    %2288 = arith.addf %2114, %2287 : vector<8x128xf32>
    %cst_844 = arith.constant 6.250000e-02 : f32
    %2289 = vector.broadcast %cst_844 : f32 to vector<8x128xf32>
    %2290 = arith.mulf %2289, %2217 : vector<8x128xf32>
    %2291 = arith.addf %2117, %2290 : vector<8x128xf32>
    %cst_845 = arith.constant 6.250000e-02 : f32
    %2292 = vector.broadcast %cst_845 : f32 to vector<8x128xf32>
    %2293 = arith.mulf %2292, %2233 : vector<8x128xf32>
    %2294 = arith.addf %2120, %2293 : vector<8x128xf32>
    %cst_846 = arith.constant 6.250000e-02 : f32
    %2295 = vector.broadcast %cst_846 : f32 to vector<8x128xf32>
    %2296 = arith.mulf %2295, %2240 : vector<8x128xf32>
    %2297 = arith.addf %2123, %2296 : vector<8x128xf32>
    %cst_847 = arith.constant 6.250000e-02 : f32
    %2298 = vector.broadcast %cst_847 : f32 to vector<8x128xf32>
    %2299 = arith.mulf %2298, %2243 : vector<8x128xf32>
    %2300 = arith.addf %2126, %2299 : vector<8x128xf32>
    %cst_848 = arith.constant 6.250000e-02 : f32
    %2301 = vector.broadcast %cst_848 : f32 to vector<8x128xf32>
    %2302 = arith.mulf %2301, %2246 : vector<8x128xf32>
    %2303 = arith.addf %2129, %2302 : vector<8x128xf32>
    %cst_849 = arith.constant 6.250000e-02 : f32
    %2304 = vector.broadcast %cst_849 : f32 to vector<8x128xf32>
    %2305 = arith.mulf %2304, %2254 : vector<8x128xf32>
    %2306 = arith.addf %2132, %2305 : vector<8x128xf32>
    %cst_850 = arith.constant 6.250000e-02 : f32
    %2307 = vector.broadcast %cst_850 : f32 to vector<8x128xf32>
    %2308 = arith.mulf %2307, %2260 : vector<8x128xf32>
    %2309 = arith.addf %2135, %2308 : vector<8x128xf32>
    %cst_851 = arith.constant 6.250000e-02 : f32
    %2310 = vector.broadcast %cst_851 : f32 to vector<8x128xf32>
    %2311 = arith.mulf %2310, %2268 : vector<8x128xf32>
    %2312 = arith.addf %2138, %2311 : vector<8x128xf32>
    %cst_852 = arith.constant 6.250000e-02 : f32
    %2313 = vector.broadcast %cst_852 : f32 to vector<8x128xf32>
    %2314 = arith.mulf %2313, %2276 : vector<8x128xf32>
    %2315 = arith.addf %2141, %2314 : vector<8x128xf32>
    %c12_i32 = arith.constant 12 : i32
    %2316 = arith.addf %2279, %2282 : vector<8x128xf32>
    %2317 = arith.subf %2316, %25 : vector<8x128xf32>
    %2318 = arith.mulf %21, %2317 : vector<8x128xf32>
    %2319 = math.tanh %2318 : vector<8x128xf32>
    %2320 = arith.subf %2316, %27 : vector<8x128xf32>
    %2321 = arith.mulf %23, %2320 : vector<8x128xf32>
    %2322 = math.tanh %2321 : vector<8x128xf32>
    %2323 = arith.subf %2319, %2322 : vector<8x128xf32>
    %cst_853 = arith.constant 2.000000e+00 : f32
    %2324 = vector.broadcast %cst_853 : f32 to vector<8x128xf32>
    %2325 = arith.addf %2323, %2324 : vector<8x128xf32>
    %cst_854 = arith.constant 1.900000e-02 : f32
    %2326 = vector.broadcast %cst_854 : f32 to vector<8x128xf32>
    %2327 = arith.mulf %2326, %2325 : vector<8x128xf32>
    %cst_855 = arith.constant 0.00779999978 : f32
    %2328 = vector.broadcast %cst_855 : f32 to vector<8x128xf32>
    %2329 = arith.addf %2328, %2327 : vector<8x128xf32>
    %cst_856 = arith.constant 4.580000e-02 : f32
    %2330 = vector.broadcast %cst_856 : f32 to vector<8x128xf32>
    %2331 = arith.select %15, %2329, %2330 : vector<8x128xi1>, vector<8x128xf32>
    %cst_857 = arith.constant -4.580000e-02 : f32
    %2332 = vector.broadcast %cst_857 : f32 to vector<8x128xf32>
    %2333 = arith.mulf %2332, %2279 : vector<8x128xf32>
    %2334 = arith.addf %2333, %11 : vector<8x128xf32>
    %cst_858 = arith.constant 4.580000e-02 : f32
    %2335 = vector.broadcast %cst_858 : f32 to vector<8x128xf32>
    %2336 = arith.mulf %2335, %2279 : vector<8x128xf32>
    %2337 = arith.mulf %2282, %2331 : vector<8x128xf32>
    %2338 = arith.subf %2336, %2337 : vector<8x128xf32>
    %2339 = arith.mulf %2331, %2282 : vector<8x128xf32>
    %cst_859 = arith.constant 5.680000e-02 : f32
    %2340 = vector.broadcast %cst_859 : f32 to vector<8x128xf32>
    %2341 = arith.mulf %2340, %2285 : vector<8x128xf32>
    %2342 = arith.subf %2339, %2341 : vector<8x128xf32>
    %cst_860 = arith.constant 7.44104793E-4 : f32
    %2343 = vector.broadcast %cst_860 : f32 to vector<8x128xf32>
    %2344 = arith.mulf %2343, %2285 : vector<8x128xf32>
    %cst_861 = arith.constant 6.490000e-03 : f32
    %2345 = vector.broadcast %cst_861 : f32 to vector<8x128xf32>
    %2346 = arith.mulf %2345, %2288 : vector<8x128xf32>
    %cst_862 = arith.constant 4.730000e+00 : f32
    %2347 = vector.broadcast %cst_862 : f32 to vector<8x128xf32>
    %2348 = arith.subf %2347, %2346 : vector<8x128xf32>
    %cst_863 = arith.constant 9.510000e-03 : f32
    %2349 = vector.broadcast %cst_863 : f32 to vector<8x128xf32>
    %2350 = arith.mulf %2349, %2303 : vector<8x128xf32>
    %2351 = arith.subf %2348, %2350 : vector<8x128xf32>
    %cst_864 = arith.constant 3.390000e+02 : f32
    %2352 = vector.broadcast %cst_864 : f32 to vector<8x128xf32>
    %2353 = arith.cmpf ogt, %2288, %2352 : vector<8x128xf32>
    %cst_865 = arith.constant 3.390000e+02 : f32
    %2354 = vector.broadcast %cst_865 : f32 to vector<8x128xf32>
    %2355 = arith.subf %2288, %2354 : vector<8x128xf32>
    %cst_866 = arith.constant 5.000000e-04 : f32
    %2356 = vector.broadcast %cst_866 : f32 to vector<8x128xf32>
    %2357 = arith.mulf %2356, %2355 : vector<8x128xf32>
    %2358 = arith.select %2353, %2357, %9 : vector<8x128xi1>, vector<8x128xf32>
    %2359 = arith.maximumf %2351, %9 : vector<8x128xf32>
    %2360 = arith.addf %2359, %2344 : vector<8x128xf32>
    %cst_867 = arith.constant 1.000000e+00 : f32
    %2361 = vector.broadcast %cst_867 : f32 to vector<8x128xf32>
    %2362 = arith.subf %2360, %2361 : vector<8x128xf32>
    %2363 = arith.subf %2362, %2358 : vector<8x128xf32>
    %cst_868 = arith.constant 6.560000e-02 : f32
    %2364 = vector.broadcast %cst_868 : f32 to vector<8x128xf32>
    %2365 = arith.mulf %2364, %2288 : vector<8x128xf32>
    %2366 = arith.subf %2363, %2365 : vector<8x128xf32>
    %cst_869 = arith.constant 7.180000e-02 : f32
    %2367 = vector.broadcast %cst_869 : f32 to vector<8x128xf32>
    %2368 = arith.mulf %2367, %2291 : vector<8x128xf32>
    %2369 = arith.addf %2366, %2368 : vector<8x128xf32>
    %cst_870 = arith.constant 0.000000e+00 : f32
    %2370 = vector.broadcast %cst_870 : f32 to vector<8x128xf32>
    %2371 = arith.cmpf oge, %2288, %2370 : vector<8x128xf32>
    %2372 = arith.select %2371, %2369, %9 : vector<8x128xi1>, vector<8x128xf32>
    %cst_871 = arith.constant 7.370000e-02 : f32
    %2373 = vector.broadcast %cst_871 : f32 to vector<8x128xf32>
    %2374 = arith.mulf %2373, %2297 : vector<8x128xf32>
    %cst_872 = arith.constant 3.250000e+00 : f32
    %2375 = vector.broadcast %cst_872 : f32 to vector<8x128xf32>
    %2376 = arith.addf %2375, %2374 : vector<8x128xf32>
    %2377 = arith.mulf %2376, %2291 : vector<8x128xf32>
    %cst_873 = arith.constant 2.608900e+02 : f32
    %2378 = vector.broadcast %cst_873 : f32 to vector<8x128xf32>
    %2379 = arith.addf %2378, %2291 : vector<8x128xf32>
    %2380 = arith.divf %2377, %2379 : vector<8x128xf32>
    %cst_874 = arith.constant 0.000000e+00 : f32
    %2381 = vector.broadcast %cst_874 : f32 to vector<8x128xf32>
    %2382 = arith.subf %2381, %2380 : vector<8x128xf32>
    %cst_875 = arith.constant 6.560000e-02 : f32
    %2383 = vector.broadcast %cst_875 : f32 to vector<8x128xf32>
    %2384 = arith.mulf %2383, %2288 : vector<8x128xf32>
    %2385 = arith.addf %2382, %2384 : vector<8x128xf32>
    %cst_876 = arith.constant 7.180000e-02 : f32
    %2386 = vector.broadcast %cst_876 : f32 to vector<8x128xf32>
    %2387 = arith.mulf %2386, %2291 : vector<8x128xf32>
    %2388 = arith.subf %2385, %2387 : vector<8x128xf32>
    %cst_877 = arith.constant 0.000000e+00 : f32
    %2389 = vector.broadcast %cst_877 : f32 to vector<8x128xf32>
    %2390 = arith.cmpf oge, %2291, %2389 : vector<8x128xf32>
    %2391 = arith.select %2390, %2388, %9 : vector<8x128xi1>, vector<8x128xf32>
    %cst_878 = arith.constant -5.500000e-01 : f32
    %2392 = vector.broadcast %cst_878 : f32 to vector<8x128xf32>
    %2393 = arith.mulf %2392, %2294 : vector<8x128xf32>
    %cst_879 = arith.constant 1.450000e-01 : f32
    %2394 = vector.broadcast %cst_879 : f32 to vector<8x128xf32>
    %2395 = arith.mulf %2394, %2306 : vector<8x128xf32>
    %2396 = arith.addf %2393, %2395 : vector<8x128xf32>
    %cst_880 = arith.constant 1.800000e-03 : f32
    %2397 = vector.broadcast %cst_880 : f32 to vector<8x128xf32>
    %2398 = arith.mulf %2397, %2309 : vector<8x128xf32>
    %2399 = arith.addf %2396, %2398 : vector<8x128xf32>
    %cst_881 = arith.constant 1.820000e-02 : f32
    %2400 = vector.broadcast %cst_881 : f32 to vector<8x128xf32>
    %2401 = arith.mulf %2400, %2312 : vector<8x128xf32>
    %2402 = arith.addf %2399, %2401 : vector<8x128xf32>
    %cst_882 = arith.constant 20.4918041 : f32
    %2403 = vector.broadcast %cst_882 : f32 to vector<8x128xf32>
    %2404 = arith.mulf %2294, %2403 : vector<8x128xf32>
    %cst_883 = arith.constant 0.000000e+00 : f32
    %2405 = vector.broadcast %cst_883 : f32 to vector<8x128xf32>
    %2406 = arith.cmpf oge, %2294, %2405 : vector<8x128xf32>
    %2407 = arith.select %2406, %2402, %9 : vector<8x128xi1>, vector<8x128xf32>
    %cst_884 = arith.constant -2.750000e-02 : f32
    %2408 = vector.broadcast %cst_884 : f32 to vector<8x128xf32>
    %2409 = arith.mulf %2408, %2297 : vector<8x128xf32>
    %cst_885 = arith.constant 1.002500e+02 : f32
    %2410 = vector.broadcast %cst_885 : f32 to vector<8x128xf32>
    %2411 = arith.subf %2404, %2410 : vector<8x128xf32>
    %cst_886 = arith.constant 2.750000e-02 : f32
    %2412 = vector.broadcast %cst_886 : f32 to vector<8x128xf32>
    %2413 = arith.mulf %2412, %2411 : vector<8x128xf32>
    %2414 = arith.addf %2409, %2413 : vector<8x128xf32>
    %2415 = arith.subf %2300, %2404 : vector<8x128xf32>
    %cst_887 = arith.constant -7.600000e-03 : f32
    %2416 = vector.broadcast %cst_887 : f32 to vector<8x128xf32>
    %2417 = arith.mulf %2416, %2415 : vector<8x128xf32>
    %2418 = arith.subf %2303, %2300 : vector<8x128xf32>
    %cst_888 = arith.constant -7.600000e-03 : f32
    %2419 = vector.broadcast %cst_888 : f32 to vector<8x128xf32>
    %2420 = arith.mulf %2419, %2418 : vector<8x128xf32>
    %cst_889 = arith.constant -3.650000e-01 : f32
    %2421 = vector.broadcast %cst_889 : f32 to vector<8x128xf32>
    %2422 = arith.mulf %2421, %2306 : vector<8x128xf32>
    %cst_890 = arith.constant 3.930000e-01 : f32
    %2423 = vector.broadcast %cst_890 : f32 to vector<8x128xf32>
    %2424 = arith.mulf %2423, %2294 : vector<8x128xf32>
    %2425 = arith.addf %2422, %2424 : vector<8x128xf32>
    %cst_891 = arith.constant 0.000000e+00 : f32
    %2426 = vector.broadcast %cst_891 : f32 to vector<8x128xf32>
    %2427 = arith.cmpf oge, %2306, %2426 : vector<8x128xf32>
    %2428 = arith.select %2427, %2425, %9 : vector<8x128xi1>, vector<8x128xf32>
    %cst_892 = arith.constant 1.820000e-02 : f32
    %2429 = vector.broadcast %cst_892 : f32 to vector<8x128xf32>
    %2430 = arith.mulf %2429, %2309 : vector<8x128xf32>
    %2431 = arith.subf %13, %2430 : vector<8x128xf32>
    %cst_893 = arith.constant 0.000000e+00 : f32
    %2432 = vector.broadcast %cst_893 : f32 to vector<8x128xf32>
    %2433 = arith.cmpf oge, %2309, %2432 : vector<8x128xf32>
    %2434 = arith.select %2433, %2431, %9 : vector<8x128xi1>, vector<8x128xf32>
    %cst_894 = arith.constant 1.640000e-02 : f32
    %2435 = vector.broadcast %cst_894 : f32 to vector<8x128xf32>
    %2436 = arith.mulf %2435, %2309 : vector<8x128xf32>
    %cst_895 = arith.constant 1.820000e-02 : f32
    %2437 = vector.broadcast %cst_895 : f32 to vector<8x128xf32>
    %2438 = arith.mulf %2437, %2312 : vector<8x128xf32>
    %2439 = arith.subf %2436, %2438 : vector<8x128xf32>
    %cst_896 = arith.constant 0.000000e+00 : f32
    %2440 = vector.broadcast %cst_896 : f32 to vector<8x128xf32>
    %2441 = arith.cmpf oge, %2312, %2440 : vector<8x128xf32>
    %2442 = arith.select %2441, %2439, %9 : vector<8x128xi1>, vector<8x128xf32>
    %cst_897 = arith.constant -5.690000e-02 : f32
    %2443 = vector.broadcast %cst_897 : f32 to vector<8x128xf32>
    %2444 = arith.mulf %2443, %2315 : vector<8x128xf32>
    %cst_898 = arith.constant 5.690000e-02 : f32
    %2445 = vector.broadcast %cst_898 : f32 to vector<8x128xf32>
    %2446 = arith.mulf %2445, %2288 : vector<8x128xf32>
    %2447 = arith.addf %2444, %2446 : vector<8x128xf32>
    %cst_899 = arith.constant 0.000000e+00 : f32
    %2448 = vector.broadcast %cst_899 : f32 to vector<8x128xf32>
    %2449 = arith.cmpf oge, %2315, %2448 : vector<8x128xf32>
    %2450 = arith.select %2449, %2447, %9 : vector<8x128xi1>, vector<8x128xf32>
    %cst_900 = arith.constant 6.250000e-02 : f32
    %2451 = vector.broadcast %cst_900 : f32 to vector<8x128xf32>
    %2452 = arith.mulf %2451, %2334 : vector<8x128xf32>
    %2453 = arith.addf %2279, %2452 : vector<8x128xf32>
    %cst_901 = arith.constant 6.250000e-02 : f32
    %2454 = vector.broadcast %cst_901 : f32 to vector<8x128xf32>
    %2455 = arith.mulf %2454, %2338 : vector<8x128xf32>
    %2456 = arith.addf %2282, %2455 : vector<8x128xf32>
    %cst_902 = arith.constant 6.250000e-02 : f32
    %2457 = vector.broadcast %cst_902 : f32 to vector<8x128xf32>
    %2458 = arith.mulf %2457, %2342 : vector<8x128xf32>
    %2459 = arith.addf %2285, %2458 : vector<8x128xf32>
    %cst_903 = arith.constant 6.250000e-02 : f32
    %2460 = vector.broadcast %cst_903 : f32 to vector<8x128xf32>
    %2461 = arith.mulf %2460, %2372 : vector<8x128xf32>
    %2462 = arith.addf %2288, %2461 : vector<8x128xf32>
    %cst_904 = arith.constant 6.250000e-02 : f32
    %2463 = vector.broadcast %cst_904 : f32 to vector<8x128xf32>
    %2464 = arith.mulf %2463, %2391 : vector<8x128xf32>
    %2465 = arith.addf %2291, %2464 : vector<8x128xf32>
    %cst_905 = arith.constant 6.250000e-02 : f32
    %2466 = vector.broadcast %cst_905 : f32 to vector<8x128xf32>
    %2467 = arith.mulf %2466, %2407 : vector<8x128xf32>
    %2468 = arith.addf %2294, %2467 : vector<8x128xf32>
    %cst_906 = arith.constant 6.250000e-02 : f32
    %2469 = vector.broadcast %cst_906 : f32 to vector<8x128xf32>
    %2470 = arith.mulf %2469, %2414 : vector<8x128xf32>
    %2471 = arith.addf %2297, %2470 : vector<8x128xf32>
    %cst_907 = arith.constant 6.250000e-02 : f32
    %2472 = vector.broadcast %cst_907 : f32 to vector<8x128xf32>
    %2473 = arith.mulf %2472, %2417 : vector<8x128xf32>
    %2474 = arith.addf %2300, %2473 : vector<8x128xf32>
    %cst_908 = arith.constant 6.250000e-02 : f32
    %2475 = vector.broadcast %cst_908 : f32 to vector<8x128xf32>
    %2476 = arith.mulf %2475, %2420 : vector<8x128xf32>
    %2477 = arith.addf %2303, %2476 : vector<8x128xf32>
    %cst_909 = arith.constant 6.250000e-02 : f32
    %2478 = vector.broadcast %cst_909 : f32 to vector<8x128xf32>
    %2479 = arith.mulf %2478, %2428 : vector<8x128xf32>
    %2480 = arith.addf %2306, %2479 : vector<8x128xf32>
    %cst_910 = arith.constant 6.250000e-02 : f32
    %2481 = vector.broadcast %cst_910 : f32 to vector<8x128xf32>
    %2482 = arith.mulf %2481, %2434 : vector<8x128xf32>
    %2483 = arith.addf %2309, %2482 : vector<8x128xf32>
    %cst_911 = arith.constant 6.250000e-02 : f32
    %2484 = vector.broadcast %cst_911 : f32 to vector<8x128xf32>
    %2485 = arith.mulf %2484, %2442 : vector<8x128xf32>
    %2486 = arith.addf %2312, %2485 : vector<8x128xf32>
    %cst_912 = arith.constant 6.250000e-02 : f32
    %2487 = vector.broadcast %cst_912 : f32 to vector<8x128xf32>
    %2488 = arith.mulf %2487, %2450 : vector<8x128xf32>
    %2489 = arith.addf %2315, %2488 : vector<8x128xf32>
    %c13_i32 = arith.constant 13 : i32
    %2490 = arith.addf %2453, %2456 : vector<8x128xf32>
    %2491 = arith.subf %2490, %25 : vector<8x128xf32>
    %2492 = arith.mulf %21, %2491 : vector<8x128xf32>
    %2493 = math.tanh %2492 : vector<8x128xf32>
    %2494 = arith.subf %2490, %27 : vector<8x128xf32>
    %2495 = arith.mulf %23, %2494 : vector<8x128xf32>
    %2496 = math.tanh %2495 : vector<8x128xf32>
    %2497 = arith.subf %2493, %2496 : vector<8x128xf32>
    %cst_913 = arith.constant 2.000000e+00 : f32
    %2498 = vector.broadcast %cst_913 : f32 to vector<8x128xf32>
    %2499 = arith.addf %2497, %2498 : vector<8x128xf32>
    %cst_914 = arith.constant 1.900000e-02 : f32
    %2500 = vector.broadcast %cst_914 : f32 to vector<8x128xf32>
    %2501 = arith.mulf %2500, %2499 : vector<8x128xf32>
    %cst_915 = arith.constant 0.00779999978 : f32
    %2502 = vector.broadcast %cst_915 : f32 to vector<8x128xf32>
    %2503 = arith.addf %2502, %2501 : vector<8x128xf32>
    %cst_916 = arith.constant 4.580000e-02 : f32
    %2504 = vector.broadcast %cst_916 : f32 to vector<8x128xf32>
    %2505 = arith.select %15, %2503, %2504 : vector<8x128xi1>, vector<8x128xf32>
    %cst_917 = arith.constant -4.580000e-02 : f32
    %2506 = vector.broadcast %cst_917 : f32 to vector<8x128xf32>
    %2507 = arith.mulf %2506, %2453 : vector<8x128xf32>
    %2508 = arith.addf %2507, %11 : vector<8x128xf32>
    %cst_918 = arith.constant 4.580000e-02 : f32
    %2509 = vector.broadcast %cst_918 : f32 to vector<8x128xf32>
    %2510 = arith.mulf %2509, %2453 : vector<8x128xf32>
    %2511 = arith.mulf %2456, %2505 : vector<8x128xf32>
    %2512 = arith.subf %2510, %2511 : vector<8x128xf32>
    %2513 = arith.mulf %2505, %2456 : vector<8x128xf32>
    %cst_919 = arith.constant 5.680000e-02 : f32
    %2514 = vector.broadcast %cst_919 : f32 to vector<8x128xf32>
    %2515 = arith.mulf %2514, %2459 : vector<8x128xf32>
    %2516 = arith.subf %2513, %2515 : vector<8x128xf32>
    %cst_920 = arith.constant 7.44104793E-4 : f32
    %2517 = vector.broadcast %cst_920 : f32 to vector<8x128xf32>
    %2518 = arith.mulf %2517, %2459 : vector<8x128xf32>
    %cst_921 = arith.constant 6.490000e-03 : f32
    %2519 = vector.broadcast %cst_921 : f32 to vector<8x128xf32>
    %2520 = arith.mulf %2519, %2462 : vector<8x128xf32>
    %cst_922 = arith.constant 4.730000e+00 : f32
    %2521 = vector.broadcast %cst_922 : f32 to vector<8x128xf32>
    %2522 = arith.subf %2521, %2520 : vector<8x128xf32>
    %cst_923 = arith.constant 9.510000e-03 : f32
    %2523 = vector.broadcast %cst_923 : f32 to vector<8x128xf32>
    %2524 = arith.mulf %2523, %2477 : vector<8x128xf32>
    %2525 = arith.subf %2522, %2524 : vector<8x128xf32>
    %cst_924 = arith.constant 3.390000e+02 : f32
    %2526 = vector.broadcast %cst_924 : f32 to vector<8x128xf32>
    %2527 = arith.cmpf ogt, %2462, %2526 : vector<8x128xf32>
    %cst_925 = arith.constant 3.390000e+02 : f32
    %2528 = vector.broadcast %cst_925 : f32 to vector<8x128xf32>
    %2529 = arith.subf %2462, %2528 : vector<8x128xf32>
    %cst_926 = arith.constant 5.000000e-04 : f32
    %2530 = vector.broadcast %cst_926 : f32 to vector<8x128xf32>
    %2531 = arith.mulf %2530, %2529 : vector<8x128xf32>
    %2532 = arith.select %2527, %2531, %9 : vector<8x128xi1>, vector<8x128xf32>
    %2533 = arith.maximumf %2525, %9 : vector<8x128xf32>
    %2534 = arith.addf %2533, %2518 : vector<8x128xf32>
    %cst_927 = arith.constant 1.000000e+00 : f32
    %2535 = vector.broadcast %cst_927 : f32 to vector<8x128xf32>
    %2536 = arith.subf %2534, %2535 : vector<8x128xf32>
    %2537 = arith.subf %2536, %2532 : vector<8x128xf32>
    %cst_928 = arith.constant 6.560000e-02 : f32
    %2538 = vector.broadcast %cst_928 : f32 to vector<8x128xf32>
    %2539 = arith.mulf %2538, %2462 : vector<8x128xf32>
    %2540 = arith.subf %2537, %2539 : vector<8x128xf32>
    %cst_929 = arith.constant 7.180000e-02 : f32
    %2541 = vector.broadcast %cst_929 : f32 to vector<8x128xf32>
    %2542 = arith.mulf %2541, %2465 : vector<8x128xf32>
    %2543 = arith.addf %2540, %2542 : vector<8x128xf32>
    %cst_930 = arith.constant 0.000000e+00 : f32
    %2544 = vector.broadcast %cst_930 : f32 to vector<8x128xf32>
    %2545 = arith.cmpf oge, %2462, %2544 : vector<8x128xf32>
    %2546 = arith.select %2545, %2543, %9 : vector<8x128xi1>, vector<8x128xf32>
    %cst_931 = arith.constant 7.370000e-02 : f32
    %2547 = vector.broadcast %cst_931 : f32 to vector<8x128xf32>
    %2548 = arith.mulf %2547, %2471 : vector<8x128xf32>
    %cst_932 = arith.constant 3.250000e+00 : f32
    %2549 = vector.broadcast %cst_932 : f32 to vector<8x128xf32>
    %2550 = arith.addf %2549, %2548 : vector<8x128xf32>
    %2551 = arith.mulf %2550, %2465 : vector<8x128xf32>
    %cst_933 = arith.constant 2.608900e+02 : f32
    %2552 = vector.broadcast %cst_933 : f32 to vector<8x128xf32>
    %2553 = arith.addf %2552, %2465 : vector<8x128xf32>
    %2554 = arith.divf %2551, %2553 : vector<8x128xf32>
    %cst_934 = arith.constant 0.000000e+00 : f32
    %2555 = vector.broadcast %cst_934 : f32 to vector<8x128xf32>
    %2556 = arith.subf %2555, %2554 : vector<8x128xf32>
    %cst_935 = arith.constant 6.560000e-02 : f32
    %2557 = vector.broadcast %cst_935 : f32 to vector<8x128xf32>
    %2558 = arith.mulf %2557, %2462 : vector<8x128xf32>
    %2559 = arith.addf %2556, %2558 : vector<8x128xf32>
    %cst_936 = arith.constant 7.180000e-02 : f32
    %2560 = vector.broadcast %cst_936 : f32 to vector<8x128xf32>
    %2561 = arith.mulf %2560, %2465 : vector<8x128xf32>
    %2562 = arith.subf %2559, %2561 : vector<8x128xf32>
    %cst_937 = arith.constant 0.000000e+00 : f32
    %2563 = vector.broadcast %cst_937 : f32 to vector<8x128xf32>
    %2564 = arith.cmpf oge, %2465, %2563 : vector<8x128xf32>
    %2565 = arith.select %2564, %2562, %9 : vector<8x128xi1>, vector<8x128xf32>
    %cst_938 = arith.constant -5.500000e-01 : f32
    %2566 = vector.broadcast %cst_938 : f32 to vector<8x128xf32>
    %2567 = arith.mulf %2566, %2468 : vector<8x128xf32>
    %cst_939 = arith.constant 1.450000e-01 : f32
    %2568 = vector.broadcast %cst_939 : f32 to vector<8x128xf32>
    %2569 = arith.mulf %2568, %2480 : vector<8x128xf32>
    %2570 = arith.addf %2567, %2569 : vector<8x128xf32>
    %cst_940 = arith.constant 1.800000e-03 : f32
    %2571 = vector.broadcast %cst_940 : f32 to vector<8x128xf32>
    %2572 = arith.mulf %2571, %2483 : vector<8x128xf32>
    %2573 = arith.addf %2570, %2572 : vector<8x128xf32>
    %cst_941 = arith.constant 1.820000e-02 : f32
    %2574 = vector.broadcast %cst_941 : f32 to vector<8x128xf32>
    %2575 = arith.mulf %2574, %2486 : vector<8x128xf32>
    %2576 = arith.addf %2573, %2575 : vector<8x128xf32>
    %cst_942 = arith.constant 20.4918041 : f32
    %2577 = vector.broadcast %cst_942 : f32 to vector<8x128xf32>
    %2578 = arith.mulf %2468, %2577 : vector<8x128xf32>
    %cst_943 = arith.constant 0.000000e+00 : f32
    %2579 = vector.broadcast %cst_943 : f32 to vector<8x128xf32>
    %2580 = arith.cmpf oge, %2468, %2579 : vector<8x128xf32>
    %2581 = arith.select %2580, %2576, %9 : vector<8x128xi1>, vector<8x128xf32>
    %cst_944 = arith.constant -2.750000e-02 : f32
    %2582 = vector.broadcast %cst_944 : f32 to vector<8x128xf32>
    %2583 = arith.mulf %2582, %2471 : vector<8x128xf32>
    %cst_945 = arith.constant 1.002500e+02 : f32
    %2584 = vector.broadcast %cst_945 : f32 to vector<8x128xf32>
    %2585 = arith.subf %2578, %2584 : vector<8x128xf32>
    %cst_946 = arith.constant 2.750000e-02 : f32
    %2586 = vector.broadcast %cst_946 : f32 to vector<8x128xf32>
    %2587 = arith.mulf %2586, %2585 : vector<8x128xf32>
    %2588 = arith.addf %2583, %2587 : vector<8x128xf32>
    %2589 = arith.subf %2474, %2578 : vector<8x128xf32>
    %cst_947 = arith.constant -7.600000e-03 : f32
    %2590 = vector.broadcast %cst_947 : f32 to vector<8x128xf32>
    %2591 = arith.mulf %2590, %2589 : vector<8x128xf32>
    %2592 = arith.subf %2477, %2474 : vector<8x128xf32>
    %cst_948 = arith.constant -7.600000e-03 : f32
    %2593 = vector.broadcast %cst_948 : f32 to vector<8x128xf32>
    %2594 = arith.mulf %2593, %2592 : vector<8x128xf32>
    %cst_949 = arith.constant -3.650000e-01 : f32
    %2595 = vector.broadcast %cst_949 : f32 to vector<8x128xf32>
    %2596 = arith.mulf %2595, %2480 : vector<8x128xf32>
    %cst_950 = arith.constant 3.930000e-01 : f32
    %2597 = vector.broadcast %cst_950 : f32 to vector<8x128xf32>
    %2598 = arith.mulf %2597, %2468 : vector<8x128xf32>
    %2599 = arith.addf %2596, %2598 : vector<8x128xf32>
    %cst_951 = arith.constant 0.000000e+00 : f32
    %2600 = vector.broadcast %cst_951 : f32 to vector<8x128xf32>
    %2601 = arith.cmpf oge, %2480, %2600 : vector<8x128xf32>
    %2602 = arith.select %2601, %2599, %9 : vector<8x128xi1>, vector<8x128xf32>
    %cst_952 = arith.constant 1.820000e-02 : f32
    %2603 = vector.broadcast %cst_952 : f32 to vector<8x128xf32>
    %2604 = arith.mulf %2603, %2483 : vector<8x128xf32>
    %2605 = arith.subf %13, %2604 : vector<8x128xf32>
    %cst_953 = arith.constant 0.000000e+00 : f32
    %2606 = vector.broadcast %cst_953 : f32 to vector<8x128xf32>
    %2607 = arith.cmpf oge, %2483, %2606 : vector<8x128xf32>
    %2608 = arith.select %2607, %2605, %9 : vector<8x128xi1>, vector<8x128xf32>
    %cst_954 = arith.constant 1.640000e-02 : f32
    %2609 = vector.broadcast %cst_954 : f32 to vector<8x128xf32>
    %2610 = arith.mulf %2609, %2483 : vector<8x128xf32>
    %cst_955 = arith.constant 1.820000e-02 : f32
    %2611 = vector.broadcast %cst_955 : f32 to vector<8x128xf32>
    %2612 = arith.mulf %2611, %2486 : vector<8x128xf32>
    %2613 = arith.subf %2610, %2612 : vector<8x128xf32>
    %cst_956 = arith.constant 0.000000e+00 : f32
    %2614 = vector.broadcast %cst_956 : f32 to vector<8x128xf32>
    %2615 = arith.cmpf oge, %2486, %2614 : vector<8x128xf32>
    %2616 = arith.select %2615, %2613, %9 : vector<8x128xi1>, vector<8x128xf32>
    %cst_957 = arith.constant -5.690000e-02 : f32
    %2617 = vector.broadcast %cst_957 : f32 to vector<8x128xf32>
    %2618 = arith.mulf %2617, %2489 : vector<8x128xf32>
    %cst_958 = arith.constant 5.690000e-02 : f32
    %2619 = vector.broadcast %cst_958 : f32 to vector<8x128xf32>
    %2620 = arith.mulf %2619, %2462 : vector<8x128xf32>
    %2621 = arith.addf %2618, %2620 : vector<8x128xf32>
    %cst_959 = arith.constant 0.000000e+00 : f32
    %2622 = vector.broadcast %cst_959 : f32 to vector<8x128xf32>
    %2623 = arith.cmpf oge, %2489, %2622 : vector<8x128xf32>
    %2624 = arith.select %2623, %2621, %9 : vector<8x128xi1>, vector<8x128xf32>
    %cst_960 = arith.constant 6.250000e-02 : f32
    %2625 = vector.broadcast %cst_960 : f32 to vector<8x128xf32>
    %2626 = arith.mulf %2625, %2508 : vector<8x128xf32>
    %2627 = arith.addf %2453, %2626 : vector<8x128xf32>
    %cst_961 = arith.constant 6.250000e-02 : f32
    %2628 = vector.broadcast %cst_961 : f32 to vector<8x128xf32>
    %2629 = arith.mulf %2628, %2512 : vector<8x128xf32>
    %2630 = arith.addf %2456, %2629 : vector<8x128xf32>
    %cst_962 = arith.constant 6.250000e-02 : f32
    %2631 = vector.broadcast %cst_962 : f32 to vector<8x128xf32>
    %2632 = arith.mulf %2631, %2516 : vector<8x128xf32>
    %2633 = arith.addf %2459, %2632 : vector<8x128xf32>
    %cst_963 = arith.constant 6.250000e-02 : f32
    %2634 = vector.broadcast %cst_963 : f32 to vector<8x128xf32>
    %2635 = arith.mulf %2634, %2546 : vector<8x128xf32>
    %2636 = arith.addf %2462, %2635 : vector<8x128xf32>
    %cst_964 = arith.constant 6.250000e-02 : f32
    %2637 = vector.broadcast %cst_964 : f32 to vector<8x128xf32>
    %2638 = arith.mulf %2637, %2565 : vector<8x128xf32>
    %2639 = arith.addf %2465, %2638 : vector<8x128xf32>
    %cst_965 = arith.constant 6.250000e-02 : f32
    %2640 = vector.broadcast %cst_965 : f32 to vector<8x128xf32>
    %2641 = arith.mulf %2640, %2581 : vector<8x128xf32>
    %2642 = arith.addf %2468, %2641 : vector<8x128xf32>
    %cst_966 = arith.constant 6.250000e-02 : f32
    %2643 = vector.broadcast %cst_966 : f32 to vector<8x128xf32>
    %2644 = arith.mulf %2643, %2588 : vector<8x128xf32>
    %2645 = arith.addf %2471, %2644 : vector<8x128xf32>
    %cst_967 = arith.constant 6.250000e-02 : f32
    %2646 = vector.broadcast %cst_967 : f32 to vector<8x128xf32>
    %2647 = arith.mulf %2646, %2591 : vector<8x128xf32>
    %2648 = arith.addf %2474, %2647 : vector<8x128xf32>
    %cst_968 = arith.constant 6.250000e-02 : f32
    %2649 = vector.broadcast %cst_968 : f32 to vector<8x128xf32>
    %2650 = arith.mulf %2649, %2594 : vector<8x128xf32>
    %2651 = arith.addf %2477, %2650 : vector<8x128xf32>
    %cst_969 = arith.constant 6.250000e-02 : f32
    %2652 = vector.broadcast %cst_969 : f32 to vector<8x128xf32>
    %2653 = arith.mulf %2652, %2602 : vector<8x128xf32>
    %2654 = arith.addf %2480, %2653 : vector<8x128xf32>
    %cst_970 = arith.constant 6.250000e-02 : f32
    %2655 = vector.broadcast %cst_970 : f32 to vector<8x128xf32>
    %2656 = arith.mulf %2655, %2608 : vector<8x128xf32>
    %2657 = arith.addf %2483, %2656 : vector<8x128xf32>
    %cst_971 = arith.constant 6.250000e-02 : f32
    %2658 = vector.broadcast %cst_971 : f32 to vector<8x128xf32>
    %2659 = arith.mulf %2658, %2616 : vector<8x128xf32>
    %2660 = arith.addf %2486, %2659 : vector<8x128xf32>
    %cst_972 = arith.constant 6.250000e-02 : f32
    %2661 = vector.broadcast %cst_972 : f32 to vector<8x128xf32>
    %2662 = arith.mulf %2661, %2624 : vector<8x128xf32>
    %2663 = arith.addf %2489, %2662 : vector<8x128xf32>
    %c14_i32 = arith.constant 14 : i32
    %2664 = arith.addf %2627, %2630 : vector<8x128xf32>
    %2665 = arith.subf %2664, %25 : vector<8x128xf32>
    %2666 = arith.mulf %21, %2665 : vector<8x128xf32>
    %2667 = math.tanh %2666 : vector<8x128xf32>
    %2668 = arith.subf %2664, %27 : vector<8x128xf32>
    %2669 = arith.mulf %23, %2668 : vector<8x128xf32>
    %2670 = math.tanh %2669 : vector<8x128xf32>
    %2671 = arith.subf %2667, %2670 : vector<8x128xf32>
    %cst_973 = arith.constant 2.000000e+00 : f32
    %2672 = vector.broadcast %cst_973 : f32 to vector<8x128xf32>
    %2673 = arith.addf %2671, %2672 : vector<8x128xf32>
    %cst_974 = arith.constant 1.900000e-02 : f32
    %2674 = vector.broadcast %cst_974 : f32 to vector<8x128xf32>
    %2675 = arith.mulf %2674, %2673 : vector<8x128xf32>
    %cst_975 = arith.constant 0.00779999978 : f32
    %2676 = vector.broadcast %cst_975 : f32 to vector<8x128xf32>
    %2677 = arith.addf %2676, %2675 : vector<8x128xf32>
    %cst_976 = arith.constant 4.580000e-02 : f32
    %2678 = vector.broadcast %cst_976 : f32 to vector<8x128xf32>
    %2679 = arith.select %15, %2677, %2678 : vector<8x128xi1>, vector<8x128xf32>
    %cst_977 = arith.constant -4.580000e-02 : f32
    %2680 = vector.broadcast %cst_977 : f32 to vector<8x128xf32>
    %2681 = arith.mulf %2680, %2627 : vector<8x128xf32>
    %2682 = arith.addf %2681, %11 : vector<8x128xf32>
    %cst_978 = arith.constant 4.580000e-02 : f32
    %2683 = vector.broadcast %cst_978 : f32 to vector<8x128xf32>
    %2684 = arith.mulf %2683, %2627 : vector<8x128xf32>
    %2685 = arith.mulf %2630, %2679 : vector<8x128xf32>
    %2686 = arith.subf %2684, %2685 : vector<8x128xf32>
    %2687 = arith.mulf %2679, %2630 : vector<8x128xf32>
    %cst_979 = arith.constant 5.680000e-02 : f32
    %2688 = vector.broadcast %cst_979 : f32 to vector<8x128xf32>
    %2689 = arith.mulf %2688, %2633 : vector<8x128xf32>
    %2690 = arith.subf %2687, %2689 : vector<8x128xf32>
    %cst_980 = arith.constant 7.44104793E-4 : f32
    %2691 = vector.broadcast %cst_980 : f32 to vector<8x128xf32>
    %2692 = arith.mulf %2691, %2633 : vector<8x128xf32>
    %cst_981 = arith.constant 6.490000e-03 : f32
    %2693 = vector.broadcast %cst_981 : f32 to vector<8x128xf32>
    %2694 = arith.mulf %2693, %2636 : vector<8x128xf32>
    %cst_982 = arith.constant 4.730000e+00 : f32
    %2695 = vector.broadcast %cst_982 : f32 to vector<8x128xf32>
    %2696 = arith.subf %2695, %2694 : vector<8x128xf32>
    %cst_983 = arith.constant 9.510000e-03 : f32
    %2697 = vector.broadcast %cst_983 : f32 to vector<8x128xf32>
    %2698 = arith.mulf %2697, %2651 : vector<8x128xf32>
    %2699 = arith.subf %2696, %2698 : vector<8x128xf32>
    %cst_984 = arith.constant 3.390000e+02 : f32
    %2700 = vector.broadcast %cst_984 : f32 to vector<8x128xf32>
    %2701 = arith.cmpf ogt, %2636, %2700 : vector<8x128xf32>
    %cst_985 = arith.constant 3.390000e+02 : f32
    %2702 = vector.broadcast %cst_985 : f32 to vector<8x128xf32>
    %2703 = arith.subf %2636, %2702 : vector<8x128xf32>
    %cst_986 = arith.constant 5.000000e-04 : f32
    %2704 = vector.broadcast %cst_986 : f32 to vector<8x128xf32>
    %2705 = arith.mulf %2704, %2703 : vector<8x128xf32>
    %2706 = arith.select %2701, %2705, %9 : vector<8x128xi1>, vector<8x128xf32>
    %2707 = arith.maximumf %2699, %9 : vector<8x128xf32>
    %2708 = arith.addf %2707, %2692 : vector<8x128xf32>
    %cst_987 = arith.constant 1.000000e+00 : f32
    %2709 = vector.broadcast %cst_987 : f32 to vector<8x128xf32>
    %2710 = arith.subf %2708, %2709 : vector<8x128xf32>
    %2711 = arith.subf %2710, %2706 : vector<8x128xf32>
    %cst_988 = arith.constant 6.560000e-02 : f32
    %2712 = vector.broadcast %cst_988 : f32 to vector<8x128xf32>
    %2713 = arith.mulf %2712, %2636 : vector<8x128xf32>
    %2714 = arith.subf %2711, %2713 : vector<8x128xf32>
    %cst_989 = arith.constant 7.180000e-02 : f32
    %2715 = vector.broadcast %cst_989 : f32 to vector<8x128xf32>
    %2716 = arith.mulf %2715, %2639 : vector<8x128xf32>
    %2717 = arith.addf %2714, %2716 : vector<8x128xf32>
    %cst_990 = arith.constant 0.000000e+00 : f32
    %2718 = vector.broadcast %cst_990 : f32 to vector<8x128xf32>
    %2719 = arith.cmpf oge, %2636, %2718 : vector<8x128xf32>
    %2720 = arith.select %2719, %2717, %9 : vector<8x128xi1>, vector<8x128xf32>
    %cst_991 = arith.constant 7.370000e-02 : f32
    %2721 = vector.broadcast %cst_991 : f32 to vector<8x128xf32>
    %2722 = arith.mulf %2721, %2645 : vector<8x128xf32>
    %cst_992 = arith.constant 3.250000e+00 : f32
    %2723 = vector.broadcast %cst_992 : f32 to vector<8x128xf32>
    %2724 = arith.addf %2723, %2722 : vector<8x128xf32>
    %2725 = arith.mulf %2724, %2639 : vector<8x128xf32>
    %cst_993 = arith.constant 2.608900e+02 : f32
    %2726 = vector.broadcast %cst_993 : f32 to vector<8x128xf32>
    %2727 = arith.addf %2726, %2639 : vector<8x128xf32>
    %2728 = arith.divf %2725, %2727 : vector<8x128xf32>
    %cst_994 = arith.constant 0.000000e+00 : f32
    %2729 = vector.broadcast %cst_994 : f32 to vector<8x128xf32>
    %2730 = arith.subf %2729, %2728 : vector<8x128xf32>
    %cst_995 = arith.constant 6.560000e-02 : f32
    %2731 = vector.broadcast %cst_995 : f32 to vector<8x128xf32>
    %2732 = arith.mulf %2731, %2636 : vector<8x128xf32>
    %2733 = arith.addf %2730, %2732 : vector<8x128xf32>
    %cst_996 = arith.constant 7.180000e-02 : f32
    %2734 = vector.broadcast %cst_996 : f32 to vector<8x128xf32>
    %2735 = arith.mulf %2734, %2639 : vector<8x128xf32>
    %2736 = arith.subf %2733, %2735 : vector<8x128xf32>
    %cst_997 = arith.constant 0.000000e+00 : f32
    %2737 = vector.broadcast %cst_997 : f32 to vector<8x128xf32>
    %2738 = arith.cmpf oge, %2639, %2737 : vector<8x128xf32>
    %2739 = arith.select %2738, %2736, %9 : vector<8x128xi1>, vector<8x128xf32>
    %cst_998 = arith.constant -5.500000e-01 : f32
    %2740 = vector.broadcast %cst_998 : f32 to vector<8x128xf32>
    %2741 = arith.mulf %2740, %2642 : vector<8x128xf32>
    %cst_999 = arith.constant 1.450000e-01 : f32
    %2742 = vector.broadcast %cst_999 : f32 to vector<8x128xf32>
    %2743 = arith.mulf %2742, %2654 : vector<8x128xf32>
    %2744 = arith.addf %2741, %2743 : vector<8x128xf32>
    %cst_1000 = arith.constant 1.800000e-03 : f32
    %2745 = vector.broadcast %cst_1000 : f32 to vector<8x128xf32>
    %2746 = arith.mulf %2745, %2657 : vector<8x128xf32>
    %2747 = arith.addf %2744, %2746 : vector<8x128xf32>
    %cst_1001 = arith.constant 1.820000e-02 : f32
    %2748 = vector.broadcast %cst_1001 : f32 to vector<8x128xf32>
    %2749 = arith.mulf %2748, %2660 : vector<8x128xf32>
    %2750 = arith.addf %2747, %2749 : vector<8x128xf32>
    %cst_1002 = arith.constant 20.4918041 : f32
    %2751 = vector.broadcast %cst_1002 : f32 to vector<8x128xf32>
    %2752 = arith.mulf %2642, %2751 : vector<8x128xf32>
    %cst_1003 = arith.constant 0.000000e+00 : f32
    %2753 = vector.broadcast %cst_1003 : f32 to vector<8x128xf32>
    %2754 = arith.cmpf oge, %2642, %2753 : vector<8x128xf32>
    %2755 = arith.select %2754, %2750, %9 : vector<8x128xi1>, vector<8x128xf32>
    %cst_1004 = arith.constant -2.750000e-02 : f32
    %2756 = vector.broadcast %cst_1004 : f32 to vector<8x128xf32>
    %2757 = arith.mulf %2756, %2645 : vector<8x128xf32>
    %cst_1005 = arith.constant 1.002500e+02 : f32
    %2758 = vector.broadcast %cst_1005 : f32 to vector<8x128xf32>
    %2759 = arith.subf %2752, %2758 : vector<8x128xf32>
    %cst_1006 = arith.constant 2.750000e-02 : f32
    %2760 = vector.broadcast %cst_1006 : f32 to vector<8x128xf32>
    %2761 = arith.mulf %2760, %2759 : vector<8x128xf32>
    %2762 = arith.addf %2757, %2761 : vector<8x128xf32>
    %2763 = arith.subf %2648, %2752 : vector<8x128xf32>
    %cst_1007 = arith.constant -7.600000e-03 : f32
    %2764 = vector.broadcast %cst_1007 : f32 to vector<8x128xf32>
    %2765 = arith.mulf %2764, %2763 : vector<8x128xf32>
    %2766 = arith.subf %2651, %2648 : vector<8x128xf32>
    %cst_1008 = arith.constant -7.600000e-03 : f32
    %2767 = vector.broadcast %cst_1008 : f32 to vector<8x128xf32>
    %2768 = arith.mulf %2767, %2766 : vector<8x128xf32>
    %cst_1009 = arith.constant -3.650000e-01 : f32
    %2769 = vector.broadcast %cst_1009 : f32 to vector<8x128xf32>
    %2770 = arith.mulf %2769, %2654 : vector<8x128xf32>
    %cst_1010 = arith.constant 3.930000e-01 : f32
    %2771 = vector.broadcast %cst_1010 : f32 to vector<8x128xf32>
    %2772 = arith.mulf %2771, %2642 : vector<8x128xf32>
    %2773 = arith.addf %2770, %2772 : vector<8x128xf32>
    %cst_1011 = arith.constant 0.000000e+00 : f32
    %2774 = vector.broadcast %cst_1011 : f32 to vector<8x128xf32>
    %2775 = arith.cmpf oge, %2654, %2774 : vector<8x128xf32>
    %2776 = arith.select %2775, %2773, %9 : vector<8x128xi1>, vector<8x128xf32>
    %cst_1012 = arith.constant 1.820000e-02 : f32
    %2777 = vector.broadcast %cst_1012 : f32 to vector<8x128xf32>
    %2778 = arith.mulf %2777, %2657 : vector<8x128xf32>
    %2779 = arith.subf %13, %2778 : vector<8x128xf32>
    %cst_1013 = arith.constant 0.000000e+00 : f32
    %2780 = vector.broadcast %cst_1013 : f32 to vector<8x128xf32>
    %2781 = arith.cmpf oge, %2657, %2780 : vector<8x128xf32>
    %2782 = arith.select %2781, %2779, %9 : vector<8x128xi1>, vector<8x128xf32>
    %cst_1014 = arith.constant 1.640000e-02 : f32
    %2783 = vector.broadcast %cst_1014 : f32 to vector<8x128xf32>
    %2784 = arith.mulf %2783, %2657 : vector<8x128xf32>
    %cst_1015 = arith.constant 1.820000e-02 : f32
    %2785 = vector.broadcast %cst_1015 : f32 to vector<8x128xf32>
    %2786 = arith.mulf %2785, %2660 : vector<8x128xf32>
    %2787 = arith.subf %2784, %2786 : vector<8x128xf32>
    %cst_1016 = arith.constant 0.000000e+00 : f32
    %2788 = vector.broadcast %cst_1016 : f32 to vector<8x128xf32>
    %2789 = arith.cmpf oge, %2660, %2788 : vector<8x128xf32>
    %2790 = arith.select %2789, %2787, %9 : vector<8x128xi1>, vector<8x128xf32>
    %cst_1017 = arith.constant -5.690000e-02 : f32
    %2791 = vector.broadcast %cst_1017 : f32 to vector<8x128xf32>
    %2792 = arith.mulf %2791, %2663 : vector<8x128xf32>
    %cst_1018 = arith.constant 5.690000e-02 : f32
    %2793 = vector.broadcast %cst_1018 : f32 to vector<8x128xf32>
    %2794 = arith.mulf %2793, %2636 : vector<8x128xf32>
    %2795 = arith.addf %2792, %2794 : vector<8x128xf32>
    %cst_1019 = arith.constant 0.000000e+00 : f32
    %2796 = vector.broadcast %cst_1019 : f32 to vector<8x128xf32>
    %2797 = arith.cmpf oge, %2663, %2796 : vector<8x128xf32>
    %2798 = arith.select %2797, %2795, %9 : vector<8x128xi1>, vector<8x128xf32>
    %cst_1020 = arith.constant 6.250000e-02 : f32
    %2799 = vector.broadcast %cst_1020 : f32 to vector<8x128xf32>
    %2800 = arith.mulf %2799, %2682 : vector<8x128xf32>
    %2801 = arith.addf %2627, %2800 : vector<8x128xf32>
    %cst_1021 = arith.constant 6.250000e-02 : f32
    %2802 = vector.broadcast %cst_1021 : f32 to vector<8x128xf32>
    %2803 = arith.mulf %2802, %2686 : vector<8x128xf32>
    %2804 = arith.addf %2630, %2803 : vector<8x128xf32>
    %cst_1022 = arith.constant 6.250000e-02 : f32
    %2805 = vector.broadcast %cst_1022 : f32 to vector<8x128xf32>
    %2806 = arith.mulf %2805, %2690 : vector<8x128xf32>
    %2807 = arith.addf %2633, %2806 : vector<8x128xf32>
    %cst_1023 = arith.constant 6.250000e-02 : f32
    %2808 = vector.broadcast %cst_1023 : f32 to vector<8x128xf32>
    %2809 = arith.mulf %2808, %2720 : vector<8x128xf32>
    %2810 = arith.addf %2636, %2809 : vector<8x128xf32>
    %cst_1024 = arith.constant 6.250000e-02 : f32
    %2811 = vector.broadcast %cst_1024 : f32 to vector<8x128xf32>
    %2812 = arith.mulf %2811, %2739 : vector<8x128xf32>
    %2813 = arith.addf %2639, %2812 : vector<8x128xf32>
    %cst_1025 = arith.constant 6.250000e-02 : f32
    %2814 = vector.broadcast %cst_1025 : f32 to vector<8x128xf32>
    %2815 = arith.mulf %2814, %2755 : vector<8x128xf32>
    %2816 = arith.addf %2642, %2815 : vector<8x128xf32>
    %cst_1026 = arith.constant 6.250000e-02 : f32
    %2817 = vector.broadcast %cst_1026 : f32 to vector<8x128xf32>
    %2818 = arith.mulf %2817, %2762 : vector<8x128xf32>
    %2819 = arith.addf %2645, %2818 : vector<8x128xf32>
    %cst_1027 = arith.constant 6.250000e-02 : f32
    %2820 = vector.broadcast %cst_1027 : f32 to vector<8x128xf32>
    %2821 = arith.mulf %2820, %2765 : vector<8x128xf32>
    %2822 = arith.addf %2648, %2821 : vector<8x128xf32>
    %cst_1028 = arith.constant 6.250000e-02 : f32
    %2823 = vector.broadcast %cst_1028 : f32 to vector<8x128xf32>
    %2824 = arith.mulf %2823, %2768 : vector<8x128xf32>
    %2825 = arith.addf %2651, %2824 : vector<8x128xf32>
    %cst_1029 = arith.constant 6.250000e-02 : f32
    %2826 = vector.broadcast %cst_1029 : f32 to vector<8x128xf32>
    %2827 = arith.mulf %2826, %2776 : vector<8x128xf32>
    %2828 = arith.addf %2654, %2827 : vector<8x128xf32>
    %cst_1030 = arith.constant 6.250000e-02 : f32
    %2829 = vector.broadcast %cst_1030 : f32 to vector<8x128xf32>
    %2830 = arith.mulf %2829, %2782 : vector<8x128xf32>
    %2831 = arith.addf %2657, %2830 : vector<8x128xf32>
    %cst_1031 = arith.constant 6.250000e-02 : f32
    %2832 = vector.broadcast %cst_1031 : f32 to vector<8x128xf32>
    %2833 = arith.mulf %2832, %2790 : vector<8x128xf32>
    %2834 = arith.addf %2660, %2833 : vector<8x128xf32>
    %cst_1032 = arith.constant 6.250000e-02 : f32
    %2835 = vector.broadcast %cst_1032 : f32 to vector<8x128xf32>
    %2836 = arith.mulf %2835, %2798 : vector<8x128xf32>
    %2837 = arith.addf %2663, %2836 : vector<8x128xf32>
    %c15_i32 = arith.constant 15 : i32
    %2838 = arith.addf %2801, %2804 : vector<8x128xf32>
    %2839 = arith.subf %2838, %25 : vector<8x128xf32>
    %2840 = arith.mulf %21, %2839 : vector<8x128xf32>
    %2841 = math.tanh %2840 : vector<8x128xf32>
    %2842 = arith.subf %2838, %27 : vector<8x128xf32>
    %2843 = arith.mulf %23, %2842 : vector<8x128xf32>
    %2844 = math.tanh %2843 : vector<8x128xf32>
    %2845 = arith.subf %2841, %2844 : vector<8x128xf32>
    %cst_1033 = arith.constant 2.000000e+00 : f32
    %2846 = vector.broadcast %cst_1033 : f32 to vector<8x128xf32>
    %2847 = arith.addf %2845, %2846 : vector<8x128xf32>
    %cst_1034 = arith.constant 1.900000e-02 : f32
    %2848 = vector.broadcast %cst_1034 : f32 to vector<8x128xf32>
    %2849 = arith.mulf %2848, %2847 : vector<8x128xf32>
    %cst_1035 = arith.constant 0.00779999978 : f32
    %2850 = vector.broadcast %cst_1035 : f32 to vector<8x128xf32>
    %2851 = arith.addf %2850, %2849 : vector<8x128xf32>
    %cst_1036 = arith.constant 4.580000e-02 : f32
    %2852 = vector.broadcast %cst_1036 : f32 to vector<8x128xf32>
    %2853 = arith.select %15, %2851, %2852 : vector<8x128xi1>, vector<8x128xf32>
    %cst_1037 = arith.constant -4.580000e-02 : f32
    %2854 = vector.broadcast %cst_1037 : f32 to vector<8x128xf32>
    %2855 = arith.mulf %2854, %2801 : vector<8x128xf32>
    %2856 = arith.addf %2855, %11 : vector<8x128xf32>
    %cst_1038 = arith.constant 4.580000e-02 : f32
    %2857 = vector.broadcast %cst_1038 : f32 to vector<8x128xf32>
    %2858 = arith.mulf %2857, %2801 : vector<8x128xf32>
    %2859 = arith.mulf %2804, %2853 : vector<8x128xf32>
    %2860 = arith.subf %2858, %2859 : vector<8x128xf32>
    %2861 = arith.mulf %2853, %2804 : vector<8x128xf32>
    %cst_1039 = arith.constant 5.680000e-02 : f32
    %2862 = vector.broadcast %cst_1039 : f32 to vector<8x128xf32>
    %2863 = arith.mulf %2862, %2807 : vector<8x128xf32>
    %2864 = arith.subf %2861, %2863 : vector<8x128xf32>
    %cst_1040 = arith.constant 7.44104793E-4 : f32
    %2865 = vector.broadcast %cst_1040 : f32 to vector<8x128xf32>
    %2866 = arith.mulf %2865, %2807 : vector<8x128xf32>
    %cst_1041 = arith.constant 6.490000e-03 : f32
    %2867 = vector.broadcast %cst_1041 : f32 to vector<8x128xf32>
    %2868 = arith.mulf %2867, %2810 : vector<8x128xf32>
    %cst_1042 = arith.constant 4.730000e+00 : f32
    %2869 = vector.broadcast %cst_1042 : f32 to vector<8x128xf32>
    %2870 = arith.subf %2869, %2868 : vector<8x128xf32>
    %cst_1043 = arith.constant 9.510000e-03 : f32
    %2871 = vector.broadcast %cst_1043 : f32 to vector<8x128xf32>
    %2872 = arith.mulf %2871, %2825 : vector<8x128xf32>
    %2873 = arith.subf %2870, %2872 : vector<8x128xf32>
    %cst_1044 = arith.constant 3.390000e+02 : f32
    %2874 = vector.broadcast %cst_1044 : f32 to vector<8x128xf32>
    %2875 = arith.cmpf ogt, %2810, %2874 : vector<8x128xf32>
    %cst_1045 = arith.constant 3.390000e+02 : f32
    %2876 = vector.broadcast %cst_1045 : f32 to vector<8x128xf32>
    %2877 = arith.subf %2810, %2876 : vector<8x128xf32>
    %cst_1046 = arith.constant 5.000000e-04 : f32
    %2878 = vector.broadcast %cst_1046 : f32 to vector<8x128xf32>
    %2879 = arith.mulf %2878, %2877 : vector<8x128xf32>
    %2880 = arith.select %2875, %2879, %9 : vector<8x128xi1>, vector<8x128xf32>
    %2881 = arith.maximumf %2873, %9 : vector<8x128xf32>
    %2882 = arith.addf %2881, %2866 : vector<8x128xf32>
    %cst_1047 = arith.constant 1.000000e+00 : f32
    %2883 = vector.broadcast %cst_1047 : f32 to vector<8x128xf32>
    %2884 = arith.subf %2882, %2883 : vector<8x128xf32>
    %2885 = arith.subf %2884, %2880 : vector<8x128xf32>
    %cst_1048 = arith.constant 6.560000e-02 : f32
    %2886 = vector.broadcast %cst_1048 : f32 to vector<8x128xf32>
    %2887 = arith.mulf %2886, %2810 : vector<8x128xf32>
    %2888 = arith.subf %2885, %2887 : vector<8x128xf32>
    %cst_1049 = arith.constant 7.180000e-02 : f32
    %2889 = vector.broadcast %cst_1049 : f32 to vector<8x128xf32>
    %2890 = arith.mulf %2889, %2813 : vector<8x128xf32>
    %2891 = arith.addf %2888, %2890 : vector<8x128xf32>
    %cst_1050 = arith.constant 0.000000e+00 : f32
    %2892 = vector.broadcast %cst_1050 : f32 to vector<8x128xf32>
    %2893 = arith.cmpf oge, %2810, %2892 : vector<8x128xf32>
    %2894 = arith.select %2893, %2891, %9 : vector<8x128xi1>, vector<8x128xf32>
    %cst_1051 = arith.constant 7.370000e-02 : f32
    %2895 = vector.broadcast %cst_1051 : f32 to vector<8x128xf32>
    %2896 = arith.mulf %2895, %2819 : vector<8x128xf32>
    %cst_1052 = arith.constant 3.250000e+00 : f32
    %2897 = vector.broadcast %cst_1052 : f32 to vector<8x128xf32>
    %2898 = arith.addf %2897, %2896 : vector<8x128xf32>
    %2899 = arith.mulf %2898, %2813 : vector<8x128xf32>
    %cst_1053 = arith.constant 2.608900e+02 : f32
    %2900 = vector.broadcast %cst_1053 : f32 to vector<8x128xf32>
    %2901 = arith.addf %2900, %2813 : vector<8x128xf32>
    %2902 = arith.divf %2899, %2901 : vector<8x128xf32>
    %cst_1054 = arith.constant 0.000000e+00 : f32
    %2903 = vector.broadcast %cst_1054 : f32 to vector<8x128xf32>
    %2904 = arith.subf %2903, %2902 : vector<8x128xf32>
    %cst_1055 = arith.constant 6.560000e-02 : f32
    %2905 = vector.broadcast %cst_1055 : f32 to vector<8x128xf32>
    %2906 = arith.mulf %2905, %2810 : vector<8x128xf32>
    %2907 = arith.addf %2904, %2906 : vector<8x128xf32>
    %cst_1056 = arith.constant 7.180000e-02 : f32
    %2908 = vector.broadcast %cst_1056 : f32 to vector<8x128xf32>
    %2909 = arith.mulf %2908, %2813 : vector<8x128xf32>
    %2910 = arith.subf %2907, %2909 : vector<8x128xf32>
    %cst_1057 = arith.constant 0.000000e+00 : f32
    %2911 = vector.broadcast %cst_1057 : f32 to vector<8x128xf32>
    %2912 = arith.cmpf oge, %2813, %2911 : vector<8x128xf32>
    %2913 = arith.select %2912, %2910, %9 : vector<8x128xi1>, vector<8x128xf32>
    %cst_1058 = arith.constant -5.500000e-01 : f32
    %2914 = vector.broadcast %cst_1058 : f32 to vector<8x128xf32>
    %2915 = arith.mulf %2914, %2816 : vector<8x128xf32>
    %cst_1059 = arith.constant 1.450000e-01 : f32
    %2916 = vector.broadcast %cst_1059 : f32 to vector<8x128xf32>
    %2917 = arith.mulf %2916, %2828 : vector<8x128xf32>
    %2918 = arith.addf %2915, %2917 : vector<8x128xf32>
    %cst_1060 = arith.constant 1.800000e-03 : f32
    %2919 = vector.broadcast %cst_1060 : f32 to vector<8x128xf32>
    %2920 = arith.mulf %2919, %2831 : vector<8x128xf32>
    %2921 = arith.addf %2918, %2920 : vector<8x128xf32>
    %cst_1061 = arith.constant 1.820000e-02 : f32
    %2922 = vector.broadcast %cst_1061 : f32 to vector<8x128xf32>
    %2923 = arith.mulf %2922, %2834 : vector<8x128xf32>
    %2924 = arith.addf %2921, %2923 : vector<8x128xf32>
    %cst_1062 = arith.constant 20.4918041 : f32
    %2925 = vector.broadcast %cst_1062 : f32 to vector<8x128xf32>
    %2926 = arith.mulf %2816, %2925 : vector<8x128xf32>
    %cst_1063 = arith.constant 0.000000e+00 : f32
    %2927 = vector.broadcast %cst_1063 : f32 to vector<8x128xf32>
    %2928 = arith.cmpf oge, %2816, %2927 : vector<8x128xf32>
    %2929 = arith.select %2928, %2924, %9 : vector<8x128xi1>, vector<8x128xf32>
    %cst_1064 = arith.constant -2.750000e-02 : f32
    %2930 = vector.broadcast %cst_1064 : f32 to vector<8x128xf32>
    %2931 = arith.mulf %2930, %2819 : vector<8x128xf32>
    %cst_1065 = arith.constant 1.002500e+02 : f32
    %2932 = vector.broadcast %cst_1065 : f32 to vector<8x128xf32>
    %2933 = arith.subf %2926, %2932 : vector<8x128xf32>
    %cst_1066 = arith.constant 2.750000e-02 : f32
    %2934 = vector.broadcast %cst_1066 : f32 to vector<8x128xf32>
    %2935 = arith.mulf %2934, %2933 : vector<8x128xf32>
    %2936 = arith.addf %2931, %2935 : vector<8x128xf32>
    %2937 = arith.subf %2822, %2926 : vector<8x128xf32>
    %cst_1067 = arith.constant -7.600000e-03 : f32
    %2938 = vector.broadcast %cst_1067 : f32 to vector<8x128xf32>
    %2939 = arith.mulf %2938, %2937 : vector<8x128xf32>
    %2940 = arith.subf %2825, %2822 : vector<8x128xf32>
    %cst_1068 = arith.constant -7.600000e-03 : f32
    %2941 = vector.broadcast %cst_1068 : f32 to vector<8x128xf32>
    %2942 = arith.mulf %2941, %2940 : vector<8x128xf32>
    %cst_1069 = arith.constant -3.650000e-01 : f32
    %2943 = vector.broadcast %cst_1069 : f32 to vector<8x128xf32>
    %2944 = arith.mulf %2943, %2828 : vector<8x128xf32>
    %cst_1070 = arith.constant 3.930000e-01 : f32
    %2945 = vector.broadcast %cst_1070 : f32 to vector<8x128xf32>
    %2946 = arith.mulf %2945, %2816 : vector<8x128xf32>
    %2947 = arith.addf %2944, %2946 : vector<8x128xf32>
    %cst_1071 = arith.constant 0.000000e+00 : f32
    %2948 = vector.broadcast %cst_1071 : f32 to vector<8x128xf32>
    %2949 = arith.cmpf oge, %2828, %2948 : vector<8x128xf32>
    %2950 = arith.select %2949, %2947, %9 : vector<8x128xi1>, vector<8x128xf32>
    %cst_1072 = arith.constant 1.820000e-02 : f32
    %2951 = vector.broadcast %cst_1072 : f32 to vector<8x128xf32>
    %2952 = arith.mulf %2951, %2831 : vector<8x128xf32>
    %2953 = arith.subf %13, %2952 : vector<8x128xf32>
    %cst_1073 = arith.constant 0.000000e+00 : f32
    %2954 = vector.broadcast %cst_1073 : f32 to vector<8x128xf32>
    %2955 = arith.cmpf oge, %2831, %2954 : vector<8x128xf32>
    %2956 = arith.select %2955, %2953, %9 : vector<8x128xi1>, vector<8x128xf32>
    %cst_1074 = arith.constant 1.640000e-02 : f32
    %2957 = vector.broadcast %cst_1074 : f32 to vector<8x128xf32>
    %2958 = arith.mulf %2957, %2831 : vector<8x128xf32>
    %cst_1075 = arith.constant 1.820000e-02 : f32
    %2959 = vector.broadcast %cst_1075 : f32 to vector<8x128xf32>
    %2960 = arith.mulf %2959, %2834 : vector<8x128xf32>
    %2961 = arith.subf %2958, %2960 : vector<8x128xf32>
    %cst_1076 = arith.constant 0.000000e+00 : f32
    %2962 = vector.broadcast %cst_1076 : f32 to vector<8x128xf32>
    %2963 = arith.cmpf oge, %2834, %2962 : vector<8x128xf32>
    %2964 = arith.select %2963, %2961, %9 : vector<8x128xi1>, vector<8x128xf32>
    %cst_1077 = arith.constant -5.690000e-02 : f32
    %2965 = vector.broadcast %cst_1077 : f32 to vector<8x128xf32>
    %2966 = arith.mulf %2965, %2837 : vector<8x128xf32>
    %cst_1078 = arith.constant 5.690000e-02 : f32
    %2967 = vector.broadcast %cst_1078 : f32 to vector<8x128xf32>
    %2968 = arith.mulf %2967, %2810 : vector<8x128xf32>
    %2969 = arith.addf %2966, %2968 : vector<8x128xf32>
    %cst_1079 = arith.constant 0.000000e+00 : f32
    %2970 = vector.broadcast %cst_1079 : f32 to vector<8x128xf32>
    %2971 = arith.cmpf oge, %2837, %2970 : vector<8x128xf32>
    %2972 = arith.select %2971, %2969, %9 : vector<8x128xi1>, vector<8x128xf32>
    %cst_1080 = arith.constant 6.250000e-02 : f32
    %2973 = vector.broadcast %cst_1080 : f32 to vector<8x128xf32>
    %2974 = arith.mulf %2973, %2856 : vector<8x128xf32>
    %2975 = arith.addf %2801, %2974 : vector<8x128xf32>
    %cst_1081 = arith.constant 6.250000e-02 : f32
    %2976 = vector.broadcast %cst_1081 : f32 to vector<8x128xf32>
    %2977 = arith.mulf %2976, %2860 : vector<8x128xf32>
    %2978 = arith.addf %2804, %2977 : vector<8x128xf32>
    %cst_1082 = arith.constant 6.250000e-02 : f32
    %2979 = vector.broadcast %cst_1082 : f32 to vector<8x128xf32>
    %2980 = arith.mulf %2979, %2864 : vector<8x128xf32>
    %2981 = arith.addf %2807, %2980 : vector<8x128xf32>
    %cst_1083 = arith.constant 6.250000e-02 : f32
    %2982 = vector.broadcast %cst_1083 : f32 to vector<8x128xf32>
    %2983 = arith.mulf %2982, %2894 : vector<8x128xf32>
    %2984 = arith.addf %2810, %2983 : vector<8x128xf32>
    %cst_1084 = arith.constant 6.250000e-02 : f32
    %2985 = vector.broadcast %cst_1084 : f32 to vector<8x128xf32>
    %2986 = arith.mulf %2985, %2913 : vector<8x128xf32>
    %2987 = arith.addf %2813, %2986 : vector<8x128xf32>
    %cst_1085 = arith.constant 6.250000e-02 : f32
    %2988 = vector.broadcast %cst_1085 : f32 to vector<8x128xf32>
    %2989 = arith.mulf %2988, %2929 : vector<8x128xf32>
    %2990 = arith.addf %2816, %2989 : vector<8x128xf32>
    %cst_1086 = arith.constant 6.250000e-02 : f32
    %2991 = vector.broadcast %cst_1086 : f32 to vector<8x128xf32>
    %2992 = arith.mulf %2991, %2936 : vector<8x128xf32>
    %2993 = arith.addf %2819, %2992 : vector<8x128xf32>
    %cst_1087 = arith.constant 6.250000e-02 : f32
    %2994 = vector.broadcast %cst_1087 : f32 to vector<8x128xf32>
    %2995 = arith.mulf %2994, %2939 : vector<8x128xf32>
    %2996 = arith.addf %2822, %2995 : vector<8x128xf32>
    %cst_1088 = arith.constant 6.250000e-02 : f32
    %2997 = vector.broadcast %cst_1088 : f32 to vector<8x128xf32>
    %2998 = arith.mulf %2997, %2942 : vector<8x128xf32>
    %2999 = arith.addf %2825, %2998 : vector<8x128xf32>
    %cst_1089 = arith.constant 6.250000e-02 : f32
    %3000 = vector.broadcast %cst_1089 : f32 to vector<8x128xf32>
    %3001 = arith.mulf %3000, %2950 : vector<8x128xf32>
    %3002 = arith.addf %2828, %3001 : vector<8x128xf32>
    %cst_1090 = arith.constant 6.250000e-02 : f32
    %3003 = vector.broadcast %cst_1090 : f32 to vector<8x128xf32>
    %3004 = arith.mulf %3003, %2956 : vector<8x128xf32>
    %3005 = arith.addf %2831, %3004 : vector<8x128xf32>
    %cst_1091 = arith.constant 6.250000e-02 : f32
    %3006 = vector.broadcast %cst_1091 : f32 to vector<8x128xf32>
    %3007 = arith.mulf %3006, %2964 : vector<8x128xf32>
    %3008 = arith.addf %2834, %3007 : vector<8x128xf32>
    %cst_1092 = arith.constant 6.250000e-02 : f32
    %3009 = vector.broadcast %cst_1092 : f32 to vector<8x128xf32>
    %3010 = arith.mulf %3009, %2972 : vector<8x128xf32>
    %3011 = arith.addf %2837, %3010 : vector<8x128xf32>
    %c0_1093 = arith.constant 0 : index
    %c0_1094 = arith.constant 0 : index
    %c0_1095 = arith.constant 0 : index
    %3012 = vector.load %arg3[%c0_1093, %c0_1094, %c0_1095] : memref<13x8x128xf32, #tpu.memory_space<vmem>>, vector<1x8x128xf32>
    %3013 = vector.shape_cast %3012 : vector<1x8x128xf32> to vector<8x128xf32>
    %3014 = vector.shape_cast %2975 : vector<8x128xf32> to vector<1x8x128xf32>
    tpu.vector_store %arg3[%c0_1093, %c0_1094, %c0_1095], %3014 {strides = array<i32>} : memref<13x8x128xf32, #tpu.memory_space<vmem>>, vector<1x8x128xf32>,
    %c1_1096 = arith.constant 1 : index
    %c0_1097 = arith.constant 0 : index
    %c0_1098 = arith.constant 0 : index
    %3015 = vector.load %arg3[%c1_1096, %c0_1097, %c0_1098] : memref<13x8x128xf32, #tpu.memory_space<vmem>>, vector<1x8x128xf32>
    %3016 = vector.shape_cast %3015 : vector<1x8x128xf32> to vector<8x128xf32>
    %3017 = vector.shape_cast %2978 : vector<8x128xf32> to vector<1x8x128xf32>
    tpu.vector_store %arg3[%c1_1096, %c0_1097, %c0_1098], %3017 {strides = array<i32>} : memref<13x8x128xf32, #tpu.memory_space<vmem>>, vector<1x8x128xf32>,
    %c2_1099 = arith.constant 2 : index
    %c0_1100 = arith.constant 0 : index
    %c0_1101 = arith.constant 0 : index
    %3018 = vector.load %arg3[%c2_1099, %c0_1100, %c0_1101] : memref<13x8x128xf32, #tpu.memory_space<vmem>>, vector<1x8x128xf32>
    %3019 = vector.shape_cast %3018 : vector<1x8x128xf32> to vector<8x128xf32>
    %3020 = vector.shape_cast %2981 : vector<8x128xf32> to vector<1x8x128xf32>
    tpu.vector_store %arg3[%c2_1099, %c0_1100, %c0_1101], %3020 {strides = array<i32>} : memref<13x8x128xf32, #tpu.memory_space<vmem>>, vector<1x8x128xf32>,
    %c3_1102 = arith.constant 3 : index
    %c0_1103 = arith.constant 0 : index
    %c0_1104 = arith.constant 0 : index
    %3021 = vector.load %arg3[%c3_1102, %c0_1103, %c0_1104] : memref<13x8x128xf32, #tpu.memory_space<vmem>>, vector<1x8x128xf32>
    %3022 = vector.shape_cast %3021 : vector<1x8x128xf32> to vector<8x128xf32>
    %3023 = vector.shape_cast %2984 : vector<8x128xf32> to vector<1x8x128xf32>
    tpu.vector_store %arg3[%c3_1102, %c0_1103, %c0_1104], %3023 {strides = array<i32>} : memref<13x8x128xf32, #tpu.memory_space<vmem>>, vector<1x8x128xf32>,
    %c4_1105 = arith.constant 4 : index
    %c0_1106 = arith.constant 0 : index
    %c0_1107 = arith.constant 0 : index
    %3024 = vector.load %arg3[%c4_1105, %c0_1106, %c0_1107] : memref<13x8x128xf32, #tpu.memory_space<vmem>>, vector<1x8x128xf32>
    %3025 = vector.shape_cast %3024 : vector<1x8x128xf32> to vector<8x128xf32>
    %3026 = vector.shape_cast %2987 : vector<8x128xf32> to vector<1x8x128xf32>
    tpu.vector_store %arg3[%c4_1105, %c0_1106, %c0_1107], %3026 {strides = array<i32>} : memref<13x8x128xf32, #tpu.memory_space<vmem>>, vector<1x8x128xf32>,
    %c5_1108 = arith.constant 5 : index
    %c0_1109 = arith.constant 0 : index
    %c0_1110 = arith.constant 0 : index
    %3027 = vector.load %arg3[%c5_1108, %c0_1109, %c0_1110] : memref<13x8x128xf32, #tpu.memory_space<vmem>>, vector<1x8x128xf32>
    %3028 = vector.shape_cast %3027 : vector<1x8x128xf32> to vector<8x128xf32>
    %3029 = vector.shape_cast %2990 : vector<8x128xf32> to vector<1x8x128xf32>
    tpu.vector_store %arg3[%c5_1108, %c0_1109, %c0_1110], %3029 {strides = array<i32>} : memref<13x8x128xf32, #tpu.memory_space<vmem>>, vector<1x8x128xf32>,
    %c6_1111 = arith.constant 6 : index
    %c0_1112 = arith.constant 0 : index
    %c0_1113 = arith.constant 0 : index
    %3030 = vector.load %arg3[%c6_1111, %c0_1112, %c0_1113] : memref<13x8x128xf32, #tpu.memory_space<vmem>>, vector<1x8x128xf32>
    %3031 = vector.shape_cast %3030 : vector<1x8x128xf32> to vector<8x128xf32>
    %3032 = vector.shape_cast %2993 : vector<8x128xf32> to vector<1x8x128xf32>
    tpu.vector_store %arg3[%c6_1111, %c0_1112, %c0_1113], %3032 {strides = array<i32>} : memref<13x8x128xf32, #tpu.memory_space<vmem>>, vector<1x8x128xf32>,
    %c7_1114 = arith.constant 7 : index
    %c0_1115 = arith.constant 0 : index
    %c0_1116 = arith.constant 0 : index
    %3033 = vector.load %arg3[%c7_1114, %c0_1115, %c0_1116] : memref<13x8x128xf32, #tpu.memory_space<vmem>>, vector<1x8x128xf32>
    %3034 = vector.shape_cast %3033 : vector<1x8x128xf32> to vector<8x128xf32>
    %3035 = vector.shape_cast %2996 : vector<8x128xf32> to vector<1x8x128xf32>
    tpu.vector_store %arg3[%c7_1114, %c0_1115, %c0_1116], %3035 {strides = array<i32>} : memref<13x8x128xf32, #tpu.memory_space<vmem>>, vector<1x8x128xf32>,
    %c8_1117 = arith.constant 8 : index
    %c0_1118 = arith.constant 0 : index
    %c0_1119 = arith.constant 0 : index
    %3036 = vector.load %arg3[%c8_1117, %c0_1118, %c0_1119] : memref<13x8x128xf32, #tpu.memory_space<vmem>>, vector<1x8x128xf32>
    %3037 = vector.shape_cast %3036 : vector<1x8x128xf32> to vector<8x128xf32>
    %3038 = vector.shape_cast %2999 : vector<8x128xf32> to vector<1x8x128xf32>
    tpu.vector_store %arg3[%c8_1117, %c0_1118, %c0_1119], %3038 {strides = array<i32>} : memref<13x8x128xf32, #tpu.memory_space<vmem>>, vector<1x8x128xf32>,
    %c9_1120 = arith.constant 9 : index
    %c0_1121 = arith.constant 0 : index
    %c0_1122 = arith.constant 0 : index
    %3039 = vector.load %arg3[%c9_1120, %c0_1121, %c0_1122] : memref<13x8x128xf32, #tpu.memory_space<vmem>>, vector<1x8x128xf32>
    %3040 = vector.shape_cast %3039 : vector<1x8x128xf32> to vector<8x128xf32>
    %3041 = vector.shape_cast %3002 : vector<8x128xf32> to vector<1x8x128xf32>
    tpu.vector_store %arg3[%c9_1120, %c0_1121, %c0_1122], %3041 {strides = array<i32>} : memref<13x8x128xf32, #tpu.memory_space<vmem>>, vector<1x8x128xf32>,
    %c10_1123 = arith.constant 10 : index
    %c0_1124 = arith.constant 0 : index
    %c0_1125 = arith.constant 0 : index
    %3042 = vector.load %arg3[%c10_1123, %c0_1124, %c0_1125] : memref<13x8x128xf32, #tpu.memory_space<vmem>>, vector<1x8x128xf32>
    %3043 = vector.shape_cast %3042 : vector<1x8x128xf32> to vector<8x128xf32>
    %3044 = vector.shape_cast %3005 : vector<8x128xf32> to vector<1x8x128xf32>
    tpu.vector_store %arg3[%c10_1123, %c0_1124, %c0_1125], %3044 {strides = array<i32>} : memref<13x8x128xf32, #tpu.memory_space<vmem>>, vector<1x8x128xf32>,
    %c11_1126 = arith.constant 11 : index
    %c0_1127 = arith.constant 0 : index
    %c0_1128 = arith.constant 0 : index
    %3045 = vector.load %arg3[%c11_1126, %c0_1127, %c0_1128] : memref<13x8x128xf32, #tpu.memory_space<vmem>>, vector<1x8x128xf32>
    %3046 = vector.shape_cast %3045 : vector<1x8x128xf32> to vector<8x128xf32>
    %3047 = vector.shape_cast %3008 : vector<8x128xf32> to vector<1x8x128xf32>
    tpu.vector_store %arg3[%c11_1126, %c0_1127, %c0_1128], %3047 {strides = array<i32>} : memref<13x8x128xf32, #tpu.memory_space<vmem>>, vector<1x8x128xf32>,
    %c12_1129 = arith.constant 12 : index
    %c0_1130 = arith.constant 0 : index
    %c0_1131 = arith.constant 0 : index
    %3048 = vector.load %arg3[%c12_1129, %c0_1130, %c0_1131] : memref<13x8x128xf32, #tpu.memory_space<vmem>>, vector<1x8x128xf32>
    %3049 = vector.shape_cast %3048 : vector<1x8x128xf32> to vector<8x128xf32>
    %3050 = vector.shape_cast %3011 : vector<8x128xf32> to vector<1x8x128xf32>
    tpu.vector_store %arg3[%c12_1129, %c0_1130, %c0_1131], %3050 {strides = array<i32>} : memref<13x8x128xf32, #tpu.memory_space<vmem>>, vector<1x8x128xf32>,
    return
  }
  func.func @transform_0(%arg0: i32) -> (i32, i32, i32) {
    %c0_i32 = arith.constant 0 : i32
    %c0_i32_0 = arith.constant 0 : i32
    %c0_i32_1 = arith.constant 0 : i32
    return %c0_i32, %arg0, %c0_i32_0 : i32, i32, i32
  }
  func.func @transform_1(%arg0: i32) -> (i32, i32, i32) {
    %c0_i32 = arith.constant 0 : i32
    %c0_i32_0 = arith.constant 0 : i32
    %c0_i32_1 = arith.constant 0 : i32
    return %c0_i32, %arg0, %c0_i32_0 : i32, i32, i32
  }
  func.func @transform_2(%arg0: i32) -> (i32, i32, i32) {
    %c0_i32 = arith.constant 0 : i32
    %c0_i32_0 = arith.constant 0 : i32
    %c0_i32_1 = arith.constant 0 : i32
    return %c0_i32, %arg0, %c0_i32_0 : i32, i32, i32
  }
  func.func @transform_3(%arg0: i32) -> (i32, i32, i32) {
    %c0_i32 = arith.constant 0 : i32
    %c0_i32_0 = arith.constant 0 : i32
    %c0_i32_1 = arith.constant 0 : i32
    return %c0_i32, %arg0, %c0_i32_0 : i32, i32, i32
  }
}

</mosaic_0001>

<llo_original>
// kernel: tpu_custom_call.1
$region0: #{tpu_custom_call.1}
  #allocation0 [shape = 'u32[]', space=smem, size = 0x4, offset = 0x4, fixed_abs, tag = 'smem constant byte address 0x4 - core index']
  #allocation1 [shape = 'u32[144,128]{1,0:T(1,128)}', space=vmem, size = 0x12000, scoped, tag = 'internal scratch']
  %s0 = inlined_call_operand.hbm [shape: f32[13,16,128], index: 0, kind: input, shape index: {}]
  %s1 = inlined_call_operand.hbm [shape: f32[4,16,128], index: 1, kind: input, shape index: {}]
  %s2 = inlined_call_operand.hbm [shape: f32[13,16,128], index: 2, kind: output, shape index: {0}]
  %s3 = inlined_call_operand.hbm [shape: f32[13,16,128], index: 3, kind: output, shape index: {1}]
  %4 = xla_tuple %s2, %s3
  %s5 = sld [smem:[#allocation0]]
  $region57: #{tpu_custom_call.1} parent=0
    _
  %s7 = ssub.s32 1, %s5
  %s8 = scalar_select 0, %s7, %s5
  $region1: #{tpu_custom_call.1} parent=0
    #allocation2 [shape = 'u8[106496]{0}', space=vmem, size = 0x1a000, scoped, tag = 'input window, operand 0']
    #allocation3 [shape = 's32[2]{0}', space=sflag, size = 0x8, scoped, tag = 'scoped memory for tpu_custom_call.1']
    #allocation4 [shape = 's32[2]{0}', space=sflag, size = 0x8, scoped, tag = 'scoped memory for tpu_custom_call.1']
    #allocation5 [shape = 'u8[32768]{0}', space=vmem, size = 0x8000, scoped, tag = 'input window, operand 1']
    #allocation6 [shape = 's32[2]{0}', space=sflag, size = 0x8, scoped, tag = 'scoped memory for tpu_custom_call.1']
    #allocation7 [shape = 'u8[106496]{0}', space=vmem, size = 0x1a000, scoped, tag = 'output window, operand 0']
    #allocation8 [shape = 'u8[106496]{0}', space=vmem, size = 0x1a000, scoped, tag = 'output window, operand 1']
    #allocation9 [shape = 's32[2]{0}', space=sflag, size = 0x8, scoped, tag = 'scoped memory for tpu_custom_call.1']
    %9 = vsyncpa [#allocation3], 0
    %s10 = scalar_lea.sflag [#allocation3], 1
    %11 = vsyncpa %s10, 0
    %12 = vsyncpa [#allocation6], 0
    %s13 = scalar_lea.sflag [#allocation6], 1
    %14 = vsyncpa %s13, 0
    %15 = vsyncpa [#allocation4], 0
    %s16 = scalar_lea.sflag [#allocation4], 1
    %17 = vsyncpa %s16, 0
    %18 = vsyncpa [#allocation9], 0
    %s19 = scalar_lea.sflag [#allocation9], 1
    %20 = vsyncpa %s19, 0
    loop: start=0, step=1, limit=4
    $region2: #{tpu_custom_call.1} parent=1 // loop_pre_header
      _
    $region3: #{tpu_custom_call.1} parent=1 // loop_header
      %s22 = sphi 0, %s26
      %p23 = scmp.ge.s32.totalorder %s22, 4
      %s32 = sphi 0, %s34
      %s35 = sphi 0, %s32
      %s36 = sphi 0, %s35
      %s52 = sphi 0, %s36
      %s58 = sphi 0, %s60
      %s61 = sphi 0, %s58
      %s62 = sphi 0, %s61
      %s78 = sphi 0, %s62
      %s84 = sphi 0, %s86
      %s87 = sphi 0, %s84
      %s88 = sphi 0, %s87
      %s104 = sphi 0, %s88
      %s110 = sphi 0, %s112
      %s113 = sphi 0, %s110
      %s114 = sphi 0, %s113
      %s130 = sphi 0, %s114
    $region4: #{tpu_custom_call.1} parent=1 // loop_header_branch
      %25 = sbr.rel (%p23) target = $region8
    $region5: #{tpu_custom_call.1} parent=1 // loop_body
      %s27 = ssub.s32 %s22, 1
      %s28 = ssub.s32 %s22, 2
      %s29 = sadd.s32 %s22, 1
      %s30 = ssub.s32 %s22, %s29
      %p31 = scmp.eq.s32.totalorder %s30, 0
      %s33 = sadd.s32 %s32, 1
      %s34 = scalar_select %p31, %s32, %s33
      %p37 = pneg %p31
      %p38 = scmp.eq.s32.totalorder %s22, 1
      %p39 = por %p37, %p38
      %p40 = scmp.ne.s32.totalorder %s32, %s35
      %p41 = scmp.eq.s32.totalorder %s22, 0
      %p42 = por %p40, %p41
      %p43 = scmp.ne.s32.totalorder %s32, %s35
      %p44 = scmp.eq.s32.totalorder %s27, 1
      %p45 = por %p43, %p44
      %p46 = scmp.ne.s32.totalorder %s35, %s36
      %p47 = scmp.eq.s32.totalorder %s27, 0
      %p48 = por %p46, %p47
      %p49 = scmp.ne.s32.totalorder %s35, %s36
      %p50 = scmp.eq.s32.totalorder %s28, 1
      %p51 = por %p49, %p50
      %p53 = scmp.ne.s32.totalorder %s36, %s52
      %p54 = scmp.eq.s32.totalorder %s28, 0
      %p55 = por %p53, %p54
      %s56 = ssub.s32 %s22, %s29
      %p57 = scmp.eq.s32.totalorder %s56, 0
      %s59 = sadd.s32 %s58, 1
      %s60 = scalar_select %p57, %s58, %s59
      %p63 = pneg %p57
      %p64 = scmp.eq.s32.totalorder %s22, 1
      %p65 = por %p63, %p64
      %p66 = scmp.ne.s32.totalorder %s58, %s61
      %p67 = scmp.eq.s32.totalorder %s22, 0
      %p68 = por %p66, %p67
      %p69 = scmp.ne.s32.totalorder %s58, %s61
      %p70 = scmp.eq.s32.totalorder %s27, 1
      %p71 = por %p69, %p70
      %p72 = scmp.ne.s32.totalorder %s61, %s62
      %p73 = scmp.eq.s32.totalorder %s27, 0
      %p74 = por %p72, %p73
      %p75 = scmp.ne.s32.totalorder %s61, %s62
      %p76 = scmp.eq.s32.totalorder %s28, 1
      %p77 = por %p75, %p76
      %p79 = scmp.ne.s32.totalorder %s62, %s78
      %p80 = scmp.eq.s32.totalorder %s28, 0
      %p81 = por %p79, %p80
      %s82 = ssub.s32 %s22, %s29
      %p83 = scmp.eq.s32.totalorder %s82, 0
      %s85 = sadd.s32 %s84, 1
      %s86 = scalar_select %p83, %s84, %s85
      %p89 = pneg %p83
      %p90 = scmp.eq.s32.totalorder %s22, 1
      %p91 = por %p89, %p90
      %p92 = scmp.ne.s32.totalorder %s84, %s87
      %p93 = scmp.eq.s32.totalorder %s22, 0
      %p94 = por %p92, %p93
      %p95 = scmp.ne.s32.totalorder %s84, %s87
      %p96 = scmp.eq.s32.totalorder %s27, 1
      %p97 = por %p95, %p96
      %p98 = scmp.ne.s32.totalorder %s87, %s88
      %p99 = scmp.eq.s32.totalorder %s27, 0
      %p100 = por %p98, %p99
      %p101 = scmp.ne.s32.totalorder %s87, %s88
      %p102 = scmp.eq.s32.totalorder %s28, 1
      %p103 = por %p101, %p102
      %p105 = scmp.ne.s32.totalorder %s88, %s104
      %p106 = scmp.eq.s32.totalorder %s28, 0
      %p107 = por %p105, %p106
      %s108 = ssub.s32 %s22, %s29
      %p109 = scmp.eq.s32.totalorder %s108, 0
      %s111 = sadd.s32 %s110, 1
      %s112 = scalar_select %p109, %s110, %s111
      %p115 = pneg %p109
      %p116 = scmp.eq.s32.totalorder %s22, 1
      %p117 = por %p115, %p116
      %p118 = scmp.ne.s32.totalorder %s110, %s113
      %p119 = scmp.eq.s32.totalorder %s22, 0
      %p120 = por %p118, %p119
      %p121 = scmp.ne.s32.totalorder %s110, %s113
      %p122 = scmp.eq.s32.totalorder %s27, 1
      %p123 = por %p121, %p122
      %p124 = scmp.ne.s32.totalorder %s113, %s114
      %p125 = scmp.eq.s32.totalorder %s27, 0
      %p126 = por %p124, %p125
      %p127 = scmp.ne.s32.totalorder %s113, %s114
      %p128 = scmp.eq.s32.totalorder %s28, 1
      %p129 = por %p127, %p128
      %p131 = scmp.ne.s32.totalorder %s114, %s130
      %p132 = scmp.eq.s32.totalorder %s28, 0
      %p133 = por %p131, %p132
      %p134 = scmp.le.s32.totalorder 1, %s22
      %p135 = scmp.lt.s32.totalorder %s22, 3
      %p136 = pnand %p134, %p135
      %p137 = pneg %p136
      // Predicated region
      $region9: #{tpu_custom_call.1} parent=5 // pred_check
        _
      $region10: #{tpu_custom_call.1} parent=5 // pred_check_branch
        %139 = sbr.rel (%p136) target = $region12
      $region11: #{tpu_custom_call.1} parent=5 // pred_region
        %s140 = ssub.s32 %s22, 1
      $region12: #{tpu_custom_call.1} parent=5 // pred_fallthru
        _
      %p141 = scmp.lt.s32.totalorder %s22, 2
      // Predicated region
      $region13: #{tpu_custom_call.1} parent=5 // pred_check
        %p142 = pneg %p141
      $region14: #{tpu_custom_call.1} parent=5 // pred_check_branch
        %144 = sbr.rel (%p142) target = $region16
      $region15: #{tpu_custom_call.1} parent=5 // pred_region
        // Predicated region
        $region17: #{tpu_custom_call.1} parent=15 // pred_check
          %p145 = pneg %p42
        $region18: #{tpu_custom_call.1} parent=15 // pred_check_branch
          %147 = sbr.rel (%p145) target = $region20
        $region19: #{tpu_custom_call.1} parent=15 // pred_region
          %s148 = sand.u32 %s32, 1
          %s149 = scalar_lea.sflag [#allocation3], %s148
          %s150 = sand.u32 %s32, 1
          %s151 = smul.addr %s150, 104
          %s152 = scalar_lea.vmem [#allocation2], %s151
          %s154 = ssub.s32 1664, 1664
          %155 = vsyncadd %s149, %s154
          %s156 = smul.addr %s22, 128
          %s157 = scalar_lea.hbm %s0, %s156
          %s158 = sshll.u32 %s152, 4
          %s159 = int_to_ptr.vmem [resolvable:$true] %s158
          %164 = dma.hbm_to_vmem [thread:$0]  %s157, 1664, %s159, %s149, 256, 128, 8
        $region20: #{tpu_custom_call.1} parent=15 // pred_fallthru
          _
        // Predicated region
        $region21: #{tpu_custom_call.1} parent=15 // pred_check
          %p165 = pneg %p68
        $region22: #{tpu_custom_call.1} parent=15 // pred_check_branch
          %167 = sbr.rel (%p165) target = $region24
        $region23: #{tpu_custom_call.1} parent=15 // pred_region
          %s168 = sand.u32 %s58, 1
          %s169 = scalar_lea.sflag [#allocation6], %s168
          %s170 = sand.u32 %s58, 1
          %s171 = smul.addr %s170, 32
          %s172 = scalar_lea.vmem [#allocation5], %s171
          %s174 = ssub.s32 512, 512
          %175 = vsyncadd %s169, %s174
          %s176 = smul.addr %s22, 128
          %s177 = scalar_lea.hbm %s1, %s176
          %s178 = sshll.u32 %s172, 4
          %s179 = int_to_ptr.vmem [resolvable:$true] %s178
          %184 = dma.hbm_to_vmem [thread:$0]  %s177, 512, %s179, %s169, 256, 128, 8
        $region24: #{tpu_custom_call.1} parent=15 // pred_fallthru
          _
      $region16: #{tpu_custom_call.1} parent=5 // pred_fallthru
        _
      %p185 = scmp.le.s32.totalorder 1, %s22
      %p186 = scmp.lt.s32.totalorder %s22, 3
      %p187 = pnand %p185, %p186
      %p188 = pneg %p187
      // Predicated region
      $region25: #{tpu_custom_call.1} parent=5 // pred_check
        _
      $region26: #{tpu_custom_call.1} parent=5 // pred_check_branch
        %190 = sbr.rel (%p187) target = $region28
      $region27: #{tpu_custom_call.1} parent=5 // pred_region
        %s191 = ssub.s32 %s22, 1
        %s192 = sand.u32 %s35, 1
        %s193 = scalar_lea.sflag [#allocation3], %s192
        %s194 = sand.u32 %s35, 1
        %s195 = smul.addr %s194, 104
        %s196 = scalar_lea.vmem [#allocation2], %s195
        // Predicated region
        $region29: #{tpu_custom_call.1} parent=27 // pred_check
          %p197 = pneg %p48
        $region30: #{tpu_custom_call.1} parent=27 // pred_check_branch
          %199 = sbr.rel (%p197) target = $region32
        $region31: #{tpu_custom_call.1} parent=27 // pred_region
          %200 = dma.done %s193, 1664
        $region32: #{tpu_custom_call.1} parent=27 // pred_fallthru
          _
        %s201 = sand.u32 %s61, 1
        %s202 = scalar_lea.sflag [#allocation6], %s201
        %s203 = sand.u32 %s61, 1
        %s204 = smul.addr %s203, 32
        %s205 = scalar_lea.vmem [#allocation5], %s204
        // Predicated region
        $region33: #{tpu_custom_call.1} parent=27 // pred_check
          %p206 = pneg %p74
        $region34: #{tpu_custom_call.1} parent=27 // pred_check_branch
          %208 = sbr.rel (%p206) target = $region36
        $region35: #{tpu_custom_call.1} parent=27 // pred_region
          %209 = dma.done %s202, 512
        $region36: #{tpu_custom_call.1} parent=27 // pred_fallthru
          _
        %s210 = sand.u32 %s35, 1
        %s211 = scalar_lea.sflag [#allocation3], %s210
        %s212 = sand.u32 %s35, 1
        %s213 = smul.addr %s212, 104
        %s214 = scalar_lea.vmem [#allocation2], %s213
        %p215 = pneg %p48
        %p216 = pneg %p45
        %s217 = sand.u32 %s61, 1
        %s218 = scalar_lea.sflag [#allocation6], %s217
        %s219 = sand.u32 %s61, 1
        %s220 = smul.addr %s219, 32
        %s221 = scalar_lea.vmem [#allocation5], %s220
        %p222 = pneg %p74
        %p223 = pneg %p71
        %p224 = pneg %p100
        %p225 = pneg %p97
        %s226 = sand.u32 %s87, 1
        %s227 = scalar_lea.sflag [#allocation4], %s226
        %s228 = sand.u32 %s87, 1
        %s229 = smul.addr %s228, 104
        %s230 = scalar_lea.vmem [#allocation7], %s229
        %p231 = pneg %p126
        %p232 = pneg %p123
        %s233 = sand.u32 %s113, 1
        %s234 = scalar_lea.sflag [#allocation9], %s233
        %s235 = sand.u32 %s113, 1
        %s236 = smul.addr %s235, 104
        %s237 = scalar_lea.vmem [#allocation8], %s236
        %v238 = vld [vmem:[%s205] sm:$0xff]
        %s239 = scalar_lea.vmem %s205, 8 [#allocation5]
        %v240 = vld [vmem:[%s239] sm:$0xff]
        %s241 = scalar_lea.vmem %s205, 16 [#allocation5]
        %v242 = vld [vmem:[%s241] sm:$0xff]
        %s243 = scalar_lea.vmem %s205, 24 [#allocation5]
        %v244 = vld [vmem:[%s243] sm:$0xff]
        %v245 = vadd.f32 %v242, %v244
        %v246 = vmul.f32 %v238, 1000.0
        %v247 = vmul.f32 %v240, 87.33624
        %vm248 = vcmp.gt.f32.partialorder %v245, 0.0
        %v249 = vsel %vm248, %v245, 1.0
        %v250 = vrcp.pop %v249
        %v251 = vmul.f32 1.0, %v250
        %v252 = vmul.f32 %v251, 14.705882
        %v253 = vmul.f32 %v251, 7.5757575
        %v254 = vmul.f32 %v245, 0.83
        %v255 = vmul.f32 %v245, 0.33
        %v256 = vld [vmem:[%s196] sm:$0xff]
        %s257 = scalar_lea.vmem %s196, 8 [#allocation2]
        %v258 = vld [vmem:[%s257] sm:$0xff]
        %s259 = scalar_lea.vmem %s196, 16 [#allocation2]
        %v260 = vld [vmem:[%s259] sm:$0xff]
        %s261 = scalar_lea.vmem %s196, 24 [#allocation2]
        %v262 = vld [vmem:[%s261] sm:$0xff]
        %s263 = scalar_lea.vmem %s196, 32 [#allocation2]
        %v264 = vld [vmem:[%s263] sm:$0xff]
        %s265 = scalar_lea.vmem %s196, 40 [#allocation2]
        %v266 = vld [vmem:[%s265] sm:$0xff]
        %s267 = scalar_lea.vmem %s196, 48 [#allocation2]
        %v268 = vld [vmem:[%s267] sm:$0xff]
        %s269 = scalar_lea.vmem %s196, 56 [#allocation2]
        %v270 = vld [vmem:[%s269] sm:$0xff]
        %s271 = scalar_lea.vmem %s196, 64 [#allocation2]
        %v272 = vld [vmem:[%s271] sm:$0xff]
        %s273 = scalar_lea.vmem %s196, 72 [#allocation2]
        %v274 = vld [vmem:[%s273] sm:$0xff]
        %s275 = scalar_lea.vmem %s196, 80 [#allocation2]
        %v276 = vld [vmem:[%s275] sm:$0xff]
        %s277 = scalar_lea.vmem %s196, 88 [#allocation2]
        %v278 = vld [vmem:[%s277] sm:$0xff]
        %s279 = scalar_lea.vmem %s196, 96 [#allocation2]
        %v280 = vld [vmem:[%s279] sm:$0xff]
        %v281 = vadd.f32 %v256, %v258
        %v282 = vsub.f32 %v281, %v254
        %v283 = vmul.f32 %v252, %v282
        %v284 = vtanh.pop %v283
        %v285 = vsub.f32 %v281, %v255
        %v286 = vmul.f32 %v253, %v285
        %v287 = vtanh.pop %v286
        %v288 = vsub.f32 %v284, %v287
        %v289 = vadd.f32 %v288, 2.0
        %v290 = vmul.f32 %v289, 0.019
        %v291 = vadd.f32 %v290, 0.0078
        %v292 = vsel %vm248, %v291, 0.0458
        %v293 = vmul.f32 %v256, -0.0458
        %v294 = vadd.f32 %v293, %v246
        %v295 = vmul.f32 %v256, 0.0458
        %v296 = vmul.f32 %v258, %v292
        %v297 = vsub.f32 %v295, %v296
        %v298 = vmul.f32 %v260, 0.0568
        %v299 = vsub.f32 %v296, %v298
        %v300 = vmul.f32 %v260, 0.0007441048
        %v301 = vmul.f32 %v262, 0.00649
        %v302 = vsub.f32 4.73, %v301
        %v303 = vmul.f32 %v272, 0.00951
        %v304 = vsub.f32 %v302, %v303
        %vm305 = vcmp.gt.f32.partialorder %v262, 339.0
        %v306 = vsub.f32 %v262, 339.0
        %v307 = vmul.f32 %v306, 0.0005
        %v308 = vsel %vm305, %v307, 0.0
        %v309 = vmax.f32 %v304, 0.0
        %v310 = vadd.f32 %v309, %v300
        %v311 = vsub.f32 %v310, 1.0
        %v312 = vsub.f32 %v311, %v308
        %v313 = vmul.f32 %v262, 0.0656
        %v314 = vsub.f32 %v312, %v313
        %v315 = vmul.f32 %v264, 0.0718
        %v316 = vadd.f32 %v314, %v315
        %vm317 = vcmp.ge.f32.partialorder %v262, 0.0
        %v318 = vsel %vm317, %v316, 0.0
        %v319 = vmul.f32 %v268, 0.0737
        %v320 = vadd.f32 %v319, 3.25
        %v321 = vmul.f32 %v320, %v264
        %v322 = vadd.f32 %v264, 260.89
        %v323 = vrcp.pop %v322
        %v324 = vmul.f32 %v321, %v323
        %v325 = vsub.f32 0.0, %v324
        %v326 = vadd.f32 %v325, %v313
        %v327 = vsub.f32 %v326, %v315
        %vm328 = vcmp.ge.f32.partialorder %v264, 0.0
        %v329 = vsel %vm328, %v327, 0.0
        %v330 = vmul.f32 %v266, -0.55
        %v331 = vmul.f32 %v274, 0.145
        %v332 = vadd.f32 %v330, %v331
        %v333 = vmul.f32 %v276, 0.0018
        %v334 = vadd.f32 %v332, %v333
        %v335 = vmul.f32 %v278, 0.0182
        %v336 = vadd.f32 %v334, %v335
        %v337 = vmul.f32 %v266, 20.491804
        %vm338 = vcmp.ge.f32.partialorder %v266, 0.0
        %v339 = vsel %vm338, %v336, 0.0
        %v340 = vmul.f32 %v268, -0.0275
        %v341 = vsub.f32 %v337, 100.25
        %v342 = vmul.f32 %v341, 0.0275
        %v343 = vadd.f32 %v340, %v342
        %v344 = vsub.f32 %v270, %v337
        %v345 = vmul.f32 %v344, -0.0076
        %v346 = vsub.f32 %v272, %v270
        %v347 = vmul.f32 %v346, -0.0076
        %v348 = vmul.f32 %v274, -0.365
        %v349 = vmul.f32 %v266, 0.393
        %v350 = vadd.f32 %v348, %v349
        %vm351 = vcmp.ge.f32.partialorder %v274, 0.0
        %v352 = vsel %vm351, %v350, 0.0
        %v353 = vmul.f32 %v276, 0.0182
        %v354 = vsub.f32 %v247, %v353
        %vm355 = vcmp.ge.f32.partialorder %v276, 0.0
        %v356 = vsel %vm355, %v354, 0.0
        %v357 = vmul.f32 %v276, 0.0164
        %v358 = vsub.f32 %v357, %v335
        %vm359 = vcmp.ge.f32.partialorder %v278, 0.0
        %v360 = vsel %vm359, %v358, 0.0
        %v361 = vmul.f32 %v280, -0.0569
        %v362 = vmul.f32 %v262, 0.0569
        %v363 = vadd.f32 %v361, %v362
        %vm364 = vcmp.ge.f32.partialorder %v280, 0.0
        %v365 = vsel %vm364, %v363, 0.0
        %366 = vst [vmem:[%s237] sm:$0xff] %v294
        %s367 = scalar_lea.vmem %s237, 8 [#allocation8]
        %368 = vst [vmem:[%s367] sm:$0xff] %v297
        %s369 = scalar_lea.vmem %s237, 16 [#allocation8]
        %370 = vst [vmem:[%s369] sm:$0xff] %v299
        %s371 = scalar_lea.vmem %s237, 24 [#allocation8]
        %372 = vst [vmem:[%s371] sm:$0xff] %v318
        %s373 = scalar_lea.vmem %s237, 32 [#allocation8]
        %374 = vst [vmem:[%s373] sm:$0xff] %v329
        %s375 = scalar_lea.vmem %s237, 40 [#allocation8]
        %376 = vst [vmem:[%s375] sm:$0xff] %v339
        %s377 = scalar_lea.vmem %s237, 48 [#allocation8]
        %378 = vst [vmem:[%s377] sm:$0xff] %v343
        %s379 = scalar_lea.vmem %s237, 56 [#allocation8]
        %380 = vst [vmem:[%s379] sm:$0xff] %v345
        %s381 = scalar_lea.vmem %s237, 64 [#allocation8]
        %382 = vst [vmem:[%s381] sm:$0xff] %v347
        %s383 = scalar_lea.vmem %s237, 72 [#allocation8]
        %384 = vst [vmem:[%s383] sm:$0xff] %v352
        %s385 = scalar_lea.vmem %s237, 80 [#allocation8]
        %386 = vst [vmem:[%s385] sm:$0xff] %v356
        %s387 = scalar_lea.vmem %s237, 88 [#allocation8]
        %388 = vst [vmem:[%s387] sm:$0xff] %v360
        %s389 = scalar_lea.vmem %s237, 96 [#allocation8]
        %390 = vst [vmem:[%s389] sm:$0xff] %v365
        %v391 = vmul.f32 %v294, 0.0625
        %v392 = vadd.f32 %v256, %v391
        %v393 = vmul.f32 %v297, 0.0625
        %v394 = vadd.f32 %v258, %v393
        %v395 = vmul.f32 %v299, 0.0625
        %v396 = vadd.f32 %v260, %v395
        %v397 = vmul.f32 %v318, 0.0625
        %v398 = vadd.f32 %v262, %v397
        %v399 = vmul.f32 %v329, 0.0625
        %v400 = vadd.f32 %v264, %v399
        %v401 = vmul.f32 %v339, 0.0625
        %v402 = vadd.f32 %v266, %v401
        %v403 = vmul.f32 %v343, 0.0625
        %v404 = vadd.f32 %v268, %v403
        %v405 = vmul.f32 %v345, 0.0625
        %v406 = vadd.f32 %v270, %v405
        %v407 = vmul.f32 %v347, 0.0625
        %v408 = vadd.f32 %v272, %v407
        %v409 = vmul.f32 %v352, 0.0625
        %v410 = vadd.f32 %v274, %v409
        %v411 = vmul.f32 %v356, 0.0625
        %v412 = vadd.f32 %v276, %v411
        %v413 = vmul.f32 %v360, 0.0625
        %v414 = vadd.f32 %v278, %v413
        %v415 = vmul.f32 %v365, 0.0625
        %v416 = vadd.f32 %v280, %v415
        %v417 = vadd.f32 %v392, %v394
        %v418 = vsub.f32 %v417, %v254
        %v419 = vmul.f32 %v252, %v418
        %v420 = vtanh.pop %v419
        %v421 = vsub.f32 %v417, %v255
        %v422 = vmul.f32 %v253, %v421
        %v423 = vtanh.pop %v422
        %v424 = vsub.f32 %v420, %v423
        %v425 = vadd.f32 %v424, 2.0
        %v426 = vmul.f32 %v425, 0.019
        %v427 = vadd.f32 %v426, 0.0078
        %v428 = vsel %vm248, %v427, 0.0458
        %v429 = vmul.f32 %v392, -0.0458
        %v430 = vadd.f32 %v429, %v246
        %v431 = vmul.f32 %v392, 0.0458
        %v432 = vmul.f32 %v394, %v428
        %v433 = vsub.f32 %v431, %v432
        %v434 = vmul.f32 %v396, 0.0568
        %v435 = vsub.f32 %v432, %v434
        %v436 = vmul.f32 %v396, 0.0007441048
        %v437 = vmul.f32 %v398, 0.00649
        %v438 = vsub.f32 4.73, %v437
        %v439 = vmul.f32 %v408, 0.00951
        %v440 = vsub.f32 %v438, %v439
        %vm441 = vcmp.gt.f32.partialorder %v398, 339.0
        %v442 = vsub.f32 %v398, 339.0
        %v443 = vmul.f32 %v442, 0.0005
        %v444 = vsel %vm441, %v443, 0.0
        %v445 = vmax.f32 %v440, 0.0
        %v446 = vadd.f32 %v445, %v436
        %v447 = vsub.f32 %v446, 1.0
        %v448 = vsub.f32 %v447, %v444
        %v449 = vmul.f32 %v398, 0.0656
        %v450 = vsub.f32 %v448, %v449
        %v451 = vmul.f32 %v400, 0.0718
        %v452 = vadd.f32 %v450, %v451
        %vm453 = vcmp.ge.f32.partialorder %v398, 0.0
        %v454 = vsel %vm453, %v452, 0.0
        %v455 = vmul.f32 %v404, 0.0737
        %v456 = vadd.f32 %v455, 3.25
        %v457 = vmul.f32 %v456, %v400
        %v458 = vadd.f32 %v400, 260.89
        %v459 = vrcp.pop %v458
        %v460 = vmul.f32 %v457, %v459
        %v461 = vsub.f32 0.0, %v460
        %v462 = vadd.f32 %v461, %v449
        %v463 = vsub.f32 %v462, %v451
        %vm464 = vcmp.ge.f32.partialorder %v400, 0.0
        %v465 = vsel %vm464, %v463, 0.0
        %v466 = vmul.f32 %v402, -0.55
        %v467 = vmul.f32 %v410, 0.145
        %v468 = vadd.f32 %v466, %v467
        %v469 = vmul.f32 %v412, 0.0018
        %v470 = vadd.f32 %v468, %v469
        %v471 = vmul.f32 %v414, 0.0182
        %v472 = vadd.f32 %v470, %v471
        %v473 = vmul.f32 %v402, 20.491804
        %vm474 = vcmp.ge.f32.partialorder %v402, 0.0
        %v475 = vsel %vm474, %v472, 0.0
        %v476 = vmul.f32 %v404, -0.0275
        %v477 = vsub.f32 %v473, 100.25
        %v478 = vmul.f32 %v477, 0.0275
        %v479 = vadd.f32 %v476, %v478
        %v480 = vsub.f32 %v406, %v473
        %v481 = vmul.f32 %v480, -0.0076
        %v482 = vsub.f32 %v408, %v406
        %v483 = vmul.f32 %v482, -0.0076
        %v484 = vmul.f32 %v410, -0.365
        %v485 = vmul.f32 %v402, 0.393
        %v486 = vadd.f32 %v484, %v485
        %vm487 = vcmp.ge.f32.partialorder %v410, 0.0
        %v488 = vsel %vm487, %v486, 0.0
        %v489 = vmul.f32 %v412, 0.0182
        %v490 = vsub.f32 %v247, %v489
        %vm491 = vcmp.ge.f32.partialorder %v412, 0.0
        %v492 = vsel %vm491, %v490, 0.0
        %v493 = vmul.f32 %v412, 0.0164
        %v494 = vsub.f32 %v493, %v471
        %vm495 = vcmp.ge.f32.partialorder %v414, 0.0
        %v496 = vsel %vm495, %v494, 0.0
        %v497 = vmul.f32 %v416, -0.0569
        %v498 = vmul.f32 %v398, 0.0569
        %v499 = vadd.f32 %v497, %v498
        %vm500 = vcmp.ge.f32.partialorder %v416, 0.0
        %v501 = vsel %vm500, %v499, 0.0
        %v502 = vmul.f32 %v430, 0.0625
        %v503 = vadd.f32 %v392, %v502
        %v504 = vmul.f32 %v433, 0.0625
        %v505 = vadd.f32 %v394, %v504
        %v506 = vmul.f32 %v435, 0.0625
        %v507 = vadd.f32 %v396, %v506
        %v508 = vmul.f32 %v454, 0.0625
        %v509 = vadd.f32 %v398, %v508
        %v510 = vmul.f32 %v465, 0.0625
        %v511 = vadd.f32 %v400, %v510
        %v512 = vmul.f32 %v475, 0.0625
        %v513 = vadd.f32 %v402, %v512
        %v514 = vmul.f32 %v479, 0.0625
        %v515 = vadd.f32 %v404, %v514
        %v516 = vmul.f32 %v481, 0.0625
        %v517 = vadd.f32 %v406, %v516
        %v518 = vmul.f32 %v483, 0.0625
        %v519 = vadd.f32 %v408, %v518
        %v520 = vmul.f32 %v488, 0.0625
        %v521 = vadd.f32 %v410, %v520
        %v522 = vmul.f32 %v492, 0.0625
        %v523 = vadd.f32 %v412, %v522
        %v524 = vmul.f32 %v496, 0.0625
        %v525 = vadd.f32 %v414, %v524
        %v526 = vmul.f32 %v501, 0.0625
        %v527 = vadd.f32 %v416, %v526
        %v528 = vadd.f32 %v503, %v505
        %v529 = vsub.f32 %v528, %v254
        %v530 = vmul.f32 %v252, %v529
        %v531 = vtanh.pop %v530
        %v532 = vsub.f32 %v528, %v255
        %v533 = vmul.f32 %v253, %v532
        %v534 = vtanh.pop %v533
        %v535 = vsub.f32 %v531, %v534
        %v536 = vadd.f32 %v535, 2.0
        %v537 = vmul.f32 %v536, 0.019
        %v538 = vadd.f32 %v537, 0.0078
        %v539 = vsel %vm248, %v538, 0.0458
        %v540 = vmul.f32 %v503, -0.0458
        %v541 = vadd.f32 %v540, %v246
        %v542 = vmul.f32 %v503, 0.0458
        %v543 = vmul.f32 %v505, %v539
        %v544 = vsub.f32 %v542, %v543
        %v545 = vmul.f32 %v507, 0.0568
        %v546 = vsub.f32 %v543, %v545
        %v547 = vmul.f32 %v507, 0.0007441048
        %v548 = vmul.f32 %v509, 0.00649
        %v549 = vsub.f32 4.73, %v548
        %v550 = vmul.f32 %v519, 0.00951
        %v551 = vsub.f32 %v549, %v550
        %vm552 = vcmp.gt.f32.partialorder %v509, 339.0
        %v553 = vsub.f32 %v509, 339.0
        %v554 = vmul.f32 %v553, 0.0005
        %v555 = vsel %vm552, %v554, 0.0
        %v556 = vmax.f32 %v551, 0.0
        %v557 = vadd.f32 %v556, %v547
        %v558 = vsub.f32 %v557, 1.0
        %v559 = vsub.f32 %v558, %v555
        %v560 = vmul.f32 %v509, 0.0656
        %v561 = vsub.f32 %v559, %v560
        %v562 = vmul.f32 %v511, 0.0718
        %v563 = vadd.f32 %v561, %v562
        %vm564 = vcmp.ge.f32.partialorder %v509, 0.0
        %v565 = vsel %vm564, %v563, 0.0
        %v566 = vmul.f32 %v515, 0.0737
        %v567 = vadd.f32 %v566, 3.25
        %v568 = vmul.f32 %v567, %v511
        %v569 = vadd.f32 %v511, 260.89
        %v570 = vrcp.pop %v569
        %v571 = vmul.f32 %v568, %v570
        %v572 = vsub.f32 0.0, %v571
        %v573 = vadd.f32 %v572, %v560
        %v574 = vsub.f32 %v573, %v562
        %vm575 = vcmp.ge.f32.partialorder %v511, 0.0
        %v576 = vsel %vm575, %v574, 0.0
        %v577 = vmul.f32 %v513, -0.55
        %v578 = vmul.f32 %v521, 0.145
        %v579 = vadd.f32 %v577, %v578
        %v580 = vmul.f32 %v523, 0.0018
        %v581 = vadd.f32 %v579, %v580
        %v582 = vmul.f32 %v525, 0.0182
        %v583 = vadd.f32 %v581, %v582
        %v584 = vmul.f32 %v513, 20.491804
        %vm585 = vcmp.ge.f32.partialorder %v513, 0.0
        %v586 = vsel %vm585, %v583, 0.0
        %v587 = vmul.f32 %v515, -0.0275
        %v588 = vsub.f32 %v584, 100.25
        %v589 = vmul.f32 %v588, 0.0275
        %v590 = vadd.f32 %v587, %v589
        %v591 = vsub.f32 %v517, %v584
        %v592 = vmul.f32 %v591, -0.0076
        %v593 = vsub.f32 %v519, %v517
        %v594 = vmul.f32 %v593, -0.0076
        %v595 = vmul.f32 %v521, -0.365
        %v596 = vmul.f32 %v513, 0.393
        %v597 = vadd.f32 %v595, %v596
        %vm598 = vcmp.ge.f32.partialorder %v521, 0.0
        %v599 = vsel %vm598, %v597, 0.0
        %v600 = vmul.f32 %v523, 0.0182
        %v601 = vsub.f32 %v247, %v600
        %vm602 = vcmp.ge.f32.partialorder %v523, 0.0
        %v603 = vsel %vm602, %v601, 0.0
        %v604 = vmul.f32 %v523, 0.0164
        %v605 = vsub.f32 %v604, %v582
        %vm606 = vcmp.ge.f32.partialorder %v525, 0.0
        %v607 = vsel %vm606, %v605, 0.0
        %v608 = vmul.f32 %v527, -0.0569
        %v609 = vmul.f32 %v509, 0.0569
        %v610 = vadd.f32 %v608, %v609
        %vm611 = vcmp.ge.f32.partialorder %v527, 0.0
        %v612 = vsel %vm611, %v610, 0.0
        %v613 = vmul.f32 %v541, 0.0625
        %v614 = vadd.f32 %v503, %v613
        %v615 = vmul.f32 %v544, 0.0625
        %v616 = vadd.f32 %v505, %v615
        %v617 = vmul.f32 %v546, 0.0625
        %v618 = vadd.f32 %v507, %v617
        %v619 = vmul.f32 %v565, 0.0625
        %v620 = vadd.f32 %v509, %v619
        %v621 = vmul.f32 %v576, 0.0625
        %v622 = vadd.f32 %v511, %v621
        %v623 = vmul.f32 %v586, 0.0625
        %v624 = vadd.f32 %v513, %v623
        %v625 = vmul.f32 %v590, 0.0625
        %v626 = vadd.f32 %v515, %v625
        %v627 = vmul.f32 %v592, 0.0625
        %v628 = vadd.f32 %v517, %v627
        %v629 = vmul.f32 %v594, 0.0625
        %v630 = vadd.f32 %v519, %v629
        %v631 = vmul.f32 %v599, 0.0625
        %v632 = vadd.f32 %v521, %v631
        %v633 = vmul.f32 %v603, 0.0625
        %v634 = vadd.f32 %v523, %v633
        %v635 = vmul.f32 %v607, 0.0625
        %v636 = vadd.f32 %v525, %v635
        %v637 = vmul.f32 %v612, 0.0625
        %v638 = vadd.f32 %v527, %v637
        %v639 = vadd.f32 %v614, %v616
        %v640 = vsub.f32 %v639, %v254
        %v641 = vmul.f32 %v252, %v640
        %v642 = vtanh.pop %v641
        %v643 = vsub.f32 %v639, %v255
        %v644 = vmul.f32 %v253, %v643
        %v645 = vtanh.pop %v644
        %v646 = vsub.f32 %v642, %v645
        %v647 = vadd.f32 %v646, 2.0
        %v648 = vmul.f32 %v647, 0.019
        %v649 = vadd.f32 %v648, 0.0078
        %v650 = vsel %vm248, %v649, 0.0458
        %v651 = vmul.f32 %v614, -0.0458
        %v652 = vadd.f32 %v651, %v246
        %v653 = vmul.f32 %v614, 0.0458
        %v654 = vmul.f32 %v616, %v650
        %v655 = vsub.f32 %v653, %v654
        %v656 = vmul.f32 %v618, 0.0568
        %v657 = vsub.f32 %v654, %v656
        %v658 = vmul.f32 %v618, 0.0007441048
        %v659 = vmul.f32 %v620, 0.00649
        %v660 = vsub.f32 4.73, %v659
        %v661 = vmul.f32 %v630, 0.00951
        %v662 = vsub.f32 %v660, %v661
        %vm663 = vcmp.gt.f32.partialorder %v620, 339.0
        %v664 = vsub.f32 %v620, 339.0
        %v665 = vmul.f32 %v664, 0.0005
        %v666 = vsel %vm663, %v665, 0.0
        %v667 = vmax.f32 %v662, 0.0
        %v668 = vadd.f32 %v667, %v658
        %v669 = vsub.f32 %v668, 1.0
        %v670 = vsub.f32 %v669, %v666
        %v671 = vmul.f32 %v620, 0.0656
        %v672 = vsub.f32 %v670, %v671
        %v673 = vmul.f32 %v622, 0.0718
        %v674 = vadd.f32 %v672, %v673
        %vm675 = vcmp.ge.f32.partialorder %v620, 0.0
        %v676 = vsel %vm675, %v674, 0.0
        %v677 = vmul.f32 %v626, 0.0737
        %v678 = vadd.f32 %v677, 3.25
        %v679 = vmul.f32 %v678, %v622
        %v680 = vadd.f32 %v622, 260.89
        %v681 = vrcp.pop %v680
        %v682 = vmul.f32 %v679, %v681
        %v683 = vsub.f32 0.0, %v682
        %v684 = vadd.f32 %v683, %v671
        %v685 = vsub.f32 %v684, %v673
        %vm686 = vcmp.ge.f32.partialorder %v622, 0.0
        %v687 = vsel %vm686, %v685, 0.0
        %v688 = vmul.f32 %v624, -0.55
        %v689 = vmul.f32 %v632, 0.145
        %v690 = vadd.f32 %v688, %v689
        %v691 = vmul.f32 %v634, 0.0018
        %v692 = vadd.f32 %v690, %v691
        %v693 = vmul.f32 %v636, 0.0182
        %v694 = vadd.f32 %v692, %v693
        %v695 = vmul.f32 %v624, 20.491804
        %vm696 = vcmp.ge.f32.partialorder %v624, 0.0
        %v697 = vsel %vm696, %v694, 0.0
        %v698 = vmul.f32 %v626, -0.0275
        %v699 = vsub.f32 %v695, 100.25
        %v700 = vmul.f32 %v699, 0.0275
        %v701 = vadd.f32 %v698, %v700
        %v702 = vsub.f32 %v628, %v695
        %v703 = vmul.f32 %v702, -0.0076
        %v704 = vsub.f32 %v630, %v628
        %v705 = vmul.f32 %v704, -0.0076
        %v706 = vmul.f32 %v632, -0.365
        %v707 = vmul.f32 %v624, 0.393
        %v708 = vadd.f32 %v706, %v707
        %vm709 = vcmp.ge.f32.partialorder %v632, 0.0
        %v710 = vsel %vm709, %v708, 0.0
        %v711 = vmul.f32 %v634, 0.0182
        %v712 = vsub.f32 %v247, %v711
        %vm713 = vcmp.ge.f32.partialorder %v634, 0.0
        %v714 = vsel %vm713, %v712, 0.0
        %v715 = vmul.f32 %v634, 0.0164
        %v716 = vsub.f32 %v715, %v693
        %vm717 = vcmp.ge.f32.partialorder %v636, 0.0
        %v718 = vsel %vm717, %v716, 0.0
        %v719 = vmul.f32 %v638, -0.0569
        %v720 = vmul.f32 %v620, 0.0569
        %v721 = vadd.f32 %v719, %v720
        %vm722 = vcmp.ge.f32.partialorder %v638, 0.0
        %v723 = vsel %vm722, %v721, 0.0
        %v724 = vmul.f32 %v652, 0.0625
        %v725 = vadd.f32 %v614, %v724
        %v726 = vmul.f32 %v655, 0.0625
        %v727 = vadd.f32 %v616, %v726
        %v728 = vmul.f32 %v657, 0.0625
        %v729 = vadd.f32 %v618, %v728
        %v730 = vmul.f32 %v676, 0.0625
        %v731 = vadd.f32 %v620, %v730
        %v732 = vmul.f32 %v687, 0.0625
        %v733 = vadd.f32 %v622, %v732
        %v734 = vmul.f32 %v697, 0.0625
        %v735 = vadd.f32 %v624, %v734
        %v736 = vmul.f32 %v701, 0.0625
        %v737 = vadd.f32 %v626, %v736
        %v738 = vmul.f32 %v703, 0.0625
        %v739 = vadd.f32 %v628, %v738
        %v740 = vmul.f32 %v705, 0.0625
        %v741 = vadd.f32 %v630, %v740
        %v742 = vmul.f32 %v710, 0.0625
        %v743 = vadd.f32 %v632, %v742
        %v744 = vmul.f32 %v714, 0.0625
        %v745 = vadd.f32 %v634, %v744
        %v746 = vmul.f32 %v718, 0.0625
        %v747 = vadd.f32 %v636, %v746
        %v748 = vmul.f32 %v723, 0.0625
        %v749 = vadd.f32 %v638, %v748
        %v750 = vadd.f32 %v725, %v727
        %v751 = vsub.f32 %v750, %v254
        %v752 = vmul.f32 %v252, %v751
        %v753 = vtanh.pop %v752
        %v754 = vsub.f32 %v750, %v255
        %v755 = vmul.f32 %v253, %v754
        %v756 = vtanh.pop %v755
        %v757 = vsub.f32 %v753, %v756
        %v758 = vadd.f32 %v757, 2.0
        %v759 = vmul.f32 %v758, 0.019
        %v760 = vadd.f32 %v759, 0.0078
        %v761 = vsel %vm248, %v760, 0.0458
        %v762 = vmul.f32 %v725, -0.0458
        %v763 = vadd.f32 %v762, %v246
        %v764 = vmul.f32 %v725, 0.0458
        %v765 = vmul.f32 %v727, %v761
        %v766 = vsub.f32 %v764, %v765
        %v767 = vmul.f32 %v729, 0.0568
        %v768 = vsub.f32 %v765, %v767
        %v769 = vmul.f32 %v729, 0.0007441048
        %v770 = vmul.f32 %v731, 0.00649
        %v771 = vsub.f32 4.73, %v770
        %v772 = vmul.f32 %v741, 0.00951
        %v773 = vsub.f32 %v771, %v772
        %vm774 = vcmp.gt.f32.partialorder %v731, 339.0
        %v775 = vsub.f32 %v731, 339.0
        %v776 = vmul.f32 %v775, 0.0005
        %v777 = vsel %vm774, %v776, 0.0
        %v778 = vmax.f32 %v773, 0.0
        %v779 = vadd.f32 %v778, %v769
        %v780 = vsub.f32 %v779, 1.0
        %v781 = vsub.f32 %v780, %v777
        %v782 = vmul.f32 %v731, 0.0656
        %v783 = vsub.f32 %v781, %v782
        %v784 = vmul.f32 %v733, 0.0718
        %v785 = vadd.f32 %v783, %v784
        %vm786 = vcmp.ge.f32.partialorder %v731, 0.0
        %v787 = vsel %vm786, %v785, 0.0
        %v788 = vmul.f32 %v737, 0.0737
        %v789 = vadd.f32 %v788, 3.25
        %v790 = vmul.f32 %v789, %v733
        %v791 = vadd.f32 %v733, 260.89
        %v792 = vrcp.pop %v791
        %v793 = vmul.f32 %v790, %v792
        %v794 = vsub.f32 0.0, %v793
        %v795 = vadd.f32 %v794, %v782
        %v796 = vsub.f32 %v795, %v784
        %vm797 = vcmp.ge.f32.partialorder %v733, 0.0
        %v798 = vsel %vm797, %v796, 0.0
        %v799 = vmul.f32 %v735, -0.55
        %v800 = vmul.f32 %v743, 0.145
        %v801 = vadd.f32 %v799, %v800
        %v802 = vmul.f32 %v745, 0.0018
        %v803 = vadd.f32 %v801, %v802
        %v804 = vmul.f32 %v747, 0.0182
        %v805 = vadd.f32 %v803, %v804
        %v806 = vmul.f32 %v735, 20.491804
        %vm807 = vcmp.ge.f32.partialorder %v735, 0.0
        %v808 = vsel %vm807, %v805, 0.0
        %v809 = vmul.f32 %v737, -0.0275
        %v810 = vsub.f32 %v806, 100.25
        %v811 = vmul.f32 %v810, 0.0275
        %v812 = vadd.f32 %v809, %v811
        %v813 = vsub.f32 %v739, %v806
        %v814 = vmul.f32 %v813, -0.0076
        %v815 = vsub.f32 %v741, %v739
        %v816 = vmul.f32 %v815, -0.0076
        %v817 = vmul.f32 %v743, -0.365
        %v818 = vmul.f32 %v735, 0.393
        %v819 = vadd.f32 %v817, %v818
        %vm820 = vcmp.ge.f32.partialorder %v743, 0.0
        %v821 = vsel %vm820, %v819, 0.0
        %v822 = vmul.f32 %v745, 0.0182
        %v823 = vsub.f32 %v247, %v822
        %vm824 = vcmp.ge.f32.partialorder %v745, 0.0
        %v825 = vsel %vm824, %v823, 0.0
        %v826 = vmul.f32 %v745, 0.0164
        %v827 = vsub.f32 %v826, %v804
        %vm828 = vcmp.ge.f32.partialorder %v747, 0.0
        %v829 = vsel %vm828, %v827, 0.0
        %v830 = vmul.f32 %v749, -0.0569
        %v831 = vmul.f32 %v731, 0.0569
        %v832 = vadd.f32 %v830, %v831
        %vm833 = vcmp.ge.f32.partialorder %v749, 0.0
        %v834 = vsel %vm833, %v832, 0.0
        %v835 = vmul.f32 %v763, 0.0625
        %v836 = vadd.f32 %v725, %v835
        %v837 = vmul.f32 %v766, 0.0625
        %v838 = vadd.f32 %v727, %v837
        %v839 = vmul.f32 %v768, 0.0625
        %v840 = vadd.f32 %v729, %v839
        %v841 = vmul.f32 %v787, 0.0625
        %v842 = vadd.f32 %v731, %v841
        %v843 = vmul.f32 %v798, 0.0625
        %v844 = vadd.f32 %v733, %v843
        %v845 = vmul.f32 %v808, 0.0625
        %v846 = vadd.f32 %v735, %v845
        %v847 = vmul.f32 %v812, 0.0625
        %v848 = vadd.f32 %v737, %v847
        %v849 = vmul.f32 %v814, 0.0625
        %v850 = vadd.f32 %v739, %v849
        %v851 = vmul.f32 %v816, 0.0625
        %v852 = vadd.f32 %v741, %v851
        %v853 = vmul.f32 %v821, 0.0625
        %v854 = vadd.f32 %v743, %v853
        %v855 = vmul.f32 %v825, 0.0625
        %v856 = vadd.f32 %v745, %v855
        %v857 = vmul.f32 %v829, 0.0625
        %v858 = vadd.f32 %v747, %v857
        %v859 = vmul.f32 %v834, 0.0625
        %v860 = vadd.f32 %v749, %v859
        %v861 = vadd.f32 %v836, %v838
        %v862 = vsub.f32 %v861, %v254
        %v863 = vmul.f32 %v252, %v862
        %v864 = vtanh.pop %v863
        %v865 = vsub.f32 %v861, %v255
        %v866 = vmul.f32 %v253, %v865
        %v867 = vtanh.pop %v866
        %v868 = vsub.f32 %v864, %v867
        %v869 = vadd.f32 %v868, 2.0
        %v870 = vmul.f32 %v869, 0.019
        %v871 = vadd.f32 %v870, 0.0078
        %v872 = vsel %vm248, %v871, 0.0458
        %v873 = vmul.f32 %v836, -0.0458
        %v874 = vadd.f32 %v873, %v246
        %v875 = vmul.f32 %v836, 0.0458
        %v876 = vmul.f32 %v838, %v872
        %v877 = vsub.f32 %v875, %v876
        %v878 = vmul.f32 %v840, 0.0568
        %v879 = vsub.f32 %v876, %v878
        %v880 = vmul.f32 %v840, 0.0007441048
        %v881 = vmul.f32 %v842, 0.00649
        %v882 = vsub.f32 4.73, %v881
        %v883 = vmul.f32 %v852, 0.00951
        %v884 = vsub.f32 %v882, %v883
        %vm885 = vcmp.gt.f32.partialorder %v842, 339.0
        %v886 = vsub.f32 %v842, 339.0
        %v887 = vmul.f32 %v886, 0.0005
        %v888 = vsel %vm885, %v887, 0.0
        %v889 = vmax.f32 %v884, 0.0
        %v890 = vadd.f32 %v889, %v880
        %v891 = vsub.f32 %v890, 1.0
        %v892 = vsub.f32 %v891, %v888
        %v893 = vmul.f32 %v842, 0.0656
        %v894 = vsub.f32 %v892, %v893
        %v895 = vmul.f32 %v844, 0.0718
        %v896 = vadd.f32 %v894, %v895
        %vm897 = vcmp.ge.f32.partialorder %v842, 0.0
        %v898 = vsel %vm897, %v896, 0.0
        %v899 = vmul.f32 %v848, 0.0737
        %v900 = vadd.f32 %v899, 3.25
        %v901 = vmul.f32 %v900, %v844
        %v902 = vadd.f32 %v844, 260.89
        %v903 = vrcp.pop %v902
        %v904 = vmul.f32 %v901, %v903
        %v905 = vsub.f32 0.0, %v904
        %v906 = vadd.f32 %v905, %v893
        %v907 = vsub.f32 %v906, %v895
        %vm908 = vcmp.ge.f32.partialorder %v844, 0.0
        %v909 = vsel %vm908, %v907, 0.0
        %v910 = vmul.f32 %v846, -0.55
        %v911 = vmul.f32 %v854, 0.145
        %v912 = vadd.f32 %v910, %v911
        %v913 = vmul.f32 %v856, 0.0018
        %v914 = vadd.f32 %v912, %v913
        %v915 = vmul.f32 %v858, 0.0182
        %v916 = vadd.f32 %v914, %v915
        %v917 = vmul.f32 %v846, 20.491804
        %vm918 = vcmp.ge.f32.partialorder %v846, 0.0
        %v919 = vsel %vm918, %v916, 0.0
        %v920 = vmul.f32 %v848, -0.0275
        %v921 = vsub.f32 %v917, 100.25
        %v922 = vmul.f32 %v921, 0.0275
        %v923 = vadd.f32 %v920, %v922
        %v924 = vsub.f32 %v850, %v917
        %v925 = vmul.f32 %v924, -0.0076
        %v926 = vsub.f32 %v852, %v850
        %v927 = vmul.f32 %v926, -0.0076
        %v928 = vmul.f32 %v854, -0.365
        %v929 = vmul.f32 %v846, 0.393
        %v930 = vadd.f32 %v928, %v929
        %vm931 = vcmp.ge.f32.partialorder %v854, 0.0
        %v932 = vsel %vm931, %v930, 0.0
        %v933 = vmul.f32 %v856, 0.0182
        %v934 = vsub.f32 %v247, %v933
        %vm935 = vcmp.ge.f32.partialorder %v856, 0.0
        %v936 = vsel %vm935, %v934, 0.0
        %v937 = vmul.f32 %v856, 0.0164
        %v938 = vsub.f32 %v937, %v915
        %vm939 = vcmp.ge.f32.partialorder %v858, 0.0
        %v940 = vsel %vm939, %v938, 0.0
        %v941 = vmul.f32 %v860, -0.0569
        %v942 = vmul.f32 %v842, 0.0569
        %v943 = vadd.f32 %v941, %v942
        %vm944 = vcmp.ge.f32.partialorder %v860, 0.0
        %v945 = vsel %vm944, %v943, 0.0
        %v946 = vmul.f32 %v874, 0.0625
        %v947 = vadd.f32 %v836, %v946
        %v948 = vmul.f32 %v877, 0.0625
        %v949 = vadd.f32 %v838, %v948
        %v950 = vmul.f32 %v879, 0.0625
        %v951 = vadd.f32 %v840, %v950
        %v952 = vmul.f32 %v898, 0.0625
        %v953 = vadd.f32 %v842, %v952
        %v954 = vmul.f32 %v909, 0.0625
        %v955 = vadd.f32 %v844, %v954
        %v956 = vmul.f32 %v919, 0.0625
        %v957 = vadd.f32 %v846, %v956
        %v958 = vmul.f32 %v923, 0.0625
        %v959 = vadd.f32 %v848, %v958
        %v960 = vmul.f32 %v925, 0.0625
        %v961 = vadd.f32 %v850, %v960
        %v962 = vmul.f32 %v927, 0.0625
        %v963 = vadd.f32 %v852, %v962
        %v964 = vmul.f32 %v932, 0.0625
        %v965 = vadd.f32 %v854, %v964
        %v966 = vmul.f32 %v936, 0.0625
        %v967 = vadd.f32 %v856, %v966
        %v968 = vmul.f32 %v940, 0.0625
        %v969 = vadd.f32 %v858, %v968
        %v970 = vmul.f32 %v945, 0.0625
        %v971 = vadd.f32 %v860, %v970
        %v972 = vadd.f32 %v947, %v949
        %v973 = vsub.f32 %v972, %v254
        %v974 = vmul.f32 %v252, %v973
        %v975 = vtanh.pop %v974
        %v976 = vsub.f32 %v972, %v255
        %v977 = vmul.f32 %v253, %v976
        %v978 = vtanh.pop %v977
        %v979 = vsub.f32 %v975, %v978
        %v980 = vadd.f32 %v979, 2.0
        %v981 = vmul.f32 %v980, 0.019
        %v982 = vadd.f32 %v981, 0.0078
        %v983 = vsel %vm248, %v982, 0.0458
        %v984 = vmul.f32 %v947, -0.0458
        %v985 = vadd.f32 %v984, %v246
        %v986 = vmul.f32 %v947, 0.0458
        %v987 = vmul.f32 %v949, %v983
        %v988 = vsub.f32 %v986, %v987
        %v989 = vmul.f32 %v951, 0.0568
        %v990 = vsub.f32 %v987, %v989
        %v991 = vmul.f32 %v951, 0.0007441048
        %v992 = vmul.f32 %v953, 0.00649
        %v993 = vsub.f32 4.73, %v992
        %v994 = vmul.f32 %v963, 0.00951
        %v995 = vsub.f32 %v993, %v994
        %vm996 = vcmp.gt.f32.partialorder %v953, 339.0
        %v997 = vsub.f32 %v953, 339.0
        %v998 = vmul.f32 %v997, 0.0005
        %v999 = vsel %vm996, %v998, 0.0
        %v1000 = vmax.f32 %v995, 0.0
        %v1001 = vadd.f32 %v1000, %v991
        %v1002 = vsub.f32 %v1001, 1.0
        %v1003 = vsub.f32 %v1002, %v999
        %v1004 = vmul.f32 %v953, 0.0656
        %v1005 = vsub.f32 %v1003, %v1004
        %v1006 = vmul.f32 %v955, 0.0718
        %v1007 = vadd.f32 %v1005, %v1006
        %vm1008 = vcmp.ge.f32.partialorder %v953, 0.0
        %v1009 = vsel %vm1008, %v1007, 0.0
        %v1010 = vmul.f32 %v959, 0.0737
        %v1011 = vadd.f32 %v1010, 3.25
        %v1012 = vmul.f32 %v1011, %v955
        %v1013 = vadd.f32 %v955, 260.89
        %v1014 = vrcp.pop %v1013
        %v1015 = vmul.f32 %v1012, %v1014
        %v1016 = vsub.f32 0.0, %v1015
        %v1017 = vadd.f32 %v1016, %v1004
        %v1018 = vsub.f32 %v1017, %v1006
        %vm1019 = vcmp.ge.f32.partialorder %v955, 0.0
        %v1020 = vsel %vm1019, %v1018, 0.0
        %v1021 = vmul.f32 %v957, -0.55
        %v1022 = vmul.f32 %v965, 0.145
        %v1023 = vadd.f32 %v1021, %v1022
        %v1024 = vmul.f32 %v967, 0.0018
        %v1025 = vadd.f32 %v1023, %v1024
        %v1026 = vmul.f32 %v969, 0.0182
        %v1027 = vadd.f32 %v1025, %v1026
        %v1028 = vmul.f32 %v957, 20.491804
        %vm1029 = vcmp.ge.f32.partialorder %v957, 0.0
        %v1030 = vsel %vm1029, %v1027, 0.0
        %v1031 = vmul.f32 %v959, -0.0275
        %v1032 = vsub.f32 %v1028, 100.25
        %v1033 = vmul.f32 %v1032, 0.0275
        %v1034 = vadd.f32 %v1031, %v1033
        %v1035 = vsub.f32 %v961, %v1028
        %v1036 = vmul.f32 %v1035, -0.0076
        %v1037 = vsub.f32 %v963, %v961
        %v1038 = vmul.f32 %v1037, -0.0076
        %v1039 = vmul.f32 %v965, -0.365
        %v1040 = vmul.f32 %v957, 0.393
        %v1041 = vadd.f32 %v1039, %v1040
        %vm1042 = vcmp.ge.f32.partialorder %v965, 0.0
        %v1043 = vsel %vm1042, %v1041, 0.0
        %v1044 = vmul.f32 %v967, 0.0182
        %v1045 = vsub.f32 %v247, %v1044
        %vm1046 = vcmp.ge.f32.partialorder %v967, 0.0
        %v1047 = vsel %vm1046, %v1045, 0.0
        %v1048 = vmul.f32 %v967, 0.0164
        %v1049 = vsub.f32 %v1048, %v1026
        %vm1050 = vcmp.ge.f32.partialorder %v969, 0.0
        %v1051 = vsel %vm1050, %v1049, 0.0
        %v1052 = vmul.f32 %v971, -0.0569
        %v1053 = vmul.f32 %v953, 0.0569
        %v1054 = vadd.f32 %v1052, %v1053
        %vm1055 = vcmp.ge.f32.partialorder %v971, 0.0
        %v1056 = vsel %vm1055, %v1054, 0.0
        %v1057 = vmul.f32 %v985, 0.0625
        %v1058 = vadd.f32 %v947, %v1057
        %v1059 = vmul.f32 %v988, 0.0625
        %v1060 = vadd.f32 %v949, %v1059
        %v1061 = vmul.f32 %v990, 0.0625
        %v1062 = vadd.f32 %v951, %v1061
        %v1063 = vmul.f32 %v1009, 0.0625
        %v1064 = vadd.f32 %v953, %v1063
        %v1065 = vmul.f32 %v1020, 0.0625
        %v1066 = vadd.f32 %v955, %v1065
        %v1067 = vmul.f32 %v1030, 0.0625
        %v1068 = vadd.f32 %v957, %v1067
        %v1069 = vmul.f32 %v1034, 0.0625
        %v1070 = vadd.f32 %v959, %v1069
        %v1071 = vmul.f32 %v1036, 0.0625
        %v1072 = vadd.f32 %v961, %v1071
        %v1073 = vmul.f32 %v1038, 0.0625
        %v1074 = vadd.f32 %v963, %v1073
        %v1075 = vmul.f32 %v1043, 0.0625
        %v1076 = vadd.f32 %v965, %v1075
        %v1077 = vmul.f32 %v1047, 0.0625
        %v1078 = vadd.f32 %v967, %v1077
        %v1079 = vmul.f32 %v1051, 0.0625
        %v1080 = vadd.f32 %v969, %v1079
        %v1081 = vmul.f32 %v1056, 0.0625
        %v1082 = vadd.f32 %v971, %v1081
        %v1083 = vadd.f32 %v1058, %v1060
        %v1084 = vsub.f32 %v1083, %v254
        %v1085 = vmul.f32 %v252, %v1084
        %v1086 = vtanh.pop %v1085
        %v1087 = vsub.f32 %v1083, %v255
        %v1088 = vmul.f32 %v253, %v1087
        %v1089 = vtanh.pop %v1088
        %v1090 = vsub.f32 %v1086, %v1089
        %v1091 = vadd.f32 %v1090, 2.0
        %v1092 = vmul.f32 %v1091, 0.019
        %v1093 = vadd.f32 %v1092, 0.0078
        %v1094 = vsel %vm248, %v1093, 0.0458
        %v1095 = vmul.f32 %v1058, -0.0458
        %v1096 = vadd.f32 %v1095, %v246
        %v1097 = vmul.f32 %v1058, 0.0458
        %v1098 = vmul.f32 %v1060, %v1094
        %v1099 = vsub.f32 %v1097, %v1098
        %v1100 = vmul.f32 %v1062, 0.0568
        %v1101 = vsub.f32 %v1098, %v1100
        %v1102 = vmul.f32 %v1062, 0.0007441048
        %v1103 = vmul.f32 %v1064, 0.00649
        %v1104 = vsub.f32 4.73, %v1103
        %v1105 = vmul.f32 %v1074, 0.00951
        %v1106 = vsub.f32 %v1104, %v1105
        %vm1107 = vcmp.gt.f32.partialorder %v1064, 339.0
        %v1108 = vsub.f32 %v1064, 339.0
        %v1109 = vmul.f32 %v1108, 0.0005
        %v1110 = vsel %vm1107, %v1109, 0.0
        %v1111 = vmax.f32 %v1106, 0.0
        %v1112 = vadd.f32 %v1111, %v1102
        %v1113 = vsub.f32 %v1112, 1.0
        %v1114 = vsub.f32 %v1113, %v1110
        %v1115 = vmul.f32 %v1064, 0.0656
        %v1116 = vsub.f32 %v1114, %v1115
        %v1117 = vmul.f32 %v1066, 0.0718
        %v1118 = vadd.f32 %v1116, %v1117
        %vm1119 = vcmp.ge.f32.partialorder %v1064, 0.0
        %v1120 = vsel %vm1119, %v1118, 0.0
        %v1121 = vmul.f32 %v1070, 0.0737
        %v1122 = vadd.f32 %v1121, 3.25
        %v1123 = vmul.f32 %v1122, %v1066
        %v1124 = vadd.f32 %v1066, 260.89
        %v1125 = vrcp.pop %v1124
        %v1126 = vmul.f32 %v1123, %v1125
        %v1127 = vsub.f32 0.0, %v1126
        %v1128 = vadd.f32 %v1127, %v1115
        %v1129 = vsub.f32 %v1128, %v1117
        %vm1130 = vcmp.ge.f32.partialorder %v1066, 0.0
        %v1131 = vsel %vm1130, %v1129, 0.0
        %v1132 = vmul.f32 %v1068, -0.55
        %v1133 = vmul.f32 %v1076, 0.145
        %v1134 = vadd.f32 %v1132, %v1133
        %v1135 = vmul.f32 %v1078, 0.0018
        %v1136 = vadd.f32 %v1134, %v1135
        %v1137 = vmul.f32 %v1080, 0.0182
        %v1138 = vadd.f32 %v1136, %v1137
        %v1139 = vmul.f32 %v1068, 20.491804
        %vm1140 = vcmp.ge.f32.partialorder %v1068, 0.0
        %v1141 = vsel %vm1140, %v1138, 0.0
        %v1142 = vmul.f32 %v1070, -0.0275
        %v1143 = vsub.f32 %v1139, 100.25
        %v1144 = vmul.f32 %v1143, 0.0275
        %v1145 = vadd.f32 %v1142, %v1144
        %v1146 = vsub.f32 %v1072, %v1139
        %v1147 = vmul.f32 %v1146, -0.0076
        %v1148 = vsub.f32 %v1074, %v1072
        %v1149 = vmul.f32 %v1148, -0.0076
        %v1150 = vmul.f32 %v1076, -0.365
        %v1151 = vmul.f32 %v1068, 0.393
        %v1152 = vadd.f32 %v1150, %v1151
        %vm1153 = vcmp.ge.f32.partialorder %v1076, 0.0
        %v1154 = vsel %vm1153, %v1152, 0.0
        %v1155 = vmul.f32 %v1078, 0.0182
        %v1156 = vsub.f32 %v247, %v1155
        %vm1157 = vcmp.ge.f32.partialorder %v1078, 0.0
        %v1158 = vsel %vm1157, %v1156, 0.0
        %v1159 = vmul.f32 %v1078, 0.0164
        %v1160 = vsub.f32 %v1159, %v1137
        %vm1161 = vcmp.ge.f32.partialorder %v1080, 0.0
        %v1162 = vsel %vm1161, %v1160, 0.0
        %v1163 = vmul.f32 %v1082, -0.0569
        %v1164 = vmul.f32 %v1064, 0.0569
        %v1165 = vadd.f32 %v1163, %v1164
        %vm1166 = vcmp.ge.f32.partialorder %v1082, 0.0
        %v1167 = vsel %vm1166, %v1165, 0.0
        %v1168 = vmul.f32 %v1096, 0.0625
        %v1169 = vadd.f32 %v1058, %v1168
        %v1170 = vmul.f32 %v1099, 0.0625
        %v1171 = vadd.f32 %v1060, %v1170
        %v1172 = vmul.f32 %v1101, 0.0625
        %v1173 = vadd.f32 %v1062, %v1172
        %v1174 = vmul.f32 %v1120, 0.0625
        %v1175 = vadd.f32 %v1064, %v1174
        %v1176 = vmul.f32 %v1131, 0.0625
        %v1177 = vadd.f32 %v1066, %v1176
        %v1178 = vmul.f32 %v1141, 0.0625
        %v1179 = vadd.f32 %v1068, %v1178
        %v1180 = vmul.f32 %v1145, 0.0625
        %v1181 = vadd.f32 %v1070, %v1180
        %v1182 = vmul.f32 %v1147, 0.0625
        %v1183 = vadd.f32 %v1072, %v1182
        %v1184 = vmul.f32 %v1149, 0.0625
        %v1185 = vadd.f32 %v1074, %v1184
        %v1186 = vmul.f32 %v1154, 0.0625
        %v1187 = vadd.f32 %v1076, %v1186
        %v1188 = vmul.f32 %v1158, 0.0625
        %v1189 = vadd.f32 %v1078, %v1188
        %v1190 = vmul.f32 %v1162, 0.0625
        %v1191 = vadd.f32 %v1080, %v1190
        %v1192 = vmul.f32 %v1167, 0.0625
        %v1193 = vadd.f32 %v1082, %v1192
        %v1194 = vadd.f32 %v1169, %v1171
        %v1195 = vsub.f32 %v1194, %v254
        %v1196 = vmul.f32 %v252, %v1195
        %v1197 = vtanh.pop %v1196
        %v1198 = vsub.f32 %v1194, %v255
        %v1199 = vmul.f32 %v253, %v1198
        %v1200 = vtanh.pop %v1199
        %v1201 = vsub.f32 %v1197, %v1200
        %v1202 = vadd.f32 %v1201, 2.0
        %v1203 = vmul.f32 %v1202, 0.019
        %v1204 = vadd.f32 %v1203, 0.0078
        %v1205 = vsel %vm248, %v1204, 0.0458
        %v1206 = vmul.f32 %v1169, -0.0458
        %v1207 = vadd.f32 %v1206, %v246
        %v1208 = vmul.f32 %v1169, 0.0458
        %v1209 = vmul.f32 %v1171, %v1205
        %v1210 = vsub.f32 %v1208, %v1209
        %v1211 = vmul.f32 %v1173, 0.0568
        %v1212 = vsub.f32 %v1209, %v1211
        %v1213 = vmul.f32 %v1173, 0.0007441048
        %v1214 = vmul.f32 %v1175, 0.00649
        %v1215 = vsub.f32 4.73, %v1214
        %v1216 = vmul.f32 %v1185, 0.00951
        %v1217 = vsub.f32 %v1215, %v1216
        %vm1218 = vcmp.gt.f32.partialorder %v1175, 339.0
        %v1219 = vsub.f32 %v1175, 339.0
        %v1220 = vmul.f32 %v1219, 0.0005
        %v1221 = vsel %vm1218, %v1220, 0.0
        %v1222 = vmax.f32 %v1217, 0.0
        %v1223 = vadd.f32 %v1222, %v1213
        %v1224 = vsub.f32 %v1223, 1.0
        %v1225 = vsub.f32 %v1224, %v1221
        %v1226 = vmul.f32 %v1175, 0.0656
        %v1227 = vsub.f32 %v1225, %v1226
        %v1228 = vmul.f32 %v1177, 0.0718
        %v1229 = vadd.f32 %v1227, %v1228
        %vm1230 = vcmp.ge.f32.partialorder %v1175, 0.0
        %v1231 = vsel %vm1230, %v1229, 0.0
        %v1232 = vmul.f32 %v1181, 0.0737
        %v1233 = vadd.f32 %v1232, 3.25
        %v1234 = vmul.f32 %v1233, %v1177
        %v1235 = vadd.f32 %v1177, 260.89
        %v1236 = vrcp.pop %v1235
        %v1237 = vmul.f32 %v1234, %v1236
        %v1238 = vsub.f32 0.0, %v1237
        %v1239 = vadd.f32 %v1238, %v1226
        %v1240 = vsub.f32 %v1239, %v1228
        %vm1241 = vcmp.ge.f32.partialorder %v1177, 0.0
        %v1242 = vsel %vm1241, %v1240, 0.0
        %v1243 = vmul.f32 %v1179, -0.55
        %v1244 = vmul.f32 %v1187, 0.145
        %v1245 = vadd.f32 %v1243, %v1244
        %v1246 = vmul.f32 %v1189, 0.0018
        %v1247 = vadd.f32 %v1245, %v1246
        %v1248 = vmul.f32 %v1191, 0.0182
        %v1249 = vadd.f32 %v1247, %v1248
        %v1250 = vmul.f32 %v1179, 20.491804
        %vm1251 = vcmp.ge.f32.partialorder %v1179, 0.0
        %v1252 = vsel %vm1251, %v1249, 0.0
        %v1253 = vmul.f32 %v1181, -0.0275
        %v1254 = vsub.f32 %v1250, 100.25
        %v1255 = vmul.f32 %v1254, 0.0275
        %v1256 = vadd.f32 %v1253, %v1255
        %v1257 = vsub.f32 %v1183, %v1250
        %v1258 = vmul.f32 %v1257, -0.0076
        %v1259 = vsub.f32 %v1185, %v1183
        %v1260 = vmul.f32 %v1259, -0.0076
        %v1261 = vmul.f32 %v1187, -0.365
        %v1262 = vmul.f32 %v1179, 0.393
        %v1263 = vadd.f32 %v1261, %v1262
        %vm1264 = vcmp.ge.f32.partialorder %v1187, 0.0
        %v1265 = vsel %vm1264, %v1263, 0.0
        %v1266 = vmul.f32 %v1189, 0.0182
        %v1267 = vsub.f32 %v247, %v1266
        %vm1268 = vcmp.ge.f32.partialorder %v1189, 0.0
        %v1269 = vsel %vm1268, %v1267, 0.0
        %v1270 = vmul.f32 %v1189, 0.0164
        %v1271 = vsub.f32 %v1270, %v1248
        %vm1272 = vcmp.ge.f32.partialorder %v1191, 0.0
        %v1273 = vsel %vm1272, %v1271, 0.0
        %v1274 = vmul.f32 %v1193, -0.0569
        %v1275 = vmul.f32 %v1175, 0.0569
        %v1276 = vadd.f32 %v1274, %v1275
        %vm1277 = vcmp.ge.f32.partialorder %v1193, 0.0
        %v1278 = vsel %vm1277, %v1276, 0.0
        %v1279 = vmul.f32 %v1207, 0.0625
        %v1280 = vadd.f32 %v1169, %v1279
        %v1281 = vmul.f32 %v1210, 0.0625
        %v1282 = vadd.f32 %v1171, %v1281
        %v1283 = vmul.f32 %v1212, 0.0625
        %v1284 = vadd.f32 %v1173, %v1283
        %v1285 = vmul.f32 %v1231, 0.0625
        %v1286 = vadd.f32 %v1175, %v1285
        %v1287 = vmul.f32 %v1242, 0.0625
        %v1288 = vadd.f32 %v1177, %v1287
        %v1289 = vmul.f32 %v1252, 0.0625
        %v1290 = vadd.f32 %v1179, %v1289
        %v1291 = vmul.f32 %v1256, 0.0625
        %v1292 = vadd.f32 %v1181, %v1291
        %v1293 = vmul.f32 %v1258, 0.0625
        %v1294 = vadd.f32 %v1183, %v1293
        %v1295 = vmul.f32 %v1260, 0.0625
        %v1296 = vadd.f32 %v1185, %v1295
        %v1297 = vmul.f32 %v1265, 0.0625
        %v1298 = vadd.f32 %v1187, %v1297
        %v1299 = vmul.f32 %v1269, 0.0625
        %v1300 = vadd.f32 %v1189, %v1299
        %v1301 = vmul.f32 %v1273, 0.0625
        %v1302 = vadd.f32 %v1191, %v1301
        %v1303 = vmul.f32 %v1278, 0.0625
        %v1304 = vadd.f32 %v1193, %v1303
        %v1305 = vadd.f32 %v1280, %v1282
        %v1306 = vsub.f32 %v1305, %v254
        %v1307 = vmul.f32 %v252, %v1306
        %v1308 = vtanh.pop %v1307
        %v1309 = vsub.f32 %v1305, %v255
        %v1310 = vmul.f32 %v253, %v1309
        %v1311 = vtanh.pop %v1310
        %v1312 = vsub.f32 %v1308, %v1311
        %v1313 = vadd.f32 %v1312, 2.0
        %v1314 = vmul.f32 %v1313, 0.019
        %v1315 = vadd.f32 %v1314, 0.0078
        %v1316 = vsel %vm248, %v1315, 0.0458
        %v1317 = vmul.f32 %v1280, -0.0458
        %v1318 = vadd.f32 %v1317, %v246
        %v1319 = vmul.f32 %v1280, 0.0458
        %v1320 = vmul.f32 %v1282, %v1316
        %v1321 = vsub.f32 %v1319, %v1320
        %v1322 = vmul.f32 %v1284, 0.0568
        %v1323 = vsub.f32 %v1320, %v1322
        %v1324 = vmul.f32 %v1284, 0.0007441048
        %v1325 = vmul.f32 %v1286, 0.00649
        %v1326 = vsub.f32 4.73, %v1325
        %v1327 = vmul.f32 %v1296, 0.00951
        %v1328 = vsub.f32 %v1326, %v1327
        %vm1329 = vcmp.gt.f32.partialorder %v1286, 339.0
        %v1330 = vsub.f32 %v1286, 339.0
        %v1331 = vmul.f32 %v1330, 0.0005
        %v1332 = vsel %vm1329, %v1331, 0.0
        %v1333 = vmax.f32 %v1328, 0.0
        %v1334 = vadd.f32 %v1333, %v1324
        %v1335 = vsub.f32 %v1334, 1.0
        %v1336 = vsub.f32 %v1335, %v1332
        %v1337 = vmul.f32 %v1286, 0.0656
        %v1338 = vsub.f32 %v1336, %v1337
        %v1339 = vmul.f32 %v1288, 0.0718
        %v1340 = vadd.f32 %v1338, %v1339
        %vm1341 = vcmp.ge.f32.partialorder %v1286, 0.0
        %v1342 = vsel %vm1341, %v1340, 0.0
        %v1343 = vmul.f32 %v1292, 0.0737
        %v1344 = vadd.f32 %v1343, 3.25
        %v1345 = vmul.f32 %v1344, %v1288
        %v1346 = vadd.f32 %v1288, 260.89
        %v1347 = vrcp.pop %v1346
        %v1348 = vmul.f32 %v1345, %v1347
        %v1349 = vsub.f32 0.0, %v1348
        %v1350 = vadd.f32 %v1349, %v1337
        %v1351 = vsub.f32 %v1350, %v1339
        %vm1352 = vcmp.ge.f32.partialorder %v1288, 0.0
        %v1353 = vsel %vm1352, %v1351, 0.0
        %v1354 = vmul.f32 %v1290, -0.55
        %v1355 = vmul.f32 %v1298, 0.145
        %v1356 = vadd.f32 %v1354, %v1355
        %v1357 = vmul.f32 %v1300, 0.0018
        %v1358 = vadd.f32 %v1356, %v1357
        %v1359 = vmul.f32 %v1302, 0.0182
        %v1360 = vadd.f32 %v1358, %v1359
        %v1361 = vmul.f32 %v1290, 20.491804
        %vm1362 = vcmp.ge.f32.partialorder %v1290, 0.0
        %v1363 = vsel %vm1362, %v1360, 0.0
        %v1364 = vmul.f32 %v1292, -0.0275
        %v1365 = vsub.f32 %v1361, 100.25
        %v1366 = vmul.f32 %v1365, 0.0275
        %v1367 = vadd.f32 %v1364, %v1366
        %v1368 = vsub.f32 %v1294, %v1361
        %v1369 = vmul.f32 %v1368, -0.0076
        %v1370 = vsub.f32 %v1296, %v1294
        %v1371 = vmul.f32 %v1370, -0.0076
        %v1372 = vmul.f32 %v1298, -0.365
        %v1373 = vmul.f32 %v1290, 0.393
        %v1374 = vadd.f32 %v1372, %v1373
        %vm1375 = vcmp.ge.f32.partialorder %v1298, 0.0
        %v1376 = vsel %vm1375, %v1374, 0.0
        %v1377 = vmul.f32 %v1300, 0.0182
        %v1378 = vsub.f32 %v247, %v1377
        %vm1379 = vcmp.ge.f32.partialorder %v1300, 0.0
        %v1380 = vsel %vm1379, %v1378, 0.0
        %v1381 = vmul.f32 %v1300, 0.0164
        %v1382 = vsub.f32 %v1381, %v1359
        %vm1383 = vcmp.ge.f32.partialorder %v1302, 0.0
        %v1384 = vsel %vm1383, %v1382, 0.0
        %v1385 = vmul.f32 %v1304, -0.0569
        %v1386 = vmul.f32 %v1286, 0.0569
        %v1387 = vadd.f32 %v1385, %v1386
        %vm1388 = vcmp.ge.f32.partialorder %v1304, 0.0
        %v1389 = vsel %vm1388, %v1387, 0.0
        %v1390 = vmul.f32 %v1318, 0.0625
        %v1391 = vadd.f32 %v1280, %v1390
        %v1392 = vmul.f32 %v1321, 0.0625
        %v1393 = vadd.f32 %v1282, %v1392
        %v1394 = vmul.f32 %v1323, 0.0625
        %v1395 = vadd.f32 %v1284, %v1394
        %v1396 = vmul.f32 %v1342, 0.0625
        %v1397 = vadd.f32 %v1286, %v1396
        %v1398 = vmul.f32 %v1353, 0.0625
        %v1399 = vadd.f32 %v1288, %v1398
        %v1400 = vmul.f32 %v1363, 0.0625
        %v1401 = vadd.f32 %v1290, %v1400
        %v1402 = vmul.f32 %v1367, 0.0625
        %v1403 = vadd.f32 %v1292, %v1402
        %v1404 = vmul.f32 %v1369, 0.0625
        %v1405 = vadd.f32 %v1294, %v1404
        %v1406 = vmul.f32 %v1371, 0.0625
        %v1407 = vadd.f32 %v1296, %v1406
        %v1408 = vmul.f32 %v1376, 0.0625
        %v1409 = vadd.f32 %v1298, %v1408
        %v1410 = vmul.f32 %v1380, 0.0625
        %v1411 = vadd.f32 %v1300, %v1410
        %v1412 = vmul.f32 %v1384, 0.0625
        %v1413 = vadd.f32 %v1302, %v1412
        %v1414 = vmul.f32 %v1389, 0.0625
        %v1415 = vadd.f32 %v1304, %v1414
        %v1416 = vadd.f32 %v1391, %v1393
        %v1417 = vsub.f32 %v1416, %v254
        %v1418 = vmul.f32 %v252, %v1417
        %v1419 = vtanh.pop %v1418
        %v1420 = vsub.f32 %v1416, %v255
        %v1421 = vmul.f32 %v253, %v1420
        %v1422 = vtanh.pop %v1421
        %v1423 = vsub.f32 %v1419, %v1422
        %v1424 = vadd.f32 %v1423, 2.0
        %v1425 = vmul.f32 %v1424, 0.019
        %v1426 = vadd.f32 %v1425, 0.0078
        %v1427 = vsel %vm248, %v1426, 0.0458
        %v1428 = vmul.f32 %v1391, -0.0458
        %v1429 = vadd.f32 %v1428, %v246
        %v1430 = vmul.f32 %v1391, 0.0458
        %v1431 = vmul.f32 %v1393, %v1427
        %v1432 = vsub.f32 %v1430, %v1431
        %v1433 = vmul.f32 %v1395, 0.0568
        %v1434 = vsub.f32 %v1431, %v1433
        %v1435 = vmul.f32 %v1395, 0.0007441048
        %v1436 = vmul.f32 %v1397, 0.00649
        %v1437 = vsub.f32 4.73, %v1436
        %v1438 = vmul.f32 %v1407, 0.00951
        %v1439 = vsub.f32 %v1437, %v1438
        %vm1440 = vcmp.gt.f32.partialorder %v1397, 339.0
        %v1441 = vsub.f32 %v1397, 339.0
        %v1442 = vmul.f32 %v1441, 0.0005
        %v1443 = vsel %vm1440, %v1442, 0.0
        %v1444 = vmax.f32 %v1439, 0.0
        %v1445 = vadd.f32 %v1444, %v1435
        %v1446 = vsub.f32 %v1445, 1.0
        %v1447 = vsub.f32 %v1446, %v1443
        %v1448 = vmul.f32 %v1397, 0.0656
        %v1449 = vsub.f32 %v1447, %v1448
        %v1450 = vmul.f32 %v1399, 0.0718
        %v1451 = vadd.f32 %v1449, %v1450
        %vm1452 = vcmp.ge.f32.partialorder %v1397, 0.0
        %v1453 = vsel %vm1452, %v1451, 0.0
        %v1454 = vmul.f32 %v1403, 0.0737
        %v1455 = vadd.f32 %v1454, 3.25
        %v1456 = vmul.f32 %v1455, %v1399
        %v1457 = vadd.f32 %v1399, 260.89
        %v1458 = vrcp.pop %v1457
        %v1459 = vmul.f32 %v1456, %v1458
        %v1460 = vsub.f32 0.0, %v1459
        %v1461 = vadd.f32 %v1460, %v1448
        %v1462 = vsub.f32 %v1461, %v1450
        %vm1463 = vcmp.ge.f32.partialorder %v1399, 0.0
        %v1464 = vsel %vm1463, %v1462, 0.0
        %v1465 = vmul.f32 %v1401, -0.55
        %v1466 = vmul.f32 %v1409, 0.145
        %v1467 = vadd.f32 %v1465, %v1466
        %v1468 = vmul.f32 %v1411, 0.0018
        %v1469 = vadd.f32 %v1467, %v1468
        %v1470 = vmul.f32 %v1413, 0.0182
        %v1471 = vadd.f32 %v1469, %v1470
        %v1472 = vmul.f32 %v1401, 20.491804
        %vm1473 = vcmp.ge.f32.partialorder %v1401, 0.0
        %v1474 = vsel %vm1473, %v1471, 0.0
        %v1475 = vmul.f32 %v1403, -0.0275
        %v1476 = vsub.f32 %v1472, 100.25
        %v1477 = vmul.f32 %v1476, 0.0275
        %v1478 = vadd.f32 %v1475, %v1477
        %v1479 = vsub.f32 %v1405, %v1472
        %v1480 = vmul.f32 %v1479, -0.0076
        %v1481 = vsub.f32 %v1407, %v1405
        %v1482 = vmul.f32 %v1481, -0.0076
        %v1483 = vmul.f32 %v1409, -0.365
        %v1484 = vmul.f32 %v1401, 0.393
        %v1485 = vadd.f32 %v1483, %v1484
        %vm1486 = vcmp.ge.f32.partialorder %v1409, 0.0
        %v1487 = vsel %vm1486, %v1485, 0.0
        %v1488 = vmul.f32 %v1411, 0.0182
        %v1489 = vsub.f32 %v247, %v1488
        %vm1490 = vcmp.ge.f32.partialorder %v1411, 0.0
        %v1491 = vsel %vm1490, %v1489, 0.0
        %v1492 = vmul.f32 %v1411, 0.0164
        %v1493 = vsub.f32 %v1492, %v1470
        %vm1494 = vcmp.ge.f32.partialorder %v1413, 0.0
        %v1495 = vsel %vm1494, %v1493, 0.0
        %v1496 = vmul.f32 %v1415, -0.0569
        %v1497 = vmul.f32 %v1397, 0.0569
        %v1498 = vadd.f32 %v1496, %v1497
        %vm1499 = vcmp.ge.f32.partialorder %v1415, 0.0
        %v1500 = vsel %vm1499, %v1498, 0.0
        %v1501 = vmul.f32 %v1429, 0.0625
        %v1502 = vadd.f32 %v1391, %v1501
        %v1503 = vmul.f32 %v1432, 0.0625
        %v1504 = vadd.f32 %v1393, %v1503
        %v1505 = vmul.f32 %v1434, 0.0625
        %v1506 = vadd.f32 %v1395, %v1505
        %v1507 = vmul.f32 %v1453, 0.0625
        %v1508 = vadd.f32 %v1397, %v1507
        %v1509 = vmul.f32 %v1464, 0.0625
        %v1510 = vadd.f32 %v1399, %v1509
        %v1511 = vmul.f32 %v1474, 0.0625
        %v1512 = vadd.f32 %v1401, %v1511
        %v1513 = vmul.f32 %v1478, 0.0625
        %v1514 = vadd.f32 %v1403, %v1513
        %v1515 = vmul.f32 %v1480, 0.0625
        %v1516 = vadd.f32 %v1405, %v1515
        %v1517 = vmul.f32 %v1482, 0.0625
        %v1518 = vadd.f32 %v1407, %v1517
        %v1519 = vmul.f32 %v1487, 0.0625
        %v1520 = vadd.f32 %v1409, %v1519
        %v1521 = vmul.f32 %v1491, 0.0625
        %v1522 = vadd.f32 %v1411, %v1521
        %v1523 = vmul.f32 %v1495, 0.0625
        %v1524 = vadd.f32 %v1413, %v1523
        %v1525 = vmul.f32 %v1500, 0.0625
        %v1526 = vadd.f32 %v1415, %v1525
        %v1527 = vadd.f32 %v1502, %v1504
        %v1528 = vsub.f32 %v1527, %v254
        %v1529 = vmul.f32 %v252, %v1528
        %v1530 = vtanh.pop %v1529
        %v1531 = vsub.f32 %v1527, %v255
        %v1532 = vmul.f32 %v253, %v1531
        %v1533 = vtanh.pop %v1532
        %v1534 = vsub.f32 %v1530, %v1533
        %v1535 = vadd.f32 %v1534, 2.0
        %v1536 = vmul.f32 %v1535, 0.019
        %v1537 = vadd.f32 %v1536, 0.0078
        %v1538 = vsel %vm248, %v1537, 0.0458
        %v1539 = vmul.f32 %v1502, -0.0458
        %v1540 = vadd.f32 %v1539, %v246
        %v1541 = vmul.f32 %v1502, 0.0458
        %v1542 = vmul.f32 %v1504, %v1538
        %v1543 = vsub.f32 %v1541, %v1542
        %v1544 = vmul.f32 %v1506, 0.0568
        %v1545 = vsub.f32 %v1542, %v1544
        %v1546 = vmul.f32 %v1506, 0.0007441048
        %v1547 = vmul.f32 %v1508, 0.00649
        %v1548 = vsub.f32 4.73, %v1547
        %v1549 = vmul.f32 %v1518, 0.00951
        %v1550 = vsub.f32 %v1548, %v1549
        %vm1551 = vcmp.gt.f32.partialorder %v1508, 339.0
        %v1552 = vsub.f32 %v1508, 339.0
        %v1553 = vmul.f32 %v1552, 0.0005
        %v1554 = vsel %vm1551, %v1553, 0.0
        %v1555 = vmax.f32 %v1550, 0.0
        %v1556 = vadd.f32 %v1555, %v1546
        %v1557 = vsub.f32 %v1556, 1.0
        %v1558 = vsub.f32 %v1557, %v1554
        %v1559 = vmul.f32 %v1508, 0.0656
        %v1560 = vsub.f32 %v1558, %v1559
        %v1561 = vmul.f32 %v1510, 0.0718
        %v1562 = vadd.f32 %v1560, %v1561
        %vm1563 = vcmp.ge.f32.partialorder %v1508, 0.0
        %v1564 = vsel %vm1563, %v1562, 0.0
        %v1565 = vmul.f32 %v1514, 0.0737
        %v1566 = vadd.f32 %v1565, 3.25
        %v1567 = vmul.f32 %v1566, %v1510
        %v1568 = vadd.f32 %v1510, 260.89
        %v1569 = vrcp.pop %v1568
        %v1570 = vmul.f32 %v1567, %v1569
        %v1571 = vsub.f32 0.0, %v1570
        %v1572 = vadd.f32 %v1571, %v1559
        %v1573 = vsub.f32 %v1572, %v1561
        %vm1574 = vcmp.ge.f32.partialorder %v1510, 0.0
        %v1575 = vsel %vm1574, %v1573, 0.0
        %v1576 = vmul.f32 %v1512, -0.55
        %v1577 = vmul.f32 %v1520, 0.145
        %v1578 = vadd.f32 %v1576, %v1577
        %v1579 = vmul.f32 %v1522, 0.0018
        %v1580 = vadd.f32 %v1578, %v1579
        %v1581 = vmul.f32 %v1524, 0.0182
        %v1582 = vadd.f32 %v1580, %v1581
        %v1583 = vmul.f32 %v1512, 20.491804
        %vm1584 = vcmp.ge.f32.partialorder %v1512, 0.0
        %v1585 = vsel %vm1584, %v1582, 0.0
        %v1586 = vmul.f32 %v1514, -0.0275
        %v1587 = vsub.f32 %v1583, 100.25
        %v1588 = vmul.f32 %v1587, 0.0275
        %v1589 = vadd.f32 %v1586, %v1588
        %v1590 = vsub.f32 %v1516, %v1583
        %v1591 = vmul.f32 %v1590, -0.0076
        %v1592 = vsub.f32 %v1518, %v1516
        %v1593 = vmul.f32 %v1592, -0.0076
        %v1594 = vmul.f32 %v1520, -0.365
        %v1595 = vmul.f32 %v1512, 0.393
        %v1596 = vadd.f32 %v1594, %v1595
        %vm1597 = vcmp.ge.f32.partialorder %v1520, 0.0
        %v1598 = vsel %vm1597, %v1596, 0.0
        %v1599 = vmul.f32 %v1522, 0.0182
        %v1600 = vsub.f32 %v247, %v1599
        %vm1601 = vcmp.ge.f32.partialorder %v1522, 0.0
        %v1602 = vsel %vm1601, %v1600, 0.0
        %v1603 = vmul.f32 %v1522, 0.0164
        %v1604 = vsub.f32 %v1603, %v1581
        %vm1605 = vcmp.ge.f32.partialorder %v1524, 0.0
        %v1606 = vsel %vm1605, %v1604, 0.0
        %v1607 = vmul.f32 %v1526, -0.0569
        %v1608 = vmul.f32 %v1508, 0.0569
        %v1609 = vadd.f32 %v1607, %v1608
        %vm1610 = vcmp.ge.f32.partialorder %v1526, 0.0
        %v1611 = vsel %vm1610, %v1609, 0.0
        %v1612 = vmul.f32 %v1540, 0.0625
        %v1613 = vadd.f32 %v1502, %v1612
        %v1614 = vmul.f32 %v1543, 0.0625
        %v1615 = vadd.f32 %v1504, %v1614
        %v1616 = vmul.f32 %v1545, 0.0625
        %v1617 = vadd.f32 %v1506, %v1616
        %v1618 = vmul.f32 %v1564, 0.0625
        %v1619 = vadd.f32 %v1508, %v1618
        %v1620 = vmul.f32 %v1575, 0.0625
        %v1621 = vadd.f32 %v1510, %v1620
        %v1622 = vmul.f32 %v1585, 0.0625
        %v1623 = vadd.f32 %v1512, %v1622
        %v1624 = vmul.f32 %v1589, 0.0625
        %v1625 = vadd.f32 %v1514, %v1624
        %v1626 = vmul.f32 %v1591, 0.0625
        %v1627 = vadd.f32 %v1516, %v1626
        %v1628 = vmul.f32 %v1593, 0.0625
        %v1629 = vadd.f32 %v1518, %v1628
        %v1630 = vmul.f32 %v1598, 0.0625
        %v1631 = vadd.f32 %v1520, %v1630
        %v1632 = vmul.f32 %v1602, 0.0625
        %v1633 = vadd.f32 %v1522, %v1632
        %v1634 = vmul.f32 %v1606, 0.0625
        %v1635 = vadd.f32 %v1524, %v1634
        %v1636 = vmul.f32 %v1611, 0.0625
        %v1637 = vadd.f32 %v1526, %v1636
        %v1638 = vadd.f32 %v1613, %v1615
        %v1639 = vsub.f32 %v1638, %v254
        %v1640 = vmul.f32 %v252, %v1639
        %v1641 = vtanh.pop %v1640
        %v1642 = vsub.f32 %v1638, %v255
        %v1643 = vmul.f32 %v253, %v1642
        %v1644 = vtanh.pop %v1643
        %v1645 = vsub.f32 %v1641, %v1644
        %v1646 = vadd.f32 %v1645, 2.0
        %v1647 = vmul.f32 %v1646, 0.019
        %v1648 = vadd.f32 %v1647, 0.0078
        %v1649 = vsel %vm248, %v1648, 0.0458
        %v1650 = vmul.f32 %v1613, -0.0458
        %v1651 = vadd.f32 %v1650, %v246
        %v1652 = vmul.f32 %v1613, 0.0458
        %v1653 = vmul.f32 %v1615, %v1649
        %v1654 = vsub.f32 %v1652, %v1653
        %v1655 = vmul.f32 %v1617, 0.0568
        %v1656 = vsub.f32 %v1653, %v1655
        %v1657 = vmul.f32 %v1617, 0.0007441048
        %v1658 = vmul.f32 %v1619, 0.00649
        %v1659 = vsub.f32 4.73, %v1658
        %v1660 = vmul.f32 %v1629, 0.00951
        %v1661 = vsub.f32 %v1659, %v1660
        %vm1662 = vcmp.gt.f32.partialorder %v1619, 339.0
        %v1663 = vsub.f32 %v1619, 339.0
        %v1664 = vmul.f32 %v1663, 0.0005
        %v1665 = vsel %vm1662, %v1664, 0.0
        %v1666 = vmax.f32 %v1661, 0.0
        %v1667 = vadd.f32 %v1666, %v1657
        %v1668 = vsub.f32 %v1667, 1.0
        %v1669 = vsub.f32 %v1668, %v1665
        %v1670 = vmul.f32 %v1619, 0.0656
        %v1671 = vsub.f32 %v1669, %v1670
        %v1672 = vmul.f32 %v1621, 0.0718
        %v1673 = vadd.f32 %v1671, %v1672
        %vm1674 = vcmp.ge.f32.partialorder %v1619, 0.0
        %v1675 = vsel %vm1674, %v1673, 0.0
        %v1676 = vmul.f32 %v1625, 0.0737
        %v1677 = vadd.f32 %v1676, 3.25
        %v1678 = vmul.f32 %v1677, %v1621
        %v1679 = vadd.f32 %v1621, 260.89
        %v1680 = vrcp.pop %v1679
        %v1681 = vmul.f32 %v1678, %v1680
        %v1682 = vsub.f32 0.0, %v1681
        %v1683 = vadd.f32 %v1682, %v1670
        %v1684 = vsub.f32 %v1683, %v1672
        %vm1685 = vcmp.ge.f32.partialorder %v1621, 0.0
        %v1686 = vsel %vm1685, %v1684, 0.0
        %v1687 = vmul.f32 %v1623, -0.55
        %v1688 = vmul.f32 %v1631, 0.145
        %v1689 = vadd.f32 %v1687, %v1688
        %v1690 = vmul.f32 %v1633, 0.0018
        %v1691 = vadd.f32 %v1689, %v1690
        %v1692 = vmul.f32 %v1635, 0.0182
        %v1693 = vadd.f32 %v1691, %v1692
        %v1694 = vmul.f32 %v1623, 20.491804
        %vm1695 = vcmp.ge.f32.partialorder %v1623, 0.0
        %v1696 = vsel %vm1695, %v1693, 0.0
        %v1697 = vmul.f32 %v1625, -0.0275
        %v1698 = vsub.f32 %v1694, 100.25
        %v1699 = vmul.f32 %v1698, 0.0275
        %v1700 = vadd.f32 %v1697, %v1699
        %v1701 = vsub.f32 %v1627, %v1694
        %v1702 = vmul.f32 %v1701, -0.0076
        %v1703 = vsub.f32 %v1629, %v1627
        %v1704 = vmul.f32 %v1703, -0.0076
        %v1705 = vmul.f32 %v1631, -0.365
        %v1706 = vmul.f32 %v1623, 0.393
        %v1707 = vadd.f32 %v1705, %v1706
        %vm1708 = vcmp.ge.f32.partialorder %v1631, 0.0
        %v1709 = vsel %vm1708, %v1707, 0.0
        %v1710 = vmul.f32 %v1633, 0.0182
        %v1711 = vsub.f32 %v247, %v1710
        %vm1712 = vcmp.ge.f32.partialorder %v1633, 0.0
        %v1713 = vsel %vm1712, %v1711, 0.0
        %v1714 = vmul.f32 %v1633, 0.0164
        %v1715 = vsub.f32 %v1714, %v1692
        %vm1716 = vcmp.ge.f32.partialorder %v1635, 0.0
        %v1717 = vsel %vm1716, %v1715, 0.0
        %v1718 = vmul.f32 %v1637, -0.0569
        %v1719 = vmul.f32 %v1619, 0.0569
        %v1720 = vadd.f32 %v1718, %v1719
        %vm1721 = vcmp.ge.f32.partialorder %v1637, 0.0
        %v1722 = vsel %vm1721, %v1720, 0.0
        %v1723 = vmul.f32 %v1651, 0.0625
        %v1724 = vadd.f32 %v1613, %v1723
        %v1725 = vmul.f32 %v1654, 0.0625
        %v1726 = vadd.f32 %v1615, %v1725
        %v1727 = vmul.f32 %v1656, 0.0625
        %v1728 = vadd.f32 %v1617, %v1727
        %v1729 = vmul.f32 %v1675, 0.0625
        %v1730 = vadd.f32 %v1619, %v1729
        %v1731 = vmul.f32 %v1686, 0.0625
        %v1732 = vadd.f32 %v1621, %v1731
        %v1733 = vmul.f32 %v1696, 0.0625
        %v1734 = vadd.f32 %v1623, %v1733
        %v1735 = vmul.f32 %v1700, 0.0625
        %v1736 = vadd.f32 %v1625, %v1735
        %v1737 = vmul.f32 %v1702, 0.0625
        %v1738 = vadd.f32 %v1627, %v1737
        %v1739 = vmul.f32 %v1704, 0.0625
        %v1740 = vadd.f32 %v1629, %v1739
        %v1741 = vmul.f32 %v1709, 0.0625
        %v1742 = vadd.f32 %v1631, %v1741
        %v1743 = vmul.f32 %v1713, 0.0625
        %v1744 = vadd.f32 %v1633, %v1743
        %v1745 = vmul.f32 %v1717, 0.0625
        %v1746 = vadd.f32 %v1635, %v1745
        %v1747 = vmul.f32 %v1722, 0.0625
        %v1748 = vadd.f32 %v1637, %v1747
        %v1749 = vadd.f32 %v1724, %v1726
        %v1750 = vsub.f32 %v1749, %v254
        %v1751 = vmul.f32 %v252, %v1750
        %v1752 = vtanh.pop %v1751
        %v1753 = vsub.f32 %v1749, %v255
        %v1754 = vmul.f32 %v253, %v1753
        %v1755 = vtanh.pop %v1754
        %v1756 = vsub.f32 %v1752, %v1755
        %v1757 = vadd.f32 %v1756, 2.0
        %v1758 = vmul.f32 %v1757, 0.019
        %v1759 = vadd.f32 %v1758, 0.0078
        %v1760 = vsel %vm248, %v1759, 0.0458
        %v1761 = vmul.f32 %v1724, -0.0458
        %v1762 = vadd.f32 %v1761, %v246
        %v1763 = vmul.f32 %v1724, 0.0458
        %v1764 = vmul.f32 %v1726, %v1760
        %v1765 = vsub.f32 %v1763, %v1764
        %v1766 = vmul.f32 %v1728, 0.0568
        %v1767 = vsub.f32 %v1764, %v1766
        %v1768 = vmul.f32 %v1728, 0.0007441048
        %v1769 = vmul.f32 %v1730, 0.00649
        %v1770 = vsub.f32 4.73, %v1769
        %v1771 = vmul.f32 %v1740, 0.00951
        %v1772 = vsub.f32 %v1770, %v1771
        %vm1773 = vcmp.gt.f32.partialorder %v1730, 339.0
        %v1774 = vsub.f32 %v1730, 339.0
        %v1775 = vmul.f32 %v1774, 0.0005
        %v1776 = vsel %vm1773, %v1775, 0.0
        %v1777 = vmax.f32 %v1772, 0.0
        %v1778 = vadd.f32 %v1777, %v1768
        %v1779 = vsub.f32 %v1778, 1.0
        %v1780 = vsub.f32 %v1779, %v1776
        %v1781 = vmul.f32 %v1730, 0.0656
        %v1782 = vsub.f32 %v1780, %v1781
        %v1783 = vmul.f32 %v1732, 0.0718
        %v1784 = vadd.f32 %v1782, %v1783
        %vm1785 = vcmp.ge.f32.partialorder %v1730, 0.0
        %v1786 = vsel %vm1785, %v1784, 0.0
        %v1787 = vmul.f32 %v1736, 0.0737
        %v1788 = vadd.f32 %v1787, 3.25
        %v1789 = vmul.f32 %v1788, %v1732
        %v1790 = vadd.f32 %v1732, 260.89
        %v1791 = vrcp.pop %v1790
        %v1792 = vmul.f32 %v1789, %v1791
        %v1793 = vsub.f32 0.0, %v1792
        %v1794 = vadd.f32 %v1793, %v1781
        %v1795 = vsub.f32 %v1794, %v1783
        %vm1796 = vcmp.ge.f32.partialorder %v1732, 0.0
        %v1797 = vsel %vm1796, %v1795, 0.0
        %v1798 = vmul.f32 %v1734, -0.55
        %v1799 = vmul.f32 %v1742, 0.145
        %v1800 = vadd.f32 %v1798, %v1799
        %v1801 = vmul.f32 %v1744, 0.0018
        %v1802 = vadd.f32 %v1800, %v1801
        %v1803 = vmul.f32 %v1746, 0.0182
        %v1804 = vadd.f32 %v1802, %v1803
        %v1805 = vmul.f32 %v1734, 20.491804
        %vm1806 = vcmp.ge.f32.partialorder %v1734, 0.0
        %v1807 = vsel %vm1806, %v1804, 0.0
        %v1808 = vmul.f32 %v1736, -0.0275
        %v1809 = vsub.f32 %v1805, 100.25
        %v1810 = vmul.f32 %v1809, 0.0275
        %v1811 = vadd.f32 %v1808, %v1810
        %v1812 = vsub.f32 %v1738, %v1805
        %v1813 = vmul.f32 %v1812, -0.0076
        %v1814 = vsub.f32 %v1740, %v1738
        %v1815 = vmul.f32 %v1814, -0.0076
        %v1816 = vmul.f32 %v1742, -0.365
        %v1817 = vmul.f32 %v1734, 0.393
        %v1818 = vadd.f32 %v1816, %v1817
        %vm1819 = vcmp.ge.f32.partialorder %v1742, 0.0
        %v1820 = vsel %vm1819, %v1818, 0.0
        %v1821 = vmul.f32 %v1744, 0.0182
        %v1822 = vsub.f32 %v247, %v1821
        %vm1823 = vcmp.ge.f32.partialorder %v1744, 0.0
        %v1824 = vsel %vm1823, %v1822, 0.0
        %v1825 = vmul.f32 %v1744, 0.0164
        %v1826 = vsub.f32 %v1825, %v1803
        %vm1827 = vcmp.ge.f32.partialorder %v1746, 0.0
        %v1828 = vsel %vm1827, %v1826, 0.0
        %v1829 = vmul.f32 %v1748, -0.0569
        %v1830 = vmul.f32 %v1730, 0.0569
        %v1831 = vadd.f32 %v1829, %v1830
        %vm1832 = vcmp.ge.f32.partialorder %v1748, 0.0
        %v1833 = vsel %vm1832, %v1831, 0.0
        %v1834 = vmul.f32 %v1762, 0.0625
        %v1835 = vadd.f32 %v1724, %v1834
        %v1836 = vmul.f32 %v1765, 0.0625
        %v1837 = vadd.f32 %v1726, %v1836
        %v1838 = vmul.f32 %v1767, 0.0625
        %v1839 = vadd.f32 %v1728, %v1838
        %v1840 = vmul.f32 %v1786, 0.0625
        %v1841 = vadd.f32 %v1730, %v1840
        %v1842 = vmul.f32 %v1797, 0.0625
        %v1843 = vadd.f32 %v1732, %v1842
        %v1844 = vmul.f32 %v1807, 0.0625
        %v1845 = vadd.f32 %v1734, %v1844
        %v1846 = vmul.f32 %v1811, 0.0625
        %v1847 = vadd.f32 %v1736, %v1846
        %v1848 = vmul.f32 %v1813, 0.0625
        %v1849 = vadd.f32 %v1738, %v1848
        %v1850 = vmul.f32 %v1815, 0.0625
        %v1851 = vadd.f32 %v1740, %v1850
        %v1852 = vmul.f32 %v1820, 0.0625
        %v1853 = vadd.f32 %v1742, %v1852
        %v1854 = vmul.f32 %v1824, 0.0625
        %v1855 = vadd.f32 %v1744, %v1854
        %v1856 = vmul.f32 %v1828, 0.0625
        %v1857 = vadd.f32 %v1746, %v1856
        %v1858 = vmul.f32 %v1833, 0.0625
        %v1859 = vadd.f32 %v1748, %v1858
        %v1860 = vadd.f32 %v1835, %v1837
        %v1861 = vsub.f32 %v1860, %v254
        %v1862 = vmul.f32 %v252, %v1861
        %v1863 = vtanh.pop %v1862
        %v1864 = vsub.f32 %v1860, %v255
        %v1865 = vmul.f32 %v253, %v1864
        %v1866 = vtanh.pop %v1865
        %v1867 = vsub.f32 %v1863, %v1866
        %v1868 = vadd.f32 %v1867, 2.0
        %v1869 = vmul.f32 %v1868, 0.019
        %v1870 = vadd.f32 %v1869, 0.0078
        %v1871 = vsel %vm248, %v1870, 0.0458
        %v1872 = vmul.f32 %v1835, -0.0458
        %v1873 = vadd.f32 %v1872, %v246
        %v1874 = vmul.f32 %v1835, 0.0458
        %v1875 = vmul.f32 %v1837, %v1871
        %v1876 = vsub.f32 %v1874, %v1875
        %v1877 = vmul.f32 %v1839, 0.0568
        %v1878 = vsub.f32 %v1875, %v1877
        %v1879 = vmul.f32 %v1839, 0.0007441048
        %v1880 = vmul.f32 %v1841, 0.00649
        %v1881 = vsub.f32 4.73, %v1880
        %v1882 = vmul.f32 %v1851, 0.00951
        %v1883 = vsub.f32 %v1881, %v1882
        %vm1884 = vcmp.gt.f32.partialorder %v1841, 339.0
        %v1885 = vsub.f32 %v1841, 339.0
        %v1886 = vmul.f32 %v1885, 0.0005
        %v1887 = vsel %vm1884, %v1886, 0.0
        %v1888 = vmax.f32 %v1883, 0.0
        %v1889 = vadd.f32 %v1888, %v1879
        %v1890 = vsub.f32 %v1889, 1.0
        %v1891 = vsub.f32 %v1890, %v1887
        %v1892 = vmul.f32 %v1841, 0.0656
        %v1893 = vsub.f32 %v1891, %v1892
        %v1894 = vmul.f32 %v1843, 0.0718
        %v1895 = vadd.f32 %v1893, %v1894
        %vm1896 = vcmp.ge.f32.partialorder %v1841, 0.0
        %v1897 = vsel %vm1896, %v1895, 0.0
        %v1898 = vmul.f32 %v1847, 0.0737
        %v1899 = vadd.f32 %v1898, 3.25
        %v1900 = vmul.f32 %v1899, %v1843
        %v1901 = vadd.f32 %v1843, 260.89
        %v1902 = vrcp.pop %v1901
        %v1903 = vmul.f32 %v1900, %v1902
        %v1904 = vsub.f32 0.0, %v1903
        %v1905 = vadd.f32 %v1904, %v1892
        %v1906 = vsub.f32 %v1905, %v1894
        %vm1907 = vcmp.ge.f32.partialorder %v1843, 0.0
        %v1908 = vsel %vm1907, %v1906, 0.0
        %v1909 = vmul.f32 %v1845, -0.55
        %v1910 = vmul.f32 %v1853, 0.145
        %v1911 = vadd.f32 %v1909, %v1910
        %v1912 = vmul.f32 %v1855, 0.0018
        %v1913 = vadd.f32 %v1911, %v1912
        %v1914 = vmul.f32 %v1857, 0.0182
        %v1915 = vadd.f32 %v1913, %v1914
        %v1916 = vmul.f32 %v1845, 20.491804
        %vm1917 = vcmp.ge.f32.partialorder %v1845, 0.0
        %v1918 = vsel %vm1917, %v1915, 0.0
        %v1919 = vmul.f32 %v1847, -0.0275
        %v1920 = vsub.f32 %v1916, 100.25
        %v1921 = vmul.f32 %v1920, 0.0275
        %v1922 = vadd.f32 %v1919, %v1921
        %v1923 = vsub.f32 %v1849, %v1916
        %v1924 = vmul.f32 %v1923, -0.0076
        %v1925 = vsub.f32 %v1851, %v1849
        %v1926 = vmul.f32 %v1925, -0.0076
        %v1927 = vmul.f32 %v1853, -0.365
        %v1928 = vmul.f32 %v1845, 0.393
        %v1929 = vadd.f32 %v1927, %v1928
        %vm1930 = vcmp.ge.f32.partialorder %v1853, 0.0
        %v1931 = vsel %vm1930, %v1929, 0.0
        %v1932 = vmul.f32 %v1855, 0.0182
        %v1933 = vsub.f32 %v247, %v1932
        %vm1934 = vcmp.ge.f32.partialorder %v1855, 0.0
        %v1935 = vsel %vm1934, %v1933, 0.0
        %v1936 = vmul.f32 %v1855, 0.0164
        %v1937 = vsub.f32 %v1936, %v1914
        %vm1938 = vcmp.ge.f32.partialorder %v1857, 0.0
        %v1939 = vsel %vm1938, %v1937, 0.0
        %v1940 = vmul.f32 %v1859, -0.0569
        %v1941 = vmul.f32 %v1841, 0.0569
        %v1942 = vadd.f32 %v1940, %v1941
        %vm1943 = vcmp.ge.f32.partialorder %v1859, 0.0
        %v1944 = vsel %vm1943, %v1942, 0.0
        %v1945 = vmul.f32 %v1873, 0.0625
        %v1946 = vadd.f32 %v1835, %v1945
        %v1947 = vmul.f32 %v1876, 0.0625
        %v1948 = vadd.f32 %v1837, %v1947
        %v1949 = vmul.f32 %v1878, 0.0625
        %v1950 = vadd.f32 %v1839, %v1949
        %v1951 = vmul.f32 %v1897, 0.0625
        %v1952 = vadd.f32 %v1841, %v1951
        %v1953 = vmul.f32 %v1908, 0.0625
        %v1954 = vadd.f32 %v1843, %v1953
        %v1955 = vmul.f32 %v1918, 0.0625
        %v1956 = vadd.f32 %v1845, %v1955
        %v1957 = vmul.f32 %v1922, 0.0625
        %v1958 = vadd.f32 %v1847, %v1957
        %v1959 = vmul.f32 %v1924, 0.0625
        %v1960 = vadd.f32 %v1849, %v1959
        %v1961 = vmul.f32 %v1926, 0.0625
        %v1962 = vadd.f32 %v1851, %v1961
        %v1963 = vmul.f32 %v1931, 0.0625
        %v1964 = vadd.f32 %v1853, %v1963
        %v1965 = vmul.f32 %v1935, 0.0625
        %v1966 = vadd.f32 %v1855, %v1965
        %v1967 = vmul.f32 %v1939, 0.0625
        %v1968 = vadd.f32 %v1857, %v1967
        %v1969 = vmul.f32 %v1944, 0.0625
        %v1970 = vadd.f32 %v1859, %v1969
        %v1971 = vadd.f32 %v1946, %v1948
        %v1972 = vsub.f32 %v1971, %v254
        %v1973 = vmul.f32 %v252, %v1972
        %v1974 = vtanh.pop %v1973
        %v1975 = vsub.f32 %v1971, %v255
        %v1976 = vmul.f32 %v253, %v1975
        %v1977 = vtanh.pop %v1976
        %v1978 = vsub.f32 %v1974, %v1977
        %v1979 = vadd.f32 %v1978, 2.0
        %v1980 = vmul.f32 %v1979, 0.019
        %v1981 = vadd.f32 %v1980, 0.0078
        %v1982 = vsel %vm248, %v1981, 0.0458
        %v1983 = vmul.f32 %v1946, -0.0458
        %v1984 = vadd.f32 %v1983, %v246
        %v1985 = vmul.f32 %v1946, 0.0458
        %v1986 = vmul.f32 %v1948, %v1982
        %v1987 = vsub.f32 %v1985, %v1986
        %v1988 = vmul.f32 %v1950, 0.0568
        %v1989 = vsub.f32 %v1986, %v1988
        %v1990 = vmul.f32 %v1950, 0.0007441048
        %v1991 = vmul.f32 %v1952, 0.00649
        %v1992 = vsub.f32 4.73, %v1991
        %v1993 = vmul.f32 %v1962, 0.00951
        %v1994 = vsub.f32 %v1992, %v1993
        %vm1995 = vcmp.gt.f32.partialorder %v1952, 339.0
        %v1996 = vsub.f32 %v1952, 339.0
        %v1997 = vmul.f32 %v1996, 0.0005
        %v1998 = vsel %vm1995, %v1997, 0.0
        %v1999 = vmax.f32 %v1994, 0.0
        %v2000 = vadd.f32 %v1999, %v1990
        %v2001 = vsub.f32 %v2000, 1.0
        %v2002 = vsub.f32 %v2001, %v1998
        %v2003 = vmul.f32 %v1952, 0.0656
        %v2004 = vsub.f32 %v2002, %v2003
        %v2005 = vmul.f32 %v1954, 0.0718
        %v2006 = vadd.f32 %v2004, %v2005
        %vm2007 = vcmp.ge.f32.partialorder %v1952, 0.0
        %v2008 = vsel %vm2007, %v2006, 0.0
        %v2009 = vmul.f32 %v1958, 0.0737
        %v2010 = vadd.f32 %v2009, 3.25
        %v2011 = vmul.f32 %v2010, %v1954
        %v2012 = vadd.f32 %v1954, 260.89
        %v2013 = vrcp.pop %v2012
        %v2014 = vmul.f32 %v2011, %v2013
        %v2015 = vsub.f32 0.0, %v2014
        %v2016 = vadd.f32 %v2015, %v2003
        %v2017 = vsub.f32 %v2016, %v2005
        %vm2018 = vcmp.ge.f32.partialorder %v1954, 0.0
        %v2019 = vsel %vm2018, %v2017, 0.0
        %v2020 = vmul.f32 %v1956, -0.55
        %v2021 = vmul.f32 %v1964, 0.145
        %v2022 = vadd.f32 %v2020, %v2021
        %v2023 = vmul.f32 %v1966, 0.0018
        %v2024 = vadd.f32 %v2022, %v2023
        %v2025 = vmul.f32 %v1968, 0.0182
        %v2026 = vadd.f32 %v2024, %v2025
        %v2027 = vmul.f32 %v1956, 20.491804
        %vm2028 = vcmp.ge.f32.partialorder %v1956, 0.0
        %v2029 = vsel %vm2028, %v2026, 0.0
        %v2030 = vmul.f32 %v1958, -0.0275
        %v2031 = vsub.f32 %v2027, 100.25
        %v2032 = vmul.f32 %v2031, 0.0275
        %v2033 = vadd.f32 %v2030, %v2032
        %v2034 = vsub.f32 %v1960, %v2027
        %v2035 = vmul.f32 %v2034, -0.0076
        %v2036 = vsub.f32 %v1962, %v1960
        %v2037 = vmul.f32 %v2036, -0.0076
        %v2038 = vmul.f32 %v1964, -0.365
        %v2039 = vmul.f32 %v1956, 0.393
        %v2040 = vadd.f32 %v2038, %v2039
        %vm2041 = vcmp.ge.f32.partialorder %v1964, 0.0
        %v2042 = vsel %vm2041, %v2040, 0.0
        %v2043 = vmul.f32 %v1966, 0.0182
        %v2044 = vsub.f32 %v247, %v2043
        %vm2045 = vcmp.ge.f32.partialorder %v1966, 0.0
        %v2046 = vsel %vm2045, %v2044, 0.0
        %v2047 = vmul.f32 %v1966, 0.0164
        %v2048 = vsub.f32 %v2047, %v2025
        %vm2049 = vcmp.ge.f32.partialorder %v1968, 0.0
        %v2050 = vsel %vm2049, %v2048, 0.0
        %v2051 = vmul.f32 %v1970, -0.0569
        %v2052 = vmul.f32 %v1952, 0.0569
        %v2053 = vadd.f32 %v2051, %v2052
        %vm2054 = vcmp.ge.f32.partialorder %v1970, 0.0
        %v2055 = vsel %vm2054, %v2053, 0.0
        %v2056 = vmul.f32 %v1984, 0.0625
        %v2057 = vadd.f32 %v1946, %v2056
        %v2058 = vmul.f32 %v1987, 0.0625
        %v2059 = vadd.f32 %v1948, %v2058
        %v2060 = vmul.f32 %v1989, 0.0625
        %v2061 = vadd.f32 %v1950, %v2060
        %v2062 = vmul.f32 %v2008, 0.0625
        %v2063 = vadd.f32 %v1952, %v2062
        %v2064 = vmul.f32 %v2019, 0.0625
        %v2065 = vadd.f32 %v1954, %v2064
        %v2066 = vmul.f32 %v2029, 0.0625
        %v2067 = vadd.f32 %v1956, %v2066
        %v2068 = vmul.f32 %v2033, 0.0625
        %v2069 = vadd.f32 %v1958, %v2068
        %v2070 = vmul.f32 %v2035, 0.0625
        %v2071 = vadd.f32 %v1960, %v2070
        %v2072 = vmul.f32 %v2037, 0.0625
        %v2073 = vadd.f32 %v1962, %v2072
        %v2074 = vmul.f32 %v2042, 0.0625
        %v2075 = vadd.f32 %v1964, %v2074
        %v2076 = vmul.f32 %v2046, 0.0625
        %v2077 = vadd.f32 %v1966, %v2076
        %v2078 = vmul.f32 %v2050, 0.0625
        %v2079 = vadd.f32 %v1968, %v2078
        %v2080 = vmul.f32 %v2055, 0.0625
        %v2081 = vadd.f32 %v1970, %v2080
        %2082 = vst [vmem:[%s230] sm:$0xff] %v2057
        %s2083 = scalar_lea.vmem %s230, 8 [#allocation7]
        %2084 = vst [vmem:[%s2083] sm:$0xff] %v2059
        %s2085 = scalar_lea.vmem %s230, 16 [#allocation7]
        %2086 = vst [vmem:[%s2085] sm:$0xff] %v2061
        %s2087 = scalar_lea.vmem %s230, 24 [#allocation7]
        %2088 = vst [vmem:[%s2087] sm:$0xff] %v2063
        %s2089 = scalar_lea.vmem %s230, 32 [#allocation7]
        %2090 = vst [vmem:[%s2089] sm:$0xff] %v2065
        %s2091 = scalar_lea.vmem %s230, 40 [#allocation7]
        %2092 = vst [vmem:[%s2091] sm:$0xff] %v2067
        %s2093 = scalar_lea.vmem %s230, 48 [#allocation7]
        %2094 = vst [vmem:[%s2093] sm:$0xff] %v2069
        %s2095 = scalar_lea.vmem %s230, 56 [#allocation7]
        %2096 = vst [vmem:[%s2095] sm:$0xff] %v2071
        %s2097 = scalar_lea.vmem %s230, 64 [#allocation7]
        %2098 = vst [vmem:[%s2097] sm:$0xff] %v2073
        %s2099 = scalar_lea.vmem %s230, 72 [#allocation7]
        %2100 = vst [vmem:[%s2099] sm:$0xff] %v2075
        %s2101 = scalar_lea.vmem %s230, 80 [#allocation7]
        %2102 = vst [vmem:[%s2101] sm:$0xff] %v2077
        %s2103 = scalar_lea.vmem %s230, 88 [#allocation7]
        %2104 = vst [vmem:[%s2103] sm:$0xff] %v2079
        %s2105 = scalar_lea.vmem %s230, 96 [#allocation7]
        %2106 = vst [vmem:[%s2105] sm:$0xff] %v2081
        %s2107 = sand.u32 %s87, 1
        %s2108 = scalar_lea.sflag [#allocation4], %s2107
        %s2109 = sand.u32 %s87, 1
        %s2110 = smul.addr %s2109, 104
        %s2111 = scalar_lea.vmem [#allocation7], %s2110
        %s2112 = sand.u32 %s113, 1
        %s2113 = scalar_lea.sflag [#allocation9], %s2112
        %s2114 = sand.u32 %s113, 1
        %s2115 = smul.addr %s2114, 104
        %s2116 = scalar_lea.vmem [#allocation8], %s2115
        // Predicated region
        $region37: #{tpu_custom_call.1} parent=27 // pred_check
          %p2117 = pneg %p97
        $region38: #{tpu_custom_call.1} parent=27 // pred_check_branch
          %2119 = sbr.rel (%p2117) target = $region40
        $region39: #{tpu_custom_call.1} parent=27 // pred_region
          %s2121 = ssub.s32 1664, 1664
          %2122 = vsyncadd %s2108, %s2121
          %s2123 = smul.addr %s27, 128
          %s2124 = scalar_lea.hbm %s2, %s2123
          %s2125 = sshll.u32 %s2111, 4
          %s2126 = int_to_ptr.vmem [resolvable:$true] %s2125
          %2131 = dma.vmem_to_hbm [thread:$0]  %s2126, 1664, %s2124, %s2108, 128, 256, 8
        $region40: #{tpu_custom_call.1} parent=27 // pred_fallthru
          _
        // Predicated region
        $region41: #{tpu_custom_call.1} parent=27 // pred_check
          %p2132 = pneg %p123
        $region42: #{tpu_custom_call.1} parent=27 // pred_check_branch
          %2134 = sbr.rel (%p2132) target = $region44
        $region43: #{tpu_custom_call.1} parent=27 // pred_region
          %s2136 = ssub.s32 1664, 1664
          %2137 = vsyncadd %s2113, %s2136
          %s2138 = smul.addr %s27, 128
          %s2139 = scalar_lea.hbm %s3, %s2138
          %s2140 = sshll.u32 %s2116, 4
          %s2141 = int_to_ptr.vmem [resolvable:$true] %s2140
          %2146 = dma.vmem_to_hbm [thread:$0]  %s2141, 1664, %s2139, %s2113, 128, 256, 8
        $region44: #{tpu_custom_call.1} parent=27 // pred_fallthru
          _
      $region28: #{tpu_custom_call.1} parent=5 // pred_fallthru
        _
      %p2147 = scmp.le.s32.totalorder 2, %s22
      // Predicated region
      $region45: #{tpu_custom_call.1} parent=5 // pred_check
        %p2148 = pneg %p2147
      $region46: #{tpu_custom_call.1} parent=5 // pred_check_branch
        %2150 = sbr.rel (%p2148) target = $region48
      $region47: #{tpu_custom_call.1} parent=5 // pred_region
        %s2151 = ssub.s32 %s22, 2
        // Predicated region
        $region49: #{tpu_custom_call.1} parent=47 // pred_check
          %p2152 = pneg %p103
        $region50: #{tpu_custom_call.1} parent=47 // pred_check_branch
          %2154 = sbr.rel (%p2152) target = $region52
        $region51: #{tpu_custom_call.1} parent=47 // pred_region
          %s2155 = sand.u32 %s88, 1
          %s2156 = scalar_lea.sflag [#allocation4], %s2155
          %s2157 = sand.u32 %s88, 1
          %s2158 = smul.addr %s2157, 104
          %s2159 = scalar_lea.vmem [#allocation7], %s2158
          %2160 = dma.done %s2156, 1664
        $region52: #{tpu_custom_call.1} parent=47 // pred_fallthru
          _
        // Predicated region
        $region53: #{tpu_custom_call.1} parent=47 // pred_check
          %p2161 = pneg %p129
        $region54: #{tpu_custom_call.1} parent=47 // pred_check_branch
          %2163 = sbr.rel (%p2161) target = $region56
        $region55: #{tpu_custom_call.1} parent=47 // pred_region
          %s2164 = sand.u32 %s114, 1
          %s2165 = scalar_lea.sflag [#allocation9], %s2164
          %s2166 = sand.u32 %s114, 1
          %s2167 = smul.addr %s2166, 104
          %s2168 = scalar_lea.vmem [#allocation8], %s2167
          %2169 = dma.done %s2165, 1664
        $region56: #{tpu_custom_call.1} parent=47 // pred_fallthru
          _
      $region48: #{tpu_custom_call.1} parent=5 // pred_fallthru
        _
    $region6: #{tpu_custom_call.1} parent=1 // loop_footer
      %s26 = sadd.s32 1, %s22
    $region7: #{tpu_custom_call.1} parent=1 // loop_footer_branch
      %21 = sbr.rel target = $region3
    $region8: #{tpu_custom_call.1} parent=1 // loop_exit
      _
    %2170 = vsyncpa [#allocation3], 1
    %s2171 = scalar_lea.sflag [#allocation3], 1
    %2172 = vsyncpa %s2171, 1
    %2173 = vsyncpa [#allocation6], 1
    %s2174 = scalar_lea.sflag [#allocation6], 1
    %2175 = vsyncpa %s2174, 1
    %2176 = vsyncpa [#allocation4], 1
    %s2177 = scalar_lea.sflag [#allocation4], 1
    %2178 = vsyncpa %s2177, 1
    %2179 = vsyncpa [#allocation9], 1
    %s2180 = scalar_lea.sflag [#allocation9], 1
    %2181 = vsyncpa %s2180, 1

</llo_original>
